<compile_context>
chip_gen: v5e
topology: v5e:2x2
jax: 0.10.0
libtpu: 0.0.40
codegen_flags: <defaults>
</compile_context>

<pallas_src>
import functools

import numpy as np
import jax
import jax.numpy as jnp
from jax.experimental import pallas as pl
from jax.experimental.pallas import tpu as pltpu


# ----------------------------------------------------------------------------
# Host-side weight preparation (hoisted out of the jitted forward)
# ----------------------------------------------------------------------------
def _build_banded_conv_weights(w_oihw, b, H):
    """Build per-row-tap banded weight matrices for a 5x5 'same' conv on an HxH image.

    Input rows are laid out as lanes (x * Cin + c).  Output columns are laid out as
    (dx * Wo * Cout + xo * Cout + co) where the real output x = 2*xo + dx, i.e. the
    even-x / odd-x pooling phases occupy the two lane halves of the result.
    Horizontal zero-padding is folded in by simply clipping the band at the edges.
    """
    w_oihw = np.asarray(w_oihw, np.float32)
    b = np.asarray(b, np.float32)
    Cout, Cin, KH, KW = w_oihw.shape
    assert KH == 5 and KW == 5
    W = H
    Wo = W // 2
    K = W * Cin
    n_cols = 2 * Wo * Cout
    band = np.zeros((KH, K, n_cols), np.float32)
    for i in range(KH):
        for dx in range(2):
            for xo in range(Wo):
                x = 2 * xo + dx
                col0 = dx * (Wo * Cout) + xo * Cout
                for j in range(KW):
                    x_in = x + j - 2          # unpadded input column
                    if 0 <= x_in < W:
                        # band[i, x_in*Cin + c, col0 + co] = w[co, c, i, j]
                        band[i, x_in * Cin:(x_in + 1) * Cin, col0:col0 + Cout] = \
                            w_oihw[:, :, i, j].T
    bias_tiled = np.tile(b, 2 * Wo).reshape(1, n_cols)
    return band, bias_tiled


def init_params(key, in_channels, n_classes):
    ks = jax.random.split(key, 12)

    def normal(k, shape, fan_in):
        return jax.random.normal(k, shape, jnp.float32) / jnp.sqrt(fan_in)

    p = {}
    p["w1"] = normal(ks[0], (16, in_channels, 5, 5), in_channels * 25)
    p["b1"] = normal(ks[1], (16,), in_channels * 25)
    p["w2"] = normal(ks[2], (32, 16, 5, 5), 16 * 25)
    p["b2"] = normal(ks[3], (32,), 16 * 25)
    p["w3"] = normal(ks[4], (64, 32, 5, 5), 32 * 25)
    p["b3"] = normal(ks[5], (64,), 32 * 25)
    p["fc1_w"] = normal(ks[6], (120, 64 * 4 * 4), 64 * 4 * 4)  # torch (out, in)
    p["fc1_b"] = normal(ks[7], (120,), 64 * 4 * 4)
    p["fc2_w"] = normal(ks[8], (84, 120), 120)
    p["fc2_b"] = normal(ks[9], (84,), 120)
    p["fc3_w"] = normal(ks[10], (n_classes, 84), 84)
    p["fc3_b"] = normal(ks[11], (n_classes,), 84)
    return p


def prepare_params(p, *, in_channels, spatial):
    """One-time host-side layout work: banded conv weights, tiled biases,
    MXU-ready (bf16, pre-transposed / column-permuted) FC weights."""
    prep = {}
    stage_cfg = [("1", in_channels, 16, spatial),
                 ("2", 16, 32, spatial // 2),
                 ("3", 32, 64, spatial // 4)]
    for name, cin, cout, H in stage_cfg:
        band, bias_t = _build_banded_conv_weights(p["w" + name], p["b" + name], H)
        prep["conv" + name + "_w"] = jnp.asarray(band, jnp.bfloat16)
        prep["conv" + name + "_b"] = jnp.asarray(bias_t, jnp.float32)

    # Final feature map is produced in (h, w, c) order; permute fc1 columns so it
    # matches torch.flatten on NCHW (feature index c*16 + h*4 + w) with no runtime
    # transpose.
    Ho = spatial // 8
    w1 = np.asarray(p["fc1_w"], np.float32)                       # (120, 64*Ho*Ho)
    w1 = w1.reshape(120, 64, Ho, Ho).transpose(2, 3, 1, 0).reshape(Ho * Ho * 64, 120)
    prep["fc1_w"] = jnp.asarray(w1, jnp.bfloat16)
    prep["fc1_b"] = jnp.asarray(np.asarray(p["fc1_b"]).reshape(1, -1), jnp.float32)
    prep["fc2_w"] = jnp.asarray(np.asarray(p["fc2_w"]).T, jnp.bfloat16)
    prep["fc2_b"] = jnp.asarray(np.asarray(p["fc2_b"]).reshape(1, -1), jnp.float32)
    prep["fc3_w"] = jnp.asarray(np.asarray(p["fc3_w"]).T, jnp.bfloat16)
    prep["fc3_b"] = jnp.asarray(np.asarray(p["fc3_b"]).reshape(1, -1), jnp.float32)
    return prep


# ----------------------------------------------------------------------------
# Pallas kernels
# ----------------------------------------------------------------------------
def _conv_relu_pool_kernel(x_ref, w_ref, b_ref, o_ref, *, H, Ho, pad_out):
    """Fused conv5x5(same) + bias + ReLU + maxpool2x2 for one image.

    x_ref: (1, H+4, W*Cin)      vertically zero-padded input rows (lanes = x*Cin+c)
    w_ref: (5, W*Cin, 2*Wo*Cout) bf16 banded weights (column halves = x-pool phases)
    b_ref: (1, 2*Wo*Cout)       f32 tiled bias
    o_ref: (1, Ho+4, Wo*Cout) if pad_out else (1, Ho, Wo*Cout)
    """
    n_cols = b_ref.shape[-1]
    half = n_cols // 2                      # Wo * Cout

    # Convolution: 5 row-tap MXU dots, bf16 inputs, f32 accumulation.
    acc = jnp.zeros((H, n_cols), jnp.float32)
    for i in range(5):
        lhs = x_ref[0, i:i + H, :].astype(jnp.bfloat16)
        acc = acc + jnp.dot(lhs, w_ref[i], preferred_element_type=jnp.float32)

    # Bias + ReLU (f32 epilogue).
    y = jnp.maximum(acc + b_ref[...], 0.0)                    # (H, 2*Wo*Cout)

    # MaxPool over x: even-x phase vs odd-x phase = the two 128-aligned lane halves.
    xm = jnp.maximum(y[:, :half], y[:, half:])                # (H, Wo*Cout)

    # MaxPool over y: select rows 2*yo and 2*yo+1 via tiny 0/1 selection matmuls.
    r = jax.lax.broadcasted_iota(jnp.int32, (Ho, H), 0)
    c = jax.lax.broadcasted_iota(jnp.int32, (Ho, H), 1)
    s_even = (c == 2 * r).astype(jnp.float32)
    s_odd = (c == 2 * r + 1).astype(jnp.float32)
    pooled = jnp.maximum(
        jnp.dot(s_even, xm, preferred_element_type=jnp.float32),
        jnp.dot(s_odd, xm, preferred_element_type=jnp.float32))  # (Ho, Wo*Cout)

    if pad_out:
        # Emit the next stage's vertically zero-padded input directly (no glue).
        o_ref[...] = jnp.zeros(o_ref.shape, o_ref.dtype)
        o_ref[0, 2:2 + Ho, :] = pooled.astype(o_ref.dtype)
    else:
        o_ref[0, :, :] = pooled.astype(o_ref.dtype)


def _fc_stack_kernel(x_ref, w1_ref, b1_ref, w2_ref, b2_ref, w3_ref, b3_ref, o_ref):
    """fc1 + ReLU -> fc2 + ReLU -> fc3, fused; activations never leave VMEM."""
    h = jnp.dot(x_ref[...].astype(jnp.bfloat16), w1_ref[...],
                preferred_element_type=jnp.float32)
    h = jnp.maximum(h + b1_ref[...], 0.0)
    h = jnp.dot(h.astype(jnp.bfloat16), w2_ref[...],
                preferred_element_type=jnp.float32)
    h = jnp.maximum(h + b2_ref[...], 0.0)
    h = jnp.dot(h.astype(jnp.bfloat16), w3_ref[...],
                preferred_element_type=jnp.float32)
    o_ref[...] = h + b3_ref[...]


# ----------------------------------------------------------------------------
# Pallas wrappers
# ----------------------------------------------------------------------------
def conv_relu_pool(x3d, band_w, bias_t, *, Cin, Cout, H, pad_out):
    N = x3d.shape[0]
    Hp = H + 4
    Ho = H // 2
    WCin = H * Cin
    n_cols = 2 * Ho * Cout
    out_rows = Ho + 4 if pad_out else Ho
    assert x3d.shape == (N, Hp, WCin), x3d.shape
    assert band_w.shape == (5, WCin, n_cols), band_w.shape

    kernel = functools.partial(_conv_relu_pool_kernel, H=H, Ho=Ho, pad_out=pad_out)
    return pl.pallas_call(
        kernel,
        out_shape=jax.ShapeDtypeStruct((N, out_rows, Ho * Cout), jnp.float32),
        grid=(N,),
        in_specs=[
            pl.BlockSpec((1, Hp, WCin), lambda n: (n, 0, 0)),
            pl.BlockSpec((5, WCin, n_cols), lambda n: (0, 0, 0)),
            pl.BlockSpec((1, n_cols), lambda n: (0, 0)),
        ],
        out_specs=pl.BlockSpec((1, out_rows, Ho * Cout), lambda n: (n, 0, 0)),
        compiler_params=pltpu.CompilerParams(dimension_semantics=("parallel",)),
    )(x3d, band_w, bias_t)


def fc_stack(x, w1, b1, w2, b2, w3, b3):
    N, D = x.shape
    n_classes = w3.shape[1]
    return pl.pallas_call(
        _fc_stack_kernel,
        out_shape=jax.ShapeDtypeStruct((N, n_classes), jnp.float32),
        grid=(1,),
        in_specs=[
            pl.BlockSpec((N, D), lambda i: (0, 0)),
            pl.BlockSpec(w1.shape, lambda i: (0, 0)),
            pl.BlockSpec(b1.shape, lambda i: (0, 0)),
            pl.BlockSpec(w2.shape, lambda i: (0, 0)),
            pl.BlockSpec(b2.shape, lambda i: (0, 0)),
            pl.BlockSpec(w3.shape, lambda i: (0, 0)),
            pl.BlockSpec(b3.shape, lambda i: (0, 0)),
        ],
        out_specs=pl.BlockSpec((N, n_classes), lambda i: (0, 0)),
        compiler_params=pltpu.CompilerParams(dimension_semantics=("arbitrary",)),
    )(x, w1, b1, w2, b2, w3, b3)


# ----------------------------------------------------------------------------
# Model forward
# ----------------------------------------------------------------------------
@jax.jit
def cnn_forward(x_nchw, prep):
    N, Cin, H, W = x_nchw.shape
    # NCHW -> rows (n, y) with lanes (x*Cin + c), plus the vertical zero-pad of 2.
    x = jnp.transpose(x_nchw, (0, 2, 3, 1)).reshape(N, H, W * Cin)
    x = jnp.pad(x, ((0, 0), (2, 2), (0, 0)))

    x = conv_relu_pool(x, prep["conv1_w"], prep["conv1_b"],
                       Cin=Cin, Cout=16, H=H, pad_out=True)
    x = conv_relu_pool(x, prep["conv2_w"], prep["conv2_b"],
                       Cin=16, Cout=32, H=H // 2, pad_out=True)
    x = conv_relu_pool(x, prep["conv3_w"], prep["conv3_b"],
                       Cin=32, Cout=64, H=H // 4, pad_out=False)

    # (N, Ho, Wo*64) row-major == (N, Ho*Wo*64) in (h, w, c) order; fc1 weights were
    # column-permuted at prep time to match torch's NCHW flatten.
    x = x.reshape(N, -1)
    return fc_stack(x, prep["fc1_w"], prep["fc1_b"], prep["fc2_w"], prep["fc2_b"],
                    prep["fc3_w"], prep["fc3_b"])


if __name__ == "__main__":
    key = jax.random.PRNGKey(0)
    k_x, k_p = jax.random.split(key)

    # fc1 expects 64*4*4 features => 32 -> 16 -> 8 -> 4 spatial.
    batch, in_channels, spatial, n_classes = 2, 3, 32, 10
    x = jax.random.normal(k_x, (batch, in_channels, spatial, spatial), jnp.float32)

    params = init_params(k_p, in_channels, n_classes)
    prep = prepare_params(params, in_channels=in_channels, spatial=spatial)

    out = cnn_forward(x, prep)
    jax.block_until_ready(out)
    assert out.shape == (batch, n_classes), out.shape
    print("KERNEL_OK")
</pallas_src>

<mosaic_0001>
module attributes {stable_mosaic.version = 11 : i64} {
  func.func @_conv_relu_pool_kernel(%arg0: i32, %arg1: memref<1x20x256xf32, #tpu.memory_space<vmem>>, %arg2: memref<5x256x512xbf16, #tpu.memory_space<vmem>>, %arg3: memref<1x512xf32, #tpu.memory_space<vmem>>, %arg4: memref<1x12x256xf32, #tpu.memory_space<vmem>>) attributes {dimension_semantics = [#tpu.dimension_semantics<parallel>], iteration_bounds = array<i64: 2>, scalar_prefetch = 0 : i64, scratch_operands = 0 : i64, tpu.core_type = #tpu.core_type<tc>, window_params = [{transform_indices = @transform_0, window_bounds = array<i64: 1, 20, 256>}, {pipeline_mode = #tpu.pipeline_mode<synchronous>, transform_indices = @transform_1, window_bounds = array<i64: 5, 256, 512>}, {pipeline_mode = #tpu.pipeline_mode<synchronous>, transform_indices = @transform_2, window_bounds = array<i64: 1, 512>}, {transform_indices = @transform_3, window_bounds = array<i64: 1, 12, 256>}]} {
    %cst = arith.constant 0.000000e+00 : f32
    %0 = vector.broadcast %cst : f32 to vector<16x512xf32>
    %c0 = arith.constant 0 : index
    %c0_0 = arith.constant 0 : index
    %c0_1 = arith.constant 0 : index
    %1 = vector.load %arg1[%c0, %c0_0, %c0_1] : memref<1x20x256xf32, #tpu.memory_space<vmem>>, vector<1x16x256xf32>
    %2 = vector.shape_cast %1 : vector<1x16x256xf32> to vector<16x256xf32>
    %3 = arith.truncf %2 : vector<16x256xf32> to vector<16x256xbf16>
    %c0_2 = arith.constant 0 : index
    %c0_3 = arith.constant 0 : index
    %c0_4 = arith.constant 0 : index
    %4 = vector.load %arg2[%c0_2, %c0_3, %c0_4] : memref<5x256x512xbf16, #tpu.memory_space<vmem>>, vector<1x256x512xbf16>
    %5 = vector.shape_cast %4 : vector<1x256x512xbf16> to vector<256x512xbf16>
    %cst_5 = arith.constant dense<0.000000e+00> : vector<16x512xf32>
    %6 = tpu.matmul %3, %5, %cst_5 {dimension_numbers = #tpu.dot_dimension_numbers<[1], [0], [0], [1], [0, 0, 1, 1], [], []>} : vector<16x256xbf16>, vector<256x512xbf16>, vector<16x512xf32> -> vector<16x512xf32>
    %7 = arith.addf %0, %6 : vector<16x512xf32>
    %c0_6 = arith.constant 0 : index
    %c1 = arith.constant 1 : index
    %c0_7 = arith.constant 0 : index
    %8 = vector.load %arg1[%c0_6, %c1, %c0_7] : memref<1x20x256xf32, #tpu.memory_space<vmem>>, vector<1x16x256xf32>
    %9 = vector.shape_cast %8 : vector<1x16x256xf32> to vector<16x256xf32>
    %10 = arith.truncf %9 : vector<16x256xf32> to vector<16x256xbf16>
    %c1_8 = arith.constant 1 : index
    %c0_9 = arith.constant 0 : index
    %c0_10 = arith.constant 0 : index
    %11 = vector.load %arg2[%c1_8, %c0_9, %c0_10] : memref<5x256x512xbf16, #tpu.memory_space<vmem>>, vector<1x256x512xbf16>
    %12 = vector.shape_cast %11 : vector<1x256x512xbf16> to vector<256x512xbf16>
    %cst_11 = arith.constant dense<0.000000e+00> : vector<16x512xf32>
    %13 = tpu.matmul %10, %12, %cst_11 {dimension_numbers = #tpu.dot_dimension_numbers<[1], [0], [0], [1], [0, 0, 1, 1], [], []>} : vector<16x256xbf16>, vector<256x512xbf16>, vector<16x512xf32> -> vector<16x512xf32>
    %14 = arith.addf %7, %13 : vector<16x512xf32>
    %c0_12 = arith.constant 0 : index
    %c2 = arith.constant 2 : index
    %c0_13 = arith.constant 0 : index
    %15 = vector.load %arg1[%c0_12, %c2, %c0_13] : memref<1x20x256xf32, #tpu.memory_space<vmem>>, vector<1x16x256xf32>
    %16 = vector.shape_cast %15 : vector<1x16x256xf32> to vector<16x256xf32>
    %17 = arith.truncf %16 : vector<16x256xf32> to vector<16x256xbf16>
    %c2_14 = arith.constant 2 : index
    %c0_15 = arith.constant 0 : index
    %c0_16 = arith.constant 0 : index
    %18 = vector.load %arg2[%c2_14, %c0_15, %c0_16] : memref<5x256x512xbf16, #tpu.memory_space<vmem>>, vector<1x256x512xbf16>
    %19 = vector.shape_cast %18 : vector<1x256x512xbf16> to vector<256x512xbf16>
    %cst_17 = arith.constant dense<0.000000e+00> : vector<16x512xf32>
    %20 = tpu.matmul %17, %19, %cst_17 {dimension_numbers = #tpu.dot_dimension_numbers<[1], [0], [0], [1], [0, 0, 1, 1], [], []>} : vector<16x256xbf16>, vector<256x512xbf16>, vector<16x512xf32> -> vector<16x512xf32>
    %21 = arith.addf %14, %20 : vector<16x512xf32>
    %c0_18 = arith.constant 0 : index
    %c3 = arith.constant 3 : index
    %c0_19 = arith.constant 0 : index
    %22 = vector.load %arg1[%c0_18, %c3, %c0_19] : memref<1x20x256xf32, #tpu.memory_space<vmem>>, vector<1x16x256xf32>
    %23 = vector.shape_cast %22 : vector<1x16x256xf32> to vector<16x256xf32>
    %24 = arith.truncf %23 : vector<16x256xf32> to vector<16x256xbf16>
    %c3_20 = arith.constant 3 : index
    %c0_21 = arith.constant 0 : index
    %c0_22 = arith.constant 0 : index
    %25 = vector.load %arg2[%c3_20, %c0_21, %c0_22] : memref<5x256x512xbf16, #tpu.memory_space<vmem>>, vector<1x256x512xbf16>
    %26 = vector.shape_cast %25 : vector<1x256x512xbf16> to vector<256x512xbf16>
    %cst_23 = arith.constant dense<0.000000e+00> : vector<16x512xf32>
    %27 = tpu.matmul %24, %26, %cst_23 {dimension_numbers = #tpu.dot_dimension_numbers<[1], [0], [0], [1], [0, 0, 1, 1], [], []>} : vector<16x256xbf16>, vector<256x512xbf16>, vector<16x512xf32> -> vector<16x512xf32>
    %28 = arith.addf %21, %27 : vector<16x512xf32>
    %c0_24 = arith.constant 0 : index
    %c4 = arith.constant 4 : index
    %c0_25 = arith.constant 0 : index
    %29 = vector.load %arg1[%c0_24, %c4, %c0_25] : memref<1x20x256xf32, #tpu.memory_space<vmem>>, vector<1x16x256xf32>
    %30 = vector.shape_cast %29 : vector<1x16x256xf32> to vector<16x256xf32>
    %31 = arith.truncf %30 : vector<16x256xf32> to vector<16x256xbf16>
    %c4_26 = arith.constant 4 : index
    %c0_27 = arith.constant 0 : index
    %c0_28 = arith.constant 0 : index
    %32 = vector.load %arg2[%c4_26, %c0_27, %c0_28] : memref<5x256x512xbf16, #tpu.memory_space<vmem>>, vector<1x256x512xbf16>
    %33 = vector.shape_cast %32 : vector<1x256x512xbf16> to vector<256x512xbf16>
    %cst_29 = arith.constant dense<0.000000e+00> : vector<16x512xf32>
    %34 = tpu.matmul %31, %33, %cst_29 {dimension_numbers = #tpu.dot_dimension_numbers<[1], [0], [0], [1], [0, 0, 1, 1], [], []>} : vector<16x256xbf16>, vector<256x512xbf16>, vector<16x512xf32> -> vector<16x512xf32>
    %35 = arith.addf %28, %34 : vector<16x512xf32>
    %c0_30 = arith.constant 0 : index
    %c0_31 = arith.constant 0 : index
    %36 = vector.load %arg3[%c0_30, %c0_31] : memref<1x512xf32, #tpu.memory_space<vmem>>, vector<1x512xf32>
    %37 = vector.broadcast %36 : vector<1x512xf32> to vector<16x512xf32>
    %38 = arith.addf %35, %37 : vector<16x512xf32>
    %cst_32 = arith.constant 0.000000e+00 : f32
    %39 = vector.broadcast %cst_32 : f32 to vector<16x512xf32>
    %40 = arith.maximumf %38, %39 : vector<16x512xf32>
    %41 = vector.extract_strided_slice %40 {offsets = [0, 0], sizes = [16, 256], strides = [1, 1]} : vector<16x512xf32> to vector<16x256xf32>
    %42 = vector.extract_strided_slice %40 {offsets = [0, 256], sizes = [16, 256], strides = [1, 1]} : vector<16x512xf32> to vector<16x256xf32>
    %43 = arith.maximumf %41, %42 : vector<16x256xf32>
    %44 = tpu.iota {dimensions = array<i32: 0>} : vector<8x16xi32>
    %45 = tpu.iota {dimensions = array<i32: 1>} : vector<8x16xi32>
    %c2_i32 = arith.constant 2 : i32
    %46 = vector.broadcast %c2_i32 : i32 to vector<8x16xi32>
    %47 = arith.muli %46, %44 : vector<8x16xi32>
    %48 = arith.cmpi eq, %45, %47 : vector<8x16xi32>
    %49 = arith.extui %48 : vector<8x16xi1> to vector<8x16xi32>
    %50 = arith.sitofp %49 : vector<8x16xi32> to vector<8x16xf32>
    %c2_i32_33 = arith.constant 2 : i32
    %51 = vector.broadcast %c2_i32_33 : i32 to vector<8x16xi32>
    %52 = arith.muli %51, %44 : vector<8x16xi32>
    %c1_i32 = arith.constant 1 : i32
    %53 = vector.broadcast %c1_i32 : i32 to vector<8x16xi32>
    %54 = arith.addi %52, %53 : vector<8x16xi32>
    %55 = arith.cmpi eq, %45, %54 : vector<8x16xi32>
    %56 = arith.extui %55 : vector<8x16xi1> to vector<8x16xi32>
    %57 = arith.sitofp %56 : vector<8x16xi32> to vector<8x16xf32>
    %cst_34 = arith.constant dense<0.000000e+00> : vector<8x256xf32>
    %58 = tpu.matmul %50, %43, %cst_34 {dimension_numbers = #tpu.dot_dimension_numbers<[1], [0], [0], [1], [0, 0, 1, 1], [], []>} : vector<8x16xf32>, vector<16x256xf32>, vector<8x256xf32> -> vector<8x256xf32>
    %cst_35 = arith.constant dense<0.000000e+00> : vector<8x256xf32>
    %59 = tpu.matmul %57, %43, %cst_35 {dimension_numbers = #tpu.dot_dimension_numbers<[1], [0], [0], [1], [0, 0, 1, 1], [], []>} : vector<8x16xf32>, vector<16x256xf32>, vector<8x256xf32> -> vector<8x256xf32>
    %60 = arith.maximumf %58, %59 : vector<8x256xf32>
    %cst_36 = arith.constant 0.000000e+00 : f32
    %61 = vector.broadcast %cst_36 : f32 to vector<1x12x256xf32>
    %c0_37 = arith.constant 0 : index
    %c0_38 = arith.constant 0 : index
    %c0_39 = arith.constant 0 : index
    %62 = vector.load %arg4[%c0_37, %c0_38, %c0_39] : memref<1x12x256xf32, #tpu.memory_space<vmem>>, vector<1x12x256xf32>
    tpu.vector_store %arg4[%c0_37, %c0_38, %c0_39], %61 {strides = array<i32>} : memref<1x12x256xf32, #tpu.memory_space<vmem>>, vector<1x12x256xf32>,
    %c0_40 = arith.constant 0 : index
    %c2_41 = arith.constant 2 : index
    %c0_42 = arith.constant 0 : index
    %63 = vector.load %arg4[%c0_40, %c2_41, %c0_42] : memref<1x12x256xf32, #tpu.memory_space<vmem>>, vector<1x8x256xf32>
    %64 = vector.shape_cast %63 : vector<1x8x256xf32> to vector<8x256xf32>
    %65 = vector.shape_cast %60 : vector<8x256xf32> to vector<1x8x256xf32>
    tpu.vector_store %arg4[%c0_40, %c2_41, %c0_42], %65 {strides = array<i32>} : memref<1x12x256xf32, #tpu.memory_space<vmem>>, vector<1x8x256xf32>,
    return
  }
  func.func @transform_0(%arg0: i32) -> (i32, i32, i32) {
    %c0_i32 = arith.constant 0 : i32
    %c0_i32_0 = arith.constant 0 : i32
    %c0_i32_1 = arith.constant 0 : i32
    return %arg0, %c0_i32, %c0_i32_0 : i32, i32, i32
  }
  func.func @transform_1(%arg0: i32) -> (i32, i32, i32) {
    %c0_i32 = arith.constant 0 : i32
    %c0_i32_0 = arith.constant 0 : i32
    %c0_i32_1 = arith.constant 0 : i32
    %c0_i32_2 = arith.constant 0 : i32
    return %c0_i32, %c0_i32_0, %c0_i32_1 : i32, i32, i32
  }
  func.func @transform_2(%arg0: i32) -> (i32, i32) {
    %c0_i32 = arith.constant 0 : i32
    %c0_i32_0 = arith.constant 0 : i32
    %c0_i32_1 = arith.constant 0 : i32
    return %c0_i32, %c0_i32_0 : i32, i32
  }
  func.func @transform_3(%arg0: i32) -> (i32, i32, i32) {
    %c0_i32 = arith.constant 0 : i32
    %c0_i32_0 = arith.constant 0 : i32
    %c0_i32_1 = arith.constant 0 : i32
    return %arg0, %c0_i32, %c0_i32_0 : i32, i32, i32
  }
}

module attributes {stable_mosaic.version = 11 : i64} {
  func.func @_conv_relu_pool_kernel(%arg0: i32, %arg1: memref<1x36x96xf32, #tpu.memory_space<vmem>>, %arg2: memref<5x96x512xbf16, #tpu.memory_space<vmem>>, %arg3: memref<1x512xf32, #tpu.memory_space<vmem>>, %arg4: memref<1x20x256xf32, #tpu.memory_space<vmem>>) attributes {dimension_semantics = [#tpu.dimension_semantics<parallel>], iteration_bounds = array<i64: 2>, scalar_prefetch = 0 : i64, scratch_operands = 0 : i64, tpu.core_type = #tpu.core_type<tc>, window_params = [{transform_indices = @transform_0, window_bounds = array<i64: 1, 36, 96>}, {pipeline_mode = #tpu.pipeline_mode<synchronous>, transform_indices = @transform_1, window_bounds = array<i64: 5, 96, 512>}, {pipeline_mode = #tpu.pipeline_mode<synchronous>, transform_indices = @transform_2, window_bounds = array<i64: 1, 512>}, {transform_indices = @transform_3, window_bounds = array<i64: 1, 20, 256>}]} {
    %cst = arith.constant 0.000000e+00 : f32
    %0 = vector.broadcast %cst : f32 to vector<32x512xf32>
    %c0 = arith.constant 0 : index
    %c0_0 = arith.constant 0 : index
    %c0_1 = arith.constant 0 : index
    %1 = vector.load %arg1[%c0, %c0_0, %c0_1] : memref<1x36x96xf32, #tpu.memory_space<vmem>>, vector<1x32x96xf32>
    %2 = vector.shape_cast %1 : vector<1x32x96xf32> to vector<32x96xf32>
    %3 = arith.truncf %2 : vector<32x96xf32> to vector<32x96xbf16>
    %c0_2 = arith.constant 0 : index
    %c0_3 = arith.constant 0 : index
    %c0_4 = arith.constant 0 : index
    %4 = vector.load %arg2[%c0_2, %c0_3, %c0_4] : memref<5x96x512xbf16, #tpu.memory_space<vmem>>, vector<1x96x512xbf16>
    %5 = vector.shape_cast %4 : vector<1x96x512xbf16> to vector<96x512xbf16>
    %cst_5 = arith.constant dense<0.000000e+00> : vector<32x512xf32>
    %6 = tpu.matmul %3, %5, %cst_5 {dimension_numbers = #tpu.dot_dimension_numbers<[1], [0], [0], [1], [0, 0, 1, 1], [], []>} : vector<32x96xbf16>, vector<96x512xbf16>, vector<32x512xf32> -> vector<32x512xf32>
    %7 = arith.addf %0, %6 : vector<32x512xf32>
    %c0_6 = arith.constant 0 : index
    %c1 = arith.constant 1 : index
    %c0_7 = arith.constant 0 : index
    %8 = vector.load %arg1[%c0_6, %c1, %c0_7] : memref<1x36x96xf32, #tpu.memory_space<vmem>>, vector<1x32x96xf32>
    %9 = vector.shape_cast %8 : vector<1x32x96xf32> to vector<32x96xf32>
    %10 = arith.truncf %9 : vector<32x96xf32> to vector<32x96xbf16>
    %c1_8 = arith.constant 1 : index
    %c0_9 = arith.constant 0 : index
    %c0_10 = arith.constant 0 : index
    %11 = vector.load %arg2[%c1_8, %c0_9, %c0_10] : memref<5x96x512xbf16, #tpu.memory_space<vmem>>, vector<1x96x512xbf16>
    %12 = vector.shape_cast %11 : vector<1x96x512xbf16> to vector<96x512xbf16>
    %cst_11 = arith.constant dense<0.000000e+00> : vector<32x512xf32>
    %13 = tpu.matmul %10, %12, %cst_11 {dimension_numbers = #tpu.dot_dimension_numbers<[1], [0], [0], [1], [0, 0, 1, 1], [], []>} : vector<32x96xbf16>, vector<96x512xbf16>, vector<32x512xf32> -> vector<32x512xf32>
    %14 = arith.addf %7, %13 : vector<32x512xf32>
    %c0_12 = arith.constant 0 : index
    %c2 = arith.constant 2 : index
    %c0_13 = arith.constant 0 : index
    %15 = vector.load %arg1[%c0_12, %c2, %c0_13] : memref<1x36x96xf32, #tpu.memory_space<vmem>>, vector<1x32x96xf32>
    %16 = vector.shape_cast %15 : vector<1x32x96xf32> to vector<32x96xf32>
    %17 = arith.truncf %16 : vector<32x96xf32> to vector<32x96xbf16>
    %c2_14 = arith.constant 2 : index
    %c0_15 = arith.constant 0 : index
    %c0_16 = arith.constant 0 : index
    %18 = vector.load %arg2[%c2_14, %c0_15, %c0_16] : memref<5x96x512xbf16, #tpu.memory_space<vmem>>, vector<1x96x512xbf16>
    %19 = vector.shape_cast %18 : vector<1x96x512xbf16> to vector<96x512xbf16>
    %cst_17 = arith.constant dense<0.000000e+00> : vector<32x512xf32>
    %20 = tpu.matmul %17, %19, %cst_17 {dimension_numbers = #tpu.dot_dimension_numbers<[1], [0], [0], [1], [0, 0, 1, 1], [], []>} : vector<32x96xbf16>, vector<96x512xbf16>, vector<32x512xf32> -> vector<32x512xf32>
    %21 = arith.addf %14, %20 : vector<32x512xf32>
    %c0_18 = arith.constant 0 : index
    %c3 = arith.constant 3 : index
    %c0_19 = arith.constant 0 : index
    %22 = vector.load %arg1[%c0_18, %c3, %c0_19] : memref<1x36x96xf32, #tpu.memory_space<vmem>>, vector<1x32x96xf32>
    %23 = vector.shape_cast %22 : vector<1x32x96xf32> to vector<32x96xf32>
    %24 = arith.truncf %23 : vector<32x96xf32> to vector<32x96xbf16>
    %c3_20 = arith.constant 3 : index
    %c0_21 = arith.constant 0 : index
    %c0_22 = arith.constant 0 : index
    %25 = vector.load %arg2[%c3_20, %c0_21, %c0_22] : memref<5x96x512xbf16, #tpu.memory_space<vmem>>, vector<1x96x512xbf16>
    %26 = vector.shape_cast %25 : vector<1x96x512xbf16> to vector<96x512xbf16>
    %cst_23 = arith.constant dense<0.000000e+00> : vector<32x512xf32>
    %27 = tpu.matmul %24, %26, %cst_23 {dimension_numbers = #tpu.dot_dimension_numbers<[1], [0], [0], [1], [0, 0, 1, 1], [], []>} : vector<32x96xbf16>, vector<96x512xbf16>, vector<32x512xf32> -> vector<32x512xf32>
    %28 = arith.addf %21, %27 : vector<32x512xf32>
    %c0_24 = arith.constant 0 : index
    %c4 = arith.constant 4 : index
    %c0_25 = arith.constant 0 : index
    %29 = vector.load %arg1[%c0_24, %c4, %c0_25] : memref<1x36x96xf32, #tpu.memory_space<vmem>>, vector<1x32x96xf32>
    %30 = vector.shape_cast %29 : vector<1x32x96xf32> to vector<32x96xf32>
    %31 = arith.truncf %30 : vector<32x96xf32> to vector<32x96xbf16>
    %c4_26 = arith.constant 4 : index
    %c0_27 = arith.constant 0 : index
    %c0_28 = arith.constant 0 : index
    %32 = vector.load %arg2[%c4_26, %c0_27, %c0_28] : memref<5x96x512xbf16, #tpu.memory_space<vmem>>, vector<1x96x512xbf16>
    %33 = vector.shape_cast %32 : vector<1x96x512xbf16> to vector<96x512xbf16>
    %cst_29 = arith.constant dense<0.000000e+00> : vector<32x512xf32>
    %34 = tpu.matmul %31, %33, %cst_29 {dimension_numbers = #tpu.dot_dimension_numbers<[1], [0], [0], [1], [0, 0, 1, 1], [], []>} : vector<32x96xbf16>, vector<96x512xbf16>, vector<32x512xf32> -> vector<32x512xf32>
    %35 = arith.addf %28, %34 : vector<32x512xf32>
    %c0_30 = arith.constant 0 : index
    %c0_31 = arith.constant 0 : index
    %36 = vector.load %arg3[%c0_30, %c0_31] : memref<1x512xf32, #tpu.memory_space<vmem>>, vector<1x512xf32>
    %37 = vector.broadcast %36 : vector<1x512xf32> to vector<32x512xf32>
    %38 = arith.addf %35, %37 : vector<32x512xf32>
    %cst_32 = arith.constant 0.000000e+00 : f32
    %39 = vector.broadcast %cst_32 : f32 to vector<32x512xf32>
    %40 = arith.maximumf %38, %39 : vector<32x512xf32>
    %41 = vector.extract_strided_slice %40 {offsets = [0, 0], sizes = [32, 256], strides = [1, 1]} : vector<32x512xf32> to vector<32x256xf32>
    %42 = vector.extract_strided_slice %40 {offsets = [0, 256], sizes = [32, 256], strides = [1, 1]} : vector<32x512xf32> to vector<32x256xf32>
    %43 = arith.maximumf %41, %42 : vector<32x256xf32>
    %44 = tpu.iota {dimensions = array<i32: 0>} : vector<16x32xi32>
    %45 = tpu.iota {dimensions = array<i32: 1>} : vector<16x32xi32>
    %c2_i32 = arith.constant 2 : i32
    %46 = vector.broadcast %c2_i32 : i32 to vector<16x32xi32>
    %47 = arith.muli %46, %44 : vector<16x32xi32>
    %48 = arith.cmpi eq, %45, %47 : vector<16x32xi32>
    %49 = arith.extui %48 : vector<16x32xi1> to vector<16x32xi32>
    %50 = arith.sitofp %49 : vector<16x32xi32> to vector<16x32xf32>
    %c2_i32_33 = arith.constant 2 : i32
    %51 = vector.broadcast %c2_i32_33 : i32 to vector<16x32xi32>
    %52 = arith.muli %51, %44 : vector<16x32xi32>
    %c1_i32 = arith.constant 1 : i32
    %53 = vector.broadcast %c1_i32 : i32 to vector<16x32xi32>
    %54 = arith.addi %52, %53 : vector<16x32xi32>
    %55 = arith.cmpi eq, %45, %54 : vector<16x32xi32>
    %56 = arith.extui %55 : vector<16x32xi1> to vector<16x32xi32>
    %57 = arith.sitofp %56 : vector<16x32xi32> to vector<16x32xf32>
    %cst_34 = arith.constant dense<0.000000e+00> : vector<16x256xf32>
    %58 = tpu.matmul %50, %43, %cst_34 {dimension_numbers = #tpu.dot_dimension_numbers<[1], [0], [0], [1], [0, 0, 1, 1], [], []>} : vector<16x32xf32>, vector<32x256xf32>, vector<16x256xf32> -> vector<16x256xf32>
    %cst_35 = arith.constant dense<0.000000e+00> : vector<16x256xf32>
    %59 = tpu.matmul %57, %43, %cst_35 {dimension_numbers = #tpu.dot_dimension_numbers<[1], [0], [0], [1], [0, 0, 1, 1], [], []>} : vector<16x32xf32>, vector<32x256xf32>, vector<16x256xf32> -> vector<16x256xf32>
    %60 = arith.maximumf %58, %59 : vector<16x256xf32>
    %cst_36 = arith.constant 0.000000e+00 : f32
    %61 = vector.broadcast %cst_36 : f32 to vector<1x20x256xf32>
    %c0_37 = arith.constant 0 : index
    %c0_38 = arith.constant 0 : index
    %c0_39 = arith.constant 0 : index
    %62 = vector.load %arg4[%c0_37, %c0_38, %c0_39] : memref<1x20x256xf32, #tpu.memory_space<vmem>>, vector<1x20x256xf32>
    tpu.vector_store %arg4[%c0_37, %c0_38, %c0_39], %61 {strides = array<i32>} : memref<1x20x256xf32, #tpu.memory_space<vmem>>, vector<1x20x256xf32>,
    %c0_40 = arith.constant 0 : index
    %c2_41 = arith.constant 2 : index
    %c0_42 = arith.constant 0 : index
    %63 = vector.load %arg4[%c0_40, %c2_41, %c0_42] : memref<1x20x256xf32, #tpu.memory_space<vmem>>, vector<1x16x256xf32>
    %64 = vector.shape_cast %63 : vector<1x16x256xf32> to vector<16x256xf32>
    %65 = vector.shape_cast %60 : vector<16x256xf32> to vector<1x16x256xf32>
    tpu.vector_store %arg4[%c0_40, %c2_41, %c0_42], %65 {strides = array<i32>} : memref<1x20x256xf32, #tpu.memory_space<vmem>>, vector<1x16x256xf32>,
    return
  }
  func.func @transform_0(%arg0: i32) -> (i32, i32, i32) {
    %c0_i32 = arith.constant 0 : i32
    %c0_i32_0 = arith.constant 0 : i32
    %c0_i32_1 = arith.constant 0 : i32
    return %arg0, %c0_i32, %c0_i32_0 : i32, i32, i32
  }
  func.func @transform_1(%arg0: i32) -> (i32, i32, i32) {
    %c0_i32 = arith.constant 0 : i32
    %c0_i32_0 = arith.constant 0 : i32
    %c0_i32_1 = arith.constant 0 : i32
    %c0_i32_2 = arith.constant 0 : i32
    return %c0_i32, %c0_i32_0, %c0_i32_1 : i32, i32, i32
  }
  func.func @transform_2(%arg0: i32) -> (i32, i32) {
    %c0_i32 = arith.constant 0 : i32
    %c0_i32_0 = arith.constant 0 : i32
    %c0_i32_1 = arith.constant 0 : i32
    return %c0_i32, %c0_i32_0 : i32, i32
  }
  func.func @transform_3(%arg0: i32) -> (i32, i32, i32) {
    %c0_i32 = arith.constant 0 : i32
    %c0_i32_0 = arith.constant 0 : i32
    %c0_i32_1 = arith.constant 0 : i32
    return %arg0, %c0_i32, %c0_i32_0 : i32, i32, i32
  }
}

module attributes {stable_mosaic.version = 11 : i64} {
  func.func @_conv_relu_pool_kernel(%arg0: i32, %arg1: memref<1x12x256xf32, #tpu.memory_space<vmem>>, %arg2: memref<5x256x512xbf16, #tpu.memory_space<vmem>>, %arg3: memref<1x512xf32, #tpu.memory_space<vmem>>, %arg4: memref<1x4x256xf32, #tpu.memory_space<vmem>>) attributes {dimension_semantics = [#tpu.dimension_semantics<parallel>], iteration_bounds = array<i64: 2>, scalar_prefetch = 0 : i64, scratch_operands = 0 : i64, tpu.core_type = #tpu.core_type<tc>, window_params = [{transform_indices = @transform_0, window_bounds = array<i64: 1, 12, 256>}, {pipeline_mode = #tpu.pipeline_mode<synchronous>, transform_indices = @transform_1, window_bounds = array<i64: 5, 256, 512>}, {pipeline_mode = #tpu.pipeline_mode<synchronous>, transform_indices = @transform_2, window_bounds = array<i64: 1, 512>}, {transform_indices = @transform_3, window_bounds = array<i64: 1, 4, 256>}]} {
    %cst = arith.constant 0.000000e+00 : f32
    %0 = vector.broadcast %cst : f32 to vector<8x512xf32>
    %c0 = arith.constant 0 : index
    %c0_0 = arith.constant 0 : index
    %c0_1 = arith.constant 0 : index
    %1 = vector.load %arg1[%c0, %c0_0, %c0_1] : memref<1x12x256xf32, #tpu.memory_space<vmem>>, vector<1x8x256xf32>
    %2 = vector.shape_cast %1 : vector<1x8x256xf32> to vector<8x256xf32>
    %3 = arith.truncf %2 : vector<8x256xf32> to vector<8x256xbf16>
    %c0_2 = arith.constant 0 : index
    %c0_3 = arith.constant 0 : index
    %c0_4 = arith.constant 0 : index
    %4 = vector.load %arg2[%c0_2, %c0_3, %c0_4] : memref<5x256x512xbf16, #tpu.memory_space<vmem>>, vector<1x256x512xbf16>
    %5 = vector.shape_cast %4 : vector<1x256x512xbf16> to vector<256x512xbf16>
    %cst_5 = arith.constant dense<0.000000e+00> : vector<8x512xf32>
    %6 = tpu.matmul %3, %5, %cst_5 {dimension_numbers = #tpu.dot_dimension_numbers<[1], [0], [0], [1], [0, 0, 1, 1], [], []>} : vector<8x256xbf16>, vector<256x512xbf16>, vector<8x512xf32> -> vector<8x512xf32>
    %7 = arith.addf %0, %6 : vector<8x512xf32>
    %c0_6 = arith.constant 0 : index
    %c1 = arith.constant 1 : index
    %c0_7 = arith.constant 0 : index
    %8 = vector.load %arg1[%c0_6, %c1, %c0_7] : memref<1x12x256xf32, #tpu.memory_space<vmem>>, vector<1x8x256xf32>
    %9 = vector.shape_cast %8 : vector<1x8x256xf32> to vector<8x256xf32>
    %10 = arith.truncf %9 : vector<8x256xf32> to vector<8x256xbf16>
    %c1_8 = arith.constant 1 : index
    %c0_9 = arith.constant 0 : index
    %c0_10 = arith.constant 0 : index
    %11 = vector.load %arg2[%c1_8, %c0_9, %c0_10] : memref<5x256x512xbf16, #tpu.memory_space<vmem>>, vector<1x256x512xbf16>
    %12 = vector.shape_cast %11 : vector<1x256x512xbf16> to vector<256x512xbf16>
    %cst_11 = arith.constant dense<0.000000e+00> : vector<8x512xf32>
    %13 = tpu.matmul %10, %12, %cst_11 {dimension_numbers = #tpu.dot_dimension_numbers<[1], [0], [0], [1], [0, 0, 1, 1], [], []>} : vector<8x256xbf16>, vector<256x512xbf16>, vector<8x512xf32> -> vector<8x512xf32>
    %14 = arith.addf %7, %13 : vector<8x512xf32>
    %c0_12 = arith.constant 0 : index
    %c2 = arith.constant 2 : index
    %c0_13 = arith.constant 0 : index
    %15 = vector.load %arg1[%c0_12, %c2, %c0_13] : memref<1x12x256xf32, #tpu.memory_space<vmem>>, vector<1x8x256xf32>
    %16 = vector.shape_cast %15 : vector<1x8x256xf32> to vector<8x256xf32>
    %17 = arith.truncf %16 : vector<8x256xf32> to vector<8x256xbf16>
    %c2_14 = arith.constant 2 : index
    %c0_15 = arith.constant 0 : index
    %c0_16 = arith.constant 0 : index
    %18 = vector.load %arg2[%c2_14, %c0_15, %c0_16] : memref<5x256x512xbf16, #tpu.memory_space<vmem>>, vector<1x256x512xbf16>
    %19 = vector.shape_cast %18 : vector<1x256x512xbf16> to vector<256x512xbf16>
    %cst_17 = arith.constant dense<0.000000e+00> : vector<8x512xf32>
    %20 = tpu.matmul %17, %19, %cst_17 {dimension_numbers = #tpu.dot_dimension_numbers<[1], [0], [0], [1], [0, 0, 1, 1], [], []>} : vector<8x256xbf16>, vector<256x512xbf16>, vector<8x512xf32> -> vector<8x512xf32>
    %21 = arith.addf %14, %20 : vector<8x512xf32>
    %c0_18 = arith.constant 0 : index
    %c3 = arith.constant 3 : index
    %c0_19 = arith.constant 0 : index
    %22 = vector.load %arg1[%c0_18, %c3, %c0_19] : memref<1x12x256xf32, #tpu.memory_space<vmem>>, vector<1x8x256xf32>
    %23 = vector.shape_cast %22 : vector<1x8x256xf32> to vector<8x256xf32>
    %24 = arith.truncf %23 : vector<8x256xf32> to vector<8x256xbf16>
    %c3_20 = arith.constant 3 : index
    %c0_21 = arith.constant 0 : index
    %c0_22 = arith.constant 0 : index
    %25 = vector.load %arg2[%c3_20, %c0_21, %c0_22] : memref<5x256x512xbf16, #tpu.memory_space<vmem>>, vector<1x256x512xbf16>
    %26 = vector.shape_cast %25 : vector<1x256x512xbf16> to vector<256x512xbf16>
    %cst_23 = arith.constant dense<0.000000e+00> : vector<8x512xf32>
    %27 = tpu.matmul %24, %26, %cst_23 {dimension_numbers = #tpu.dot_dimension_numbers<[1], [0], [0], [1], [0, 0, 1, 1], [], []>} : vector<8x256xbf16>, vector<256x512xbf16>, vector<8x512xf32> -> vector<8x512xf32>
    %28 = arith.addf %21, %27 : vector<8x512xf32>
    %c0_24 = arith.constant 0 : index
    %c4 = arith.constant 4 : index
    %c0_25 = arith.constant 0 : index
    %29 = vector.load %arg1[%c0_24, %c4, %c0_25] : memref<1x12x256xf32, #tpu.memory_space<vmem>>, vector<1x8x256xf32>
    %30 = vector.shape_cast %29 : vector<1x8x256xf32> to vector<8x256xf32>
    %31 = arith.truncf %30 : vector<8x256xf32> to vector<8x256xbf16>
    %c4_26 = arith.constant 4 : index
    %c0_27 = arith.constant 0 : index
    %c0_28 = arith.constant 0 : index
    %32 = vector.load %arg2[%c4_26, %c0_27, %c0_28] : memref<5x256x512xbf16, #tpu.memory_space<vmem>>, vector<1x256x512xbf16>
    %33 = vector.shape_cast %32 : vector<1x256x512xbf16> to vector<256x512xbf16>
    %cst_29 = arith.constant dense<0.000000e+00> : vector<8x512xf32>
    %34 = tpu.matmul %31, %33, %cst_29 {dimension_numbers = #tpu.dot_dimension_numbers<[1], [0], [0], [1], [0, 0, 1, 1], [], []>} : vector<8x256xbf16>, vector<256x512xbf16>, vector<8x512xf32> -> vector<8x512xf32>
    %35 = arith.addf %28, %34 : vector<8x512xf32>
    %c0_30 = arith.constant 0 : index
    %c0_31 = arith.constant 0 : index
    %36 = vector.load %arg3[%c0_30, %c0_31] : memref<1x512xf32, #tpu.memory_space<vmem>>, vector<1x512xf32>
    %37 = vector.broadcast %36 : vector<1x512xf32> to vector<8x512xf32>
    %38 = arith.addf %35, %37 : vector<8x512xf32>
    %cst_32 = arith.constant 0.000000e+00 : f32
    %39 = vector.broadcast %cst_32 : f32 to vector<8x512xf32>
    %40 = arith.maximumf %38, %39 : vector<8x512xf32>
    %41 = vector.extract_strided_slice %40 {offsets = [0, 0], sizes = [8, 256], strides = [1, 1]} : vector<8x512xf32> to vector<8x256xf32>
    %42 = vector.extract_strided_slice %40 {offsets = [0, 256], sizes = [8, 256], strides = [1, 1]} : vector<8x512xf32> to vector<8x256xf32>
    %43 = arith.maximumf %41, %42 : vector<8x256xf32>
    %44 = tpu.iota {dimensions = array<i32: 0>} : vector<4x8xi32>
    %45 = tpu.iota {dimensions = array<i32: 1>} : vector<4x8xi32>
    %c2_i32 = arith.constant 2 : i32
    %46 = vector.broadcast %c2_i32 : i32 to vector<4x8xi32>
    %47 = arith.muli %46, %44 : vector<4x8xi32>
    %48 = arith.cmpi eq, %45, %47 : vector<4x8xi32>
    %49 = arith.extui %48 : vector<4x8xi1> to vector<4x8xi32>
    %50 = arith.sitofp %49 : vector<4x8xi32> to vector<4x8xf32>
    %c2_i32_33 = arith.constant 2 : i32
    %51 = vector.broadcast %c2_i32_33 : i32 to vector<4x8xi32>
    %52 = arith.muli %51, %44 : vector<4x8xi32>
    %c1_i32 = arith.constant 1 : i32
    %53 = vector.broadcast %c1_i32 : i32 to vector<4x8xi32>
    %54 = arith.addi %52, %53 : vector<4x8xi32>
    %55 = arith.cmpi eq, %45, %54 : vector<4x8xi32>
    %56 = arith.extui %55 : vector<4x8xi1> to vector<4x8xi32>
    %57 = arith.sitofp %56 : vector<4x8xi32> to vector<4x8xf32>
    %cst_34 = arith.constant dense<0.000000e+00> : vector<4x256xf32>
    %58 = tpu.matmul %50, %43, %cst_34 {dimension_numbers = #tpu.dot_dimension_numbers<[1], [0], [0], [1], [0, 0, 1, 1], [], []>} : vector<4x8xf32>, vector<8x256xf32>, vector<4x256xf32> -> vector<4x256xf32>
    %cst_35 = arith.constant dense<0.000000e+00> : vector<4x256xf32>
    %59 = tpu.matmul %57, %43, %cst_35 {dimension_numbers = #tpu.dot_dimension_numbers<[1], [0], [0], [1], [0, 0, 1, 1], [], []>} : vector<4x8xf32>, vector<8x256xf32>, vector<4x256xf32> -> vector<4x256xf32>
    %60 = arith.maximumf %58, %59 : vector<4x256xf32>
    %c0_36 = arith.constant 0 : index
    %c0_37 = arith.constant 0 : index
    %c0_38 = arith.constant 0 : index
    %61 = vector.load %arg4[%c0_36, %c0_37, %c0_38] : memref<1x4x256xf32, #tpu.memory_space<vmem>>, vector<1x4x256xf32>
    %62 = vector.shape_cast %61 : vector<1x4x256xf32> to vector<4x256xf32>
    %63 = vector.shape_cast %60 : vector<4x256xf32> to vector<1x4x256xf32>
    tpu.vector_store %arg4[%c0_36, %c0_37, %c0_38], %63 {strides = array<i32>} : memref<1x4x256xf32, #tpu.memory_space<vmem>>, vector<1x4x256xf32>,
    return
  }
  func.func @transform_0(%arg0: i32) -> (i32, i32, i32) {
    %c0_i32 = arith.constant 0 : i32
    %c0_i32_0 = arith.constant 0 : i32
    %c0_i32_1 = arith.constant 0 : i32
    return %arg0, %c0_i32, %c0_i32_0 : i32, i32, i32
  }
  func.func @transform_1(%arg0: i32) -> (i32, i32, i32) {
    %c0_i32 = arith.constant 0 : i32
    %c0_i32_0 = arith.constant 0 : i32
    %c0_i32_1 = arith.constant 0 : i32
    %c0_i32_2 = arith.constant 0 : i32
    return %c0_i32, %c0_i32_0, %c0_i32_1 : i32, i32, i32
  }
  func.func @transform_2(%arg0: i32) -> (i32, i32) {
    %c0_i32 = arith.constant 0 : i32
    %c0_i32_0 = arith.constant 0 : i32
    %c0_i32_1 = arith.constant 0 : i32
    return %c0_i32, %c0_i32_0 : i32, i32
  }
  func.func @transform_3(%arg0: i32) -> (i32, i32, i32) {
    %c0_i32 = arith.constant 0 : i32
    %c0_i32_0 = arith.constant 0 : i32
    %c0_i32_1 = arith.constant 0 : i32
    return %arg0, %c0_i32, %c0_i32_0 : i32, i32, i32
  }
}

module attributes {stable_mosaic.version = 11 : i64} {
  func.func @_fc_stack_kernel(%arg0: i32, %arg1: memref<2x1024xf32, #tpu.memory_space<vmem>>, %arg2: memref<1024x120xbf16, #tpu.memory_space<vmem>>, %arg3: memref<1x120xf32, #tpu.memory_space<vmem>>, %arg4: memref<120x84xbf16, #tpu.memory_space<vmem>>, %arg5: memref<1x84xf32, #tpu.memory_space<vmem>>, %arg6: memref<84x10xbf16, #tpu.memory_space<vmem>>, %arg7: memref<1x10xf32, #tpu.memory_space<vmem>>, %arg8: memref<2x10xf32, #tpu.memory_space<vmem>>) attributes {dimension_semantics = [#tpu.dimension_semantics<arbitrary>], iteration_bounds = array<i64: 1>, scalar_prefetch = 0 : i64, scratch_operands = 0 : i64, tpu.core_type = #tpu.core_type<tc>, window_params = [{pipeline_mode = #tpu.pipeline_mode<synchronous>, transform_indices = @transform_0, window_bounds = array<i64: 2, 1024>}, {pipeline_mode = #tpu.pipeline_mode<synchronous>, transform_indices = @transform_1, window_bounds = array<i64: 1024, 120>}, {pipeline_mode = #tpu.pipeline_mode<synchronous>, transform_indices = @transform_2, window_bounds = array<i64: 1, 120>}, {pipeline_mode = #tpu.pipeline_mode<synchronous>, transform_indices = @transform_3, window_bounds = array<i64: 120, 84>}, {pipeline_mode = #tpu.pipeline_mode<synchronous>, transform_indices = @transform_4, window_bounds = array<i64: 1, 84>}, {pipeline_mode = #tpu.pipeline_mode<synchronous>, transform_indices = @transform_5, window_bounds = array<i64: 84, 10>}, {pipeline_mode = #tpu.pipeline_mode<synchronous>, transform_indices = @transform_6, window_bounds = array<i64: 1, 10>}, {pipeline_mode = #tpu.pipeline_mode<synchronous>, transform_indices = @transform_7, window_bounds = array<i64: 2, 10>}]} {
    %c0 = arith.constant 0 : index
    %c0_0 = arith.constant 0 : index
    %0 = vector.load %arg1[%c0, %c0_0] : memref<2x1024xf32, #tpu.memory_space<vmem>>, vector<2x1024xf32>
    %1 = arith.truncf %0 : vector<2x1024xf32> to vector<2x1024xbf16>
    %c0_1 = arith.constant 0 : index
    %c0_2 = arith.constant 0 : index
    %2 = vector.load %arg2[%c0_1, %c0_2] : memref<1024x120xbf16, #tpu.memory_space<vmem>>, vector<1024x120xbf16>
    %cst = arith.constant dense<0.000000e+00> : vector<2x120xf32>
    %3 = tpu.matmul %1, %2, %cst {dimension_numbers = #tpu.dot_dimension_numbers<[1], [0], [0], [1], [0, 0, 1, 1], [], []>} : vector<2x1024xbf16>, vector<1024x120xbf16>, vector<2x120xf32> -> vector<2x120xf32>
    %c0_3 = arith.constant 0 : index
    %c0_4 = arith.constant 0 : index
    %4 = vector.load %arg3[%c0_3, %c0_4] : memref<1x120xf32, #tpu.memory_space<vmem>>, vector<1x120xf32>
    %5 = vector.broadcast %4 : vector<1x120xf32> to vector<2x120xf32>
    %6 = arith.addf %3, %5 : vector<2x120xf32>
    %cst_5 = arith.constant 0.000000e+00 : f32
    %7 = vector.broadcast %cst_5 : f32 to vector<2x120xf32>
    %8 = arith.maximumf %6, %7 : vector<2x120xf32>
    %9 = arith.truncf %8 : vector<2x120xf32> to vector<2x120xbf16>
    %c0_6 = arith.constant 0 : index
    %c0_7 = arith.constant 0 : index
    %10 = vector.load %arg4[%c0_6, %c0_7] : memref<120x84xbf16, #tpu.memory_space<vmem>>, vector<120x84xbf16>
    %cst_8 = arith.constant dense<0.000000e+00> : vector<2x84xf32>
    %11 = tpu.matmul %9, %10, %cst_8 {dimension_numbers = #tpu.dot_dimension_numbers<[1], [0], [0], [1], [0, 0, 1, 1], [], []>} : vector<2x120xbf16>, vector<120x84xbf16>, vector<2x84xf32> -> vector<2x84xf32>
    %c0_9 = arith.constant 0 : index
    %c0_10 = arith.constant 0 : index
    %12 = vector.load %arg5[%c0_9, %c0_10] : memref<1x84xf32, #tpu.memory_space<vmem>>, vector<1x84xf32>
    %13 = vector.broadcast %12 : vector<1x84xf32> to vector<2x84xf32>
    %14 = arith.addf %11, %13 : vector<2x84xf32>
    %cst_11 = arith.constant 0.000000e+00 : f32
    %15 = vector.broadcast %cst_11 : f32 to vector<2x84xf32>
    %16 = arith.maximumf %14, %15 : vector<2x84xf32>
    %17 = arith.truncf %16 : vector<2x84xf32> to vector<2x84xbf16>
    %c0_12 = arith.constant 0 : index
    %c0_13 = arith.constant 0 : index
    %18 = vector.load %arg6[%c0_12, %c0_13] : memref<84x10xbf16, #tpu.memory_space<vmem>>, vector<84x10xbf16>
    %cst_14 = arith.constant dense<0.000000e+00> : vector<2x10xf32>
    %19 = tpu.matmul %17, %18, %cst_14 {dimension_numbers = #tpu.dot_dimension_numbers<[1], [0], [0], [1], [0, 0, 1, 1], [], []>} : vector<2x84xbf16>, vector<84x10xbf16>, vector<2x10xf32> -> vector<2x10xf32>
    %c0_15 = arith.constant 0 : index
    %c0_16 = arith.constant 0 : index
    %20 = vector.load %arg7[%c0_15, %c0_16] : memref<1x10xf32, #tpu.memory_space<vmem>>, vector<1x10xf32>
    %21 = vector.broadcast %20 : vector<1x10xf32> to vector<2x10xf32>
    %22 = arith.addf %19, %21 : vector<2x10xf32>
    %c0_17 = arith.constant 0 : index
    %c0_18 = arith.constant 0 : index
    %23 = vector.load %arg8[%c0_17, %c0_18] : memref<2x10xf32, #tpu.memory_space<vmem>>, vector<2x10xf32>
    tpu.vector_store %arg8[%c0_17, %c0_18], %22 {strides = array<i32>} : memref<2x10xf32, #tpu.memory_space<vmem>>, vector<2x10xf32>,
    return
  }
  func.func @transform_0(%arg0: i32) -> (i32, i32) {
    %c0_i32 = arith.constant 0 : i32
    %c0_i32_0 = arith.constant 0 : i32
    %c0_i32_1 = arith.constant 0 : i32
    return %c0_i32, %c0_i32_0 : i32, i32
  }
  func.func @transform_1(%arg0: i32) -> (i32, i32) {
    %c0_i32 = arith.constant 0 : i32
    %c0_i32_0 = arith.constant 0 : i32
    %c0_i32_1 = arith.constant 0 : i32
    return %c0_i32, %c0_i32_0 : i32, i32
  }
  func.func @transform_2(%arg0: i32) -> (i32, i32) {
    %c0_i32 = arith.constant 0 : i32
    %c0_i32_0 = arith.constant 0 : i32
    %c0_i32_1 = arith.constant 0 : i32
    return %c0_i32, %c0_i32_0 : i32, i32
  }
  func.func @transform_3(%arg0: i32) -> (i32, i32) {
    %c0_i32 = arith.constant 0 : i32
    %c0_i32_0 = arith.constant 0 : i32
    %c0_i32_1 = arith.constant 0 : i32
    return %c0_i32, %c0_i32_0 : i32, i32
  }
  func.func @transform_4(%arg0: i32) -> (i32, i32) {
    %c0_i32 = arith.constant 0 : i32
    %c0_i32_0 = arith.constant 0 : i32
    %c0_i32_1 = arith.constant 0 : i32
    return %c0_i32, %c0_i32_0 : i32, i32
  }
  func.func @transform_5(%arg0: i32) -> (i32, i32) {
    %c0_i32 = arith.constant 0 : i32
    %c0_i32_0 = arith.constant 0 : i32
    %c0_i32_1 = arith.constant 0 : i32
    return %c0_i32, %c0_i32_0 : i32, i32
  }
  func.func @transform_6(%arg0: i32) -> (i32, i32) {
    %c0_i32 = arith.constant 0 : i32
    %c0_i32_0 = arith.constant 0 : i32
    %c0_i32_1 = arith.constant 0 : i32
    return %c0_i32, %c0_i32_0 : i32, i32
  }
  func.func @transform_7(%arg0: i32) -> (i32, i32) {
    %c0_i32 = arith.constant 0 : i32
    %c0_i32_0 = arith.constant 0 : i32
    %c0_i32_1 = arith.constant 0 : i32
    return %c0_i32, %c0_i32_0 : i32, i32
  }
}

</mosaic_0001>

<llo_original>
// kernel: cnn_forward.4
$region0: #{cnn_forward.4}
  #allocation0 [shape = 'u32[]', space=smem, size = 0x4, offset = 0x4, fixed_abs, tag = 'smem constant byte address 0x4 - core index']
  #allocation1 [shape = 'u32[72,128]{1,0:T(1,128)}', space=vmem, size = 0x9000, scoped, tag = 'internal scratch']
  %s0 = inlined_call_operand.vmem [shape: f32[2,36,96], index: 0, kind: input, shape index: {}]
  %s1 = inlined_call_operand.hbm [shape: bf16[5,96,512], index: 1, kind: input, shape index: {}]
  %s2 = inlined_call_operand.hbm [shape: f32[1,512], index: 2, kind: input, shape index: {}]
  %s3 = inlined_call_operand.vmem [shape: f32[2,20,256], index: 3, kind: output, shape index: {}]
  %s4 = sld [smem:[#allocation0]]
  $region53: #{cnn_forward.4} parent=0
    _
  %s6 = ssub.s32 1, %s4
  %s7 = scalar_select 0, %s6, %s4
  $region1: #{cnn_forward.4} parent=0
    #allocation2 [shape = 'u8[491520]{0}', space=vmem, size = 0x78000, scoped, tag = 'input window, operand 1, single buffered']
    #allocation3 [shape = 's32[2]{0}', space=sflag, size = 0x8, scoped, tag = 'scoped memory for cnn_forward.4']
    #allocation4 [shape = 'u8[2048]{0}', space=vmem, size = 0x800, scoped, tag = 'input window, operand 2, single buffered']
    #allocation5 [shape = 's32[1]{0}', space=sflag, size = 0x4, scoped, tag = 'scoped memory for cnn_forward.4']
    %8 = vsyncpa [#allocation3], 0
    %9 = vsyncpa [#allocation5], 0
    loop: start=0, step=1, limit=4
    $region2: #{cnn_forward.4} parent=1 // loop_pre_header
      _
    $region3: #{cnn_forward.4} parent=1 // loop_header
      %s11 = sphi 0, %s15
      %p12 = scmp.ge.s32.totalorder %s11, 4
      %s21 = sphi 0, %s23
      %s24 = sphi 0, %s21
      %s25 = sphi 0, %s24
      %s41 = sphi 0, %s25
      %s45 = sphi 0, %s45
      %s47 = sphi 0, %s45
      %s48 = sphi 0, %s47
      %s62 = sphi 0, %s48
      %s66 = sphi 0, %s66
      %s68 = sphi 0, %s66
      %s69 = sphi 0, %s68
      %s83 = sphi 0, %s69
      %s89 = sphi 0, %s91
      %s92 = sphi 0, %s89
      %s93 = sphi 0, %s92
      %s109 = sphi 0, %s93
    $region4: #{cnn_forward.4} parent=1 // loop_header_branch
      %14 = sbr.rel (%p12) target = $region8
    $region5: #{cnn_forward.4} parent=1 // loop_body
      %s16 = ssub.s32 %s11, 1
      %s17 = ssub.s32 %s11, 2
      %s18 = sadd.s32 %s11, 1
      %s19 = ssub.s32 %s11, %s18
      %p20 = scmp.eq.s32.totalorder %s19, 0
      %s22 = sadd.s32 %s21, 1
      %s23 = scalar_select %p20, %s21, %s22
      %p26 = pneg %p20
      %p27 = scmp.eq.s32.totalorder %s11, 1
      %p28 = por %p26, %p27
      %p29 = scmp.ne.s32.totalorder %s21, %s24
      %p30 = scmp.eq.s32.totalorder %s11, 0
      %p31 = por %p29, %p30
      %p32 = scmp.ne.s32.totalorder %s21, %s24
      %p33 = scmp.eq.s32.totalorder %s16, 1
      %p34 = por %p32, %p33
      %p35 = scmp.ne.s32.totalorder %s24, %s25
      %p36 = scmp.eq.s32.totalorder %s16, 0
      %p37 = por %p35, %p36
      %p38 = scmp.ne.s32.totalorder %s24, %s25
      %p39 = scmp.eq.s32.totalorder %s17, 1
      %p40 = por %p38, %p39
      %p42 = scmp.ne.s32.totalorder %s25, %s41
      %p43 = scmp.eq.s32.totalorder %s17, 0
      %p44 = por %p42, %p43
      %s46 = sadd.s32 %s45, 1
      %p49 = scmp.eq.s32.totalorder %s11, 1
      %p50 = scmp.ne.s32.totalorder %s45, %s47
      %p51 = scmp.eq.s32.totalorder %s11, 0
      %p52 = por %p50, %p51
      %p53 = scmp.ne.s32.totalorder %s45, %s47
      %p54 = scmp.eq.s32.totalorder %s16, 1
      %p55 = por %p53, %p54
      %p56 = scmp.ne.s32.totalorder %s47, %s48
      %p57 = scmp.eq.s32.totalorder %s16, 0
      %p58 = por %p56, %p57
      %p59 = scmp.ne.s32.totalorder %s47, %s48
      %p60 = scmp.eq.s32.totalorder %s17, 1
      %p61 = por %p59, %p60
      %p63 = scmp.ne.s32.totalorder %s48, %s62
      %p64 = scmp.eq.s32.totalorder %s17, 0
      %p65 = por %p63, %p64
      %s67 = sadd.s32 %s66, 1
      %p70 = scmp.eq.s32.totalorder %s11, 1
      %p71 = scmp.ne.s32.totalorder %s66, %s68
      %p72 = scmp.eq.s32.totalorder %s11, 0
      %p73 = por %p71, %p72
      %p74 = scmp.ne.s32.totalorder %s66, %s68
      %p75 = scmp.eq.s32.totalorder %s16, 1
      %p76 = por %p74, %p75
      %p77 = scmp.ne.s32.totalorder %s68, %s69
      %p78 = scmp.eq.s32.totalorder %s16, 0
      %p79 = por %p77, %p78
      %p80 = scmp.ne.s32.totalorder %s68, %s69
      %p81 = scmp.eq.s32.totalorder %s17, 1
      %p82 = por %p80, %p81
      %p84 = scmp.ne.s32.totalorder %s69, %s83
      %p85 = scmp.eq.s32.totalorder %s17, 0
      %p86 = por %p84, %p85
      %s87 = ssub.s32 %s11, %s18
      %p88 = scmp.eq.s32.totalorder %s87, 0
      %s90 = sadd.s32 %s89, 1
      %s91 = scalar_select %p88, %s89, %s90
      %p94 = pneg %p88
      %p95 = scmp.eq.s32.totalorder %s11, 1
      %p96 = por %p94, %p95
      %p97 = scmp.ne.s32.totalorder %s89, %s92
      %p98 = scmp.eq.s32.totalorder %s11, 0
      %p99 = por %p97, %p98
      %p100 = scmp.ne.s32.totalorder %s89, %s92
      %p101 = scmp.eq.s32.totalorder %s16, 1
      %p102 = por %p100, %p101
      %p103 = scmp.ne.s32.totalorder %s92, %s93
      %p104 = scmp.eq.s32.totalorder %s16, 0
      %p105 = por %p103, %p104
      %p106 = scmp.ne.s32.totalorder %s92, %s93
      %p107 = scmp.eq.s32.totalorder %s17, 1
      %p108 = por %p106, %p107
      %p110 = scmp.ne.s32.totalorder %s93, %s109
      %p111 = scmp.eq.s32.totalorder %s17, 0
      %p112 = por %p110, %p111
      %p113 = scmp.le.s32.totalorder 1, %s11
      %p114 = scmp.lt.s32.totalorder %s11, 3
      %p115 = pnand %p113, %p114
      %p116 = pneg %p115
      // Predicated region
      $region9: #{cnn_forward.4} parent=5 // pred_check
        _
      $region10: #{cnn_forward.4} parent=5 // pred_check_branch
        %118 = sbr.rel (%p115) target = $region12
      $region11: #{cnn_forward.4} parent=5 // pred_region
        %s119 = ssub.s32 %s11, 1
        // Predicated region
        $region13: #{cnn_forward.4} parent=11 // pred_check
          %p120 = pneg %p58
        $region14: #{cnn_forward.4} parent=11 // pred_check_branch
          %122 = sbr.rel (%p120) target = $region16
        $region15: #{cnn_forward.4} parent=11 // pred_region
          %124 = vsyncadd [#allocation3], 0
          %s125 = sshll.u32 %s1, 4
          %s126 = int_to_ptr.hbm [resolvable:$true] %s125
          %s127 = sshll.u32 [#allocation2], 4
          %s128 = int_to_ptr.vmem [resolvable:$true] %s127
          %133 = dma.hbm_to_vmem [thread:$0]  %s126, 15360, %s128, [#allocation3], 256, 256, 16
        $region16: #{cnn_forward.4} parent=11 // pred_fallthru
          _
        // Predicated region
        $region17: #{cnn_forward.4} parent=11 // pred_check
          %p134 = pneg %p79
        $region18: #{cnn_forward.4} parent=11 // pred_check_branch
          %136 = sbr.rel (%p134) target = $region20
        $region19: #{cnn_forward.4} parent=11 // pred_region
          %138 = vsyncadd [#allocation5], 0
          %s140 = sshll.u32 %s2, 4
          %s141 = int_to_ptr.hbm [resolvable:$true] %s140
          %s142 = sshll.u32 [#allocation4], 4
          %s143 = int_to_ptr.vmem [resolvable:$true] %s142
          %145 = dma.hbm_to_vmem [thread:$0]  %s141, 64, %s143, [#allocation5]
        $region20: #{cnn_forward.4} parent=11 // pred_fallthru
          _
      $region12: #{cnn_forward.4} parent=5 // pred_fallthru
        _
      %p146 = scmp.lt.s32.totalorder %s11, 2
      // Predicated region
      $region21: #{cnn_forward.4} parent=5 // pred_check
        %p147 = pneg %p146
      $region22: #{cnn_forward.4} parent=5 // pred_check_branch
        %149 = sbr.rel (%p147) target = $region24
      $region23: #{cnn_forward.4} parent=5 // pred_region
        // Predicated region
        $region25: #{cnn_forward.4} parent=23 // pred_check
          %p150 = pneg %p31
        $region26: #{cnn_forward.4} parent=23 // pred_check_branch
          %152 = sbr.rel (%p150) target = $region28
        $region27: #{cnn_forward.4} parent=23 // pred_region
          %p153 = scmp.lt.s32.totalorder %s11, 1
          %s154 = scalar_select %p153, %s11, 1
          %s155 = smul.addr %s154, 5
          %s156 = smul.addr %s155, 8
          %s157 = scalar_lea.vmem %s0, %s156
        $region28: #{cnn_forward.4} parent=23 // pred_fallthru
          _
      $region24: #{cnn_forward.4} parent=5 // pred_fallthru
        _
      %p158 = scmp.le.s32.totalorder 1, %s11
      %p159 = scmp.lt.s32.totalorder %s11, 3
      %p160 = pnand %p158, %p159
      %p161 = pneg %p160
      // Predicated region
      $region29: #{cnn_forward.4} parent=5 // pred_check
        _
      $region30: #{cnn_forward.4} parent=5 // pred_check_branch
        %163 = sbr.rel (%p160) target = $region32
      $region31: #{cnn_forward.4} parent=5 // pred_region
        %s164 = ssub.s32 %s11, 1
        // Predicated region
        $region33: #{cnn_forward.4} parent=31 // pred_check
          %p165 = pneg %p58
        $region34: #{cnn_forward.4} parent=31 // pred_check_branch
          %167 = sbr.rel (%p165) target = $region36
        $region35: #{cnn_forward.4} parent=31 // pred_region
          %169 = dma.done [#allocation3], 15360
        $region36: #{cnn_forward.4} parent=31 // pred_fallthru
          _
        // Predicated region
        $region37: #{cnn_forward.4} parent=31 // pred_check
          %p170 = pneg %p79
        $region38: #{cnn_forward.4} parent=31 // pred_check_branch
          %172 = sbr.rel (%p170) target = $region40
        $region39: #{cnn_forward.4} parent=31 // pred_region
          %174 = dma.done [#allocation5], 64
        $region40: #{cnn_forward.4} parent=31 // pred_fallthru
          _
        %p175 = scmp.lt.s32.totalorder %s16, 1
        %s176 = scalar_select %p175, %s16, 1
        %s177 = smul.addr %s176, 5
        %s178 = smul.addr %s177, 8
        %s179 = scalar_lea.vmem %s0, %s178
        %p180 = pneg %p37
        %p181 = pneg %p34
        %p182 = pneg %p58
        %p183 = pneg %p55
        %p184 = pneg %p79
        %p185 = pneg %p76
        %p186 = pneg %p105
        %p187 = pneg %p102
        %p188 = scmp.lt.s32.totalorder %s16, 1
        %s189 = scalar_select %p188, %s16, 1
        %s190 = smul.addr %s189, 6
        %s191 = smul.addr %s190, 8
        %s192 = scalar_lea.vmem %s3, %s191
        %p193 = scmp.lt.s32.totalorder %s16, 1
        %s194 = scalar_select %p193, %s16, 1
        %s195 = smul.addr %s194, 5
        %s196 = smul.addr %s195, 8
        %s197 = scalar_lea.vmem %s0, %s196
        %p198 = scmp.lt.s32.totalorder %s16, 1
        %s199 = scalar_select %p198, %s16, 1
        %s200 = smul.addr %s199, 6
        %s201 = smul.addr %s200, 8
        %s202 = scalar_lea.vmem %s3, %s201
        %v204 = vld [vmem:[%s197] sm:$0xff]
        %v205 = vld [vmem:[%s197 + $0x8] sm:$0xff]
        %v206 = vld [vmem:[%s197 + $0x10] sm:$0xff]
        %v207 = vld [vmem:[%s197 + $0x18] sm:$0xff]
        %v208 = vpack.c.bf16 %v205, %v204
        %v209 = vpack.c.bf16 %v207, %v206
        %v210 = vld [vmem:[#allocation2] sm:$0xff]
        %v211 = vld [vmem:[#allocation2 + $0x8] sm:$0xff]
        %v212 = vld [vmem:[#allocation2 + $0x10] sm:$0xff]
        %v213 = vld [vmem:[#allocation2 + $0x18] sm:$0xff]
        %v214 = vld [vmem:[#allocation2 + $0x20] sm:$0xff]
        %v215 = vld [vmem:[#allocation2 + $0x28] sm:$0xff]
        %v216 = vld [vmem:[#allocation2 + $0x30] sm:$0xff]
        %v217 = vld [vmem:[#allocation2 + $0x38] sm:$0xff]
        %v218 = vld [vmem:[#allocation2 + $0x40] sm:$0xff]
        %v219 = vld [vmem:[#allocation2 + $0x48] sm:$0xff]
        %v220 = vld [vmem:[#allocation2 + $0x50] sm:$0xff]
        %v221 = vld [vmem:[#allocation2 + $0x58] sm:$0xff]
        %v222 = vld [vmem:[#allocation2 + $0x60] sm:$0xff]
        %v223 = vld [vmem:[#allocation2 + $0x68] sm:$0xff]
        %v224 = vld [vmem:[#allocation2 + $0x70] sm:$0xff]
        %v225 = vld [vmem:[#allocation2 + $0x78] sm:$0xff]
        %v226 = vld [vmem:[#allocation2 + $0x80] sm:$0xff]
        %v227 = vld [vmem:[#allocation2 + $0x88] sm:$0xff]
        %v228 = vld [vmem:[#allocation2 + $0x90] sm:$0xff]
        %v229 = vld [vmem:[#allocation2 + $0x98] sm:$0xff]
        %v230 = vld [vmem:[#allocation2 + $0xa0] sm:$0xff]
        %v231 = vld [vmem:[#allocation2 + $0xa8] sm:$0xff]
        %v232 = vld [vmem:[#allocation2 + $0xb0] sm:$0xff]
        %v233 = vld [vmem:[#allocation2 + $0xb8] sm:$0xff]
        %v234 = vld [vmem:[%s197 + $0x1] sm:$0xff]
        %v235 = vld [vmem:[%s197 + $0x9] sm:$0xff]
        %v236 = vld [vmem:[%s197 + $0x11] sm:$0xff]
        %v237 = vld [vmem:[%s197 + $0x19] sm:$0xff]
        %v238 = vpack.c.bf16 %v235, %v234
        %v239 = vpack.c.bf16 %v237, %v236
        %s240 = scalar_lea.vmem [#allocation2], 192
        %v241 = vld [vmem:[%s240] sm:$0xff]
        %v242 = vld [vmem:[%s240 + $0x8] sm:$0xff]
        %v243 = vld [vmem:[%s240 + $0x10] sm:$0xff]
        %v244 = vld [vmem:[%s240 + $0x18] sm:$0xff]
        %v245 = vld [vmem:[%s240 + $0x20] sm:$0xff]
        %v246 = vld [vmem:[%s240 + $0x28] sm:$0xff]
        %v247 = vld [vmem:[%s240 + $0x30] sm:$0xff]
        %v248 = vld [vmem:[%s240 + $0x38] sm:$0xff]
        %v249 = vld [vmem:[%s240 + $0x40] sm:$0xff]
        %v250 = vld [vmem:[%s240 + $0x48] sm:$0xff]
        %v251 = vld [vmem:[%s240 + $0x50] sm:$0xff]
        %v252 = vld [vmem:[%s240 + $0x58] sm:$0xff]
        %v253 = vld [vmem:[%s240 + $0x60] sm:$0xff]
        %v254 = vld [vmem:[%s240 + $0x68] sm:$0xff]
        %v255 = vld [vmem:[%s240 + $0x70] sm:$0xff]
        %v256 = vld [vmem:[%s240 + $0x78] sm:$0xff]
        %v257 = vld [vmem:[%s240 + $0x80] sm:$0xff]
        %v258 = vld [vmem:[%s240 + $0x88] sm:$0xff]
        %v259 = vld [vmem:[%s240 + $0x90] sm:$0xff]
        %v260 = vld [vmem:[%s240 + $0x98] sm:$0xff]
        %v261 = vld [vmem:[%s240 + $0xa0] sm:$0xff]
        %v262 = vld [vmem:[%s240 + $0xa8] sm:$0xff]
        %v263 = vld [vmem:[%s240 + $0xb0] sm:$0xff]
        %v264 = vld [vmem:[%s240 + $0xb8] sm:$0xff]
        %v289 = vunpack.c.l.b16 %v241
        %v290 = vunpack.c.h.b16 %v241
        %v291 = vunpack.c.l.b16 %v242
        %v292 = vunpack.c.h.b16 %v242
        %v293 = vunpack.c.l.b16 %v243
        %v294 = vunpack.c.h.b16 %v243
        %v295 = vunpack.c.l.b16 %v244
        %v296 = vunpack.c.h.b16 %v244
        %v297 = vunpack.c.l.b16 %v245
        %v298 = vunpack.c.h.b16 %v245
        %v299 = vunpack.c.l.b16 %v246
        %v300 = vunpack.c.h.b16 %v246
        %v301 = vunpack.c.l.b16 %v247
        %v302 = vunpack.c.h.b16 %v247
        %v303 = vunpack.c.l.b16 %v248
        %v304 = vunpack.c.h.b16 %v248
        %v305 = vunpack.c.l.b16 %v249
        %v306 = vunpack.c.h.b16 %v249
        %v307 = vunpack.c.l.b16 %v250
        %v308 = vunpack.c.h.b16 %v250
        %v309 = vunpack.c.l.b16 %v251
        %v310 = vunpack.c.h.b16 %v251
        %v311 = vunpack.c.l.b16 %v252
        %v312 = vunpack.c.h.b16 %v252
        %v313 = vunpack.c.l.b16 %v253
        %v314 = vunpack.c.h.b16 %v253
        %v315 = vunpack.c.l.b16 %v254
        %v316 = vunpack.c.h.b16 %v254
        %v317 = vunpack.c.l.b16 %v255
        %v318 = vunpack.c.h.b16 %v255
        %v319 = vunpack.c.l.b16 %v256
        %v320 = vunpack.c.h.b16 %v256
        %v321 = vunpack.c.l.b16 %v257
        %v322 = vunpack.c.h.b16 %v257
        %v323 = vunpack.c.l.b16 %v258
        %v324 = vunpack.c.h.b16 %v258
        %v325 = vunpack.c.l.b16 %v259
        %v326 = vunpack.c.h.b16 %v259
        %v327 = vunpack.c.l.b16 %v260
        %v328 = vunpack.c.h.b16 %v260
        %v329 = vunpack.c.l.b16 %v261
        %v330 = vunpack.c.h.b16 %v261
        %v331 = vunpack.c.l.b16 %v262
        %v332 = vunpack.c.h.b16 %v262
        %v333 = vunpack.c.l.b16 %v263
        %v334 = vunpack.c.h.b16 %v263
        %v335 = vunpack.c.l.b16 %v264
        %v336 = vunpack.c.h.b16 %v264
        %v337 = vpack.c.b16 %v293, %v289
        %v338 = vpack.c.b16 %v294, %v290
        %v339 = vpack.c.b16 %v295, %v291
        %v340 = vpack.c.b16 %v296, %v292
        %v341 = vpack.c.b16 %v301, %v297
        %v342 = vpack.c.b16 %v302, %v298
        %v343 = vpack.c.b16 %v303, %v299
        %v344 = vpack.c.b16 %v304, %v300
        %v345 = vpack.c.b16 %v309, %v305
        %v346 = vpack.c.b16 %v310, %v306
        %v347 = vpack.c.b16 %v311, %v307
        %v348 = vpack.c.b16 %v312, %v308
        %v349 = vpack.c.b16 %v317, %v313
        %v350 = vpack.c.b16 %v318, %v314
        %v351 = vpack.c.b16 %v319, %v315
        %v352 = vpack.c.b16 %v320, %v316
        %v353 = vpack.c.b16 %v325, %v321
        %v354 = vpack.c.b16 %v326, %v322
        %v355 = vpack.c.b16 %v327, %v323
        %v356 = vpack.c.b16 %v328, %v324
        %v357 = vpack.c.b16 %v333, %v329
        %v358 = vpack.c.b16 %v334, %v330
        %v359 = vpack.c.b16 %v335, %v331
        %v360 = vpack.c.b16 %v336, %v332
        %vm385 = vcmask 785408
        %v387 = vsel %vm385, %v238, 0
        %v390 = vsel %vm385, %v239, 0
        %392 = vmatpush.bf16.msra.mxu0 0
        %393 = vmatpush.bf16.msra.mxu0 0
        %394 = vmatpush.bf16.msra.mxu0 %v357
        %395 = vmatpush.bf16.msra.mxu0 %v353
        %396 = vmatpush.bf16.msra.mxu0 %v349
        %397 = vmatpush.bf16.msra.mxu0 %v345
        %398 = vmatpush.bf16.msra.mxu0 %v341
        %399 = vmatpush.bf16.msra.mxu0 %v337
        %400 = vmatmul.bf16.gmra.mxu0 %v387
        %v401 = vpop.f32.mrf.mxu0
        %v402 = vadd.f32 0.0, %v401
        %v403 = vpop.f32.mrf.mxu0
        %v404 = vadd.f32 0.0, %v403
        %405 = vmatmul.bf16.gmra.mxu0 %v390
        %v406 = vpop.f32.mrf.mxu0
        %v407 = vadd.f32 0.0, %v406
        %v408 = vpop.f32.mrf.mxu0
        %v409 = vadd.f32 0.0, %v408
        %410 = vdwg.mxu0
        %411 = vmatpush.bf16.msra.mxu0 0
        %412 = vmatpush.bf16.msra.mxu0 0
        %413 = vmatpush.bf16.msra.mxu0 %v358
        %414 = vmatpush.bf16.msra.mxu0 %v354
        %415 = vmatpush.bf16.msra.mxu0 %v350
        %416 = vmatpush.bf16.msra.mxu0 %v346
        %417 = vmatpush.bf16.msra.mxu0 %v342
        %418 = vmatpush.bf16.msra.mxu0 %v338
        %419 = vmatmul.bf16.gmra.mxu0 %v387
        %v420 = vpop.f32.mrf.mxu0
        %v421 = vadd.f32 0.0, %v420
        %v422 = vpop.f32.mrf.mxu0
        %v423 = vadd.f32 0.0, %v422
        %424 = vmatmul.bf16.gmra.mxu0 %v390
        %v425 = vpop.f32.mrf.mxu0
        %v426 = vadd.f32 0.0, %v425
        %v427 = vpop.f32.mrf.mxu0
        %v428 = vadd.f32 0.0, %v427
        %429 = vdwg.mxu0
        %430 = vmatpush.bf16.msra.mxu0 0
        %431 = vmatpush.bf16.msra.mxu0 0
        %432 = vmatpush.bf16.msra.mxu0 %v359
        %433 = vmatpush.bf16.msra.mxu0 %v355
        %434 = vmatpush.bf16.msra.mxu0 %v351
        %435 = vmatpush.bf16.msra.mxu0 %v347
        %436 = vmatpush.bf16.msra.mxu0 %v343
        %437 = vmatpush.bf16.msra.mxu0 %v339
        %438 = vmatmul.bf16.gmra.mxu0 %v387
        %v439 = vpop.f32.mrf.mxu0
        %v440 = vadd.f32 0.0, %v439
        %v441 = vpop.f32.mrf.mxu0
        %v442 = vadd.f32 0.0, %v441
        %443 = vmatmul.bf16.gmra.mxu0 %v390
        %v444 = vpop.f32.mrf.mxu0
        %v445 = vadd.f32 0.0, %v444
        %v446 = vpop.f32.mrf.mxu0
        %v447 = vadd.f32 0.0, %v446
        %448 = vdwg.mxu0
        %449 = vmatpush.bf16.msra.mxu0 0
        %450 = vmatpush.bf16.msra.mxu0 0
        %451 = vmatpush.bf16.msra.mxu0 %v360
        %452 = vmatpush.bf16.msra.mxu0 %v356
        %453 = vmatpush.bf16.msra.mxu0 %v352
        %454 = vmatpush.bf16.msra.mxu0 %v348
        %455 = vmatpush.bf16.msra.mxu0 %v344
        %456 = vmatpush.bf16.msra.mxu0 %v340
        %457 = vmatmul.bf16.gmra.mxu0 %v387
        %v458 = vpop.f32.mrf.mxu0
        %v459 = vadd.f32 0.0, %v458
        %v460 = vpop.f32.mrf.mxu0
        %v461 = vadd.f32 0.0, %v460
        %462 = vmatmul.bf16.gmra.mxu0 %v390
        %v463 = vpop.f32.mrf.mxu0
        %v464 = vadd.f32 0.0, %v463
        %v465 = vpop.f32.mrf.mxu0
        %v466 = vadd.f32 0.0, %v465
        %467 = vdwg.mxu0
        %v492 = vunpack.c.l.b16 %v210
        %v493 = vunpack.c.h.b16 %v210
        %v494 = vunpack.c.l.b16 %v211
        %v495 = vunpack.c.h.b16 %v211
        %v496 = vunpack.c.l.b16 %v212
        %v497 = vunpack.c.h.b16 %v212
        %v498 = vunpack.c.l.b16 %v213
        %v499 = vunpack.c.h.b16 %v213
        %v500 = vunpack.c.l.b16 %v214
        %v501 = vunpack.c.h.b16 %v214
        %v502 = vunpack.c.l.b16 %v215
        %v503 = vunpack.c.h.b16 %v215
        %v504 = vunpack.c.l.b16 %v216
        %v505 = vunpack.c.h.b16 %v216
        %v506 = vunpack.c.l.b16 %v217
        %v507 = vunpack.c.h.b16 %v217
        %v508 = vunpack.c.l.b16 %v218
        %v509 = vunpack.c.h.b16 %v218
        %v510 = vunpack.c.l.b16 %v219
        %v511 = vunpack.c.h.b16 %v219
        %v512 = vunpack.c.l.b16 %v220
        %v513 = vunpack.c.h.b16 %v220
        %v514 = vunpack.c.l.b16 %v221
        %v515 = vunpack.c.h.b16 %v221
        %v516 = vunpack.c.l.b16 %v222
        %v517 = vunpack.c.h.b16 %v222
        %v518 = vunpack.c.l.b16 %v223
        %v519 = vunpack.c.h.b16 %v223
        %v520 = vunpack.c.l.b16 %v224
        %v521 = vunpack.c.h.b16 %v224
        %v522 = vunpack.c.l.b16 %v225
        %v523 = vunpack.c.h.b16 %v225
        %v524 = vunpack.c.l.b16 %v226
        %v525 = vunpack.c.h.b16 %v226
        %v526 = vunpack.c.l.b16 %v227
        %v527 = vunpack.c.h.b16 %v227
        %v528 = vunpack.c.l.b16 %v228
        %v529 = vunpack.c.h.b16 %v228
        %v530 = vunpack.c.l.b16 %v229
        %v531 = vunpack.c.h.b16 %v229
        %v532 = vunpack.c.l.b16 %v230
        %v533 = vunpack.c.h.b16 %v230
        %v534 = vunpack.c.l.b16 %v231
        %v535 = vunpack.c.h.b16 %v231
        %v536 = vunpack.c.l.b16 %v232
        %v537 = vunpack.c.h.b16 %v232
        %v538 = vunpack.c.l.b16 %v233
        %v539 = vunpack.c.h.b16 %v233
        %v540 = vpack.c.b16 %v496, %v492
        %v541 = vpack.c.b16 %v497, %v493
        %v542 = vpack.c.b16 %v498, %v494
        %v543 = vpack.c.b16 %v499, %v495
        %v544 = vpack.c.b16 %v504, %v500
        %v545 = vpack.c.b16 %v505, %v501
        %v546 = vpack.c.b16 %v506, %v502
        %v547 = vpack.c.b16 %v507, %v503
        %v548 = vpack.c.b16 %v512, %v508
        %v549 = vpack.c.b16 %v513, %v509
        %v550 = vpack.c.b16 %v514, %v510
        %v551 = vpack.c.b16 %v515, %v511
        %v552 = vpack.c.b16 %v520, %v516
        %v553 = vpack.c.b16 %v521, %v517
        %v554 = vpack.c.b16 %v522, %v518
        %v555 = vpack.c.b16 %v523, %v519
        %v556 = vpack.c.b16 %v528, %v524
        %v557 = vpack.c.b16 %v529, %v525
        %v558 = vpack.c.b16 %v530, %v526
        %v559 = vpack.c.b16 %v531, %v527
        %v560 = vpack.c.b16 %v536, %v532
        %v561 = vpack.c.b16 %v537, %v533
        %v562 = vpack.c.b16 %v538, %v534
        %v563 = vpack.c.b16 %v539, %v535
        %v589 = vsel %vm385, %v208, 0
        %v592 = vsel %vm385, %v209, 0
        %594 = vmatpush.bf16.msra.mxu0 0
        %595 = vmatpush.bf16.msra.mxu0 0
        %596 = vmatpush.bf16.msra.mxu0 %v560
        %597 = vmatpush.bf16.msra.mxu0 %v556
        %598 = vmatpush.bf16.msra.mxu0 %v552
        %599 = vmatpush.bf16.msra.mxu0 %v548
        %600 = vmatpush.bf16.msra.mxu0 %v544
        %601 = vmatpush.bf16.msra.mxu0 %v540
        %602 = vmatmul.bf16.gmra.mxu0 %v589
        %v603 = vpop.f32.mrf.mxu0
        %v604 = vadd.f32 %v402, %v603
        %v605 = vpop.f32.mrf.mxu0
        %v606 = vadd.f32 %v404, %v605
        %607 = vmatmul.bf16.gmra.mxu0 %v592
        %v608 = vpop.f32.mrf.mxu0
        %v609 = vadd.f32 %v407, %v608
        %v610 = vpop.f32.mrf.mxu0
        %v611 = vadd.f32 %v409, %v610
        %612 = vdwg.mxu0
        %613 = vmatpush.bf16.msra.mxu0 0
        %614 = vmatpush.bf16.msra.mxu0 0
        %615 = vmatpush.bf16.msra.mxu0 %v561
        %616 = vmatpush.bf16.msra.mxu0 %v557
        %617 = vmatpush.bf16.msra.mxu0 %v553
        %618 = vmatpush.bf16.msra.mxu0 %v549
        %619 = vmatpush.bf16.msra.mxu0 %v545
        %620 = vmatpush.bf16.msra.mxu0 %v541
        %621 = vmatmul.bf16.gmra.mxu0 %v589
        %v622 = vpop.f32.mrf.mxu0
        %v623 = vadd.f32 %v421, %v622
        %v624 = vpop.f32.mrf.mxu0
        %v625 = vadd.f32 %v423, %v624
        %626 = vmatmul.bf16.gmra.mxu0 %v592
        %v627 = vpop.f32.mrf.mxu0
        %v628 = vadd.f32 %v426, %v627
        %v629 = vpop.f32.mrf.mxu0
        %v630 = vadd.f32 %v428, %v629
        %631 = vdwg.mxu0
        %632 = vmatpush.bf16.msra.mxu0 0
        %633 = vmatpush.bf16.msra.mxu0 0
        %634 = vmatpush.bf16.msra.mxu0 %v562
        %635 = vmatpush.bf16.msra.mxu0 %v558
        %636 = vmatpush.bf16.msra.mxu0 %v554
        %637 = vmatpush.bf16.msra.mxu0 %v550
        %638 = vmatpush.bf16.msra.mxu0 %v546
        %639 = vmatpush.bf16.msra.mxu0 %v542
        %640 = vmatmul.bf16.gmra.mxu0 %v589
        %v641 = vpop.f32.mrf.mxu0
        %v642 = vadd.f32 %v440, %v641
        %v643 = vpop.f32.mrf.mxu0
        %v644 = vadd.f32 %v442, %v643
        %645 = vmatmul.bf16.gmra.mxu0 %v592
        %v646 = vpop.f32.mrf.mxu0
        %v647 = vadd.f32 %v445, %v646
        %v648 = vpop.f32.mrf.mxu0
        %v649 = vadd.f32 %v447, %v648
        %650 = vdwg.mxu0
        %651 = vmatpush.bf16.msra.mxu0 0
        %652 = vmatpush.bf16.msra.mxu0 0
        %653 = vmatpush.bf16.msra.mxu0 %v563
        %654 = vmatpush.bf16.msra.mxu0 %v559
        %655 = vmatpush.bf16.msra.mxu0 %v555
        %656 = vmatpush.bf16.msra.mxu0 %v551
        %657 = vmatpush.bf16.msra.mxu0 %v547
        %658 = vmatpush.bf16.msra.mxu0 %v543
        %659 = vmatmul.bf16.gmra.mxu0 %v589
        %v660 = vpop.f32.mrf.mxu0
        %v661 = vadd.f32 %v459, %v660
        %v662 = vpop.f32.mrf.mxu0
        %v663 = vadd.f32 %v461, %v662
        %664 = vmatmul.bf16.gmra.mxu0 %v592
        %v665 = vpop.f32.mrf.mxu0
        %v666 = vadd.f32 %v464, %v665
        %v667 = vpop.f32.mrf.mxu0
        %v668 = vadd.f32 %v466, %v667
        %669 = vdwg.mxu0
        %v670 = vld [vmem:[%s197 + $0x2] sm:$0xff]
        %v671 = vld [vmem:[%s197 + $0xa] sm:$0xff]
        %v672 = vld [vmem:[%s197 + $0x12] sm:$0xff]
        %v673 = vld [vmem:[%s197 + $0x1a] sm:$0xff]
        %v674 = vpack.c.bf16 %v671, %v670
        %v675 = vpack.c.bf16 %v673, %v672
        %s676 = scalar_lea.vmem [#allocation2], 384
        %v677 = vld [vmem:[%s676] sm:$0xff]
        %v678 = vld [vmem:[%s676 + $0x8] sm:$0xff]
        %v679 = vld [vmem:[%s676 + $0x10] sm:$0xff]
        %v680 = vld [vmem:[%s676 + $0x18] sm:$0xff]
        %v681 = vld [vmem:[%s676 + $0x20] sm:$0xff]
        %v682 = vld [vmem:[%s676 + $0x28] sm:$0xff]
        %v683 = vld [vmem:[%s676 + $0x30] sm:$0xff]
        %v684 = vld [vmem:[%s676 + $0x38] sm:$0xff]
        %v685 = vld [vmem:[%s676 + $0x40] sm:$0xff]
        %v686 = vld [vmem:[%s676 + $0x48] sm:$0xff]
        %v687 = vld [vmem:[%s676 + $0x50] sm:$0xff]
        %v688 = vld [vmem:[%s676 + $0x58] sm:$0xff]
        %v689 = vld [vmem:[%s676 + $0x60] sm:$0xff]
        %v690 = vld [vmem:[%s676 + $0x68] sm:$0xff]
        %v691 = vld [vmem:[%s676 + $0x70] sm:$0xff]
        %v692 = vld [vmem:[%s676 + $0x78] sm:$0xff]
        %v693 = vld [vmem:[%s676 + $0x80] sm:$0xff]
        %v694 = vld [vmem:[%s676 + $0x88] sm:$0xff]
        %v695 = vld [vmem:[%s676 + $0x90] sm:$0xff]
        %v696 = vld [vmem:[%s676 + $0x98] sm:$0xff]
        %v697 = vld [vmem:[%s676 + $0xa0] sm:$0xff]
        %v698 = vld [vmem:[%s676 + $0xa8] sm:$0xff]
        %v699 = vld [vmem:[%s676 + $0xb0] sm:$0xff]
        %v700 = vld [vmem:[%s676 + $0xb8] sm:$0xff]
        %v725 = vunpack.c.l.b16 %v677
        %v726 = vunpack.c.h.b16 %v677
        %v727 = vunpack.c.l.b16 %v678
        %v728 = vunpack.c.h.b16 %v678
        %v729 = vunpack.c.l.b16 %v679
        %v730 = vunpack.c.h.b16 %v679
        %v731 = vunpack.c.l.b16 %v680
        %v732 = vunpack.c.h.b16 %v680
        %v733 = vunpack.c.l.b16 %v681
        %v734 = vunpack.c.h.b16 %v681
        %v735 = vunpack.c.l.b16 %v682
        %v736 = vunpack.c.h.b16 %v682
        %v737 = vunpack.c.l.b16 %v683
        %v738 = vunpack.c.h.b16 %v683
        %v739 = vunpack.c.l.b16 %v684
        %v740 = vunpack.c.h.b16 %v684
        %v741 = vunpack.c.l.b16 %v685
        %v742 = vunpack.c.h.b16 %v685
        %v743 = vunpack.c.l.b16 %v686
        %v744 = vunpack.c.h.b16 %v686
        %v745 = vunpack.c.l.b16 %v687
        %v746 = vunpack.c.h.b16 %v687
        %v747 = vunpack.c.l.b16 %v688
        %v748 = vunpack.c.h.b16 %v688
        %v749 = vunpack.c.l.b16 %v689
        %v750 = vunpack.c.h.b16 %v689
        %v751 = vunpack.c.l.b16 %v690
        %v752 = vunpack.c.h.b16 %v690
        %v753 = vunpack.c.l.b16 %v691
        %v754 = vunpack.c.h.b16 %v691
        %v755 = vunpack.c.l.b16 %v692
        %v756 = vunpack.c.h.b16 %v692
        %v757 = vunpack.c.l.b16 %v693
        %v758 = vunpack.c.h.b16 %v693
        %v759 = vunpack.c.l.b16 %v694
        %v760 = vunpack.c.h.b16 %v694
        %v761 = vunpack.c.l.b16 %v695
        %v762 = vunpack.c.h.b16 %v695
        %v763 = vunpack.c.l.b16 %v696
        %v764 = vunpack.c.h.b16 %v696
        %v765 = vunpack.c.l.b16 %v697
        %v766 = vunpack.c.h.b16 %v697
        %v767 = vunpack.c.l.b16 %v698
        %v768 = vunpack.c.h.b16 %v698
        %v769 = vunpack.c.l.b16 %v699
        %v770 = vunpack.c.h.b16 %v699
        %v771 = vunpack.c.l.b16 %v700
        %v772 = vunpack.c.h.b16 %v700
        %v773 = vpack.c.b16 %v729, %v725
        %v774 = vpack.c.b16 %v730, %v726
        %v775 = vpack.c.b16 %v731, %v727
        %v776 = vpack.c.b16 %v732, %v728
        %v777 = vpack.c.b16 %v737, %v733
        %v778 = vpack.c.b16 %v738, %v734
        %v779 = vpack.c.b16 %v739, %v735
        %v780 = vpack.c.b16 %v740, %v736
        %v781 = vpack.c.b16 %v745, %v741
        %v782 = vpack.c.b16 %v746, %v742
        %v783 = vpack.c.b16 %v747, %v743
        %v784 = vpack.c.b16 %v748, %v744
        %v785 = vpack.c.b16 %v753, %v749
        %v786 = vpack.c.b16 %v754, %v750
        %v787 = vpack.c.b16 %v755, %v751
        %v788 = vpack.c.b16 %v756, %v752
        %v789 = vpack.c.b16 %v761, %v757
        %v790 = vpack.c.b16 %v762, %v758
        %v791 = vpack.c.b16 %v763, %v759
        %v792 = vpack.c.b16 %v764, %v760
        %v793 = vpack.c.b16 %v769, %v765
        %v794 = vpack.c.b16 %v770, %v766
        %v795 = vpack.c.b16 %v771, %v767
        %v796 = vpack.c.b16 %v772, %v768
        %v822 = vsel %vm385, %v674, 0
        %v825 = vsel %vm385, %v675, 0
        %827 = vmatpush.bf16.msra.mxu0 0
        %828 = vmatpush.bf16.msra.mxu0 0
        %829 = vmatpush.bf16.msra.mxu0 %v793
        %830 = vmatpush.bf16.msra.mxu0 %v789
        %831 = vmatpush.bf16.msra.mxu0 %v785
        %832 = vmatpush.bf16.msra.mxu0 %v781
        %833 = vmatpush.bf16.msra.mxu0 %v777
        %834 = vmatpush.bf16.msra.mxu0 %v773
        %835 = vmatmul.bf16.gmra.mxu0 %v822
        %v836 = vpop.f32.mrf.mxu0
        %v837 = vadd.f32 0.0, %v836
        %v838 = vpop.f32.mrf.mxu0
        %v839 = vadd.f32 0.0, %v838
        %840 = vmatmul.bf16.gmra.mxu0 %v825
        %v841 = vpop.f32.mrf.mxu0
        %v842 = vadd.f32 0.0, %v841
        %v843 = vpop.f32.mrf.mxu0
        %v844 = vadd.f32 0.0, %v843
        %845 = vdwg.mxu0
        %846 = vmatpush.bf16.msra.mxu0 0
        %847 = vmatpush.bf16.msra.mxu0 0
        %848 = vmatpush.bf16.msra.mxu0 %v794
        %849 = vmatpush.bf16.msra.mxu0 %v790
        %850 = vmatpush.bf16.msra.mxu0 %v786
        %851 = vmatpush.bf16.msra.mxu0 %v782
        %852 = vmatpush.bf16.msra.mxu0 %v778
        %853 = vmatpush.bf16.msra.mxu0 %v774
        %854 = vmatmul.bf16.gmra.mxu0 %v822
        %v855 = vpop.f32.mrf.mxu0
        %v856 = vadd.f32 0.0, %v855
        %v857 = vpop.f32.mrf.mxu0
        %v858 = vadd.f32 0.0, %v857
        %859 = vmatmul.bf16.gmra.mxu0 %v825
        %v860 = vpop.f32.mrf.mxu0
        %v861 = vadd.f32 0.0, %v860
        %v862 = vpop.f32.mrf.mxu0
        %v863 = vadd.f32 0.0, %v862
        %864 = vdwg.mxu0
        %865 = vmatpush.bf16.msra.mxu0 0
        %866 = vmatpush.bf16.msra.mxu0 0
        %867 = vmatpush.bf16.msra.mxu0 %v795
        %868 = vmatpush.bf16.msra.mxu0 %v791
        %869 = vmatpush.bf16.msra.mxu0 %v787
        %870 = vmatpush.bf16.msra.mxu0 %v783
        %871 = vmatpush.bf16.msra.mxu0 %v779
        %872 = vmatpush.bf16.msra.mxu0 %v775
        %873 = vmatmul.bf16.gmra.mxu0 %v822
        %v874 = vpop.f32.mrf.mxu0
        %v875 = vadd.f32 0.0, %v874
        %v876 = vpop.f32.mrf.mxu0
        %v877 = vadd.f32 0.0, %v876
        %878 = vmatmul.bf16.gmra.mxu0 %v825
        %v879 = vpop.f32.mrf.mxu0
        %v880 = vadd.f32 0.0, %v879
        %v881 = vpop.f32.mrf.mxu0
        %v882 = vadd.f32 0.0, %v881
        %883 = vdwg.mxu0
        %884 = vmatpush.bf16.msra.mxu0 0
        %885 = vmatpush.bf16.msra.mxu0 0
        %886 = vmatpush.bf16.msra.mxu0 %v796
        %887 = vmatpush.bf16.msra.mxu0 %v792
        %888 = vmatpush.bf16.msra.mxu0 %v788
        %889 = vmatpush.bf16.msra.mxu0 %v784
        %890 = vmatpush.bf16.msra.mxu0 %v780
        %891 = vmatpush.bf16.msra.mxu0 %v776
        %892 = vmatmul.bf16.gmra.mxu0 %v822
        %v893 = vpop.f32.mrf.mxu0
        %v894 = vadd.f32 0.0, %v893
        %v895 = vpop.f32.mrf.mxu0
        %v896 = vadd.f32 0.0, %v895
        %897 = vmatmul.bf16.gmra.mxu0 %v825
        %v898 = vpop.f32.mrf.mxu0
        %v899 = vadd.f32 0.0, %v898
        %v900 = vpop.f32.mrf.mxu0
        %v901 = vadd.f32 0.0, %v900
        %902 = vdwg.mxu0
        %v903 = vadd.f32 %v604, %v837
        %v904 = vadd.f32 %v623, %v856
        %v905 = vadd.f32 %v642, %v875
        %v906 = vadd.f32 %v661, %v894
        %v907 = vadd.f32 %v606, %v839
        %v908 = vadd.f32 %v625, %v858
        %v909 = vadd.f32 %v644, %v877
        %v910 = vadd.f32 %v663, %v896
        %v911 = vadd.f32 %v609, %v842
        %v912 = vadd.f32 %v628, %v861
        %v913 = vadd.f32 %v647, %v880
        %v914 = vadd.f32 %v666, %v899
        %v915 = vadd.f32 %v611, %v844
        %v916 = vadd.f32 %v630, %v863
        %v917 = vadd.f32 %v649, %v882
        %v918 = vadd.f32 %v668, %v901
        %v919 = vld [vmem:[%s197 + $0x3] sm:$0xff]
        %v920 = vld [vmem:[%s197 + $0xb] sm:$0xff]
        %v921 = vld [vmem:[%s197 + $0x13] sm:$0xff]
        %v922 = vld [vmem:[%s197 + $0x1b] sm:$0xff]
        %v923 = vpack.c.bf16 %v920, %v919
        %v924 = vpack.c.bf16 %v922, %v921
        %s925 = scalar_lea.vmem [#allocation2], 576
        %v926 = vld [vmem:[%s925] sm:$0xff]
        %v927 = vld [vmem:[%s925 + $0x8] sm:$0xff]
        %v928 = vld [vmem:[%s925 + $0x10] sm:$0xff]
        %v929 = vld [vmem:[%s925 + $0x18] sm:$0xff]
        %v930 = vld [vmem:[%s925 + $0x20] sm:$0xff]
        %v931 = vld [vmem:[%s925 + $0x28] sm:$0xff]
        %v932 = vld [vmem:[%s925 + $0x30] sm:$0xff]
        %v933 = vld [vmem:[%s925 + $0x38] sm:$0xff]
        %v934 = vld [vmem:[%s925 + $0x40] sm:$0xff]
        %v935 = vld [vmem:[%s925 + $0x48] sm:$0xff]
        %v936 = vld [vmem:[%s925 + $0x50] sm:$0xff]
        %v937 = vld [vmem:[%s925 + $0x58] sm:$0xff]
        %v938 = vld [vmem:[%s925 + $0x60] sm:$0xff]
        %v939 = vld [vmem:[%s925 + $0x68] sm:$0xff]
        %v940 = vld [vmem:[%s925 + $0x70] sm:$0xff]
        %v941 = vld [vmem:[%s925 + $0x78] sm:$0xff]
        %v942 = vld [vmem:[%s925 + $0x80] sm:$0xff]
        %v943 = vld [vmem:[%s925 + $0x88] sm:$0xff]
        %v944 = vld [vmem:[%s925 + $0x90] sm:$0xff]
        %v945 = vld [vmem:[%s925 + $0x98] sm:$0xff]
        %v946 = vld [vmem:[%s925 + $0xa0] sm:$0xff]
        %v947 = vld [vmem:[%s925 + $0xa8] sm:$0xff]
        %v948 = vld [vmem:[%s925 + $0xb0] sm:$0xff]
        %v949 = vld [vmem:[%s925 + $0xb8] sm:$0xff]
        %v974 = vunpack.c.l.b16 %v926
        %v975 = vunpack.c.h.b16 %v926
        %v976 = vunpack.c.l.b16 %v927
        %v977 = vunpack.c.h.b16 %v927
        %v978 = vunpack.c.l.b16 %v928
        %v979 = vunpack.c.h.b16 %v928
        %v980 = vunpack.c.l.b16 %v929
        %v981 = vunpack.c.h.b16 %v929
        %v982 = vunpack.c.l.b16 %v930
        %v983 = vunpack.c.h.b16 %v930
        %v984 = vunpack.c.l.b16 %v931
        %v985 = vunpack.c.h.b16 %v931
        %v986 = vunpack.c.l.b16 %v932
        %v987 = vunpack.c.h.b16 %v932
        %v988 = vunpack.c.l.b16 %v933
        %v989 = vunpack.c.h.b16 %v933
        %v990 = vunpack.c.l.b16 %v934
        %v991 = vunpack.c.h.b16 %v934
        %v992 = vunpack.c.l.b16 %v935
        %v993 = vunpack.c.h.b16 %v935
        %v994 = vunpack.c.l.b16 %v936
        %v995 = vunpack.c.h.b16 %v936
        %v996 = vunpack.c.l.b16 %v937
        %v997 = vunpack.c.h.b16 %v937
        %v998 = vunpack.c.l.b16 %v938
        %v999 = vunpack.c.h.b16 %v938
        %v1000 = vunpack.c.l.b16 %v939
        %v1001 = vunpack.c.h.b16 %v939
        %v1002 = vunpack.c.l.b16 %v940
        %v1003 = vunpack.c.h.b16 %v940
        %v1004 = vunpack.c.l.b16 %v941
        %v1005 = vunpack.c.h.b16 %v941
        %v1006 = vunpack.c.l.b16 %v942
        %v1007 = vunpack.c.h.b16 %v942
        %v1008 = vunpack.c.l.b16 %v943
        %v1009 = vunpack.c.h.b16 %v943
        %v1010 = vunpack.c.l.b16 %v944
        %v1011 = vunpack.c.h.b16 %v944
        %v1012 = vunpack.c.l.b16 %v945
        %v1013 = vunpack.c.h.b16 %v945
        %v1014 = vunpack.c.l.b16 %v946
        %v1015 = vunpack.c.h.b16 %v946
        %v1016 = vunpack.c.l.b16 %v947
        %v1017 = vunpack.c.h.b16 %v947
        %v1018 = vunpack.c.l.b16 %v948
        %v1019 = vunpack.c.h.b16 %v948
        %v1020 = vunpack.c.l.b16 %v949
        %v1021 = vunpack.c.h.b16 %v949
        %v1022 = vpack.c.b16 %v978, %v974
        %v1023 = vpack.c.b16 %v979, %v975
        %v1024 = vpack.c.b16 %v980, %v976
        %v1025 = vpack.c.b16 %v981, %v977
        %v1026 = vpack.c.b16 %v986, %v982
        %v1027 = vpack.c.b16 %v987, %v983
        %v1028 = vpack.c.b16 %v988, %v984
        %v1029 = vpack.c.b16 %v989, %v985
        %v1030 = vpack.c.b16 %v994, %v990
        %v1031 = vpack.c.b16 %v995, %v991
        %v1032 = vpack.c.b16 %v996, %v992
        %v1033 = vpack.c.b16 %v997, %v993
        %v1034 = vpack.c.b16 %v1002, %v998
        %v1035 = vpack.c.b16 %v1003, %v999
        %v1036 = vpack.c.b16 %v1004, %v1000
        %v1037 = vpack.c.b16 %v1005, %v1001
        %v1038 = vpack.c.b16 %v1010, %v1006
        %v1039 = vpack.c.b16 %v1011, %v1007
        %v1040 = vpack.c.b16 %v1012, %v1008
        %v1041 = vpack.c.b16 %v1013, %v1009
        %v1042 = vpack.c.b16 %v1018, %v1014
        %v1043 = vpack.c.b16 %v1019, %v1015
        %v1044 = vpack.c.b16 %v1020, %v1016
        %v1045 = vpack.c.b16 %v1021, %v1017
        %v1071 = vsel %vm385, %v923, 0
        %v1074 = vsel %vm385, %v924, 0
        %1076 = vmatpush.bf16.msra.mxu0 0
        %1077 = vmatpush.bf16.msra.mxu0 0
        %1078 = vmatpush.bf16.msra.mxu0 %v1042
        %1079 = vmatpush.bf16.msra.mxu0 %v1038
        %1080 = vmatpush.bf16.msra.mxu0 %v1034
        %1081 = vmatpush.bf16.msra.mxu0 %v1030
        %1082 = vmatpush.bf16.msra.mxu0 %v1026
        %1083 = vmatpush.bf16.msra.mxu0 %v1022
        %1084 = vmatmul.bf16.gmra.mxu0 %v1071
        %v1085 = vpop.f32.mrf.mxu0
        %v1086 = vadd.f32 0.0, %v1085
        %v1087 = vpop.f32.mrf.mxu0
        %v1088 = vadd.f32 0.0, %v1087
        %1089 = vmatmul.bf16.gmra.mxu0 %v1074
        %v1090 = vpop.f32.mrf.mxu0
        %v1091 = vadd.f32 0.0, %v1090
        %v1092 = vpop.f32.mrf.mxu0
        %v1093 = vadd.f32 0.0, %v1092
        %1094 = vdwg.mxu0
        %1095 = vmatpush.bf16.msra.mxu0 0
        %1096 = vmatpush.bf16.msra.mxu0 0
        %1097 = vmatpush.bf16.msra.mxu0 %v1043
        %1098 = vmatpush.bf16.msra.mxu0 %v1039
        %1099 = vmatpush.bf16.msra.mxu0 %v1035
        %1100 = vmatpush.bf16.msra.mxu0 %v1031
        %1101 = vmatpush.bf16.msra.mxu0 %v1027
        %1102 = vmatpush.bf16.msra.mxu0 %v1023
        %1103 = vmatmul.bf16.gmra.mxu0 %v1071
        %v1104 = vpop.f32.mrf.mxu0
        %v1105 = vadd.f32 0.0, %v1104
        %v1106 = vpop.f32.mrf.mxu0
        %v1107 = vadd.f32 0.0, %v1106
        %1108 = vmatmul.bf16.gmra.mxu0 %v1074
        %v1109 = vpop.f32.mrf.mxu0
        %v1110 = vadd.f32 0.0, %v1109
        %v1111 = vpop.f32.mrf.mxu0
        %v1112 = vadd.f32 0.0, %v1111
        %1113 = vdwg.mxu0
        %1114 = vmatpush.bf16.msra.mxu0 0
        %1115 = vmatpush.bf16.msra.mxu0 0
        %1116 = vmatpush.bf16.msra.mxu0 %v1044
        %1117 = vmatpush.bf16.msra.mxu0 %v1040
        %1118 = vmatpush.bf16.msra.mxu0 %v1036
        %1119 = vmatpush.bf16.msra.mxu0 %v1032
        %1120 = vmatpush.bf16.msra.mxu0 %v1028
        %1121 = vmatpush.bf16.msra.mxu0 %v1024
        %1122 = vmatmul.bf16.gmra.mxu0 %v1071
        %v1123 = vpop.f32.mrf.mxu0
        %v1124 = vadd.f32 0.0, %v1123
        %v1125 = vpop.f32.mrf.mxu0
        %v1126 = vadd.f32 0.0, %v1125
        %1127 = vmatmul.bf16.gmra.mxu0 %v1074
        %v1128 = vpop.f32.mrf.mxu0
        %v1129 = vadd.f32 0.0, %v1128
        %v1130 = vpop.f32.mrf.mxu0
        %v1131 = vadd.f32 0.0, %v1130
        %1132 = vdwg.mxu0
        %1133 = vmatpush.bf16.msra.mxu0 0
        %1134 = vmatpush.bf16.msra.mxu0 0
        %1135 = vmatpush.bf16.msra.mxu0 %v1045
        %1136 = vmatpush.bf16.msra.mxu0 %v1041
        %1137 = vmatpush.bf16.msra.mxu0 %v1037
        %1138 = vmatpush.bf16.msra.mxu0 %v1033
        %1139 = vmatpush.bf16.msra.mxu0 %v1029
        %1140 = vmatpush.bf16.msra.mxu0 %v1025
        %1141 = vmatmul.bf16.gmra.mxu0 %v1071
        %v1142 = vpop.f32.mrf.mxu0
        %v1143 = vadd.f32 0.0, %v1142
        %v1144 = vpop.f32.mrf.mxu0
        %v1145 = vadd.f32 0.0, %v1144
        %1146 = vmatmul.bf16.gmra.mxu0 %v1074
        %v1147 = vpop.f32.mrf.mxu0
        %v1148 = vadd.f32 0.0, %v1147
        %v1149 = vpop.f32.mrf.mxu0
        %v1150 = vadd.f32 0.0, %v1149
        %1151 = vdwg.mxu0
        %v1152 = vadd.f32 %v903, %v1086
        %v1153 = vadd.f32 %v904, %v1105
        %v1154 = vadd.f32 %v905, %v1124
        %v1155 = vadd.f32 %v906, %v1143
        %v1156 = vadd.f32 %v907, %v1088
        %v1157 = vadd.f32 %v908, %v1107
        %v1158 = vadd.f32 %v909, %v1126
        %v1159 = vadd.f32 %v910, %v1145
        %v1160 = vadd.f32 %v911, %v1091
        %v1161 = vadd.f32 %v912, %v1110
        %v1162 = vadd.f32 %v913, %v1129
        %v1163 = vadd.f32 %v914, %v1148
        %v1164 = vadd.f32 %v915, %v1093
        %v1165 = vadd.f32 %v916, %v1112
        %v1166 = vadd.f32 %v917, %v1131
        %v1167 = vadd.f32 %v918, %v1150
        %v1168 = vld [vmem:[%s197 + $0x4] sm:$0xff]
        %v1169 = vld [vmem:[%s197 + $0xc] sm:$0xff]
        %v1170 = vld [vmem:[%s197 + $0x14] sm:$0xff]
        %v1171 = vld [vmem:[%s197 + $0x1c] sm:$0xff]
        %v1172 = vpack.c.bf16 %v1169, %v1168
        %v1173 = vpack.c.bf16 %v1171, %v1170
        %s1174 = scalar_lea.vmem [#allocation2], 768
        %v1175 = vld [vmem:[%s1174] sm:$0xff]
        %v1176 = vld [vmem:[%s1174 + $0x8] sm:$0xff]
        %v1177 = vld [vmem:[%s1174 + $0x10] sm:$0xff]
        %v1178 = vld [vmem:[%s1174 + $0x18] sm:$0xff]
        %v1179 = vld [vmem:[%s1174 + $0x20] sm:$0xff]
        %v1180 = vld [vmem:[%s1174 + $0x28] sm:$0xff]
        %v1181 = vld [vmem:[%s1174 + $0x30] sm:$0xff]
        %v1182 = vld [vmem:[%s1174 + $0x38] sm:$0xff]
        %v1183 = vld [vmem:[%s1174 + $0x40] sm:$0xff]
        %v1184 = vld [vmem:[%s1174 + $0x48] sm:$0xff]
        %v1185 = vld [vmem:[%s1174 + $0x50] sm:$0xff]
        %v1186 = vld [vmem:[%s1174 + $0x58] sm:$0xff]
        %v1187 = vld [vmem:[%s1174 + $0x60] sm:$0xff]
        %v1188 = vld [vmem:[%s1174 + $0x68] sm:$0xff]
        %v1189 = vld [vmem:[%s1174 + $0x70] sm:$0xff]
        %v1190 = vld [vmem:[%s1174 + $0x78] sm:$0xff]
        %v1191 = vld [vmem:[%s1174 + $0x80] sm:$0xff]
        %v1192 = vld [vmem:[%s1174 + $0x88] sm:$0xff]
        %v1193 = vld [vmem:[%s1174 + $0x90] sm:$0xff]
        %v1194 = vld [vmem:[%s1174 + $0x98] sm:$0xff]
        %v1195 = vld [vmem:[%s1174 + $0xa0] sm:$0xff]
        %v1196 = vld [vmem:[%s1174 + $0xa8] sm:$0xff]
        %v1197 = vld [vmem:[%s1174 + $0xb0] sm:$0xff]
        %v1198 = vld [vmem:[%s1174 + $0xb8] sm:$0xff]
        %v1223 = vunpack.c.l.b16 %v1175
        %v1224 = vunpack.c.h.b16 %v1175
        %v1225 = vunpack.c.l.b16 %v1176
        %v1226 = vunpack.c.h.b16 %v1176
        %v1227 = vunpack.c.l.b16 %v1177
        %v1228 = vunpack.c.h.b16 %v1177
        %v1229 = vunpack.c.l.b16 %v1178
        %v1230 = vunpack.c.h.b16 %v1178
        %v1231 = vunpack.c.l.b16 %v1179
        %v1232 = vunpack.c.h.b16 %v1179
        %v1233 = vunpack.c.l.b16 %v1180
        %v1234 = vunpack.c.h.b16 %v1180
        %v1235 = vunpack.c.l.b16 %v1181
        %v1236 = vunpack.c.h.b16 %v1181
        %v1237 = vunpack.c.l.b16 %v1182
        %v1238 = vunpack.c.h.b16 %v1182
        %v1239 = vunpack.c.l.b16 %v1183
        %v1240 = vunpack.c.h.b16 %v1183
        %v1241 = vunpack.c.l.b16 %v1184
        %v1242 = vunpack.c.h.b16 %v1184
        %v1243 = vunpack.c.l.b16 %v1185
        %v1244 = vunpack.c.h.b16 %v1185
        %v1245 = vunpack.c.l.b16 %v1186
        %v1246 = vunpack.c.h.b16 %v1186
        %v1247 = vunpack.c.l.b16 %v1187
        %v1248 = vunpack.c.h.b16 %v1187
        %v1249 = vunpack.c.l.b16 %v1188
        %v1250 = vunpack.c.h.b16 %v1188
        %v1251 = vunpack.c.l.b16 %v1189
        %v1252 = vunpack.c.h.b16 %v1189
        %v1253 = vunpack.c.l.b16 %v1190
        %v1254 = vunpack.c.h.b16 %v1190
        %v1255 = vunpack.c.l.b16 %v1191
        %v1256 = vunpack.c.h.b16 %v1191
        %v1257 = vunpack.c.l.b16 %v1192
        %v1258 = vunpack.c.h.b16 %v1192
        %v1259 = vunpack.c.l.b16 %v1193
        %v1260 = vunpack.c.h.b16 %v1193
        %v1261 = vunpack.c.l.b16 %v1194
        %v1262 = vunpack.c.h.b16 %v1194
        %v1263 = vunpack.c.l.b16 %v1195
        %v1264 = vunpack.c.h.b16 %v1195
        %v1265 = vunpack.c.l.b16 %v1196
        %v1266 = vunpack.c.h.b16 %v1196
        %v1267 = vunpack.c.l.b16 %v1197
        %v1268 = vunpack.c.h.b16 %v1197
        %v1269 = vunpack.c.l.b16 %v1198
        %v1270 = vunpack.c.h.b16 %v1198
        %v1271 = vpack.c.b16 %v1227, %v1223
        %v1272 = vpack.c.b16 %v1228, %v1224
        %v1273 = vpack.c.b16 %v1229, %v1225
        %v1274 = vpack.c.b16 %v1230, %v1226
        %v1275 = vpack.c.b16 %v1235, %v1231
        %v1276 = vpack.c.b16 %v1236, %v1232
        %v1277 = vpack.c.b16 %v1237, %v1233
        %v1278 = vpack.c.b16 %v1238, %v1234
        %v1279 = vpack.c.b16 %v1243, %v1239
        %v1280 = vpack.c.b16 %v1244, %v1240
        %v1281 = vpack.c.b16 %v1245, %v1241
        %v1282 = vpack.c.b16 %v1246, %v1242
        %v1283 = vpack.c.b16 %v1251, %v1247
        %v1284 = vpack.c.b16 %v1252, %v1248
        %v1285 = vpack.c.b16 %v1253, %v1249
        %v1286 = vpack.c.b16 %v1254, %v1250
        %v1287 = vpack.c.b16 %v1259, %v1255
        %v1288 = vpack.c.b16 %v1260, %v1256
        %v1289 = vpack.c.b16 %v1261, %v1257
        %v1290 = vpack.c.b16 %v1262, %v1258
        %v1291 = vpack.c.b16 %v1267, %v1263
        %v1292 = vpack.c.b16 %v1268, %v1264
        %v1293 = vpack.c.b16 %v1269, %v1265
        %v1294 = vpack.c.b16 %v1270, %v1266
        %v1320 = vsel %vm385, %v1172, 0
        %v1323 = vsel %vm385, %v1173, 0
        %1325 = vmatpush.bf16.msra.mxu0 0
        %1326 = vmatpush.bf16.msra.mxu0 0
        %1327 = vmatpush.bf16.msra.mxu0 %v1291
        %1328 = vmatpush.bf16.msra.mxu0 %v1287
        %1329 = vmatpush.bf16.msra.mxu0 %v1283
        %1330 = vmatpush.bf16.msra.mxu0 %v1279
        %1331 = vmatpush.bf16.msra.mxu0 %v1275
        %1332 = vmatpush.bf16.msra.mxu0 %v1271
        %1333 = vmatmul.bf16.gmra.mxu0 %v1320
        %v1334 = vpop.f32.mrf.mxu0
        %v1335 = vadd.f32 0.0, %v1334
        %v1336 = vpop.f32.mrf.mxu0
        %v1337 = vadd.f32 0.0, %v1336
        %1338 = vmatmul.bf16.gmra.mxu0 %v1323
        %v1339 = vpop.f32.mrf.mxu0
        %v1340 = vadd.f32 0.0, %v1339
        %v1341 = vpop.f32.mrf.mxu0
        %v1342 = vadd.f32 0.0, %v1341
        %1343 = vdwg.mxu0
        %1344 = vmatpush.bf16.msra.mxu0 0
        %1345 = vmatpush.bf16.msra.mxu0 0
        %1346 = vmatpush.bf16.msra.mxu0 %v1292
        %1347 = vmatpush.bf16.msra.mxu0 %v1288
        %1348 = vmatpush.bf16.msra.mxu0 %v1284
        %1349 = vmatpush.bf16.msra.mxu0 %v1280
        %1350 = vmatpush.bf16.msra.mxu0 %v1276
        %1351 = vmatpush.bf16.msra.mxu0 %v1272
        %1352 = vmatmul.bf16.gmra.mxu0 %v1320
        %v1353 = vpop.f32.mrf.mxu0
        %v1354 = vadd.f32 0.0, %v1353
        %v1355 = vpop.f32.mrf.mxu0
        %v1356 = vadd.f32 0.0, %v1355
        %1357 = vmatmul.bf16.gmra.mxu0 %v1323
        %v1358 = vpop.f32.mrf.mxu0
        %v1359 = vadd.f32 0.0, %v1358
        %v1360 = vpop.f32.mrf.mxu0
        %v1361 = vadd.f32 0.0, %v1360
        %1362 = vdwg.mxu0
        %1363 = vmatpush.bf16.msra.mxu0 0
        %1364 = vmatpush.bf16.msra.mxu0 0
        %1365 = vmatpush.bf16.msra.mxu0 %v1293
        %1366 = vmatpush.bf16.msra.mxu0 %v1289
        %1367 = vmatpush.bf16.msra.mxu0 %v1285
        %1368 = vmatpush.bf16.msra.mxu0 %v1281
        %1369 = vmatpush.bf16.msra.mxu0 %v1277
        %1370 = vmatpush.bf16.msra.mxu0 %v1273
        %1371 = vmatmul.bf16.gmra.mxu0 %v1320
        %v1372 = vpop.f32.mrf.mxu0
        %v1373 = vadd.f32 0.0, %v1372
        %v1374 = vpop.f32.mrf.mxu0
        %v1375 = vadd.f32 0.0, %v1374
        %1376 = vmatmul.bf16.gmra.mxu0 %v1323
        %v1377 = vpop.f32.mrf.mxu0
        %v1378 = vadd.f32 0.0, %v1377
        %v1379 = vpop.f32.mrf.mxu0
        %v1380 = vadd.f32 0.0, %v1379
        %1381 = vdwg.mxu0
        %1382 = vmatpush.bf16.msra.mxu0 0
        %1383 = vmatpush.bf16.msra.mxu0 0
        %1384 = vmatpush.bf16.msra.mxu0 %v1294
        %1385 = vmatpush.bf16.msra.mxu0 %v1290
        %1386 = vmatpush.bf16.msra.mxu0 %v1286
        %1387 = vmatpush.bf16.msra.mxu0 %v1282
        %1388 = vmatpush.bf16.msra.mxu0 %v1278
        %1389 = vmatpush.bf16.msra.mxu0 %v1274
        %1390 = vmatmul.bf16.gmra.mxu0 %v1320
        %v1391 = vpop.f32.mrf.mxu0
        %v1392 = vadd.f32 0.0, %v1391
        %v1393 = vpop.f32.mrf.mxu0
        %v1394 = vadd.f32 0.0, %v1393
        %1395 = vmatmul.bf16.gmra.mxu0 %v1323
        %v1396 = vpop.f32.mrf.mxu0
        %v1397 = vadd.f32 0.0, %v1396
        %v1398 = vpop.f32.mrf.mxu0
        %v1399 = vadd.f32 0.0, %v1398
        %1400 = vdwg.mxu0
        %v1401 = vadd.f32 %v1152, %v1335
        %v1402 = vadd.f32 %v1153, %v1354
        %v1403 = vadd.f32 %v1154, %v1373
        %v1404 = vadd.f32 %v1155, %v1392
        %v1405 = vadd.f32 %v1156, %v1337
        %v1406 = vadd.f32 %v1157, %v1356
        %v1407 = vadd.f32 %v1158, %v1375
        %v1408 = vadd.f32 %v1159, %v1394
        %v1409 = vadd.f32 %v1160, %v1340
        %v1410 = vadd.f32 %v1161, %v1359
        %v1411 = vadd.f32 %v1162, %v1378
        %v1412 = vadd.f32 %v1163, %v1397
        %v1413 = vadd.f32 %v1164, %v1342
        %v1414 = vadd.f32 %v1165, %v1361
        %v1415 = vadd.f32 %v1166, %v1380
        %v1416 = vadd.f32 %v1167, %v1399
        %v1417 = vld [vmem:[#allocation4] sm:$0xf]
        %v1419 = vperm.slane %v1417, 0
        %v1420 = vperm.slane %v1417, 1
        %v1421 = vperm.slane %v1417, 2
        %v1422 = vperm.slane %v1417, 3
        %v1427 = vadd.f32 %v1401, %v1419
        %v1428 = vadd.f32 %v1402, %v1420
        %v1429 = vadd.f32 %v1403, %v1421
        %v1430 = vadd.f32 %v1404, %v1422
        %v1431 = vadd.f32 %v1405, %v1419
        %v1432 = vadd.f32 %v1406, %v1420
        %v1433 = vadd.f32 %v1407, %v1421
        %v1434 = vadd.f32 %v1408, %v1422
        %v1435 = vadd.f32 %v1409, %v1419
        %v1436 = vadd.f32 %v1410, %v1420
        %v1437 = vadd.f32 %v1411, %v1421
        %v1438 = vadd.f32 %v1412, %v1422
        %v1439 = vadd.f32 %v1413, %v1419
        %v1440 = vadd.f32 %v1414, %v1420
        %v1441 = vadd.f32 %v1415, %v1421
        %v1442 = vadd.f32 %v1416, %v1422
        %v1443 = vmax.f32 %v1427, 0.0
        %v1444 = vmax.f32 %v1428, 0.0
        %v1445 = vmax.f32 %v1429, 0.0
        %v1446 = vmax.f32 %v1430, 0.0
        %v1447 = vmax.f32 %v1431, 0.0
        %v1448 = vmax.f32 %v1432, 0.0
        %v1449 = vmax.f32 %v1433, 0.0
        %v1450 = vmax.f32 %v1434, 0.0
        %v1451 = vmax.f32 %v1435, 0.0
        %v1452 = vmax.f32 %v1436, 0.0
        %v1453 = vmax.f32 %v1437, 0.0
        %v1454 = vmax.f32 %v1438, 0.0
        %v1455 = vmax.f32 %v1439, 0.0
        %v1456 = vmax.f32 %v1440, 0.0
        %v1457 = vmax.f32 %v1441, 0.0
        %v1458 = vmax.f32 %v1442, 0.0
        %v1459 = vmax.f32 %v1443, %v1445
        %v1460 = vmax.f32 %v1444, %v1446
        %v1461 = vmax.f32 %v1447, %v1449
        %v1462 = vmax.f32 %v1448, %v1450
        %v1463 = vmax.f32 %v1451, %v1453
        %v1464 = vmax.f32 %v1452, %v1454
        %v1465 = vmax.f32 %v1455, %v1457
        %v1466 = vmax.f32 %v1456, %v1458
        %v1467 = vlaneseq
        %v1468 = vshrl.u32 %v1467, 7
        %v1469 = vadd.s32 %v1468, 8
        %v1470 = vlaneseq
        %v1471 = vand.u32 %v1470, 127
        %v1472 = vmul.u32 %v1468, 2
        %v1473 = vmul.u32 %v1469, 2
        %vm1474 = vcmp.eq.s32.totalorder %v1471, %v1472
        %vm1475 = vcmp.eq.s32.totalorder %v1471, %v1473
        %v1476 = vsel %vm1474, 1, 0
        %v1477 = vsel %vm1475, 1, 0
        %v1478 = vcvt.s32.f32 %v1476
        %v1479 = vcvt.s32.f32 %v1477
        %v1480 = vadd.s32 %v1472, 1
        %v1481 = vadd.s32 %v1473, 1
        %vm1482 = vcmp.eq.s32.totalorder %v1471, %v1480
        %vm1483 = vcmp.eq.s32.totalorder %v1471, %v1481
        %v1484 = vsel %vm1482, 1, 0
        %v1485 = vsel %vm1483, 1, 0
        %v1486 = vcvt.s32.f32 %v1484
        %v1487 = vcvt.s32.f32 %v1485
        %vm1488 = vcmask 261120
        %v1490 = vsel %vm1488, %v1478, 0
        %v1493 = vsel %vm1488, %v1479, 0
        %1495 = vmatpush.msra.mxu0 0.0
        %1496 = vmatpush.msra.mxu0 0.0
        %1497 = vmatpush.msra.mxu0 0.0
        %1498 = vmatpush.msra.mxu0 0.0
        %1499 = vmatpush.msra.mxu0 0.0
        %1500 = vmatpush.msra.mxu0 0.0
        %1501 = vmatpush.msra.mxu0 0.0
        %1502 = vmatpush.msra.mxu0 0.0
        %1503 = vmatpush.msra.mxu0 0.0
        %1504 = vmatpush.msra.mxu0 0.0
        %1505 = vmatpush.msra.mxu0 0.0
        %1506 = vmatpush.msra.mxu0 0.0
        %1507 = vmatpush.msra.mxu0 %v1465
        %1508 = vmatpush.msra.mxu0 %v1463
        %1509 = vmatpush.msra.mxu0 %v1461
        %1510 = vmatpush.msra.mxu0 %v1459
        %1511 = vmatmul.f32.gmra.mxu0 %v1490
        %v1512 = vpop.f32.mrf.mxu0
        %v1513 = vadd.f32 0.0, %v1512
        %1514 = vmatmul.f32.gmra.mxu0 %v1493
        %v1515 = vpop.f32.mrf.mxu0
        %v1516 = vadd.f32 0.0, %v1515
        %1517 = vdwg.mxu0
        %1518 = vmatpush.msra.mxu0 0.0
        %1519 = vmatpush.msra.mxu0 0.0
        %1520 = vmatpush.msra.mxu0 0.0
        %1521 = vmatpush.msra.mxu0 0.0
        %1522 = vmatpush.msra.mxu0 0.0
        %1523 = vmatpush.msra.mxu0 0.0
        %1524 = vmatpush.msra.mxu0 0.0
        %1525 = vmatpush.msra.mxu0 0.0
        %1526 = vmatpush.msra.mxu0 0.0
        %1527 = vmatpush.msra.mxu0 0.0
        %1528 = vmatpush.msra.mxu0 0.0
        %1529 = vmatpush.msra.mxu0 0.0
        %1530 = vmatpush.msra.mxu0 %v1466
        %1531 = vmatpush.msra.mxu0 %v1464
        %1532 = vmatpush.msra.mxu0 %v1462
        %1533 = vmatpush.msra.mxu0 %v1460
        %1534 = vmatmul.f32.gmra.mxu0 %v1490
        %v1535 = vpop.f32.mrf.mxu0
        %v1536 = vadd.f32 0.0, %v1535
        %1537 = vmatmul.f32.gmra.mxu0 %v1493
        %v1538 = vpop.f32.mrf.mxu0
        %v1539 = vadd.f32 0.0, %v1538
        %1540 = vdwg.mxu0
        %v1542 = vsel %vm1488, %v1486, 0
        %v1545 = vsel %vm1488, %v1487, 0
        %1547 = vmatpush.msra.mxu0 0.0
        %1548 = vmatpush.msra.mxu0 0.0
        %1549 = vmatpush.msra.mxu0 0.0
        %1550 = vmatpush.msra.mxu0 0.0
        %1551 = vmatpush.msra.mxu0 0.0
        %1552 = vmatpush.msra.mxu0 0.0
        %1553 = vmatpush.msra.mxu0 0.0
        %1554 = vmatpush.msra.mxu0 0.0
        %1555 = vmatpush.msra.mxu0 0.0
        %1556 = vmatpush.msra.mxu0 0.0
        %1557 = vmatpush.msra.mxu0 0.0
        %1558 = vmatpush.msra.mxu0 0.0
        %1559 = vmatpush.msra.mxu0 %v1465
        %1560 = vmatpush.msra.mxu0 %v1463
        %1561 = vmatpush.msra.mxu0 %v1461
        %1562 = vmatpush.msra.mxu0 %v1459
        %1563 = vmatmul.f32.gmra.mxu0 %v1542
        %v1564 = vpop.f32.mrf.mxu0
        %v1565 = vadd.f32 0.0, %v1564
        %1566 = vmatmul.f32.gmra.mxu0 %v1545
        %v1567 = vpop.f32.mrf.mxu0
        %v1568 = vadd.f32 0.0, %v1567
        %1569 = vdwg.mxu0
        %1570 = vmatpush.msra.mxu0 0.0
        %1571 = vmatpush.msra.mxu0 0.0
        %1572 = vmatpush.msra.mxu0 0.0
        %1573 = vmatpush.msra.mxu0 0.0
        %1574 = vmatpush.msra.mxu0 0.0
        %1575 = vmatpush.msra.mxu0 0.0
        %1576 = vmatpush.msra.mxu0 0.0
        %1577 = vmatpush.msra.mxu0 0.0
        %1578 = vmatpush.msra.mxu0 0.0
        %1579 = vmatpush.msra.mxu0 0.0
        %1580 = vmatpush.msra.mxu0 0.0
        %1581 = vmatpush.msra.mxu0 0.0
        %1582 = vmatpush.msra.mxu0 %v1466
        %1583 = vmatpush.msra.mxu0 %v1464
        %1584 = vmatpush.msra.mxu0 %v1462
        %1585 = vmatpush.msra.mxu0 %v1460
        %1586 = vmatmul.f32.gmra.mxu0 %v1542
        %v1587 = vpop.f32.mrf.mxu0
        %v1588 = vadd.f32 0.0, %v1587
        %1589 = vmatmul.f32.gmra.mxu0 %v1545
        %v1590 = vpop.f32.mrf.mxu0
        %v1591 = vadd.f32 0.0, %v1590
        %1592 = vdwg.mxu0
        %v1593 = vmax.f32 %v1513, %v1565
        %v1594 = vmax.f32 %v1536, %v1588
        %v1595 = vmax.f32 %v1516, %v1568
        %v1596 = vmax.f32 %v1539, %v1591
        %1597 = vst [vmem:[%s202] sm:$0xff] 0.0
        %1598 = vst [vmem:[%s202 + $0x8] sm:$0xff] 0.0
        %1599 = vst [vmem:[%s202 + $0x10] sm:$0xff] 0.0
        %1600 = vst [vmem:[%s202 + $0x18] sm:$0xff] 0.0
        %1601 = vst [vmem:[%s202 + $0x20] sm:$0xf] 0.0
        %1602 = vst [vmem:[%s202 + $0x28] sm:$0xf] 0.0
        %vm1607 = vcmask 1041408
        %v1608 = vrot.slane %v1593, 6
        %v1609 = vrot.slane %v1594, 6
        %v1610 = vrot.slane %v1595, 6
        %v1611 = vsel %vm1607, %v1608, %v1610
        %v1612 = vrot.slane %v1596, 6
        %v1613 = vsel %vm1607, %v1609, %v1612
        %1620 = vst [vmem:[%s202] sm:$0xfc] %v1608
        %1621 = vst [vmem:[%s202 + $0x8] sm:$0xfc] %v1609
        %1622 = vst [vmem:[%s202 + $0x10] sm:$0xff] %v1611
        %1623 = vst [vmem:[%s202 + $0x18] sm:$0xff] %v1613
        %1624 = vst [vmem:[%s202 + $0x20] sm:$0x3] %v1610
        %1625 = vst [vmem:[%s202 + $0x28] sm:$0x3] %v1612
        %p1626 = scmp.lt.s32.totalorder %s16, 1
        %s1627 = scalar_select %p1626, %s16, 1
        %s1628 = smul.addr %s1627, 6
        %s1629 = smul.addr %s1628, 8
        %s1630 = scalar_lea.vmem %s3, %s1629
        // Predicated region
        $region41: #{cnn_forward.4} parent=31 // pred_check
          %p1631 = pneg %p102
        $region42: #{cnn_forward.4} parent=31 // pred_check_branch
          %1633 = sbr.rel (%p1631) target = $region44
        $region43: #{cnn_forward.4} parent=31 // pred_region
          _
        $region44: #{cnn_forward.4} parent=31 // pred_fallthru
          _
      $region32: #{cnn_forward.4} parent=5 // pred_fallthru
        _
      %p1634 = scmp.le.s32.totalorder 2, %s11
      // Predicated region
      $region45: #{cnn_forward.4} parent=5 // pred_check
        %p1635 = pneg %p1634
      $region46: #{cnn_forward.4} parent=5 // pred_check_branch
        %1637 = sbr.rel (%p1635) target = $region48
      $region47: #{cnn_forward.4} parent=5 // pred_region
        %s1638 = ssub.s32 %s11, 2
        // Predicated region
        $region49: #{cnn_forward.4} parent=47 // pred_check
          %p1639 = pneg %p108
        $region50: #{cnn_forward.4} parent=47 // pred_check_branch
          %1641 = sbr.rel (%p1639) target = $region52
        $region51: #{cnn_forward.4} parent=47 // pred_region
          %p1642 = scmp.lt.s32.totalorder %s17, 1
          %s1643 = scalar_select %p1642, %s17, 1
          %s1644 = smul.addr %s1643, 6
          %s1645 = smul.addr %s1644, 8
          %s1646 = scalar_lea.vmem %s3, %s1645
        $region52: #{cnn_forward.4} parent=47 // pred_fallthru
          _
      $region48: #{cnn_forward.4} parent=5 // pred_fallthru
        _
    $region6: #{cnn_forward.4} parent=1 // loop_footer
      %s15 = sadd.s32 1, %s11
    $region7: #{cnn_forward.4} parent=1 // loop_footer_branch
      %10 = sbr.rel target = $region3
    $region8: #{cnn_forward.4} parent=1 // loop_exit
      _
    %1647 = vsyncpa [#allocation3], 1
    %s1648 = scalar_lea.sflag [#allocation3], 1
    %1649 = vsyncpa %s1648, 1
    %1650 = vsyncpa [#allocation5], 1

// kernel: cnn_forward.7
$region0: #{cnn_forward.7}
  #allocation0 [shape = 'u32[]', space=smem, size = 0x4, offset = 0x4, fixed_abs, tag = 'smem constant byte address 0x4 - core index']
  #allocation1 [shape = 'u32[72,128]{1,0:T(1,128)}', space=vmem, size = 0x9000, scoped, tag = 'internal scratch']
  %s0 = inlined_call_operand.vmem [shape: f32[2,1024], index: 0, kind: input, shape index: {}]
  %s1 = inlined_call_operand.vmem [shape: bf16[1024,120], index: 1, kind: input, shape index: {}]
  %s2 = inlined_call_operand.hbm [shape: f32[1,120], index: 2, kind: input, shape index: {}]
  %s3 = inlined_call_operand.vmem [shape: bf16[120,84], index: 3, kind: input, shape index: {}]
  %s4 = inlined_call_operand.hbm [shape: f32[1,84], index: 4, kind: input, shape index: {}]
  %s5 = inlined_call_operand.vmem [shape: bf16[84,10], index: 5, kind: input, shape index: {}]
  %s6 = inlined_call_operand.hbm [shape: f32[1,10], index: 6, kind: input, shape index: {}]
  %s7 = inlined_call_operand.hbm [shape: f32[2,10], index: 7, kind: output, shape index: {}]
  %s8 = sld [smem:[#allocation0]]
  $region50: #{cnn_forward.7} parent=0
    _
  %s10 = ssub.s32 1, %s8
  %s11 = scalar_select 0, %s10, %s8
  $region1: #{cnn_forward.7} parent=0
    #allocation2 [shape = 'u8[512]{0}', space=vmem, size = 0x400, scoped, tag = 'input window, operand 2, single buffered']
    #allocation3 [shape = 's32[1]{0}', space=sflag, size = 0x4, scoped, tag = 'scoped memory for cnn_forward.7']
    #allocation4 [shape = 's32[1]{0}', space=sflag, size = 0x4, scoped, tag = 'scoped memory for cnn_forward.7']
    #allocation5 [shape = 'u8[512]{0}', space=vmem, size = 0x400, scoped, tag = 'input window, operand 4, single buffered']
    #allocation6 [shape = 's32[1]{0}', space=sflag, size = 0x4, scoped, tag = 'scoped memory for cnn_forward.7']
    #allocation7 [shape = 'u8[512]{0}', space=vmem, size = 0x400, scoped, tag = 'input window, operand 6, single buffered']
    #allocation8 [shape = 'u8[1024]{0}', space=vmem, size = 0x400, scoped, tag = 'output window, operand 0, single buffered']
    %12 = vsyncpa [#allocation3], 0
    %13 = vsyncpa [#allocation6], 0
    %14 = vsyncpa [#allocation4], 0
    // Predicated region
    $region2: #{cnn_forward.7} parent=1 // pred_check
      _
    $region3: #{cnn_forward.7} parent=1 // pred_check_branch
      %16 = sbr.rel (0) target = $region5
    $region4: #{cnn_forward.7} parent=1 // pred_region
      _
    $region5: #{cnn_forward.7} parent=1 // pred_fallthru
      _
    // Predicated region
    $region6: #{cnn_forward.7} parent=1 // pred_check
      _
    $region7: #{cnn_forward.7} parent=1 // pred_check_branch
      %18 = sbr.rel (0) target = $region9
    $region8: #{cnn_forward.7} parent=1 // pred_region
      _
    $region9: #{cnn_forward.7} parent=1 // pred_fallthru
      _
    // Predicated region
    $region10: #{cnn_forward.7} parent=1 // pred_check
      _
    $region11: #{cnn_forward.7} parent=1 // pred_check_branch
      %20 = sbr.rel (0) target = $region13
    $region12: #{cnn_forward.7} parent=1 // pred_region
      %22 = vsyncadd [#allocation3], 0
      %s24 = sshll.u32 %s2, 4
      %s25 = int_to_ptr.hbm [resolvable:$true] %s24
      %s26 = sshll.u32 [#allocation2], 4
      %s27 = int_to_ptr.vmem [resolvable:$true] %s26
      %29 = dma.hbm_to_vmem [thread:$0]  %s25, 16, %s27, [#allocation3]
    $region13: #{cnn_forward.7} parent=1 // pred_fallthru
      _
    // Predicated region
    $region14: #{cnn_forward.7} parent=1 // pred_check
      _
    $region15: #{cnn_forward.7} parent=1 // pred_check_branch
      %31 = sbr.rel (0) target = $region17
    $region16: #{cnn_forward.7} parent=1 // pred_region
      _
    $region17: #{cnn_forward.7} parent=1 // pred_fallthru
      _
    // Predicated region
    $region18: #{cnn_forward.7} parent=1 // pred_check
      _
    $region19: #{cnn_forward.7} parent=1 // pred_check_branch
      %33 = sbr.rel (0) target = $region21
    $region20: #{cnn_forward.7} parent=1 // pred_region
      %35 = vsyncadd [#allocation6], 0
      %s37 = sshll.u32 %s4, 4
      %s38 = int_to_ptr.hbm [resolvable:$true] %s37
      %s39 = sshll.u32 [#allocation5], 4
      %s40 = int_to_ptr.vmem [resolvable:$true] %s39
      %42 = dma.hbm_to_vmem [thread:$0]  %s38, 16, %s40, [#allocation6]
    $region21: #{cnn_forward.7} parent=1 // pred_fallthru
      _
    // Predicated region
    $region22: #{cnn_forward.7} parent=1 // pred_check
      _
    $region23: #{cnn_forward.7} parent=1 // pred_check_branch
      %44 = sbr.rel (0) target = $region25
    $region24: #{cnn_forward.7} parent=1 // pred_region
      _
    $region25: #{cnn_forward.7} parent=1 // pred_fallthru
      _
    // Predicated region
    $region26: #{cnn_forward.7} parent=1 // pred_check
      _
    $region27: #{cnn_forward.7} parent=1 // pred_check_branch
      %46 = sbr.rel (0) target = $region29
    $region28: #{cnn_forward.7} parent=1 // pred_region
      %48 = vsyncadd [#allocation6], 0
      %s50 = sshll.u32 %s6, 4
      %s51 = int_to_ptr.hbm [resolvable:$true] %s50
      %s52 = sshll.u32 [#allocation7], 4
      %s53 = int_to_ptr.vmem [resolvable:$true] %s52
      %55 = dma.hbm_to_vmem [thread:$0]  %s51, 16, %s53, [#allocation6]
    $region29: #{cnn_forward.7} parent=1 // pred_fallthru
      _
    // Predicated region
    $region30: #{cnn_forward.7} parent=1 // pred_check
      _
    $region31: #{cnn_forward.7} parent=1 // pred_check_branch
      %57 = sbr.rel (0) target = $region33
    $region32: #{cnn_forward.7} parent=1 // pred_region
      %59 = dma.done [#allocation3], 16
    $region33: #{cnn_forward.7} parent=1 // pred_fallthru
      _
    // Predicated region
    $region34: #{cnn_forward.7} parent=1 // pred_check
      _
    $region35: #{cnn_forward.7} parent=1 // pred_check_branch
      %61 = sbr.rel (0) target = $region37
    $region36: #{cnn_forward.7} parent=1 // pred_region
      %63 = dma.done [#allocation6], 16
    $region37: #{cnn_forward.7} parent=1 // pred_fallthru
      _
    // Predicated region
    $region38: #{cnn_forward.7} parent=1 // pred_check
      _
    $region39: #{cnn_forward.7} parent=1 // pred_check_branch
      %65 = sbr.rel (0) target = $region41
    $region40: #{cnn_forward.7} parent=1 // pred_region
      %67 = dma.done [#allocation6], 16
    $region41: #{cnn_forward.7} parent=1 // pred_fallthru
      _
    %v69 = vld [vmem:[%s0] sm:$0xff]
    %v70 = vld [vmem:[%s0 + $0x8] sm:$0xff]
    %73 = vst [vmem:[#allocation1] ss:$4 sm:$0xff] %v69
    %s74 = scalar_lea.vmem [#allocation1], 32
    %75 = vst [vmem:[%s74] ss:$4 sm:$0xff] %v70
    %v76 = vld.sshfl [vmem:[#allocation1] sm:$0xff pattern:$0x73625140]
    %v77 = vld.sshfl [vmem:[#allocation1 + $0x8] sm:$0xff pattern:$0x73625140]
    %v78 = vld.sshfl [vmem:[#allocation1 + $0x10] sm:$0xff pattern:$0x73625140]
    %v79 = vld.sshfl [vmem:[#allocation1 + $0x18] sm:$0xff pattern:$0x73625140]
    %v80 = vld.sshfl [vmem:[#allocation1 + $0x20] sm:$0xff pattern:$0x73625140]
    %v81 = vld.sshfl [vmem:[#allocation1 + $0x28] sm:$0xff pattern:$0x73625140]
    %v82 = vld.sshfl [vmem:[#allocation1 + $0x30] sm:$0xff pattern:$0x73625140]
    %v83 = vld.sshfl [vmem:[#allocation1 + $0x38] sm:$0xff pattern:$0x73625140]
    %v92 = vpack.c.bf16 %v76, %v76
    %v93 = vpack.c.bf16 %v77, %v77
    %v94 = vpack.c.bf16 %v78, %v78
    %v95 = vpack.c.bf16 %v79, %v79
    %v96 = vpack.c.bf16 %v80, %v80
    %v97 = vpack.c.bf16 %v81, %v81
    %v98 = vpack.c.bf16 %v82, %v82
    %v99 = vpack.c.bf16 %v83, %v83
    %v100 = vld [vmem:[%s1] sm:$0xf]
    %v101 = vld [vmem:[%s1 + $0x4] sm:$0xf]
    %v102 = vld [vmem:[%s1 + $0x8] sm:$0xf]
    %v103 = vld [vmem:[%s1 + $0xc] sm:$0xf]
    %v104 = vld [vmem:[%s1 + $0x10] sm:$0xf]
    %v105 = vld [vmem:[%s1 + $0x14] sm:$0xf]
    %v106 = vld [vmem:[%s1 + $0x18] sm:$0xf]
    %v107 = vld [vmem:[%s1 + $0x1c] sm:$0xf]
    %v108 = vld [vmem:[%s1 + $0x20] sm:$0xf]
    %v109 = vld [vmem:[%s1 + $0x24] sm:$0xf]
    %v110 = vld [vmem:[%s1 + $0x28] sm:$0xf]
    %v111 = vld [vmem:[%s1 + $0x2c] sm:$0xf]
    %v112 = vld [vmem:[%s1 + $0x30] sm:$0xf]
    %v113 = vld [vmem:[%s1 + $0x34] sm:$0xf]
    %v114 = vld [vmem:[%s1 + $0x38] sm:$0xf]
    %v115 = vld [vmem:[%s1 + $0x3c] sm:$0xf]
    %v116 = vld [vmem:[%s1 + $0x40] sm:$0xf]
    %v117 = vld [vmem:[%s1 + $0x44] sm:$0xf]
    %v118 = vld [vmem:[%s1 + $0x48] sm:$0xf]
    %v119 = vld [vmem:[%s1 + $0x4c] sm:$0xf]
    %v120 = vld [vmem:[%s1 + $0x50] sm:$0xf]
    %v121 = vld [vmem:[%s1 + $0x54] sm:$0xf]
    %v122 = vld [vmem:[%s1 + $0x58] sm:$0xf]
    %v123 = vld [vmem:[%s1 + $0x5c] sm:$0xf]
    %v124 = vld [vmem:[%s1 + $0x60] sm:$0xf]
    %v125 = vld [vmem:[%s1 + $0x64] sm:$0xf]
    %v126 = vld [vmem:[%s1 + $0x68] sm:$0xf]
    %v127 = vld [vmem:[%s1 + $0x6c] sm:$0xf]
    %v128 = vld [vmem:[%s1 + $0x70] sm:$0xf]
    %v129 = vld [vmem:[%s1 + $0x74] sm:$0xf]
    %v130 = vld [vmem:[%s1 + $0x78] sm:$0xf]
    %v131 = vld [vmem:[%s1 + $0x7c] sm:$0xf]
    %v132 = vld [vmem:[%s1 + $0x80] sm:$0xf]
    %v133 = vld [vmem:[%s1 + $0x84] sm:$0xf]
    %v134 = vld [vmem:[%s1 + $0x88] sm:$0xf]
    %v135 = vld [vmem:[%s1 + $0x8c] sm:$0xf]
    %v136 = vld [vmem:[%s1 + $0x90] sm:$0xf]
    %v137 = vld [vmem:[%s1 + $0x94] sm:$0xf]
    %v138 = vld [vmem:[%s1 + $0x98] sm:$0xf]
    %v139 = vld [vmem:[%s1 + $0x9c] sm:$0xf]
    %v140 = vld [vmem:[%s1 + $0xa0] sm:$0xf]
    %v141 = vld [vmem:[%s1 + $0xa4] sm:$0xf]
    %v142 = vld [vmem:[%s1 + $0xa8] sm:$0xf]
    %v143 = vld [vmem:[%s1 + $0xac] sm:$0xf]
    %v144 = vld [vmem:[%s1 + $0xb0] sm:$0xf]
    %v145 = vld [vmem:[%s1 + $0xb4] sm:$0xf]
    %v146 = vld [vmem:[%s1 + $0xb8] sm:$0xf]
    %v147 = vld [vmem:[%s1 + $0xbc] sm:$0xf]
    %v148 = vld [vmem:[%s1 + $0xc0] sm:$0xf]
    %v149 = vld [vmem:[%s1 + $0xc4] sm:$0xf]
    %v150 = vld [vmem:[%s1 + $0xc8] sm:$0xf]
    %v151 = vld [vmem:[%s1 + $0xcc] sm:$0xf]
    %v152 = vld [vmem:[%s1 + $0xd0] sm:$0xf]
    %v153 = vld [vmem:[%s1 + $0xd4] sm:$0xf]
    %v154 = vld [vmem:[%s1 + $0xd8] sm:$0xf]
    %v155 = vld [vmem:[%s1 + $0xdc] sm:$0xf]
    %v156 = vld [vmem:[%s1 + $0xe0] sm:$0xf]
    %v157 = vld [vmem:[%s1 + $0xe4] sm:$0xf]
    %v158 = vld [vmem:[%s1 + $0xe8] sm:$0xf]
    %v159 = vld [vmem:[%s1 + $0xec] sm:$0xf]
    %v160 = vld [vmem:[%s1 + $0xf0] sm:$0xf]
    %v161 = vld [vmem:[%s1 + $0xf4] sm:$0xf]
    %v162 = vld [vmem:[%s1 + $0xf8] sm:$0xf]
    %v163 = vld [vmem:[%s1 + $0xfc] sm:$0xf]
    %v164 = vld [vmem:[%s1 + $0x100] sm:$0xf]
    %v165 = vld [vmem:[%s1 + $0x104] sm:$0xf]
    %v166 = vld [vmem:[%s1 + $0x108] sm:$0xf]
    %v167 = vld [vmem:[%s1 + $0x10c] sm:$0xf]
    %v168 = vld [vmem:[%s1 + $0x110] sm:$0xf]
    %v169 = vld [vmem:[%s1 + $0x114] sm:$0xf]
    %v170 = vld [vmem:[%s1 + $0x118] sm:$0xf]
    %v171 = vld [vmem:[%s1 + $0x11c] sm:$0xf]
    %v172 = vld [vmem:[%s1 + $0x120] sm:$0xf]
    %v173 = vld [vmem:[%s1 + $0x124] sm:$0xf]
    %v174 = vld [vmem:[%s1 + $0x128] sm:$0xf]
    %v175 = vld [vmem:[%s1 + $0x12c] sm:$0xf]
    %v176 = vld [vmem:[%s1 + $0x130] sm:$0xf]
    %v177 = vld [vmem:[%s1 + $0x134] sm:$0xf]
    %v178 = vld [vmem:[%s1 + $0x138] sm:$0xf]
    %v179 = vld [vmem:[%s1 + $0x13c] sm:$0xf]
    %v180 = vld [vmem:[%s1 + $0x140] sm:$0xf]
    %v181 = vld [vmem:[%s1 + $0x144] sm:$0xf]
    %v182 = vld [vmem:[%s1 + $0x148] sm:$0xf]
    %v183 = vld [vmem:[%s1 + $0x14c] sm:$0xf]
    %v184 = vld [vmem:[%s1 + $0x150] sm:$0xf]
    %v185 = vld [vmem:[%s1 + $0x154] sm:$0xf]
    %v186 = vld [vmem:[%s1 + $0x158] sm:$0xf]
    %v187 = vld [vmem:[%s1 + $0x15c] sm:$0xf]
    %v188 = vld [vmem:[%s1 + $0x160] sm:$0xf]
    %v189 = vld [vmem:[%s1 + $0x164] sm:$0xf]
    %v190 = vld [vmem:[%s1 + $0x168] sm:$0xf]
    %v191 = vld [vmem:[%s1 + $0x16c] sm:$0xf]
    %v192 = vld [vmem:[%s1 + $0x170] sm:$0xf]
    %v193 = vld [vmem:[%s1 + $0x174] sm:$0xf]
    %v194 = vld [vmem:[%s1 + $0x178] sm:$0xf]
    %v195 = vld [vmem:[%s1 + $0x17c] sm:$0xf]
    %v196 = vld [vmem:[%s1 + $0x180] sm:$0xf]
    %v197 = vld [vmem:[%s1 + $0x184] sm:$0xf]
    %v198 = vld [vmem:[%s1 + $0x188] sm:$0xf]
    %v199 = vld [vmem:[%s1 + $0x18c] sm:$0xf]
    %v200 = vld [vmem:[%s1 + $0x190] sm:$0xf]
    %v201 = vld [vmem:[%s1 + $0x194] sm:$0xf]
    %v202 = vld [vmem:[%s1 + $0x198] sm:$0xf]
    %v203 = vld [vmem:[%s1 + $0x19c] sm:$0xf]
    %v204 = vld [vmem:[%s1 + $0x1a0] sm:$0xf]
    %v205 = vld [vmem:[%s1 + $0x1a4] sm:$0xf]
    %v206 = vld [vmem:[%s1 + $0x1a8] sm:$0xf]
    %v207 = vld [vmem:[%s1 + $0x1ac] sm:$0xf]
    %v208 = vld [vmem:[%s1 + $0x1b0] sm:$0xf]
    %v209 = vld [vmem:[%s1 + $0x1b4] sm:$0xf]
    %v210 = vld [vmem:[%s1 + $0x1b8] sm:$0xf]
    %v211 = vld [vmem:[%s1 + $0x1bc] sm:$0xf]
    %v212 = vld [vmem:[%s1 + $0x1c0] sm:$0xf]
    %v213 = vld [vmem:[%s1 + $0x1c4] sm:$0xf]
    %v214 = vld [vmem:[%s1 + $0x1c8] sm:$0xf]
    %v215 = vld [vmem:[%s1 + $0x1cc] sm:$0xf]
    %v216 = vld [vmem:[%s1 + $0x1d0] sm:$0xf]
    %v217 = vld [vmem:[%s1 + $0x1d4] sm:$0xf]
    %v218 = vld [vmem:[%s1 + $0x1d8] sm:$0xf]
    %v219 = vld [vmem:[%s1 + $0x1dc] sm:$0xf]
    %v220 = vld [vmem:[%s1 + $0x1e0] sm:$0xf]
    %v221 = vld [vmem:[%s1 + $0x1e4] sm:$0xf]
    %v222 = vld [vmem:[%s1 + $0x1e8] sm:$0xf]
    %v223 = vld [vmem:[%s1 + $0x1ec] sm:$0xf]
    %v224 = vld [vmem:[%s1 + $0x1f0] sm:$0xf]
    %v225 = vld [vmem:[%s1 + $0x1f4] sm:$0xf]
    %v226 = vld [vmem:[%s1 + $0x1f8] sm:$0xf]
    %v227 = vld [vmem:[%s1 + $0x1fc] sm:$0xf]
    %v228 = vld [vmem:[#allocation2] sm:$0x1]
    %v230 = vperm.slane %v228, 0
    %v360 = vunpack.c.l.b16 %v100
    %v361 = vunpack.c.l.b16 %v101
    %v362 = vunpack.c.l.b16 %v102
    %v363 = vunpack.c.l.b16 %v103
    %v364 = vunpack.c.l.b16 %v104
    %v365 = vunpack.c.l.b16 %v105
    %v366 = vunpack.c.l.b16 %v106
    %v367 = vunpack.c.l.b16 %v107
    %v368 = vunpack.c.l.b16 %v108
    %v369 = vunpack.c.l.b16 %v109
    %v370 = vunpack.c.l.b16 %v110
    %v371 = vunpack.c.l.b16 %v111
    %v372 = vunpack.c.l.b16 %v112
    %v373 = vunpack.c.l.b16 %v113
    %v374 = vunpack.c.l.b16 %v114
    %v375 = vunpack.c.l.b16 %v115
    %v376 = vunpack.c.l.b16 %v116
    %v377 = vunpack.c.l.b16 %v117
    %v378 = vunpack.c.l.b16 %v118
    %v379 = vunpack.c.l.b16 %v119
    %v380 = vunpack.c.l.b16 %v120
    %v381 = vunpack.c.l.b16 %v121
    %v382 = vunpack.c.l.b16 %v122
    %v383 = vunpack.c.l.b16 %v123
    %v384 = vunpack.c.l.b16 %v124
    %v385 = vunpack.c.l.b16 %v125
    %v386 = vunpack.c.l.b16 %v126
    %v387 = vunpack.c.l.b16 %v127
    %v388 = vunpack.c.l.b16 %v128
    %v389 = vunpack.c.l.b16 %v129
    %v390 = vunpack.c.l.b16 %v130
    %v391 = vunpack.c.l.b16 %v131
    %v392 = vunpack.c.l.b16 %v132
    %v393 = vunpack.c.l.b16 %v133
    %v394 = vunpack.c.l.b16 %v134
    %v395 = vunpack.c.l.b16 %v135
    %v396 = vunpack.c.l.b16 %v136
    %v397 = vunpack.c.l.b16 %v137
    %v398 = vunpack.c.l.b16 %v138
    %v399 = vunpack.c.l.b16 %v139
    %v400 = vunpack.c.l.b16 %v140
    %v401 = vunpack.c.l.b16 %v141
    %v402 = vunpack.c.l.b16 %v142
    %v403 = vunpack.c.l.b16 %v143
    %v404 = vunpack.c.l.b16 %v144
    %v405 = vunpack.c.l.b16 %v145
    %v406 = vunpack.c.l.b16 %v146
    %v407 = vunpack.c.l.b16 %v147
    %v408 = vunpack.c.l.b16 %v148
    %v409 = vunpack.c.l.b16 %v149
    %v410 = vunpack.c.l.b16 %v150
    %v411 = vunpack.c.l.b16 %v151
    %v412 = vunpack.c.l.b16 %v152
    %v413 = vunpack.c.l.b16 %v153
    %v414 = vunpack.c.l.b16 %v154
    %v415 = vunpack.c.l.b16 %v155
    %v416 = vunpack.c.l.b16 %v156
    %v417 = vunpack.c.l.b16 %v157
    %v418 = vunpack.c.l.b16 %v158
    %v419 = vunpack.c.l.b16 %v159
    %v420 = vunpack.c.l.b16 %v160
    %v421 = vunpack.c.l.b16 %v161
    %v422 = vunpack.c.l.b16 %v162
    %v423 = vunpack.c.l.b16 %v163
    %v424 = vunpack.c.l.b16 %v164
    %v425 = vunpack.c.l.b16 %v165
    %v426 = vunpack.c.l.b16 %v166
    %v427 = vunpack.c.l.b16 %v167
    %v428 = vunpack.c.l.b16 %v168
    %v429 = vunpack.c.l.b16 %v169
    %v430 = vunpack.c.l.b16 %v170
    %v431 = vunpack.c.l.b16 %v171
    %v432 = vunpack.c.l.b16 %v172
    %v433 = vunpack.c.l.b16 %v173
    %v434 = vunpack.c.l.b16 %v174
    %v435 = vunpack.c.l.b16 %v175
    %v436 = vunpack.c.l.b16 %v176
    %v437 = vunpack.c.l.b16 %v177
    %v438 = vunpack.c.l.b16 %v178
    %v439 = vunpack.c.l.b16 %v179
    %v440 = vunpack.c.l.b16 %v180
    %v441 = vunpack.c.l.b16 %v181
    %v442 = vunpack.c.l.b16 %v182
    %v443 = vunpack.c.l.b16 %v183
    %v444 = vunpack.c.l.b16 %v184
    %v445 = vunpack.c.l.b16 %v185
    %v446 = vunpack.c.l.b16 %v186
    %v447 = vunpack.c.l.b16 %v187
    %v448 = vunpack.c.l.b16 %v188
    %v449 = vunpack.c.l.b16 %v189
    %v450 = vunpack.c.l.b16 %v190
    %v451 = vunpack.c.l.b16 %v191
    %v452 = vunpack.c.l.b16 %v192
    %v453 = vunpack.c.l.b16 %v193
    %v454 = vunpack.c.l.b16 %v194
    %v455 = vunpack.c.l.b16 %v195
    %v456 = vunpack.c.l.b16 %v196
    %v457 = vunpack.c.l.b16 %v197
    %v458 = vunpack.c.l.b16 %v198
    %v459 = vunpack.c.l.b16 %v199
    %v460 = vunpack.c.l.b16 %v200
    %v461 = vunpack.c.l.b16 %v201
    %v462 = vunpack.c.l.b16 %v202
    %v463 = vunpack.c.l.b16 %v203
    %v464 = vunpack.c.l.b16 %v204
    %v465 = vunpack.c.l.b16 %v205
    %v466 = vunpack.c.l.b16 %v206
    %v467 = vunpack.c.l.b16 %v207
    %v468 = vunpack.c.l.b16 %v208
    %v469 = vunpack.c.l.b16 %v209
    %v470 = vunpack.c.l.b16 %v210
    %v471 = vunpack.c.l.b16 %v211
    %v472 = vunpack.c.l.b16 %v212
    %v473 = vunpack.c.l.b16 %v213
    %v474 = vunpack.c.l.b16 %v214
    %v475 = vunpack.c.l.b16 %v215
    %v476 = vunpack.c.l.b16 %v216
    %v477 = vunpack.c.l.b16 %v217
    %v478 = vunpack.c.l.b16 %v218
    %v479 = vunpack.c.l.b16 %v219
    %v480 = vunpack.c.l.b16 %v220
    %v481 = vunpack.c.l.b16 %v221
    %v482 = vunpack.c.l.b16 %v222
    %v483 = vunpack.c.l.b16 %v223
    %v484 = vunpack.c.l.b16 %v224
    %v485 = vunpack.c.l.b16 %v225
    %v486 = vunpack.c.l.b16 %v226
    %v487 = vunpack.c.l.b16 %v227
    %v488 = vpack.c.b16 %v361, %v360
    %v489 = vpack.c.b16 %v363, %v362
    %v490 = vpack.c.b16 %v365, %v364
    %v491 = vpack.c.b16 %v367, %v366
    %v492 = vpack.c.b16 %v369, %v368
    %v493 = vpack.c.b16 %v371, %v370
    %v494 = vpack.c.b16 %v373, %v372
    %v495 = vpack.c.b16 %v375, %v374
    %v496 = vpack.c.b16 %v377, %v376
    %v497 = vpack.c.b16 %v379, %v378
    %v498 = vpack.c.b16 %v381, %v380
    %v499 = vpack.c.b16 %v383, %v382
    %v500 = vpack.c.b16 %v385, %v384
    %v501 = vpack.c.b16 %v387, %v386
    %v502 = vpack.c.b16 %v389, %v388
    %v503 = vpack.c.b16 %v391, %v390
    %v504 = vpack.c.b16 %v393, %v392
    %v505 = vpack.c.b16 %v395, %v394
    %v506 = vpack.c.b16 %v397, %v396
    %v507 = vpack.c.b16 %v399, %v398
    %v508 = vpack.c.b16 %v401, %v400
    %v509 = vpack.c.b16 %v403, %v402
    %v510 = vpack.c.b16 %v405, %v404
    %v511 = vpack.c.b16 %v407, %v406
    %v512 = vpack.c.b16 %v409, %v408
    %v513 = vpack.c.b16 %v411, %v410
    %v514 = vpack.c.b16 %v413, %v412
    %v515 = vpack.c.b16 %v415, %v414
    %v516 = vpack.c.b16 %v417, %v416
    %v517 = vpack.c.b16 %v419, %v418
    %v518 = vpack.c.b16 %v421, %v420
    %v519 = vpack.c.b16 %v423, %v422
    %v520 = vpack.c.b16 %v425, %v424
    %v521 = vpack.c.b16 %v427, %v426
    %v522 = vpack.c.b16 %v429, %v428
    %v523 = vpack.c.b16 %v431, %v430
    %v524 = vpack.c.b16 %v433, %v432
    %v525 = vpack.c.b16 %v435, %v434
    %v526 = vpack.c.b16 %v437, %v436
    %v527 = vpack.c.b16 %v439, %v438
    %v528 = vpack.c.b16 %v441, %v440
    %v529 = vpack.c.b16 %v443, %v442
    %v530 = vpack.c.b16 %v445, %v444
    %v531 = vpack.c.b16 %v447, %v446
    %v532 = vpack.c.b16 %v449, %v448
    %v533 = vpack.c.b16 %v451, %v450
    %v534 = vpack.c.b16 %v453, %v452
    %v535 = vpack.c.b16 %v455, %v454
    %v536 = vpack.c.b16 %v457, %v456
    %v537 = vpack.c.b16 %v459, %v458
    %v538 = vpack.c.b16 %v461, %v460
    %v539 = vpack.c.b16 %v463, %v462
    %v540 = vpack.c.b16 %v465, %v464
    %v541 = vpack.c.b16 %v467, %v466
    %v542 = vpack.c.b16 %v469, %v468
    %v543 = vpack.c.b16 %v471, %v470
    %v544 = vpack.c.b16 %v473, %v472
    %v545 = vpack.c.b16 %v475, %v474
    %v546 = vpack.c.b16 %v477, %v476
    %v547 = vpack.c.b16 %v479, %v478
    %v548 = vpack.c.b16 %v481, %v480
    %v549 = vpack.c.b16 %v483, %v482
    %v550 = vpack.c.b16 %v485, %v484
    %v551 = vpack.c.b16 %v487, %v486
    %616 = vmatpush.bf16.msra.mxu0 %v495
    %617 = vmatpush.bf16.msra.mxu0 %v494
    %618 = vmatpush.bf16.msra.mxu0 %v493
    %619 = vmatpush.bf16.msra.mxu0 %v492
    %620 = vmatpush.bf16.msra.mxu0 %v491
    %621 = vmatpush.bf16.msra.mxu0 %v490
    %622 = vmatpush.bf16.msra.mxu0 %v489
    %623 = vmatpush.bf16.msra.mxu0 %v488
    %624 = vmatmul.bf16.gmra.mxu0 %v92
    %v625 = vpop.f32.mrf.mxu0
    %v626 = vadd.f32 %v230, %v625
    %v627 = vpop.f32.mrf.mxu0
    %628 = vdwg.mxu0
    %629 = vmatpush.bf16.msra.mxu0 %v503
    %630 = vmatpush.bf16.msra.mxu0 %v502
    %631 = vmatpush.bf16.msra.mxu0 %v501
    %632 = vmatpush.bf16.msra.mxu0 %v500
    %633 = vmatpush.bf16.msra.mxu0 %v499
    %634 = vmatpush.bf16.msra.mxu0 %v498
    %635 = vmatpush.bf16.msra.mxu0 %v497
    %636 = vmatpush.bf16.msra.mxu0 %v496
    %637 = vmatmul.bf16.gmra.mxu0 %v93
    %v638 = vpop.f32.mrf.mxu0
    %v639 = vadd.f32 %v626, %v638
    %v640 = vpop.f32.mrf.mxu0
    %641 = vdwg.mxu0
    %642 = vmatpush.bf16.msra.mxu0 %v511
    %643 = vmatpush.bf16.msra.mxu0 %v510
    %644 = vmatpush.bf16.msra.mxu0 %v509
    %645 = vmatpush.bf16.msra.mxu0 %v508
    %646 = vmatpush.bf16.msra.mxu0 %v507
    %647 = vmatpush.bf16.msra.mxu0 %v506
    %648 = vmatpush.bf16.msra.mxu0 %v505
    %649 = vmatpush.bf16.msra.mxu0 %v504
    %650 = vmatmul.bf16.gmra.mxu0 %v94
    %v651 = vpop.f32.mrf.mxu0
    %v652 = vadd.f32 %v639, %v651
    %v653 = vpop.f32.mrf.mxu0
    %654 = vdwg.mxu0
    %655 = vmatpush.bf16.msra.mxu0 %v519
    %656 = vmatpush.bf16.msra.mxu0 %v518
    %657 = vmatpush.bf16.msra.mxu0 %v517
    %658 = vmatpush.bf16.msra.mxu0 %v516
    %659 = vmatpush.bf16.msra.mxu0 %v515
    %660 = vmatpush.bf16.msra.mxu0 %v514
    %661 = vmatpush.bf16.msra.mxu0 %v513
    %662 = vmatpush.bf16.msra.mxu0 %v512
    %663 = vmatmul.bf16.gmra.mxu0 %v95
    %v664 = vpop.f32.mrf.mxu0
    %v665 = vadd.f32 %v652, %v664
    %v666 = vpop.f32.mrf.mxu0
    %667 = vdwg.mxu0
    %668 = vmatpush.bf16.msra.mxu0 %v527
    %669 = vmatpush.bf16.msra.mxu0 %v526
    %670 = vmatpush.bf16.msra.mxu0 %v525
    %671 = vmatpush.bf16.msra.mxu0 %v524
    %672 = vmatpush.bf16.msra.mxu0 %v523
    %673 = vmatpush.bf16.msra.mxu0 %v522
    %674 = vmatpush.bf16.msra.mxu0 %v521
    %675 = vmatpush.bf16.msra.mxu0 %v520
    %676 = vmatmul.bf16.gmra.mxu0 %v96
    %v677 = vpop.f32.mrf.mxu0
    %v678 = vadd.f32 %v665, %v677
    %v679 = vpop.f32.mrf.mxu0
    %680 = vdwg.mxu0
    %681 = vmatpush.bf16.msra.mxu0 %v535
    %682 = vmatpush.bf16.msra.mxu0 %v534
    %683 = vmatpush.bf16.msra.mxu0 %v533
    %684 = vmatpush.bf16.msra.mxu0 %v532
    %685 = vmatpush.bf16.msra.mxu0 %v531
    %686 = vmatpush.bf16.msra.mxu0 %v530
    %687 = vmatpush.bf16.msra.mxu0 %v529
    %688 = vmatpush.bf16.msra.mxu0 %v528
    %689 = vmatmul.bf16.gmra.mxu0 %v97
    %v690 = vpop.f32.mrf.mxu0
    %v691 = vadd.f32 %v678, %v690
    %v692 = vpop.f32.mrf.mxu0
    %693 = vdwg.mxu0
    %694 = vmatpush.bf16.msra.mxu0 %v543
    %695 = vmatpush.bf16.msra.mxu0 %v542
    %696 = vmatpush.bf16.msra.mxu0 %v541
    %697 = vmatpush.bf16.msra.mxu0 %v540
    %698 = vmatpush.bf16.msra.mxu0 %v539
    %699 = vmatpush.bf16.msra.mxu0 %v538
    %700 = vmatpush.bf16.msra.mxu0 %v537
    %701 = vmatpush.bf16.msra.mxu0 %v536
    %702 = vmatmul.bf16.gmra.mxu0 %v98
    %v703 = vpop.f32.mrf.mxu0
    %v704 = vadd.f32 %v691, %v703
    %v705 = vpop.f32.mrf.mxu0
    %706 = vdwg.mxu0
    %707 = vmatpush.bf16.msra.mxu0 %v551
    %708 = vmatpush.bf16.msra.mxu0 %v550
    %709 = vmatpush.bf16.msra.mxu0 %v549
    %710 = vmatpush.bf16.msra.mxu0 %v548
    %711 = vmatpush.bf16.msra.mxu0 %v547
    %712 = vmatpush.bf16.msra.mxu0 %v546
    %713 = vmatpush.bf16.msra.mxu0 %v545
    %714 = vmatpush.bf16.msra.mxu0 %v544
    %715 = vmatmul.bf16.gmra.mxu0 %v99
    %v716 = vpop.f32.mrf.mxu0
    %v717 = vadd.f32 %v704, %v716
    %v718 = vpop.f32.mrf.mxu0
    %719 = vdwg.mxu0
    %v720 = vmax.f32 %v717, 0.0
    %v721 = vpack.c.bf16 %v720, %v720
    %v722 = vld [vmem:[%s3] sm:$0xf]
    %v723 = vld [vmem:[%s3 + $0x4] sm:$0xf]
    %v724 = vld [vmem:[%s3 + $0x8] sm:$0xf]
    %v725 = vld [vmem:[%s3 + $0xc] sm:$0xf]
    %v726 = vld [vmem:[%s3 + $0x10] sm:$0xf]
    %v727 = vld [vmem:[%s3 + $0x14] sm:$0xf]
    %v728 = vld [vmem:[%s3 + $0x18] sm:$0xf]
    %v729 = vld [vmem:[%s3 + $0x1c] sm:$0xf]
    %v730 = vld [vmem:[%s3 + $0x20] sm:$0xf]
    %v731 = vld [vmem:[%s3 + $0x24] sm:$0xf]
    %v732 = vld [vmem:[%s3 + $0x28] sm:$0xf]
    %v733 = vld [vmem:[%s3 + $0x2c] sm:$0xf]
    %v734 = vld [vmem:[%s3 + $0x30] sm:$0xf]
    %v735 = vld [vmem:[%s3 + $0x34] sm:$0xf]
    %v736 = vld [vmem:[%s3 + $0x38] sm:$0xf]
    %v737 = vld [vmem:[#allocation5] sm:$0x1]
    %v739 = vperm.slane %v737, 0
    %v756 = vunpack.c.l.b16 %v722
    %v757 = vunpack.c.l.b16 %v723
    %v758 = vunpack.c.l.b16 %v724
    %v759 = vunpack.c.l.b16 %v725
    %v760 = vunpack.c.l.b16 %v726
    %v761 = vunpack.c.l.b16 %v727
    %v762 = vunpack.c.l.b16 %v728
    %v763 = vunpack.c.l.b16 %v729
    %v764 = vunpack.c.l.b16 %v730
    %v765 = vunpack.c.l.b16 %v731
    %v766 = vunpack.c.l.b16 %v732
    %v767 = vunpack.c.l.b16 %v733
    %v768 = vunpack.c.l.b16 %v734
    %v769 = vunpack.c.l.b16 %v735
    %v770 = vunpack.c.l.b16 %v736
    %v771 = vpack.c.b16 %v757, %v756
    %v772 = vpack.c.b16 %v759, %v758
    %v773 = vpack.c.b16 %v761, %v760
    %v774 = vpack.c.b16 %v763, %v762
    %v775 = vpack.c.b16 %v765, %v764
    %v776 = vpack.c.b16 %v767, %v766
    %v777 = vpack.c.b16 %v769, %v768
    %v778 = vpack.c.b16 %v770, %v770
    %vm786 = vcmask 982016
    %v788 = vsel %vm786, %v721, 0
    %vm790 = vcmask 1043456
    %v792 = vsel %vm790, %v778, 0
    %794 = vmatpush.bf16.msra.mxu0 %v792
    %795 = vmatpush.bf16.msra.mxu0 %v777
    %796 = vmatpush.bf16.msra.mxu0 %v776
    %797 = vmatpush.bf16.msra.mxu0 %v775
    %798 = vmatpush.bf16.msra.mxu0 %v774
    %799 = vmatpush.bf16.msra.mxu0 %v773
    %800 = vmatpush.bf16.msra.mxu0 %v772
    %801 = vmatpush.bf16.msra.mxu0 %v771
    %802 = vmatmul.bf16.gmra.mxu0 %v788
    %v803 = vpop.f32.mrf.mxu0
    %v804 = vadd.f32 %v739, %v803
    %v805 = vpop.f32.mrf.mxu0
    %806 = vdwg.mxu0
    %v807 = vmax.f32 %v804, 0.0
    %v808 = vpack.c.bf16 %v807, %v807
    %v809 = vld [vmem:[%s5] sm:$0xf]
    %v810 = vld [vmem:[%s5 + $0x4] sm:$0xf]
    %v811 = vld [vmem:[%s5 + $0x8] sm:$0xf]
    %v812 = vld [vmem:[%s5 + $0xc] sm:$0xf]
    %v813 = vld [vmem:[%s5 + $0x10] sm:$0xf]
    %v814 = vld [vmem:[%s5 + $0x14] sm:$0xf]
    %v815 = vld [vmem:[%s5 + $0x18] sm:$0xf]
    %v816 = vld [vmem:[%s5 + $0x1c] sm:$0xf]
    %v817 = vld [vmem:[%s5 + $0x20] sm:$0xf]
    %v818 = vld [vmem:[%s5 + $0x24] sm:$0xf]
    %v819 = vld [vmem:[%s5 + $0x28] sm:$0x3]
    %v820 = vld [vmem:[#allocation7] sm:$0x1]
    %v822 = vperm.slane %v820, 0
    %v835 = vunpack.c.l.b16 %v809
    %v836 = vunpack.c.l.b16 %v810
    %v837 = vunpack.c.l.b16 %v811
    %v838 = vunpack.c.l.b16 %v812
    %v839 = vunpack.c.l.b16 %v813
    %v840 = vunpack.c.l.b16 %v814
    %v841 = vunpack.c.l.b16 %v815
    %v842 = vunpack.c.l.b16 %v816
    %v843 = vunpack.c.l.b16 %v817
    %v844 = vunpack.c.l.b16 %v818
    %v845 = vunpack.c.l.b16 %v819
    %v846 = vpack.c.b16 %v836, %v835
    %v847 = vpack.c.b16 %v838, %v837
    %v848 = vpack.c.b16 %v840, %v839
    %v849 = vpack.c.b16 %v842, %v841
    %v850 = vpack.c.b16 %v844, %v843
    %v851 = vpack.c.b16 %v845, %v845
    %vm857 = vcmask 687104
    %v859 = vsel %vm857, %v808, 0
    %vm861 = vcmask 1041408
    %v863 = vsel %vm861, %v851, 0
    %865 = vmatpush.bf16.msra.mxu0 0
    %866 = vmatpush.bf16.msra.mxu0 0
    %867 = vmatpush.bf16.msra.mxu0 %v863
    %868 = vmatpush.bf16.msra.mxu0 %v850
    %869 = vmatpush.bf16.msra.mxu0 %v849
    %870 = vmatpush.bf16.msra.mxu0 %v848
    %871 = vmatpush.bf16.msra.mxu0 %v847
    %872 = vmatpush.bf16.msra.mxu0 %v846
    %873 = vmatmul.bf16.gmra.mxu0 %v859
    %v874 = vpop.f32.mrf.mxu0
    %v875 = vadd.f32 %v822, %v874
    %v876 = vpop.f32.mrf.mxu0
    %877 = vdwg.mxu0
    %vm878 = vcmask 74752
    %879 = vst.msk [vmem:[#allocation8] sm:$0x3] %vm878, %v875
    // Predicated region
    $region42: #{cnn_forward.7} parent=1 // pred_check
      _
    $region43: #{cnn_forward.7} parent=1 // pred_check_branch
      %881 = sbr.rel (0) target = $region45
    $region44: #{cnn_forward.7} parent=1 // pred_region
      %883 = vsyncadd [#allocation4], 0
      %s885 = sshll.u32 [#allocation8], 4
      %s886 = int_to_ptr.vmem [resolvable:$true] %s885
      %s887 = sshll.u32 %s7, 4
      %s888 = int_to_ptr.hbm [resolvable:$true] %s887
      %890 = dma.vmem_to_hbm [thread:$0]  %s886, 32, %s888, [#allocation4]
    $region45: #{cnn_forward.7} parent=1 // pred_fallthru
      _
    // Predicated region
    $region46: #{cnn_forward.7} parent=1 // pred_check
      _
    $region47: #{cnn_forward.7} parent=1 // pred_check_branch
      %892 = sbr.rel (0) target = $region49
    $region48: #{cnn_forward.7} parent=1 // pred_region
      %894 = dma.done [#allocation4], 32
    $region49: #{cnn_forward.7} parent=1 // pred_fallthru
      _
    %895 = vsyncpa [#allocation3], 1
    %896 = vsyncpa [#allocation6], 1
    %897 = vsyncpa [#allocation4], 1

// kernel: cnn_forward.5
$region0: #{cnn_forward.5}
  #allocation0 [shape = 'u32[]', space=smem, size = 0x4, offset = 0x4, fixed_abs, tag = 'smem constant byte address 0x4 - core index']
  #allocation1 [shape = 'u32[72,128]{1,0:T(1,128)}', space=vmem, size = 0x9000, scoped, tag = 'internal scratch']
  %s0 = inlined_call_operand.vmem [shape: f32[2,20,256], index: 0, kind: input, shape index: {}]
  %s1 = inlined_call_operand.hbm [shape: bf16[5,256,512], index: 1, kind: input, shape index: {}]
  %s2 = inlined_call_operand.hbm [shape: f32[1,512], index: 2, kind: input, shape index: {}]
  %s3 = inlined_call_operand.vmem [shape: f32[2,12,256], index: 3, kind: output, shape index: {}]
  %s4 = sld [smem:[#allocation0]]
  $region53: #{cnn_forward.5} parent=0
    _
  %s6 = ssub.s32 1, %s4
  %s7 = scalar_select 0, %s6, %s4
  $region1: #{cnn_forward.5} parent=0
    #allocation2 [shape = 'u8[1310720]{0}', space=vmem, size = 0x140000, scoped, tag = 'input window, operand 1, single buffered']
    #allocation3 [shape = 's32[2]{0}', space=sflag, size = 0x8, scoped, tag = 'scoped memory for cnn_forward.5']
    #allocation4 [shape = 'u8[2048]{0}', space=vmem, size = 0x800, scoped, tag = 'input window, operand 2, single buffered']
    #allocation5 [shape = 's32[1]{0}', space=sflag, size = 0x4, scoped, tag = 'scoped memory for cnn_forward.5']
    %8 = vsyncpa [#allocation3], 0
    %9 = vsyncpa [#allocation5], 0
    loop: start=0, step=1, limit=4
    $region2: #{cnn_forward.5} parent=1 // loop_pre_header
      _
    $region3: #{cnn_forward.5} parent=1 // loop_header
      %s11 = sphi 0, %s15
      %p12 = scmp.ge.s32.totalorder %s11, 4
      %s21 = sphi 0, %s23
      %s24 = sphi 0, %s21
      %s25 = sphi 0, %s24
      %s41 = sphi 0, %s25
      %s45 = sphi 0, %s45
      %s47 = sphi 0, %s45
      %s48 = sphi 0, %s47
      %s62 = sphi 0, %s48
      %s66 = sphi 0, %s66
      %s68 = sphi 0, %s66
      %s69 = sphi 0, %s68
      %s83 = sphi 0, %s69
      %s89 = sphi 0, %s91
      %s92 = sphi 0, %s89
      %s93 = sphi 0, %s92
      %s109 = sphi 0, %s93
    $region4: #{cnn_forward.5} parent=1 // loop_header_branch
      %14 = sbr.rel (%p12) target = $region8
    $region5: #{cnn_forward.5} parent=1 // loop_body
      %s16 = ssub.s32 %s11, 1
      %s17 = ssub.s32 %s11, 2
      %s18 = sadd.s32 %s11, 1
      %s19 = ssub.s32 %s11, %s18
      %p20 = scmp.eq.s32.totalorder %s19, 0
      %s22 = sadd.s32 %s21, 1
      %s23 = scalar_select %p20, %s21, %s22
      %p26 = pneg %p20
      %p27 = scmp.eq.s32.totalorder %s11, 1
      %p28 = por %p26, %p27
      %p29 = scmp.ne.s32.totalorder %s21, %s24
      %p30 = scmp.eq.s32.totalorder %s11, 0
      %p31 = por %p29, %p30
      %p32 = scmp.ne.s32.totalorder %s21, %s24
      %p33 = scmp.eq.s32.totalorder %s16, 1
      %p34 = por %p32, %p33
      %p35 = scmp.ne.s32.totalorder %s24, %s25
      %p36 = scmp.eq.s32.totalorder %s16, 0
      %p37 = por %p35, %p36
      %p38 = scmp.ne.s32.totalorder %s24, %s25
      %p39 = scmp.eq.s32.totalorder %s17, 1
      %p40 = por %p38, %p39
      %p42 = scmp.ne.s32.totalorder %s25, %s41
      %p43 = scmp.eq.s32.totalorder %s17, 0
      %p44 = por %p42, %p43
      %s46 = sadd.s32 %s45, 1
      %p49 = scmp.eq.s32.totalorder %s11, 1
      %p50 = scmp.ne.s32.totalorder %s45, %s47
      %p51 = scmp.eq.s32.totalorder %s11, 0
      %p52 = por %p50, %p51
      %p53 = scmp.ne.s32.totalorder %s45, %s47
      %p54 = scmp.eq.s32.totalorder %s16, 1
      %p55 = por %p53, %p54
      %p56 = scmp.ne.s32.totalorder %s47, %s48
      %p57 = scmp.eq.s32.totalorder %s16, 0
      %p58 = por %p56, %p57
      %p59 = scmp.ne.s32.totalorder %s47, %s48
      %p60 = scmp.eq.s32.totalorder %s17, 1
      %p61 = por %p59, %p60
      %p63 = scmp.ne.s32.totalorder %s48, %s62
      %p64 = scmp.eq.s32.totalorder %s17, 0
      %p65 = por %p63, %p64
      %s67 = sadd.s32 %s66, 1
      %p70 = scmp.eq.s32.totalorder %s11, 1
      %p71 = scmp.ne.s32.totalorder %s66, %s68
      %p72 = scmp.eq.s32.totalorder %s11, 0
      %p73 = por %p71, %p72
      %p74 = scmp.ne.s32.totalorder %s66, %s68
      %p75 = scmp.eq.s32.totalorder %s16, 1
      %p76 = por %p74, %p75
      %p77 = scmp.ne.s32.totalorder %s68, %s69
      %p78 = scmp.eq.s32.totalorder %s16, 0
      %p79 = por %p77, %p78
      %p80 = scmp.ne.s32.totalorder %s68, %s69
      %p81 = scmp.eq.s32.totalorder %s17, 1
      %p82 = por %p80, %p81
      %p84 = scmp.ne.s32.totalorder %s69, %s83
      %p85 = scmp.eq.s32.totalorder %s17, 0
      %p86 = por %p84, %p85
      %s87 = ssub.s32 %s11, %s18
      %p88 = scmp.eq.s32.totalorder %s87, 0
      %s90 = sadd.s32 %s89, 1
      %s91 = scalar_select %p88, %s89, %s90
      %p94 = pneg %p88
      %p95 = scmp.eq.s32.totalorder %s11, 1
      %p96 = por %p94, %p95
      %p97 = scmp.ne.s32.totalorder %s89, %s92
      %p98 = scmp.eq.s32.totalorder %s11, 0
      %p99 = por %p97, %p98
      %p100 = scmp.ne.s32.totalorder %s89, %s92
      %p101 = scmp.eq.s32.totalorder %s16, 1
      %p102 = por %p100, %p101
      %p103 = scmp.ne.s32.totalorder %s92, %s93
      %p104 = scmp.eq.s32.totalorder %s16, 0
      %p105 = por %p103, %p104
      %p106 = scmp.ne.s32.totalorder %s92, %s93
      %p107 = scmp.eq.s32.totalorder %s17, 1
      %p108 = por %p106, %p107
      %p110 = scmp.ne.s32.totalorder %s93, %s109
      %p111 = scmp.eq.s32.totalorder %s17, 0
      %p112 = por %p110, %p111
      %p113 = scmp.le.s32.totalorder 1, %s11
      %p114 = scmp.lt.s32.totalorder %s11, 3
      %p115 = pnand %p113, %p114
      %p116 = pneg %p115
      // Predicated region
      $region9: #{cnn_forward.5} parent=5 // pred_check
        _
      $region10: #{cnn_forward.5} parent=5 // pred_check_branch
        %118 = sbr.rel (%p115) target = $region12
      $region11: #{cnn_forward.5} parent=5 // pred_region
        %s119 = ssub.s32 %s11, 1
        // Predicated region
        $region13: #{cnn_forward.5} parent=11 // pred_check
          %p120 = pneg %p58
        $region14: #{cnn_forward.5} parent=11 // pred_check_branch
          %122 = sbr.rel (%p120) target = $region16
        $region15: #{cnn_forward.5} parent=11 // pred_region
          %124 = vsyncadd [#allocation3], 0
          %s125 = sshll.u32 %s1, 4
          %s126 = int_to_ptr.hbm [resolvable:$true] %s125
          %s127 = sshll.u32 [#allocation2], 4
          %s128 = int_to_ptr.vmem [resolvable:$true] %s127
          %133 = dma.hbm_to_vmem [thread:$0]  %s126, 40960, %s128, [#allocation3], 256, 256, 16
        $region16: #{cnn_forward.5} parent=11 // pred_fallthru
          _
        // Predicated region
        $region17: #{cnn_forward.5} parent=11 // pred_check
          %p134 = pneg %p79
        $region18: #{cnn_forward.5} parent=11 // pred_check_branch
          %136 = sbr.rel (%p134) target = $region20
        $region19: #{cnn_forward.5} parent=11 // pred_region
          %138 = vsyncadd [#allocation5], 0
          %s140 = sshll.u32 %s2, 4
          %s141 = int_to_ptr.hbm [resolvable:$true] %s140
          %s142 = sshll.u32 [#allocation4], 4
          %s143 = int_to_ptr.vmem [resolvable:$true] %s142
          %145 = dma.hbm_to_vmem [thread:$0]  %s141, 64, %s143, [#allocation5]
        $region20: #{cnn_forward.5} parent=11 // pred_fallthru
          _
      $region12: #{cnn_forward.5} parent=5 // pred_fallthru
        _
      %p146 = scmp.lt.s32.totalorder %s11, 2
      // Predicated region
      $region21: #{cnn_forward.5} parent=5 // pred_check
        %p147 = pneg %p146
      $region22: #{cnn_forward.5} parent=5 // pred_check_branch
        %149 = sbr.rel (%p147) target = $region24
      $region23: #{cnn_forward.5} parent=5 // pred_region
        // Predicated region
        $region25: #{cnn_forward.5} parent=23 // pred_check
          %p150 = pneg %p31
        $region26: #{cnn_forward.5} parent=23 // pred_check_branch
          %152 = sbr.rel (%p150) target = $region28
        $region27: #{cnn_forward.5} parent=23 // pred_region
          %p153 = scmp.lt.s32.totalorder %s11, 1
          %s154 = scalar_select %p153, %s11, 1
          %s155 = smul.addr %s154, 6
          %s156 = smul.addr %s155, 8
          %s157 = scalar_lea.vmem %s0, %s156
        $region28: #{cnn_forward.5} parent=23 // pred_fallthru
          _
      $region24: #{cnn_forward.5} parent=5 // pred_fallthru
        _
      %p158 = scmp.le.s32.totalorder 1, %s11
      %p159 = scmp.lt.s32.totalorder %s11, 3
      %p160 = pnand %p158, %p159
      %p161 = pneg %p160
      // Predicated region
      $region29: #{cnn_forward.5} parent=5 // pred_check
        _
      $region30: #{cnn_forward.5} parent=5 // pred_check_branch
        %163 = sbr.rel (%p160) target = $region32
      $region31: #{cnn_forward.5} parent=5 // pred_region
        %s164 = ssub.s32 %s11, 1
        // Predicated region
        $region33: #{cnn_forward.5} parent=31 // pred_check
          %p165 = pneg %p58
        $region34: #{cnn_forward.5} parent=31 // pred_check_branch
          %167 = sbr.rel (%p165) target = $region36
        $region35: #{cnn_forward.5} parent=31 // pred_region
          %169 = dma.done [#allocation3], 40960
        $region36: #{cnn_forward.5} parent=31 // pred_fallthru
          _
        // Predicated region
        $region37: #{cnn_forward.5} parent=31 // pred_check
          %p170 = pneg %p79
        $region38: #{cnn_forward.5} parent=31 // pred_check_branch
          %172 = sbr.rel (%p170) target = $region40
        $region39: #{cnn_forward.5} parent=31 // pred_region
          %174 = dma.done [#allocation5], 64
        $region40: #{cnn_forward.5} parent=31 // pred_fallthru
          _
        %p175 = scmp.lt.s32.totalorder %s16, 1
        %s176 = scalar_select %p175, %s16, 1
        %s177 = smul.addr %s176, 6
        %s178 = smul.addr %s177, 8
        %s179 = scalar_lea.vmem %s0, %s178
        %p180 = pneg %p37
        %p181 = pneg %p34
        %p182 = pneg %p58
        %p183 = pneg %p55
        %p184 = pneg %p79
        %p185 = pneg %p76
        %p186 = pneg %p105
        %p187 = pneg %p102
        %p188 = scmp.lt.s32.totalorder %s16, 1
        %s189 = scalar_select %p188, %s16, 1
        %s190 = smul.addr %s189, 4
        %s191 = smul.addr %s190, 8
        %s192 = scalar_lea.vmem %s3, %s191
        %p193 = scmp.lt.s32.totalorder %s16, 1
        %s194 = scalar_select %p193, %s16, 1
        %s195 = smul.addr %s194, 6
        %s196 = smul.addr %s195, 8
        %s197 = scalar_lea.vmem %s0, %s196
        %p198 = scmp.lt.s32.totalorder %s16, 1
        %s199 = scalar_select %p198, %s16, 1
        %s200 = smul.addr %s199, 4
        %s201 = smul.addr %s200, 8
        %s202 = scalar_lea.vmem %s3, %s201
        %v203 = vld [vmem:[%s197] sm:$0xff]
        %v204 = vld [vmem:[%s197 + $0x8] sm:$0xff]
        %v205 = vld [vmem:[%s197 + $0x10] sm:$0xff]
        %v206 = vld [vmem:[%s197 + $0x18] sm:$0xff]
        %v207 = vpack.c.bf16 %v205, %v203
        %v208 = vpack.c.bf16 %v206, %v204
        %v209 = vld [vmem:[#allocation2] sm:$0xff]
        %v210 = vld [vmem:[#allocation2 + $0x8] sm:$0xff]
        %v211 = vld [vmem:[#allocation2 + $0x10] sm:$0xff]
        %v212 = vld [vmem:[#allocation2 + $0x18] sm:$0xff]
        %v213 = vld [vmem:[#allocation2 + $0x20] sm:$0xff]
        %v214 = vld [vmem:[#allocation2 + $0x28] sm:$0xff]
        %v215 = vld [vmem:[#allocation2 + $0x30] sm:$0xff]
        %v216 = vld [vmem:[#allocation2 + $0x38] sm:$0xff]
        %v217 = vld [vmem:[#allocation2 + $0x40] sm:$0xff]
        %v218 = vld [vmem:[#allocation2 + $0x48] sm:$0xff]
        %v219 = vld [vmem:[#allocation2 + $0x50] sm:$0xff]
        %v220 = vld [vmem:[#allocation2 + $0x58] sm:$0xff]
        %v221 = vld [vmem:[#allocation2 + $0x60] sm:$0xff]
        %v222 = vld [vmem:[#allocation2 + $0x68] sm:$0xff]
        %v223 = vld [vmem:[#allocation2 + $0x70] sm:$0xff]
        %v224 = vld [vmem:[#allocation2 + $0x78] sm:$0xff]
        %v225 = vld [vmem:[#allocation2 + $0x80] sm:$0xff]
        %v226 = vld [vmem:[#allocation2 + $0x88] sm:$0xff]
        %v227 = vld [vmem:[#allocation2 + $0x90] sm:$0xff]
        %v228 = vld [vmem:[#allocation2 + $0x98] sm:$0xff]
        %v229 = vld [vmem:[#allocation2 + $0xa0] sm:$0xff]
        %v230 = vld [vmem:[#allocation2 + $0xa8] sm:$0xff]
        %v231 = vld [vmem:[#allocation2 + $0xb0] sm:$0xff]
        %v232 = vld [vmem:[#allocation2 + $0xb8] sm:$0xff]
        %v233 = vld [vmem:[#allocation2 + $0xc0] sm:$0xff]
        %v234 = vld [vmem:[#allocation2 + $0xc8] sm:$0xff]
        %v235 = vld [vmem:[#allocation2 + $0xd0] sm:$0xff]
        %v236 = vld [vmem:[#allocation2 + $0xd8] sm:$0xff]
        %v237 = vld [vmem:[#allocation2 + $0xe0] sm:$0xff]
        %v238 = vld [vmem:[#allocation2 + $0xe8] sm:$0xff]
        %v239 = vld [vmem:[#allocation2 + $0xf0] sm:$0xff]
        %v240 = vld [vmem:[#allocation2 + $0xf8] sm:$0xff]
        %v241 = vld [vmem:[#allocation2 + $0x100] sm:$0xff]
        %v242 = vld [vmem:[#allocation2 + $0x108] sm:$0xff]
        %v243 = vld [vmem:[#allocation2 + $0x110] sm:$0xff]
        %v244 = vld [vmem:[#allocation2 + $0x118] sm:$0xff]
        %v245 = vld [vmem:[#allocation2 + $0x120] sm:$0xff]
        %v246 = vld [vmem:[#allocation2 + $0x128] sm:$0xff]
        %v247 = vld [vmem:[#allocation2 + $0x130] sm:$0xff]
        %v248 = vld [vmem:[#allocation2 + $0x138] sm:$0xff]
        %v249 = vld [vmem:[#allocation2 + $0x140] sm:$0xff]
        %v250 = vld [vmem:[#allocation2 + $0x148] sm:$0xff]
        %v251 = vld [vmem:[#allocation2 + $0x150] sm:$0xff]
        %v252 = vld [vmem:[#allocation2 + $0x158] sm:$0xff]
        %v253 = vld [vmem:[#allocation2 + $0x160] sm:$0xff]
        %v254 = vld [vmem:[#allocation2 + $0x168] sm:$0xff]
        %v255 = vld [vmem:[#allocation2 + $0x170] sm:$0xff]
        %v256 = vld [vmem:[#allocation2 + $0x178] sm:$0xff]
        %v257 = vld [vmem:[#allocation2 + $0x180] sm:$0xff]
        %v258 = vld [vmem:[#allocation2 + $0x188] sm:$0xff]
        %v259 = vld [vmem:[#allocation2 + $0x190] sm:$0xff]
        %v260 = vld [vmem:[#allocation2 + $0x198] sm:$0xff]
        %v261 = vld [vmem:[#allocation2 + $0x1a0] sm:$0xff]
        %v262 = vld [vmem:[#allocation2 + $0x1a8] sm:$0xff]
        %v263 = vld [vmem:[#allocation2 + $0x1b0] sm:$0xff]
        %v264 = vld [vmem:[#allocation2 + $0x1b8] sm:$0xff]
        %v265 = vld [vmem:[#allocation2 + $0x1c0] sm:$0xff]
        %v266 = vld [vmem:[#allocation2 + $0x1c8] sm:$0xff]
        %v267 = vld [vmem:[#allocation2 + $0x1d0] sm:$0xff]
        %v268 = vld [vmem:[#allocation2 + $0x1d8] sm:$0xff]
        %v269 = vld [vmem:[#allocation2 + $0x1e0] sm:$0xff]
        %v270 = vld [vmem:[#allocation2 + $0x1e8] sm:$0xff]
        %v271 = vld [vmem:[#allocation2 + $0x1f0] sm:$0xff]
        %v272 = vld [vmem:[#allocation2 + $0x1f8] sm:$0xff]
        %v273 = vld [vmem:[%s197] sm:$0xfe]
        %v274 = vld [vmem:[%s197 + $0x8] sm:$0xfe]
        %v275 = vld [vmem:[%s197 + $0x20] sm:$0x1]
        %v276 = vld [vmem:[%s197 + $0x28] sm:$0x1]
        %v277 = vpack.c.bf16 %v205, %v273
        %v278 = vpack.c.bf16 %v206, %v274
        %v279 = vpack.c.bf16 %v275, %v275
        %v280 = vpack.c.bf16 %v276, %v276
        %s281 = scalar_lea.vmem [#allocation2], 512
        %v282 = vld [vmem:[%s281] sm:$0xff]
        %v283 = vld [vmem:[%s281 + $0x8] sm:$0xff]
        %v284 = vld [vmem:[%s281 + $0x10] sm:$0xff]
        %v285 = vld [vmem:[%s281 + $0x18] sm:$0xff]
        %v286 = vld [vmem:[%s281 + $0x20] sm:$0xff]
        %v287 = vld [vmem:[%s281 + $0x28] sm:$0xff]
        %v288 = vld [vmem:[%s281 + $0x30] sm:$0xff]
        %v289 = vld [vmem:[%s281 + $0x38] sm:$0xff]
        %v290 = vld [vmem:[%s281 + $0x40] sm:$0xff]
        %v291 = vld [vmem:[%s281 + $0x48] sm:$0xff]
        %v292 = vld [vmem:[%s281 + $0x50] sm:$0xff]
        %v293 = vld [vmem:[%s281 + $0x58] sm:$0xff]
        %v294 = vld [vmem:[%s281 + $0x60] sm:$0xff]
        %v295 = vld [vmem:[%s281 + $0x68] sm:$0xff]
        %v296 = vld [vmem:[%s281 + $0x70] sm:$0xff]
        %v297 = vld [vmem:[%s281 + $0x78] sm:$0xff]
        %v298 = vld [vmem:[%s281 + $0x80] sm:$0xff]
        %v299 = vld [vmem:[%s281 + $0x88] sm:$0xff]
        %v300 = vld [vmem:[%s281 + $0x90] sm:$0xff]
        %v301 = vld [vmem:[%s281 + $0x98] sm:$0xff]
        %v302 = vld [vmem:[%s281 + $0xa0] sm:$0xff]
        %v303 = vld [vmem:[%s281 + $0xa8] sm:$0xff]
        %v304 = vld [vmem:[%s281 + $0xb0] sm:$0xff]
        %v305 = vld [vmem:[%s281 + $0xb8] sm:$0xff]
        %v306 = vld [vmem:[%s281 + $0xc0] sm:$0xff]
        %v307 = vld [vmem:[%s281 + $0xc8] sm:$0xff]
        %v308 = vld [vmem:[%s281 + $0xd0] sm:$0xff]
        %v309 = vld [vmem:[%s281 + $0xd8] sm:$0xff]
        %v310 = vld [vmem:[%s281 + $0xe0] sm:$0xff]
        %v311 = vld [vmem:[%s281 + $0xe8] sm:$0xff]
        %v312 = vld [vmem:[%s281 + $0xf0] sm:$0xff]
        %v313 = vld [vmem:[%s281 + $0xf8] sm:$0xff]
        %v314 = vld [vmem:[%s281 + $0x100] sm:$0xff]
        %v315 = vld [vmem:[%s281 + $0x108] sm:$0xff]
        %v316 = vld [vmem:[%s281 + $0x110] sm:$0xff]
        %v317 = vld [vmem:[%s281 + $0x118] sm:$0xff]
        %v318 = vld [vmem:[%s281 + $0x120] sm:$0xff]
        %v319 = vld [vmem:[%s281 + $0x128] sm:$0xff]
        %v320 = vld [vmem:[%s281 + $0x130] sm:$0xff]
        %v321 = vld [vmem:[%s281 + $0x138] sm:$0xff]
        %v322 = vld [vmem:[%s281 + $0x140] sm:$0xff]
        %v323 = vld [vmem:[%s281 + $0x148] sm:$0xff]
        %v324 = vld [vmem:[%s281 + $0x150] sm:$0xff]
        %v325 = vld [vmem:[%s281 + $0x158] sm:$0xff]
        %v326 = vld [vmem:[%s281 + $0x160] sm:$0xff]
        %v327 = vld [vmem:[%s281 + $0x168] sm:$0xff]
        %v328 = vld [vmem:[%s281 + $0x170] sm:$0xff]
        %v329 = vld [vmem:[%s281 + $0x178] sm:$0xff]
        %v330 = vld [vmem:[%s281 + $0x180] sm:$0xff]
        %v331 = vld [vmem:[%s281 + $0x188] sm:$0xff]
        %v332 = vld [vmem:[%s281 + $0x190] sm:$0xff]
        %v333 = vld [vmem:[%s281 + $0x198] sm:$0xff]
        %v334 = vld [vmem:[%s281 + $0x1a0] sm:$0xff]
        %v335 = vld [vmem:[%s281 + $0x1a8] sm:$0xff]
        %v336 = vld [vmem:[%s281 + $0x1b0] sm:$0xff]
        %v337 = vld [vmem:[%s281 + $0x1b8] sm:$0xff]
        %v338 = vld [vmem:[%s281 + $0x1c0] sm:$0xff]
        %v339 = vld [vmem:[%s281 + $0x1c8] sm:$0xff]
        %v340 = vld [vmem:[%s281 + $0x1d0] sm:$0xff]
        %v341 = vld [vmem:[%s281 + $0x1d8] sm:$0xff]
        %v342 = vld [vmem:[%s281 + $0x1e0] sm:$0xff]
        %v343 = vld [vmem:[%s281 + $0x1e8] sm:$0xff]
        %v344 = vld [vmem:[%s281 + $0x1f0] sm:$0xff]
        %v345 = vld [vmem:[%s281 + $0x1f8] sm:$0xff]
        %vm346 = vsmask.f32 7424
        %v348 = vshrl.u32 %v277, 16
        %v350 = vshll.u32 %v277, 16
        %v352 = vrot.slane %v350, 1
        %v353 = vor.u32 %v348, %v352
        %v355 = vshll.u32 %v279, 16
        %v357 = vrot.slane %v355, 1
        %v358 = vsel %vm346, %v353, %v357
        %v360 = vshrl.u32 %v278, 16
        %v362 = vshll.u32 %v278, 16
        %v364 = vrot.slane %v362, 1
        %v365 = vor.u32 %v360, %v364
        %v367 = vshll.u32 %v280, 16
        %v369 = vrot.slane %v367, 1
        %v370 = vsel %vm346, %v365, %v369
        %v437 = vunpack.c.l.b16 %v282
        %v438 = vunpack.c.h.b16 %v282
        %v439 = vunpack.c.l.b16 %v283
        %v440 = vunpack.c.h.b16 %v283
        %v441 = vunpack.c.l.b16 %v284
        %v442 = vunpack.c.h.b16 %v284
        %v443 = vunpack.c.l.b16 %v285
        %v444 = vunpack.c.h.b16 %v285
        %v445 = vunpack.c.l.b16 %v286
        %v446 = vunpack.c.h.b16 %v286
        %v447 = vunpack.c.l.b16 %v287
        %v448 = vunpack.c.h.b16 %v287
        %v449 = vunpack.c.l.b16 %v288
        %v450 = vunpack.c.h.b16 %v288
        %v451 = vunpack.c.l.b16 %v289
        %v452 = vunpack.c.h.b16 %v289
        %v453 = vunpack.c.l.b16 %v290
        %v454 = vunpack.c.h.b16 %v290
        %v455 = vunpack.c.l.b16 %v291
        %v456 = vunpack.c.h.b16 %v291
        %v457 = vunpack.c.l.b16 %v292
        %v458 = vunpack.c.h.b16 %v292
        %v459 = vunpack.c.l.b16 %v293
        %v460 = vunpack.c.h.b16 %v293
        %v461 = vunpack.c.l.b16 %v294
        %v462 = vunpack.c.h.b16 %v294
        %v463 = vunpack.c.l.b16 %v295
        %v464 = vunpack.c.h.b16 %v295
        %v465 = vunpack.c.l.b16 %v296
        %v466 = vunpack.c.h.b16 %v296
        %v467 = vunpack.c.l.b16 %v297
        %v468 = vunpack.c.h.b16 %v297
        %v469 = vunpack.c.l.b16 %v298
        %v470 = vunpack.c.h.b16 %v298
        %v471 = vunpack.c.l.b16 %v299
        %v472 = vunpack.c.h.b16 %v299
        %v473 = vunpack.c.l.b16 %v300
        %v474 = vunpack.c.h.b16 %v300
        %v475 = vunpack.c.l.b16 %v301
        %v476 = vunpack.c.h.b16 %v301
        %v477 = vunpack.c.l.b16 %v302
        %v478 = vunpack.c.h.b16 %v302
        %v479 = vunpack.c.l.b16 %v303
        %v480 = vunpack.c.h.b16 %v303
        %v481 = vunpack.c.l.b16 %v304
        %v482 = vunpack.c.h.b16 %v304
        %v483 = vunpack.c.l.b16 %v305
        %v484 = vunpack.c.h.b16 %v305
        %v485 = vunpack.c.l.b16 %v306
        %v486 = vunpack.c.h.b16 %v306
        %v487 = vunpack.c.l.b16 %v307
        %v488 = vunpack.c.h.b16 %v307
        %v489 = vunpack.c.l.b16 %v308
        %v490 = vunpack.c.h.b16 %v308
        %v491 = vunpack.c.l.b16 %v309
        %v492 = vunpack.c.h.b16 %v309
        %v493 = vunpack.c.l.b16 %v310
        %v494 = vunpack.c.h.b16 %v310
        %v495 = vunpack.c.l.b16 %v311
        %v496 = vunpack.c.h.b16 %v311
        %v497 = vunpack.c.l.b16 %v312
        %v498 = vunpack.c.h.b16 %v312
        %v499 = vunpack.c.l.b16 %v313
        %v500 = vunpack.c.h.b16 %v313
        %v501 = vunpack.c.l.b16 %v314
        %v502 = vunpack.c.h.b16 %v314
        %v503 = vunpack.c.l.b16 %v315
        %v504 = vunpack.c.h.b16 %v315
        %v505 = vunpack.c.l.b16 %v316
        %v506 = vunpack.c.h.b16 %v316
        %v507 = vunpack.c.l.b16 %v317
        %v508 = vunpack.c.h.b16 %v317
        %v509 = vunpack.c.l.b16 %v318
        %v510 = vunpack.c.h.b16 %v318
        %v511 = vunpack.c.l.b16 %v319
        %v512 = vunpack.c.h.b16 %v319
        %v513 = vunpack.c.l.b16 %v320
        %v514 = vunpack.c.h.b16 %v320
        %v515 = vunpack.c.l.b16 %v321
        %v516 = vunpack.c.h.b16 %v321
        %v517 = vunpack.c.l.b16 %v322
        %v518 = vunpack.c.h.b16 %v322
        %v519 = vunpack.c.l.b16 %v323
        %v520 = vunpack.c.h.b16 %v323
        %v521 = vunpack.c.l.b16 %v324
        %v522 = vunpack.c.h.b16 %v324
        %v523 = vunpack.c.l.b16 %v325
        %v524 = vunpack.c.h.b16 %v325
        %v525 = vunpack.c.l.b16 %v326
        %v526 = vunpack.c.h.b16 %v326
        %v527 = vunpack.c.l.b16 %v327
        %v528 = vunpack.c.h.b16 %v327
        %v529 = vunpack.c.l.b16 %v328
        %v530 = vunpack.c.h.b16 %v328
        %v531 = vunpack.c.l.b16 %v329
        %v532 = vunpack.c.h.b16 %v329
        %v533 = vunpack.c.l.b16 %v330
        %v534 = vunpack.c.h.b16 %v330
        %v535 = vunpack.c.l.b16 %v331
        %v536 = vunpack.c.h.b16 %v331
        %v537 = vunpack.c.l.b16 %v332
        %v538 = vunpack.c.h.b16 %v332
        %v539 = vunpack.c.l.b16 %v333
        %v540 = vunpack.c.h.b16 %v333
        %v541 = vunpack.c.l.b16 %v334
        %v542 = vunpack.c.h.b16 %v334
        %v543 = vunpack.c.l.b16 %v335
        %v544 = vunpack.c.h.b16 %v335
        %v545 = vunpack.c.l.b16 %v336
        %v546 = vunpack.c.h.b16 %v336
        %v547 = vunpack.c.l.b16 %v337
        %v548 = vunpack.c.h.b16 %v337
        %v549 = vunpack.c.l.b16 %v338
        %v550 = vunpack.c.h.b16 %v338
        %v551 = vunpack.c.l.b16 %v339
        %v552 = vunpack.c.h.b16 %v339
        %v553 = vunpack.c.l.b16 %v340
        %v554 = vunpack.c.h.b16 %v340
        %v555 = vunpack.c.l.b16 %v341
        %v556 = vunpack.c.h.b16 %v341
        %v557 = vunpack.c.l.b16 %v342
        %v558 = vunpack.c.h.b16 %v342
        %v559 = vunpack.c.l.b16 %v343
        %v560 = vunpack.c.h.b16 %v343
        %v561 = vunpack.c.l.b16 %v344
        %v562 = vunpack.c.h.b16 %v344
        %v563 = vunpack.c.l.b16 %v345
        %v564 = vunpack.c.h.b16 %v345
        %v565 = vpack.c.b16 %v441, %v437
        %v566 = vpack.c.b16 %v442, %v438
        %v567 = vpack.c.b16 %v443, %v439
        %v568 = vpack.c.b16 %v444, %v440
        %v569 = vpack.c.b16 %v449, %v445
        %v570 = vpack.c.b16 %v450, %v446
        %v571 = vpack.c.b16 %v451, %v447
        %v572 = vpack.c.b16 %v452, %v448
        %v573 = vpack.c.b16 %v457, %v453
        %v574 = vpack.c.b16 %v458, %v454
        %v575 = vpack.c.b16 %v459, %v455
        %v576 = vpack.c.b16 %v460, %v456
        %v577 = vpack.c.b16 %v465, %v461
        %v578 = vpack.c.b16 %v466, %v462
        %v579 = vpack.c.b16 %v467, %v463
        %v580 = vpack.c.b16 %v468, %v464
        %v581 = vpack.c.b16 %v473, %v469
        %v582 = vpack.c.b16 %v474, %v470
        %v583 = vpack.c.b16 %v475, %v471
        %v584 = vpack.c.b16 %v476, %v472
        %v585 = vpack.c.b16 %v481, %v477
        %v586 = vpack.c.b16 %v482, %v478
        %v587 = vpack.c.b16 %v483, %v479
        %v588 = vpack.c.b16 %v484, %v480
        %v589 = vpack.c.b16 %v489, %v485
        %v590 = vpack.c.b16 %v490, %v486
        %v591 = vpack.c.b16 %v491, %v487
        %v592 = vpack.c.b16 %v492, %v488
        %v593 = vpack.c.b16 %v497, %v493
        %v594 = vpack.c.b16 %v498, %v494
        %v595 = vpack.c.b16 %v499, %v495
        %v596 = vpack.c.b16 %v500, %v496
        %v597 = vpack.c.b16 %v505, %v501
        %v598 = vpack.c.b16 %v506, %v502
        %v599 = vpack.c.b16 %v507, %v503
        %v600 = vpack.c.b16 %v508, %v504
        %v601 = vpack.c.b16 %v513, %v509
        %v602 = vpack.c.b16 %v514, %v510
        %v603 = vpack.c.b16 %v515, %v511
        %v604 = vpack.c.b16 %v516, %v512
        %v605 = vpack.c.b16 %v521, %v517
        %v606 = vpack.c.b16 %v522, %v518
        %v607 = vpack.c.b16 %v523, %v519
        %v608 = vpack.c.b16 %v524, %v520
        %v609 = vpack.c.b16 %v529, %v525
        %v610 = vpack.c.b16 %v530, %v526
        %v611 = vpack.c.b16 %v531, %v527
        %v612 = vpack.c.b16 %v532, %v528
        %v613 = vpack.c.b16 %v537, %v533
        %v614 = vpack.c.b16 %v538, %v534
        %v615 = vpack.c.b16 %v539, %v535
        %v616 = vpack.c.b16 %v540, %v536
        %v617 = vpack.c.b16 %v545, %v541
        %v618 = vpack.c.b16 %v546, %v542
        %v619 = vpack.c.b16 %v547, %v543
        %v620 = vpack.c.b16 %v548, %v544
        %v621 = vpack.c.b16 %v553, %v549
        %v622 = vpack.c.b16 %v554, %v550
        %v623 = vpack.c.b16 %v555, %v551
        %v624 = vpack.c.b16 %v556, %v552
        %v625 = vpack.c.b16 %v561, %v557
        %v626 = vpack.c.b16 %v562, %v558
        %v627 = vpack.c.b16 %v563, %v559
        %v628 = vpack.c.b16 %v564, %v560
        %693 = vmatpush.bf16.msra.mxu0 %v593
        %694 = vmatpush.bf16.msra.mxu0 %v589
        %695 = vmatpush.bf16.msra.mxu0 %v585
        %696 = vmatpush.bf16.msra.mxu0 %v581
        %697 = vmatpush.bf16.msra.mxu0 %v577
        %698 = vmatpush.bf16.msra.mxu0 %v573
        %699 = vmatpush.bf16.msra.mxu0 %v569
        %700 = vmatpush.bf16.msra.mxu0 %v565
        %701 = vmatmul.bf16.gmra.mxu0 %v358
        %v702 = vpop.f32.mrf.mxu0
        %v703 = vadd.f32 0.0, %v702
        %v704 = vpop.f32.mrf.mxu0
        %v705 = vadd.f32 0.0, %v704
        %706 = vdwg.mxu0
        %707 = vmatpush.bf16.msra.mxu0 %v625
        %708 = vmatpush.bf16.msra.mxu0 %v621
        %709 = vmatpush.bf16.msra.mxu0 %v617
        %710 = vmatpush.bf16.msra.mxu0 %v613
        %711 = vmatpush.bf16.msra.mxu0 %v609
        %712 = vmatpush.bf16.msra.mxu0 %v605
        %713 = vmatpush.bf16.msra.mxu0 %v601
        %714 = vmatpush.bf16.msra.mxu0 %v597
        %715 = vmatmul.bf16.gmra.mxu0 %v370
        %v716 = vpop.f32.mrf.mxu0
        %v717 = vadd.f32 %v703, %v716
        %v718 = vpop.f32.mrf.mxu0
        %v719 = vadd.f32 %v705, %v718
        %720 = vdwg.mxu0
        %721 = vmatpush.bf16.msra.mxu0 %v594
        %722 = vmatpush.bf16.msra.mxu0 %v590
        %723 = vmatpush.bf16.msra.mxu0 %v586
        %724 = vmatpush.bf16.msra.mxu0 %v582
        %725 = vmatpush.bf16.msra.mxu0 %v578
        %726 = vmatpush.bf16.msra.mxu0 %v574
        %727 = vmatpush.bf16.msra.mxu0 %v570
        %728 = vmatpush.bf16.msra.mxu0 %v566
        %729 = vmatmul.bf16.gmra.mxu0 %v358
        %v730 = vpop.f32.mrf.mxu0
        %v731 = vadd.f32 0.0, %v730
        %v732 = vpop.f32.mrf.mxu0
        %v733 = vadd.f32 0.0, %v732
        %734 = vdwg.mxu0
        %735 = vmatpush.bf16.msra.mxu0 %v626
        %736 = vmatpush.bf16.msra.mxu0 %v622
        %737 = vmatpush.bf16.msra.mxu0 %v618
        %738 = vmatpush.bf16.msra.mxu0 %v614
        %739 = vmatpush.bf16.msra.mxu0 %v610
        %740 = vmatpush.bf16.msra.mxu0 %v606
        %741 = vmatpush.bf16.msra.mxu0 %v602
        %742 = vmatpush.bf16.msra.mxu0 %v598
        %743 = vmatmul.bf16.gmra.mxu0 %v370
        %v744 = vpop.f32.mrf.mxu0
        %v745 = vadd.f32 %v731, %v744
        %v746 = vpop.f32.mrf.mxu0
        %v747 = vadd.f32 %v733, %v746
        %748 = vdwg.mxu0
        %749 = vmatpush.bf16.msra.mxu0 %v595
        %750 = vmatpush.bf16.msra.mxu0 %v591
        %751 = vmatpush.bf16.msra.mxu0 %v587
        %752 = vmatpush.bf16.msra.mxu0 %v583
        %753 = vmatpush.bf16.msra.mxu0 %v579
        %754 = vmatpush.bf16.msra.mxu0 %v575
        %755 = vmatpush.bf16.msra.mxu0 %v571
        %756 = vmatpush.bf16.msra.mxu0 %v567
        %757 = vmatmul.bf16.gmra.mxu0 %v358
        %v758 = vpop.f32.mrf.mxu0
        %v759 = vadd.f32 0.0, %v758
        %v760 = vpop.f32.mrf.mxu0
        %v761 = vadd.f32 0.0, %v760
        %762 = vdwg.mxu0
        %763 = vmatpush.bf16.msra.mxu0 %v627
        %764 = vmatpush.bf16.msra.mxu0 %v623
        %765 = vmatpush.bf16.msra.mxu0 %v619
        %766 = vmatpush.bf16.msra.mxu0 %v615
        %767 = vmatpush.bf16.msra.mxu0 %v611
        %768 = vmatpush.bf16.msra.mxu0 %v607
        %769 = vmatpush.bf16.msra.mxu0 %v603
        %770 = vmatpush.bf16.msra.mxu0 %v599
        %771 = vmatmul.bf16.gmra.mxu0 %v370
        %v772 = vpop.f32.mrf.mxu0
        %v773 = vadd.f32 %v759, %v772
        %v774 = vpop.f32.mrf.mxu0
        %v775 = vadd.f32 %v761, %v774
        %776 = vdwg.mxu0
        %777 = vmatpush.bf16.msra.mxu0 %v596
        %778 = vmatpush.bf16.msra.mxu0 %v592
        %779 = vmatpush.bf16.msra.mxu0 %v588
        %780 = vmatpush.bf16.msra.mxu0 %v584
        %781 = vmatpush.bf16.msra.mxu0 %v580
        %782 = vmatpush.bf16.msra.mxu0 %v576
        %783 = vmatpush.bf16.msra.mxu0 %v572
        %784 = vmatpush.bf16.msra.mxu0 %v568
        %785 = vmatmul.bf16.gmra.mxu0 %v358
        %v786 = vpop.f32.mrf.mxu0
        %v787 = vadd.f32 0.0, %v786
        %v788 = vpop.f32.mrf.mxu0
        %v789 = vadd.f32 0.0, %v788
        %790 = vdwg.mxu0
        %791 = vmatpush.bf16.msra.mxu0 %v628
        %792 = vmatpush.bf16.msra.mxu0 %v624
        %793 = vmatpush.bf16.msra.mxu0 %v620
        %794 = vmatpush.bf16.msra.mxu0 %v616
        %795 = vmatpush.bf16.msra.mxu0 %v612
        %796 = vmatpush.bf16.msra.mxu0 %v608
        %797 = vmatpush.bf16.msra.mxu0 %v604
        %798 = vmatpush.bf16.msra.mxu0 %v600
        %799 = vmatmul.bf16.gmra.mxu0 %v370
        %v800 = vpop.f32.mrf.mxu0
        %v801 = vadd.f32 %v787, %v800
        %v802 = vpop.f32.mrf.mxu0
        %v803 = vadd.f32 %v789, %v802
        %804 = vdwg.mxu0
        %v869 = vunpack.c.l.b16 %v209
        %v870 = vunpack.c.h.b16 %v209
        %v871 = vunpack.c.l.b16 %v210
        %v872 = vunpack.c.h.b16 %v210
        %v873 = vunpack.c.l.b16 %v211
        %v874 = vunpack.c.h.b16 %v211
        %v875 = vunpack.c.l.b16 %v212
        %v876 = vunpack.c.h.b16 %v212
        %v877 = vunpack.c.l.b16 %v213
        %v878 = vunpack.c.h.b16 %v213
        %v879 = vunpack.c.l.b16 %v214
        %v880 = vunpack.c.h.b16 %v214
        %v881 = vunpack.c.l.b16 %v215
        %v882 = vunpack.c.h.b16 %v215
        %v883 = vunpack.c.l.b16 %v216
        %v884 = vunpack.c.h.b16 %v216
        %v885 = vunpack.c.l.b16 %v217
        %v886 = vunpack.c.h.b16 %v217
        %v887 = vunpack.c.l.b16 %v218
        %v888 = vunpack.c.h.b16 %v218
        %v889 = vunpack.c.l.b16 %v219
        %v890 = vunpack.c.h.b16 %v219
        %v891 = vunpack.c.l.b16 %v220
        %v892 = vunpack.c.h.b16 %v220
        %v893 = vunpack.c.l.b16 %v221
        %v894 = vunpack.c.h.b16 %v221
        %v895 = vunpack.c.l.b16 %v222
        %v896 = vunpack.c.h.b16 %v222
        %v897 = vunpack.c.l.b16 %v223
        %v898 = vunpack.c.h.b16 %v223
        %v899 = vunpack.c.l.b16 %v224
        %v900 = vunpack.c.h.b16 %v224
        %v901 = vunpack.c.l.b16 %v225
        %v902 = vunpack.c.h.b16 %v225
        %v903 = vunpack.c.l.b16 %v226
        %v904 = vunpack.c.h.b16 %v226
        %v905 = vunpack.c.l.b16 %v227
        %v906 = vunpack.c.h.b16 %v227
        %v907 = vunpack.c.l.b16 %v228
        %v908 = vunpack.c.h.b16 %v228
        %v909 = vunpack.c.l.b16 %v229
        %v910 = vunpack.c.h.b16 %v229
        %v911 = vunpack.c.l.b16 %v230
        %v912 = vunpack.c.h.b16 %v230
        %v913 = vunpack.c.l.b16 %v231
        %v914 = vunpack.c.h.b16 %v231
        %v915 = vunpack.c.l.b16 %v232
        %v916 = vunpack.c.h.b16 %v232
        %v917 = vunpack.c.l.b16 %v233
        %v918 = vunpack.c.h.b16 %v233
        %v919 = vunpack.c.l.b16 %v234
        %v920 = vunpack.c.h.b16 %v234
        %v921 = vunpack.c.l.b16 %v235
        %v922 = vunpack.c.h.b16 %v235
        %v923 = vunpack.c.l.b16 %v236
        %v924 = vunpack.c.h.b16 %v236
        %v925 = vunpack.c.l.b16 %v237
        %v926 = vunpack.c.h.b16 %v237
        %v927 = vunpack.c.l.b16 %v238
        %v928 = vunpack.c.h.b16 %v238
        %v929 = vunpack.c.l.b16 %v239
        %v930 = vunpack.c.h.b16 %v239
        %v931 = vunpack.c.l.b16 %v240
        %v932 = vunpack.c.h.b16 %v240
        %v933 = vunpack.c.l.b16 %v241
        %v934 = vunpack.c.h.b16 %v241
        %v935 = vunpack.c.l.b16 %v242
        %v936 = vunpack.c.h.b16 %v242
        %v937 = vunpack.c.l.b16 %v243
        %v938 = vunpack.c.h.b16 %v243
        %v939 = vunpack.c.l.b16 %v244
        %v940 = vunpack.c.h.b16 %v244
        %v941 = vunpack.c.l.b16 %v245
        %v942 = vunpack.c.h.b16 %v245
        %v943 = vunpack.c.l.b16 %v246
        %v944 = vunpack.c.h.b16 %v246
        %v945 = vunpack.c.l.b16 %v247
        %v946 = vunpack.c.h.b16 %v247
        %v947 = vunpack.c.l.b16 %v248
        %v948 = vunpack.c.h.b16 %v248
        %v949 = vunpack.c.l.b16 %v249
        %v950 = vunpack.c.h.b16 %v249
        %v951 = vunpack.c.l.b16 %v250
        %v952 = vunpack.c.h.b16 %v250
        %v953 = vunpack.c.l.b16 %v251
        %v954 = vunpack.c.h.b16 %v251
        %v955 = vunpack.c.l.b16 %v252
        %v956 = vunpack.c.h.b16 %v252
        %v957 = vunpack.c.l.b16 %v253
        %v958 = vunpack.c.h.b16 %v253
        %v959 = vunpack.c.l.b16 %v254
        %v960 = vunpack.c.h.b16 %v254
        %v961 = vunpack.c.l.b16 %v255
        %v962 = vunpack.c.h.b16 %v255
        %v963 = vunpack.c.l.b16 %v256
        %v964 = vunpack.c.h.b16 %v256
        %v965 = vunpack.c.l.b16 %v257
        %v966 = vunpack.c.h.b16 %v257
        %v967 = vunpack.c.l.b16 %v258
        %v968 = vunpack.c.h.b16 %v258
        %v969 = vunpack.c.l.b16 %v259
        %v970 = vunpack.c.h.b16 %v259
        %v971 = vunpack.c.l.b16 %v260
        %v972 = vunpack.c.h.b16 %v260
        %v973 = vunpack.c.l.b16 %v261
        %v974 = vunpack.c.h.b16 %v261
        %v975 = vunpack.c.l.b16 %v262
        %v976 = vunpack.c.h.b16 %v262
        %v977 = vunpack.c.l.b16 %v263
        %v978 = vunpack.c.h.b16 %v263
        %v979 = vunpack.c.l.b16 %v264
        %v980 = vunpack.c.h.b16 %v264
        %v981 = vunpack.c.l.b16 %v265
        %v982 = vunpack.c.h.b16 %v265
        %v983 = vunpack.c.l.b16 %v266
        %v984 = vunpack.c.h.b16 %v266
        %v985 = vunpack.c.l.b16 %v267
        %v986 = vunpack.c.h.b16 %v267
        %v987 = vunpack.c.l.b16 %v268
        %v988 = vunpack.c.h.b16 %v268
        %v989 = vunpack.c.l.b16 %v269
        %v990 = vunpack.c.h.b16 %v269
        %v991 = vunpack.c.l.b16 %v270
        %v992 = vunpack.c.h.b16 %v270
        %v993 = vunpack.c.l.b16 %v271
        %v994 = vunpack.c.h.b16 %v271
        %v995 = vunpack.c.l.b16 %v272
        %v996 = vunpack.c.h.b16 %v272
        %v997 = vpack.c.b16 %v873, %v869
        %v998 = vpack.c.b16 %v874, %v870
        %v999 = vpack.c.b16 %v875, %v871
        %v1000 = vpack.c.b16 %v876, %v872
        %v1001 = vpack.c.b16 %v881, %v877
        %v1002 = vpack.c.b16 %v882, %v878
        %v1003 = vpack.c.b16 %v883, %v879
        %v1004 = vpack.c.b16 %v884, %v880
        %v1005 = vpack.c.b16 %v889, %v885
        %v1006 = vpack.c.b16 %v890, %v886
        %v1007 = vpack.c.b16 %v891, %v887
        %v1008 = vpack.c.b16 %v892, %v888
        %v1009 = vpack.c.b16 %v897, %v893
        %v1010 = vpack.c.b16 %v898, %v894
        %v1011 = vpack.c.b16 %v899, %v895
        %v1012 = vpack.c.b16 %v900, %v896
        %v1013 = vpack.c.b16 %v905, %v901
        %v1014 = vpack.c.b16 %v906, %v902
        %v1015 = vpack.c.b16 %v907, %v903
        %v1016 = vpack.c.b16 %v908, %v904
        %v1017 = vpack.c.b16 %v913, %v909
        %v1018 = vpack.c.b16 %v914, %v910
        %v1019 = vpack.c.b16 %v915, %v911
        %v1020 = vpack.c.b16 %v916, %v912
        %v1021 = vpack.c.b16 %v921, %v917
        %v1022 = vpack.c.b16 %v922, %v918
        %v1023 = vpack.c.b16 %v923, %v919
        %v1024 = vpack.c.b16 %v924, %v920
        %v1025 = vpack.c.b16 %v929, %v925
        %v1026 = vpack.c.b16 %v930, %v926
        %v1027 = vpack.c.b16 %v931, %v927
        %v1028 = vpack.c.b16 %v932, %v928
        %v1029 = vpack.c.b16 %v937, %v933
        %v1030 = vpack.c.b16 %v938, %v934
        %v1031 = vpack.c.b16 %v939, %v935
        %v1032 = vpack.c.b16 %v940, %v936
        %v1033 = vpack.c.b16 %v945, %v941
        %v1034 = vpack.c.b16 %v946, %v942
        %v1035 = vpack.c.b16 %v947, %v943
        %v1036 = vpack.c.b16 %v948, %v944
        %v1037 = vpack.c.b16 %v953, %v949
        %v1038 = vpack.c.b16 %v954, %v950
        %v1039 = vpack.c.b16 %v955, %v951
        %v1040 = vpack.c.b16 %v956, %v952
        %v1041 = vpack.c.b16 %v961, %v957
        %v1042 = vpack.c.b16 %v962, %v958
        %v1043 = vpack.c.b16 %v963, %v959
        %v1044 = vpack.c.b16 %v964, %v960
        %v1045 = vpack.c.b16 %v969, %v965
        %v1046 = vpack.c.b16 %v970, %v966
        %v1047 = vpack.c.b16 %v971, %v967
        %v1048 = vpack.c.b16 %v972, %v968
        %v1049 = vpack.c.b16 %v977, %v973
        %v1050 = vpack.c.b16 %v978, %v974
        %v1051 = vpack.c.b16 %v979, %v975
        %v1052 = vpack.c.b16 %v980, %v976
        %v1053 = vpack.c.b16 %v985, %v981
        %v1054 = vpack.c.b16 %v986, %v982
        %v1055 = vpack.c.b16 %v987, %v983
        %v1056 = vpack.c.b16 %v988, %v984
        %v1057 = vpack.c.b16 %v993, %v989
        %v1058 = vpack.c.b16 %v994, %v990
        %v1059 = vpack.c.b16 %v995, %v991
        %v1060 = vpack.c.b16 %v996, %v992
        %1125 = vmatpush.bf16.msra.mxu0 %v1025
        %1126 = vmatpush.bf16.msra.mxu0 %v1021
        %1127 = vmatpush.bf16.msra.mxu0 %v1017
        %1128 = vmatpush.bf16.msra.mxu0 %v1013
        %1129 = vmatpush.bf16.msra.mxu0 %v1009
        %1130 = vmatpush.bf16.msra.mxu0 %v1005
        %1131 = vmatpush.bf16.msra.mxu0 %v1001
        %1132 = vmatpush.bf16.msra.mxu0 %v997
        %1133 = vmatmul.bf16.gmra.mxu0 %v207
        %v1134 = vpop.f32.mrf.mxu0
        %v1135 = vadd.f32 %v717, %v1134
        %v1136 = vpop.f32.mrf.mxu0
        %v1137 = vadd.f32 %v719, %v1136
        %1138 = vdwg.mxu0
        %1139 = vmatpush.bf16.msra.mxu0 %v1057
        %1140 = vmatpush.bf16.msra.mxu0 %v1053
        %1141 = vmatpush.bf16.msra.mxu0 %v1049
        %1142 = vmatpush.bf16.msra.mxu0 %v1045
        %1143 = vmatpush.bf16.msra.mxu0 %v1041
        %1144 = vmatpush.bf16.msra.mxu0 %v1037
        %1145 = vmatpush.bf16.msra.mxu0 %v1033
        %1146 = vmatpush.bf16.msra.mxu0 %v1029
        %1147 = vmatmul.bf16.gmra.mxu0 %v208
        %v1148 = vpop.f32.mrf.mxu0
        %v1149 = vadd.f32 %v1135, %v1148
        %v1150 = vpop.f32.mrf.mxu0
        %v1151 = vadd.f32 %v1137, %v1150
        %1152 = vdwg.mxu0
        %1153 = vmatpush.bf16.msra.mxu0 %v1026
        %1154 = vmatpush.bf16.msra.mxu0 %v1022
        %1155 = vmatpush.bf16.msra.mxu0 %v1018
        %1156 = vmatpush.bf16.msra.mxu0 %v1014
        %1157 = vmatpush.bf16.msra.mxu0 %v1010
        %1158 = vmatpush.bf16.msra.mxu0 %v1006
        %1159 = vmatpush.bf16.msra.mxu0 %v1002
        %1160 = vmatpush.bf16.msra.mxu0 %v998
        %1161 = vmatmul.bf16.gmra.mxu0 %v207
        %v1162 = vpop.f32.mrf.mxu0
        %v1163 = vadd.f32 %v745, %v1162
        %v1164 = vpop.f32.mrf.mxu0
        %v1165 = vadd.f32 %v747, %v1164
        %1166 = vdwg.mxu0
        %1167 = vmatpush.bf16.msra.mxu0 %v1058
        %1168 = vmatpush.bf16.msra.mxu0 %v1054
        %1169 = vmatpush.bf16.msra.mxu0 %v1050
        %1170 = vmatpush.bf16.msra.mxu0 %v1046
        %1171 = vmatpush.bf16.msra.mxu0 %v1042
        %1172 = vmatpush.bf16.msra.mxu0 %v1038
        %1173 = vmatpush.bf16.msra.mxu0 %v1034
        %1174 = vmatpush.bf16.msra.mxu0 %v1030
        %1175 = vmatmul.bf16.gmra.mxu0 %v208
        %v1176 = vpop.f32.mrf.mxu0
        %v1177 = vadd.f32 %v1163, %v1176
        %v1178 = vpop.f32.mrf.mxu0
        %v1179 = vadd.f32 %v1165, %v1178
        %1180 = vdwg.mxu0
        %1181 = vmatpush.bf16.msra.mxu0 %v1027
        %1182 = vmatpush.bf16.msra.mxu0 %v1023
        %1183 = vmatpush.bf16.msra.mxu0 %v1019
        %1184 = vmatpush.bf16.msra.mxu0 %v1015
        %1185 = vmatpush.bf16.msra.mxu0 %v1011
        %1186 = vmatpush.bf16.msra.mxu0 %v1007
        %1187 = vmatpush.bf16.msra.mxu0 %v1003
        %1188 = vmatpush.bf16.msra.mxu0 %v999
        %1189 = vmatmul.bf16.gmra.mxu0 %v207
        %v1190 = vpop.f32.mrf.mxu0
        %v1191 = vadd.f32 %v773, %v1190
        %v1192 = vpop.f32.mrf.mxu0
        %v1193 = vadd.f32 %v775, %v1192
        %1194 = vdwg.mxu0
        %1195 = vmatpush.bf16.msra.mxu0 %v1059
        %1196 = vmatpush.bf16.msra.mxu0 %v1055
        %1197 = vmatpush.bf16.msra.mxu0 %v1051
        %1198 = vmatpush.bf16.msra.mxu0 %v1047
        %1199 = vmatpush.bf16.msra.mxu0 %v1043
        %1200 = vmatpush.bf16.msra.mxu0 %v1039
        %1201 = vmatpush.bf16.msra.mxu0 %v1035
        %1202 = vmatpush.bf16.msra.mxu0 %v1031
        %1203 = vmatmul.bf16.gmra.mxu0 %v208
        %v1204 = vpop.f32.mrf.mxu0
        %v1205 = vadd.f32 %v1191, %v1204
        %v1206 = vpop.f32.mrf.mxu0
        %v1207 = vadd.f32 %v1193, %v1206
        %1208 = vdwg.mxu0
        %1209 = vmatpush.bf16.msra.mxu0 %v1028
        %1210 = vmatpush.bf16.msra.mxu0 %v1024
        %1211 = vmatpush.bf16.msra.mxu0 %v1020
        %1212 = vmatpush.bf16.msra.mxu0 %v1016
        %1213 = vmatpush.bf16.msra.mxu0 %v1012
        %1214 = vmatpush.bf16.msra.mxu0 %v1008
        %1215 = vmatpush.bf16.msra.mxu0 %v1004
        %1216 = vmatpush.bf16.msra.mxu0 %v1000
        %1217 = vmatmul.bf16.gmra.mxu0 %v207
        %v1218 = vpop.f32.mrf.mxu0
        %v1219 = vadd.f32 %v801, %v1218
        %v1220 = vpop.f32.mrf.mxu0
        %v1221 = vadd.f32 %v803, %v1220
        %1222 = vdwg.mxu0
        %1223 = vmatpush.bf16.msra.mxu0 %v1060
        %1224 = vmatpush.bf16.msra.mxu0 %v1056
        %1225 = vmatpush.bf16.msra.mxu0 %v1052
        %1226 = vmatpush.bf16.msra.mxu0 %v1048
        %1227 = vmatpush.bf16.msra.mxu0 %v1044
        %1228 = vmatpush.bf16.msra.mxu0 %v1040
        %1229 = vmatpush.bf16.msra.mxu0 %v1036
        %1230 = vmatpush.bf16.msra.mxu0 %v1032
        %1231 = vmatmul.bf16.gmra.mxu0 %v208
        %v1232 = vpop.f32.mrf.mxu0
        %v1233 = vadd.f32 %v1219, %v1232
        %v1234 = vpop.f32.mrf.mxu0
        %v1235 = vadd.f32 %v1221, %v1234
        %1236 = vdwg.mxu0
        %v1237 = vld [vmem:[%s197] sm:$0xfc]
        %v1238 = vld [vmem:[%s197 + $0x8] sm:$0xfc]
        %v1239 = vld [vmem:[%s197 + $0x20] sm:$0x3]
        %v1240 = vld [vmem:[%s197 + $0x28] sm:$0x3]
        %v1241 = vpack.c.bf16 %v205, %v1237
        %v1242 = vpack.c.bf16 %v206, %v1238
        %v1243 = vpack.c.bf16 %v1239, %v1239
        %v1244 = vpack.c.bf16 %v1240, %v1240
        %s1245 = scalar_lea.vmem [#allocation2], 1024
        %v1246 = vld [vmem:[%s1245] sm:$0xff]
        %v1247 = vld [vmem:[%s1245 + $0x8] sm:$0xff]
        %v1248 = vld [vmem:[%s1245 + $0x10] sm:$0xff]
        %v1249 = vld [vmem:[%s1245 + $0x18] sm:$0xff]
        %v1250 = vld [vmem:[%s1245 + $0x20] sm:$0xff]
        %v1251 = vld [vmem:[%s1245 + $0x28] sm:$0xff]
        %v1252 = vld [vmem:[%s1245 + $0x30] sm:$0xff]
        %v1253 = vld [vmem:[%s1245 + $0x38] sm:$0xff]
        %v1254 = vld [vmem:[%s1245 + $0x40] sm:$0xff]
        %v1255 = vld [vmem:[%s1245 + $0x48] sm:$0xff]
        %v1256 = vld [vmem:[%s1245 + $0x50] sm:$0xff]
        %v1257 = vld [vmem:[%s1245 + $0x58] sm:$0xff]
        %v1258 = vld [vmem:[%s1245 + $0x60] sm:$0xff]
        %v1259 = vld [vmem:[%s1245 + $0x68] sm:$0xff]
        %v1260 = vld [vmem:[%s1245 + $0x70] sm:$0xff]
        %v1261 = vld [vmem:[%s1245 + $0x78] sm:$0xff]
        %v1262 = vld [vmem:[%s1245 + $0x80] sm:$0xff]
        %v1263 = vld [vmem:[%s1245 + $0x88] sm:$0xff]
        %v1264 = vld [vmem:[%s1245 + $0x90] sm:$0xff]
        %v1265 = vld [vmem:[%s1245 + $0x98] sm:$0xff]
        %v1266 = vld [vmem:[%s1245 + $0xa0] sm:$0xff]
        %v1267 = vld [vmem:[%s1245 + $0xa8] sm:$0xff]
        %v1268 = vld [vmem:[%s1245 + $0xb0] sm:$0xff]
        %v1269 = vld [vmem:[%s1245 + $0xb8] sm:$0xff]
        %v1270 = vld [vmem:[%s1245 + $0xc0] sm:$0xff]
        %v1271 = vld [vmem:[%s1245 + $0xc8] sm:$0xff]
        %v1272 = vld [vmem:[%s1245 + $0xd0] sm:$0xff]
        %v1273 = vld [vmem:[%s1245 + $0xd8] sm:$0xff]
        %v1274 = vld [vmem:[%s1245 + $0xe0] sm:$0xff]
        %v1275 = vld [vmem:[%s1245 + $0xe8] sm:$0xff]
        %v1276 = vld [vmem:[%s1245 + $0xf0] sm:$0xff]
        %v1277 = vld [vmem:[%s1245 + $0xf8] sm:$0xff]
        %v1278 = vld [vmem:[%s1245 + $0x100] sm:$0xff]
        %v1279 = vld [vmem:[%s1245 + $0x108] sm:$0xff]
        %v1280 = vld [vmem:[%s1245 + $0x110] sm:$0xff]
        %v1281 = vld [vmem:[%s1245 + $0x118] sm:$0xff]
        %v1282 = vld [vmem:[%s1245 + $0x120] sm:$0xff]
        %v1283 = vld [vmem:[%s1245 + $0x128] sm:$0xff]
        %v1284 = vld [vmem:[%s1245 + $0x130] sm:$0xff]
        %v1285 = vld [vmem:[%s1245 + $0x138] sm:$0xff]
        %v1286 = vld [vmem:[%s1245 + $0x140] sm:$0xff]
        %v1287 = vld [vmem:[%s1245 + $0x148] sm:$0xff]
        %v1288 = vld [vmem:[%s1245 + $0x150] sm:$0xff]
        %v1289 = vld [vmem:[%s1245 + $0x158] sm:$0xff]
        %v1290 = vld [vmem:[%s1245 + $0x160] sm:$0xff]
        %v1291 = vld [vmem:[%s1245 + $0x168] sm:$0xff]
        %v1292 = vld [vmem:[%s1245 + $0x170] sm:$0xff]
        %v1293 = vld [vmem:[%s1245 + $0x178] sm:$0xff]
        %v1294 = vld [vmem:[%s1245 + $0x180] sm:$0xff]
        %v1295 = vld [vmem:[%s1245 + $0x188] sm:$0xff]
        %v1296 = vld [vmem:[%s1245 + $0x190] sm:$0xff]
        %v1297 = vld [vmem:[%s1245 + $0x198] sm:$0xff]
        %v1298 = vld [vmem:[%s1245 + $0x1a0] sm:$0xff]
        %v1299 = vld [vmem:[%s1245 + $0x1a8] sm:$0xff]
        %v1300 = vld [vmem:[%s1245 + $0x1b0] sm:$0xff]
        %v1301 = vld [vmem:[%s1245 + $0x1b8] sm:$0xff]
        %v1302 = vld [vmem:[%s1245 + $0x1c0] sm:$0xff]
        %v1303 = vld [vmem:[%s1245 + $0x1c8] sm:$0xff]
        %v1304 = vld [vmem:[%s1245 + $0x1d0] sm:$0xff]
        %v1305 = vld [vmem:[%s1245 + $0x1d8] sm:$0xff]
        %v1306 = vld [vmem:[%s1245 + $0x1e0] sm:$0xff]
        %v1307 = vld [vmem:[%s1245 + $0x1e8] sm:$0xff]
        %v1308 = vld [vmem:[%s1245 + $0x1f0] sm:$0xff]
        %v1309 = vld [vmem:[%s1245 + $0x1f8] sm:$0xff]
        %vm1314 = vcmask 1046528
        %v1315 = vrot.slane %v1241, 1
        %v1316 = vrot.slane %v1243, 1
        %v1317 = vsel %vm1314, %v1315, %v1316
        %v1318 = vrot.slane %v1242, 1
        %v1319 = vrot.slane %v1244, 1
        %v1320 = vsel %vm1314, %v1318, %v1319
        %v1387 = vunpack.c.l.b16 %v1246
        %v1388 = vunpack.c.h.b16 %v1246
        %v1389 = vunpack.c.l.b16 %v1247
        %v1390 = vunpack.c.h.b16 %v1247
        %v1391 = vunpack.c.l.b16 %v1248
        %v1392 = vunpack.c.h.b16 %v1248
        %v1393 = vunpack.c.l.b16 %v1249
        %v1394 = vunpack.c.h.b16 %v1249
        %v1395 = vunpack.c.l.b16 %v1250
        %v1396 = vunpack.c.h.b16 %v1250
        %v1397 = vunpack.c.l.b16 %v1251
        %v1398 = vunpack.c.h.b16 %v1251
        %v1399 = vunpack.c.l.b16 %v1252
        %v1400 = vunpack.c.h.b16 %v1252
        %v1401 = vunpack.c.l.b16 %v1253
        %v1402 = vunpack.c.h.b16 %v1253
        %v1403 = vunpack.c.l.b16 %v1254
        %v1404 = vunpack.c.h.b16 %v1254
        %v1405 = vunpack.c.l.b16 %v1255
        %v1406 = vunpack.c.h.b16 %v1255
        %v1407 = vunpack.c.l.b16 %v1256
        %v1408 = vunpack.c.h.b16 %v1256
        %v1409 = vunpack.c.l.b16 %v1257
        %v1410 = vunpack.c.h.b16 %v1257
        %v1411 = vunpack.c.l.b16 %v1258
        %v1412 = vunpack.c.h.b16 %v1258
        %v1413 = vunpack.c.l.b16 %v1259
        %v1414 = vunpack.c.h.b16 %v1259
        %v1415 = vunpack.c.l.b16 %v1260
        %v1416 = vunpack.c.h.b16 %v1260
        %v1417 = vunpack.c.l.b16 %v1261
        %v1418 = vunpack.c.h.b16 %v1261
        %v1419 = vunpack.c.l.b16 %v1262
        %v1420 = vunpack.c.h.b16 %v1262
        %v1421 = vunpack.c.l.b16 %v1263
        %v1422 = vunpack.c.h.b16 %v1263
        %v1423 = vunpack.c.l.b16 %v1264
        %v1424 = vunpack.c.h.b16 %v1264
        %v1425 = vunpack.c.l.b16 %v1265
        %v1426 = vunpack.c.h.b16 %v1265
        %v1427 = vunpack.c.l.b16 %v1266
        %v1428 = vunpack.c.h.b16 %v1266
        %v1429 = vunpack.c.l.b16 %v1267
        %v1430 = vunpack.c.h.b16 %v1267
        %v1431 = vunpack.c.l.b16 %v1268
        %v1432 = vunpack.c.h.b16 %v1268
        %v1433 = vunpack.c.l.b16 %v1269
        %v1434 = vunpack.c.h.b16 %v1269
        %v1435 = vunpack.c.l.b16 %v1270
        %v1436 = vunpack.c.h.b16 %v1270
        %v1437 = vunpack.c.l.b16 %v1271
        %v1438 = vunpack.c.h.b16 %v1271
        %v1439 = vunpack.c.l.b16 %v1272
        %v1440 = vunpack.c.h.b16 %v1272
        %v1441 = vunpack.c.l.b16 %v1273
        %v1442 = vunpack.c.h.b16 %v1273
        %v1443 = vunpack.c.l.b16 %v1274
        %v1444 = vunpack.c.h.b16 %v1274
        %v1445 = vunpack.c.l.b16 %v1275
        %v1446 = vunpack.c.h.b16 %v1275
        %v1447 = vunpack.c.l.b16 %v1276
        %v1448 = vunpack.c.h.b16 %v1276
        %v1449 = vunpack.c.l.b16 %v1277
        %v1450 = vunpack.c.h.b16 %v1277
        %v1451 = vunpack.c.l.b16 %v1278
        %v1452 = vunpack.c.h.b16 %v1278
        %v1453 = vunpack.c.l.b16 %v1279
        %v1454 = vunpack.c.h.b16 %v1279
        %v1455 = vunpack.c.l.b16 %v1280
        %v1456 = vunpack.c.h.b16 %v1280
        %v1457 = vunpack.c.l.b16 %v1281
        %v1458 = vunpack.c.h.b16 %v1281
        %v1459 = vunpack.c.l.b16 %v1282
        %v1460 = vunpack.c.h.b16 %v1282
        %v1461 = vunpack.c.l.b16 %v1283
        %v1462 = vunpack.c.h.b16 %v1283
        %v1463 = vunpack.c.l.b16 %v1284
        %v1464 = vunpack.c.h.b16 %v1284
        %v1465 = vunpack.c.l.b16 %v1285
        %v1466 = vunpack.c.h.b16 %v1285
        %v1467 = vunpack.c.l.b16 %v1286
        %v1468 = vunpack.c.h.b16 %v1286
        %v1469 = vunpack.c.l.b16 %v1287
        %v1470 = vunpack.c.h.b16 %v1287
        %v1471 = vunpack.c.l.b16 %v1288
        %v1472 = vunpack.c.h.b16 %v1288
        %v1473 = vunpack.c.l.b16 %v1289
        %v1474 = vunpack.c.h.b16 %v1289
        %v1475 = vunpack.c.l.b16 %v1290
        %v1476 = vunpack.c.h.b16 %v1290
        %v1477 = vunpack.c.l.b16 %v1291
        %v1478 = vunpack.c.h.b16 %v1291
        %v1479 = vunpack.c.l.b16 %v1292
        %v1480 = vunpack.c.h.b16 %v1292
        %v1481 = vunpack.c.l.b16 %v1293
        %v1482 = vunpack.c.h.b16 %v1293
        %v1483 = vunpack.c.l.b16 %v1294
        %v1484 = vunpack.c.h.b16 %v1294
        %v1485 = vunpack.c.l.b16 %v1295
        %v1486 = vunpack.c.h.b16 %v1295
        %v1487 = vunpack.c.l.b16 %v1296
        %v1488 = vunpack.c.h.b16 %v1296
        %v1489 = vunpack.c.l.b16 %v1297
        %v1490 = vunpack.c.h.b16 %v1297
        %v1491 = vunpack.c.l.b16 %v1298
        %v1492 = vunpack.c.h.b16 %v1298
        %v1493 = vunpack.c.l.b16 %v1299
        %v1494 = vunpack.c.h.b16 %v1299
        %v1495 = vunpack.c.l.b16 %v1300
        %v1496 = vunpack.c.h.b16 %v1300
        %v1497 = vunpack.c.l.b16 %v1301
        %v1498 = vunpack.c.h.b16 %v1301
        %v1499 = vunpack.c.l.b16 %v1302
        %v1500 = vunpack.c.h.b16 %v1302
        %v1501 = vunpack.c.l.b16 %v1303
        %v1502 = vunpack.c.h.b16 %v1303
        %v1503 = vunpack.c.l.b16 %v1304
        %v1504 = vunpack.c.h.b16 %v1304
        %v1505 = vunpack.c.l.b16 %v1305
        %v1506 = vunpack.c.h.b16 %v1305
        %v1507 = vunpack.c.l.b16 %v1306
        %v1508 = vunpack.c.h.b16 %v1306
        %v1509 = vunpack.c.l.b16 %v1307
        %v1510 = vunpack.c.h.b16 %v1307
        %v1511 = vunpack.c.l.b16 %v1308
        %v1512 = vunpack.c.h.b16 %v1308
        %v1513 = vunpack.c.l.b16 %v1309
        %v1514 = vunpack.c.h.b16 %v1309
        %v1515 = vpack.c.b16 %v1391, %v1387
        %v1516 = vpack.c.b16 %v1392, %v1388
        %v1517 = vpack.c.b16 %v1393, %v1389
        %v1518 = vpack.c.b16 %v1394, %v1390
        %v1519 = vpack.c.b16 %v1399, %v1395
        %v1520 = vpack.c.b16 %v1400, %v1396
        %v1521 = vpack.c.b16 %v1401, %v1397
        %v1522 = vpack.c.b16 %v1402, %v1398
        %v1523 = vpack.c.b16 %v1407, %v1403
        %v1524 = vpack.c.b16 %v1408, %v1404
        %v1525 = vpack.c.b16 %v1409, %v1405
        %v1526 = vpack.c.b16 %v1410, %v1406
        %v1527 = vpack.c.b16 %v1415, %v1411
        %v1528 = vpack.c.b16 %v1416, %v1412
        %v1529 = vpack.c.b16 %v1417, %v1413
        %v1530 = vpack.c.b16 %v1418, %v1414
        %v1531 = vpack.c.b16 %v1423, %v1419
        %v1532 = vpack.c.b16 %v1424, %v1420
        %v1533 = vpack.c.b16 %v1425, %v1421
        %v1534 = vpack.c.b16 %v1426, %v1422
        %v1535 = vpack.c.b16 %v1431, %v1427
        %v1536 = vpack.c.b16 %v1432, %v1428
        %v1537 = vpack.c.b16 %v1433, %v1429
        %v1538 = vpack.c.b16 %v1434, %v1430
        %v1539 = vpack.c.b16 %v1439, %v1435
        %v1540 = vpack.c.b16 %v1440, %v1436
        %v1541 = vpack.c.b16 %v1441, %v1437
        %v1542 = vpack.c.b16 %v1442, %v1438
        %v1543 = vpack.c.b16 %v1447, %v1443
        %v1544 = vpack.c.b16 %v1448, %v1444
        %v1545 = vpack.c.b16 %v1449, %v1445
        %v1546 = vpack.c.b16 %v1450, %v1446
        %v1547 = vpack.c.b16 %v1455, %v1451
        %v1548 = vpack.c.b16 %v1456, %v1452
        %v1549 = vpack.c.b16 %v1457, %v1453
        %v1550 = vpack.c.b16 %v1458, %v1454
        %v1551 = vpack.c.b16 %v1463, %v1459
        %v1552 = vpack.c.b16 %v1464, %v1460
        %v1553 = vpack.c.b16 %v1465, %v1461
        %v1554 = vpack.c.b16 %v1466, %v1462
        %v1555 = vpack.c.b16 %v1471, %v1467
        %v1556 = vpack.c.b16 %v1472, %v1468
        %v1557 = vpack.c.b16 %v1473, %v1469
        %v1558 = vpack.c.b16 %v1474, %v1470
        %v1559 = vpack.c.b16 %v1479, %v1475
        %v1560 = vpack.c.b16 %v1480, %v1476
        %v1561 = vpack.c.b16 %v1481, %v1477
        %v1562 = vpack.c.b16 %v1482, %v1478
        %v1563 = vpack.c.b16 %v1487, %v1483
        %v1564 = vpack.c.b16 %v1488, %v1484
        %v1565 = vpack.c.b16 %v1489, %v1485
        %v1566 = vpack.c.b16 %v1490, %v1486
        %v1567 = vpack.c.b16 %v1495, %v1491
        %v1568 = vpack.c.b16 %v1496, %v1492
        %v1569 = vpack.c.b16 %v1497, %v1493
        %v1570 = vpack.c.b16 %v1498, %v1494
        %v1571 = vpack.c.b16 %v1503, %v1499
        %v1572 = vpack.c.b16 %v1504, %v1500
        %v1573 = vpack.c.b16 %v1505, %v1501
        %v1574 = vpack.c.b16 %v1506, %v1502
        %v1575 = vpack.c.b16 %v1511, %v1507
        %v1576 = vpack.c.b16 %v1512, %v1508
        %v1577 = vpack.c.b16 %v1513, %v1509
        %v1578 = vpack.c.b16 %v1514, %v1510
        %1643 = vmatpush.bf16.msra.mxu0 %v1543
        %1644 = vmatpush.bf16.msra.mxu0 %v1539
        %1645 = vmatpush.bf16.msra.mxu0 %v1535
        %1646 = vmatpush.bf16.msra.mxu0 %v1531
        %1647 = vmatpush.bf16.msra.mxu0 %v1527
        %1648 = vmatpush.bf16.msra.mxu0 %v1523
        %1649 = vmatpush.bf16.msra.mxu0 %v1519
        %1650 = vmatpush.bf16.msra.mxu0 %v1515
        %1651 = vmatmul.bf16.gmra.mxu0 %v1317
        %v1652 = vpop.f32.mrf.mxu0
        %v1653 = vadd.f32 0.0, %v1652
        %v1654 = vpop.f32.mrf.mxu0
        %v1655 = vadd.f32 0.0, %v1654
        %1656 = vdwg.mxu0
        %1657 = vmatpush.bf16.msra.mxu0 %v1575
        %1658 = vmatpush.bf16.msra.mxu0 %v1571
        %1659 = vmatpush.bf16.msra.mxu0 %v1567
        %1660 = vmatpush.bf16.msra.mxu0 %v1563
        %1661 = vmatpush.bf16.msra.mxu0 %v1559
        %1662 = vmatpush.bf16.msra.mxu0 %v1555
        %1663 = vmatpush.bf16.msra.mxu0 %v1551
        %1664 = vmatpush.bf16.msra.mxu0 %v1547
        %1665 = vmatmul.bf16.gmra.mxu0 %v1320
        %v1666 = vpop.f32.mrf.mxu0
        %v1667 = vadd.f32 %v1653, %v1666
        %v1668 = vpop.f32.mrf.mxu0
        %v1669 = vadd.f32 %v1655, %v1668
        %1670 = vdwg.mxu0
        %1671 = vmatpush.bf16.msra.mxu0 %v1544
        %1672 = vmatpush.bf16.msra.mxu0 %v1540
        %1673 = vmatpush.bf16.msra.mxu0 %v1536
        %1674 = vmatpush.bf16.msra.mxu0 %v1532
        %1675 = vmatpush.bf16.msra.mxu0 %v1528
        %1676 = vmatpush.bf16.msra.mxu0 %v1524
        %1677 = vmatpush.bf16.msra.mxu0 %v1520
        %1678 = vmatpush.bf16.msra.mxu0 %v1516
        %1679 = vmatmul.bf16.gmra.mxu0 %v1317
        %v1680 = vpop.f32.mrf.mxu0
        %v1681 = vadd.f32 0.0, %v1680
        %v1682 = vpop.f32.mrf.mxu0
        %v1683 = vadd.f32 0.0, %v1682
        %1684 = vdwg.mxu0
        %1685 = vmatpush.bf16.msra.mxu0 %v1576
        %1686 = vmatpush.bf16.msra.mxu0 %v1572
        %1687 = vmatpush.bf16.msra.mxu0 %v1568
        %1688 = vmatpush.bf16.msra.mxu0 %v1564
        %1689 = vmatpush.bf16.msra.mxu0 %v1560
        %1690 = vmatpush.bf16.msra.mxu0 %v1556
        %1691 = vmatpush.bf16.msra.mxu0 %v1552
        %1692 = vmatpush.bf16.msra.mxu0 %v1548
        %1693 = vmatmul.bf16.gmra.mxu0 %v1320
        %v1694 = vpop.f32.mrf.mxu0
        %v1695 = vadd.f32 %v1681, %v1694
        %v1696 = vpop.f32.mrf.mxu0
        %v1697 = vadd.f32 %v1683, %v1696
        %1698 = vdwg.mxu0
        %1699 = vmatpush.bf16.msra.mxu0 %v1545
        %1700 = vmatpush.bf16.msra.mxu0 %v1541
        %1701 = vmatpush.bf16.msra.mxu0 %v1537
        %1702 = vmatpush.bf16.msra.mxu0 %v1533
        %1703 = vmatpush.bf16.msra.mxu0 %v1529
        %1704 = vmatpush.bf16.msra.mxu0 %v1525
        %1705 = vmatpush.bf16.msra.mxu0 %v1521
        %1706 = vmatpush.bf16.msra.mxu0 %v1517
        %1707 = vmatmul.bf16.gmra.mxu0 %v1317
        %v1708 = vpop.f32.mrf.mxu0
        %v1709 = vadd.f32 0.0, %v1708
        %v1710 = vpop.f32.mrf.mxu0
        %v1711 = vadd.f32 0.0, %v1710
        %1712 = vdwg.mxu0
        %1713 = vmatpush.bf16.msra.mxu0 %v1577
        %1714 = vmatpush.bf16.msra.mxu0 %v1573
        %1715 = vmatpush.bf16.msra.mxu0 %v1569
        %1716 = vmatpush.bf16.msra.mxu0 %v1565
        %1717 = vmatpush.bf16.msra.mxu0 %v1561
        %1718 = vmatpush.bf16.msra.mxu0 %v1557
        %1719 = vmatpush.bf16.msra.mxu0 %v1553
        %1720 = vmatpush.bf16.msra.mxu0 %v1549
        %1721 = vmatmul.bf16.gmra.mxu0 %v1320
        %v1722 = vpop.f32.mrf.mxu0
        %v1723 = vadd.f32 %v1709, %v1722
        %v1724 = vpop.f32.mrf.mxu0
        %v1725 = vadd.f32 %v1711, %v1724
        %1726 = vdwg.mxu0
        %1727 = vmatpush.bf16.msra.mxu0 %v1546
        %1728 = vmatpush.bf16.msra.mxu0 %v1542
        %1729 = vmatpush.bf16.msra.mxu0 %v1538
        %1730 = vmatpush.bf16.msra.mxu0 %v1534
        %1731 = vmatpush.bf16.msra.mxu0 %v1530
        %1732 = vmatpush.bf16.msra.mxu0 %v1526
        %1733 = vmatpush.bf16.msra.mxu0 %v1522
        %1734 = vmatpush.bf16.msra.mxu0 %v1518
        %1735 = vmatmul.bf16.gmra.mxu0 %v1317
        %v1736 = vpop.f32.mrf.mxu0
        %v1737 = vadd.f32 0.0, %v1736
        %v1738 = vpop.f32.mrf.mxu0
        %v1739 = vadd.f32 0.0, %v1738
        %1740 = vdwg.mxu0
        %1741 = vmatpush.bf16.msra.mxu0 %v1578
        %1742 = vmatpush.bf16.msra.mxu0 %v1574
        %1743 = vmatpush.bf16.msra.mxu0 %v1570
        %1744 = vmatpush.bf16.msra.mxu0 %v1566
        %1745 = vmatpush.bf16.msra.mxu0 %v1562
        %1746 = vmatpush.bf16.msra.mxu0 %v1558
        %1747 = vmatpush.bf16.msra.mxu0 %v1554
        %1748 = vmatpush.bf16.msra.mxu0 %v1550
        %1749 = vmatmul.bf16.gmra.mxu0 %v1320
        %v1750 = vpop.f32.mrf.mxu0
        %v1751 = vadd.f32 %v1737, %v1750
        %v1752 = vpop.f32.mrf.mxu0
        %v1753 = vadd.f32 %v1739, %v1752
        %1754 = vdwg.mxu0
        %v1755 = vadd.f32 %v1149, %v1667
        %v1756 = vadd.f32 %v1177, %v1695
        %v1757 = vadd.f32 %v1205, %v1723
        %v1758 = vadd.f32 %v1233, %v1751
        %v1759 = vadd.f32 %v1151, %v1669
        %v1760 = vadd.f32 %v1179, %v1697
        %v1761 = vadd.f32 %v1207, %v1725
        %v1762 = vadd.f32 %v1235, %v1753
        %v1763 = vld [vmem:[%s197] sm:$0xf8]
        %v1764 = vld [vmem:[%s197 + $0x8] sm:$0xf8]
        %v1765 = vld [vmem:[%s197 + $0x20] sm:$0x7]
        %v1766 = vld [vmem:[%s197 + $0x28] sm:$0x7]
        %v1767 = vpack.c.bf16 %v205, %v1763
        %v1768 = vpack.c.bf16 %v206, %v1764
        %v1769 = vpack.c.bf16 %v1765, %v1765
        %v1770 = vpack.c.bf16 %v1766, %v1766
        %s1771 = scalar_lea.vmem [#allocation2], 1536
        %v1772 = vld [vmem:[%s1771] sm:$0xff]
        %v1773 = vld [vmem:[%s1771 + $0x8] sm:$0xff]
        %v1774 = vld [vmem:[%s1771 + $0x10] sm:$0xff]
        %v1775 = vld [vmem:[%s1771 + $0x18] sm:$0xff]
        %v1776 = vld [vmem:[%s1771 + $0x20] sm:$0xff]
        %v1777 = vld [vmem:[%s1771 + $0x28] sm:$0xff]
        %v1778 = vld [vmem:[%s1771 + $0x30] sm:$0xff]
        %v1779 = vld [vmem:[%s1771 + $0x38] sm:$0xff]
        %v1780 = vld [vmem:[%s1771 + $0x40] sm:$0xff]
        %v1781 = vld [vmem:[%s1771 + $0x48] sm:$0xff]
        %v1782 = vld [vmem:[%s1771 + $0x50] sm:$0xff]
        %v1783 = vld [vmem:[%s1771 + $0x58] sm:$0xff]
        %v1784 = vld [vmem:[%s1771 + $0x60] sm:$0xff]
        %v1785 = vld [vmem:[%s1771 + $0x68] sm:$0xff]
        %v1786 = vld [vmem:[%s1771 + $0x70] sm:$0xff]
        %v1787 = vld [vmem:[%s1771 + $0x78] sm:$0xff]
        %v1788 = vld [vmem:[%s1771 + $0x80] sm:$0xff]
        %v1789 = vld [vmem:[%s1771 + $0x88] sm:$0xff]
        %v1790 = vld [vmem:[%s1771 + $0x90] sm:$0xff]
        %v1791 = vld [vmem:[%s1771 + $0x98] sm:$0xff]
        %v1792 = vld [vmem:[%s1771 + $0xa0] sm:$0xff]
        %v1793 = vld [vmem:[%s1771 + $0xa8] sm:$0xff]
        %v1794 = vld [vmem:[%s1771 + $0xb0] sm:$0xff]
        %v1795 = vld [vmem:[%s1771 + $0xb8] sm:$0xff]
        %v1796 = vld [vmem:[%s1771 + $0xc0] sm:$0xff]
        %v1797 = vld [vmem:[%s1771 + $0xc8] sm:$0xff]
        %v1798 = vld [vmem:[%s1771 + $0xd0] sm:$0xff]
        %v1799 = vld [vmem:[%s1771 + $0xd8] sm:$0xff]
        %v1800 = vld [vmem:[%s1771 + $0xe0] sm:$0xff]
        %v1801 = vld [vmem:[%s1771 + $0xe8] sm:$0xff]
        %v1802 = vld [vmem:[%s1771 + $0xf0] sm:$0xff]
        %v1803 = vld [vmem:[%s1771 + $0xf8] sm:$0xff]
        %v1804 = vld [vmem:[%s1771 + $0x100] sm:$0xff]
        %v1805 = vld [vmem:[%s1771 + $0x108] sm:$0xff]
        %v1806 = vld [vmem:[%s1771 + $0x110] sm:$0xff]
        %v1807 = vld [vmem:[%s1771 + $0x118] sm:$0xff]
        %v1808 = vld [vmem:[%s1771 + $0x120] sm:$0xff]
        %v1809 = vld [vmem:[%s1771 + $0x128] sm:$0xff]
        %v1810 = vld [vmem:[%s1771 + $0x130] sm:$0xff]
        %v1811 = vld [vmem:[%s1771 + $0x138] sm:$0xff]
        %v1812 = vld [vmem:[%s1771 + $0x140] sm:$0xff]
        %v1813 = vld [vmem:[%s1771 + $0x148] sm:$0xff]
        %v1814 = vld [vmem:[%s1771 + $0x150] sm:$0xff]
        %v1815 = vld [vmem:[%s1771 + $0x158] sm:$0xff]
        %v1816 = vld [vmem:[%s1771 + $0x160] sm:$0xff]
        %v1817 = vld [vmem:[%s1771 + $0x168] sm:$0xff]
        %v1818 = vld [vmem:[%s1771 + $0x170] sm:$0xff]
        %v1819 = vld [vmem:[%s1771 + $0x178] sm:$0xff]
        %v1820 = vld [vmem:[%s1771 + $0x180] sm:$0xff]
        %v1821 = vld [vmem:[%s1771 + $0x188] sm:$0xff]
        %v1822 = vld [vmem:[%s1771 + $0x190] sm:$0xff]
        %v1823 = vld [vmem:[%s1771 + $0x198] sm:$0xff]
        %v1824 = vld [vmem:[%s1771 + $0x1a0] sm:$0xff]
        %v1825 = vld [vmem:[%s1771 + $0x1a8] sm:$0xff]
        %v1826 = vld [vmem:[%s1771 + $0x1b0] sm:$0xff]
        %v1827 = vld [vmem:[%s1771 + $0x1b8] sm:$0xff]
        %v1828 = vld [vmem:[%s1771 + $0x1c0] sm:$0xff]
        %v1829 = vld [vmem:[%s1771 + $0x1c8] sm:$0xff]
        %v1830 = vld [vmem:[%s1771 + $0x1d0] sm:$0xff]
        %v1831 = vld [vmem:[%s1771 + $0x1d8] sm:$0xff]
        %v1832 = vld [vmem:[%s1771 + $0x1e0] sm:$0xff]
        %v1833 = vld [vmem:[%s1771 + $0x1e8] sm:$0xff]
        %v1834 = vld [vmem:[%s1771 + $0x1f0] sm:$0xff]
        %v1835 = vld [vmem:[%s1771 + $0x1f8] sm:$0xff]
        %vm1836 = vsmask.f32 6400
        %v1838 = vshrl.u32 %v1767, 16
        %v1840 = vrot.slane %v1838, 1
        %v1841 = vshll.u32 %v1767, 16
        %v1843 = vrot.slane %v1841, 2
        %v1844 = vor.u32 %v1840, %v1843
        %v1846 = vshrl.u32 %v1769, 16
        %v1848 = vrot.slane %v1846, 1
        %v1849 = vshll.u32 %v1769, 16
        %v1851 = vrot.slane %v1849, 2
        %v1852 = vor.u32 %v1848, %v1851
        %v1853 = vsel %vm1836, %v1844, %v1852
        %v1855 = vshrl.u32 %v1768, 16
        %v1857 = vrot.slane %v1855, 1
        %v1858 = vshll.u32 %v1768, 16
        %v1860 = vrot.slane %v1858, 2
        %v1861 = vor.u32 %v1857, %v1860
        %v1863 = vshrl.u32 %v1770, 16
        %v1865 = vrot.slane %v1863, 1
        %v1866 = vshll.u32 %v1770, 16
        %v1868 = vrot.slane %v1866, 2
        %v1869 = vor.u32 %v1865, %v1868
        %v1870 = vsel %vm1836, %v1861, %v1869
        %v1937 = vunpack.c.l.b16 %v1772
        %v1938 = vunpack.c.h.b16 %v1772
        %v1939 = vunpack.c.l.b16 %v1773
        %v1940 = vunpack.c.h.b16 %v1773
        %v1941 = vunpack.c.l.b16 %v1774
        %v1942 = vunpack.c.h.b16 %v1774
        %v1943 = vunpack.c.l.b16 %v1775
        %v1944 = vunpack.c.h.b16 %v1775
        %v1945 = vunpack.c.l.b16 %v1776
        %v1946 = vunpack.c.h.b16 %v1776
        %v1947 = vunpack.c.l.b16 %v1777
        %v1948 = vunpack.c.h.b16 %v1777
        %v1949 = vunpack.c.l.b16 %v1778
        %v1950 = vunpack.c.h.b16 %v1778
        %v1951 = vunpack.c.l.b16 %v1779
        %v1952 = vunpack.c.h.b16 %v1779
        %v1953 = vunpack.c.l.b16 %v1780
        %v1954 = vunpack.c.h.b16 %v1780
        %v1955 = vunpack.c.l.b16 %v1781
        %v1956 = vunpack.c.h.b16 %v1781
        %v1957 = vunpack.c.l.b16 %v1782
        %v1958 = vunpack.c.h.b16 %v1782
        %v1959 = vunpack.c.l.b16 %v1783
        %v1960 = vunpack.c.h.b16 %v1783
        %v1961 = vunpack.c.l.b16 %v1784
        %v1962 = vunpack.c.h.b16 %v1784
        %v1963 = vunpack.c.l.b16 %v1785
        %v1964 = vunpack.c.h.b16 %v1785
        %v1965 = vunpack.c.l.b16 %v1786
        %v1966 = vunpack.c.h.b16 %v1786
        %v1967 = vunpack.c.l.b16 %v1787
        %v1968 = vunpack.c.h.b16 %v1787
        %v1969 = vunpack.c.l.b16 %v1788
        %v1970 = vunpack.c.h.b16 %v1788
        %v1971 = vunpack.c.l.b16 %v1789
        %v1972 = vunpack.c.h.b16 %v1789
        %v1973 = vunpack.c.l.b16 %v1790
        %v1974 = vunpack.c.h.b16 %v1790
        %v1975 = vunpack.c.l.b16 %v1791
        %v1976 = vunpack.c.h.b16 %v1791
        %v1977 = vunpack.c.l.b16 %v1792
        %v1978 = vunpack.c.h.b16 %v1792
        %v1979 = vunpack.c.l.b16 %v1793
        %v1980 = vunpack.c.h.b16 %v1793
        %v1981 = vunpack.c.l.b16 %v1794
        %v1982 = vunpack.c.h.b16 %v1794
        %v1983 = vunpack.c.l.b16 %v1795
        %v1984 = vunpack.c.h.b16 %v1795
        %v1985 = vunpack.c.l.b16 %v1796
        %v1986 = vunpack.c.h.b16 %v1796
        %v1987 = vunpack.c.l.b16 %v1797
        %v1988 = vunpack.c.h.b16 %v1797
        %v1989 = vunpack.c.l.b16 %v1798
        %v1990 = vunpack.c.h.b16 %v1798
        %v1991 = vunpack.c.l.b16 %v1799
        %v1992 = vunpack.c.h.b16 %v1799
        %v1993 = vunpack.c.l.b16 %v1800
        %v1994 = vunpack.c.h.b16 %v1800
        %v1995 = vunpack.c.l.b16 %v1801
        %v1996 = vunpack.c.h.b16 %v1801
        %v1997 = vunpack.c.l.b16 %v1802
        %v1998 = vunpack.c.h.b16 %v1802
        %v1999 = vunpack.c.l.b16 %v1803
        %v2000 = vunpack.c.h.b16 %v1803
        %v2001 = vunpack.c.l.b16 %v1804
        %v2002 = vunpack.c.h.b16 %v1804
        %v2003 = vunpack.c.l.b16 %v1805
        %v2004 = vunpack.c.h.b16 %v1805
        %v2005 = vunpack.c.l.b16 %v1806
        %v2006 = vunpack.c.h.b16 %v1806
        %v2007 = vunpack.c.l.b16 %v1807
        %v2008 = vunpack.c.h.b16 %v1807
        %v2009 = vunpack.c.l.b16 %v1808
        %v2010 = vunpack.c.h.b16 %v1808
        %v2011 = vunpack.c.l.b16 %v1809
        %v2012 = vunpack.c.h.b16 %v1809
        %v2013 = vunpack.c.l.b16 %v1810
        %v2014 = vunpack.c.h.b16 %v1810
        %v2015 = vunpack.c.l.b16 %v1811
        %v2016 = vunpack.c.h.b16 %v1811
        %v2017 = vunpack.c.l.b16 %v1812
        %v2018 = vunpack.c.h.b16 %v1812
        %v2019 = vunpack.c.l.b16 %v1813
        %v2020 = vunpack.c.h.b16 %v1813
        %v2021 = vunpack.c.l.b16 %v1814
        %v2022 = vunpack.c.h.b16 %v1814
        %v2023 = vunpack.c.l.b16 %v1815
        %v2024 = vunpack.c.h.b16 %v1815
        %v2025 = vunpack.c.l.b16 %v1816
        %v2026 = vunpack.c.h.b16 %v1816
        %v2027 = vunpack.c.l.b16 %v1817
        %v2028 = vunpack.c.h.b16 %v1817
        %v2029 = vunpack.c.l.b16 %v1818
        %v2030 = vunpack.c.h.b16 %v1818
        %v2031 = vunpack.c.l.b16 %v1819
        %v2032 = vunpack.c.h.b16 %v1819
        %v2033 = vunpack.c.l.b16 %v1820
        %v2034 = vunpack.c.h.b16 %v1820
        %v2035 = vunpack.c.l.b16 %v1821
        %v2036 = vunpack.c.h.b16 %v1821
        %v2037 = vunpack.c.l.b16 %v1822
        %v2038 = vunpack.c.h.b16 %v1822
        %v2039 = vunpack.c.l.b16 %v1823
        %v2040 = vunpack.c.h.b16 %v1823
        %v2041 = vunpack.c.l.b16 %v1824
        %v2042 = vunpack.c.h.b16 %v1824
        %v2043 = vunpack.c.l.b16 %v1825
        %v2044 = vunpack.c.h.b16 %v1825
        %v2045 = vunpack.c.l.b16 %v1826
        %v2046 = vunpack.c.h.b16 %v1826
        %v2047 = vunpack.c.l.b16 %v1827
        %v2048 = vunpack.c.h.b16 %v1827
        %v2049 = vunpack.c.l.b16 %v1828
        %v2050 = vunpack.c.h.b16 %v1828
        %v2051 = vunpack.c.l.b16 %v1829
        %v2052 = vunpack.c.h.b16 %v1829
        %v2053 = vunpack.c.l.b16 %v1830
        %v2054 = vunpack.c.h.b16 %v1830
        %v2055 = vunpack.c.l.b16 %v1831
        %v2056 = vunpack.c.h.b16 %v1831
        %v2057 = vunpack.c.l.b16 %v1832
        %v2058 = vunpack.c.h.b16 %v1832
        %v2059 = vunpack.c.l.b16 %v1833
        %v2060 = vunpack.c.h.b16 %v1833
        %v2061 = vunpack.c.l.b16 %v1834
        %v2062 = vunpack.c.h.b16 %v1834
        %v2063 = vunpack.c.l.b16 %v1835
        %v2064 = vunpack.c.h.b16 %v1835
        %v2065 = vpack.c.b16 %v1941, %v1937
        %v2066 = vpack.c.b16 %v1942, %v1938
        %v2067 = vpack.c.b16 %v1943, %v1939
        %v2068 = vpack.c.b16 %v1944, %v1940
        %v2069 = vpack.c.b16 %v1949, %v1945
        %v2070 = vpack.c.b16 %v1950, %v1946
        %v2071 = vpack.c.b16 %v1951, %v1947
        %v2072 = vpack.c.b16 %v1952, %v1948
        %v2073 = vpack.c.b16 %v1957, %v1953
        %v2074 = vpack.c.b16 %v1958, %v1954
        %v2075 = vpack.c.b16 %v1959, %v1955
        %v2076 = vpack.c.b16 %v1960, %v1956
        %v2077 = vpack.c.b16 %v1965, %v1961
        %v2078 = vpack.c.b16 %v1966, %v1962
        %v2079 = vpack.c.b16 %v1967, %v1963
        %v2080 = vpack.c.b16 %v1968, %v1964
        %v2081 = vpack.c.b16 %v1973, %v1969
        %v2082 = vpack.c.b16 %v1974, %v1970
        %v2083 = vpack.c.b16 %v1975, %v1971
        %v2084 = vpack.c.b16 %v1976, %v1972
        %v2085 = vpack.c.b16 %v1981, %v1977
        %v2086 = vpack.c.b16 %v1982, %v1978
        %v2087 = vpack.c.b16 %v1983, %v1979
        %v2088 = vpack.c.b16 %v1984, %v1980
        %v2089 = vpack.c.b16 %v1989, %v1985
        %v2090 = vpack.c.b16 %v1990, %v1986
        %v2091 = vpack.c.b16 %v1991, %v1987
        %v2092 = vpack.c.b16 %v1992, %v1988
        %v2093 = vpack.c.b16 %v1997, %v1993
        %v2094 = vpack.c.b16 %v1998, %v1994
        %v2095 = vpack.c.b16 %v1999, %v1995
        %v2096 = vpack.c.b16 %v2000, %v1996
        %v2097 = vpack.c.b16 %v2005, %v2001
        %v2098 = vpack.c.b16 %v2006, %v2002
        %v2099 = vpack.c.b16 %v2007, %v2003
        %v2100 = vpack.c.b16 %v2008, %v2004
        %v2101 = vpack.c.b16 %v2013, %v2009
        %v2102 = vpack.c.b16 %v2014, %v2010
        %v2103 = vpack.c.b16 %v2015, %v2011
        %v2104 = vpack.c.b16 %v2016, %v2012
        %v2105 = vpack.c.b16 %v2021, %v2017
        %v2106 = vpack.c.b16 %v2022, %v2018
        %v2107 = vpack.c.b16 %v2023, %v2019
        %v2108 = vpack.c.b16 %v2024, %v2020
        %v2109 = vpack.c.b16 %v2029, %v2025
        %v2110 = vpack.c.b16 %v2030, %v2026
        %v2111 = vpack.c.b16 %v2031, %v2027
        %v2112 = vpack.c.b16 %v2032, %v2028
        %v2113 = vpack.c.b16 %v2037, %v2033
        %v2114 = vpack.c.b16 %v2038, %v2034
        %v2115 = vpack.c.b16 %v2039, %v2035
        %v2116 = vpack.c.b16 %v2040, %v2036
        %v2117 = vpack.c.b16 %v2045, %v2041
        %v2118 = vpack.c.b16 %v2046, %v2042
        %v2119 = vpack.c.b16 %v2047, %v2043
        %v2120 = vpack.c.b16 %v2048, %v2044
        %v2121 = vpack.c.b16 %v2053, %v2049
        %v2122 = vpack.c.b16 %v2054, %v2050
        %v2123 = vpack.c.b16 %v2055, %v2051
        %v2124 = vpack.c.b16 %v2056, %v2052
        %v2125 = vpack.c.b16 %v2061, %v2057
        %v2126 = vpack.c.b16 %v2062, %v2058
        %v2127 = vpack.c.b16 %v2063, %v2059
        %v2128 = vpack.c.b16 %v2064, %v2060
        %2193 = vmatpush.bf16.msra.mxu0 %v2093
        %2194 = vmatpush.bf16.msra.mxu0 %v2089
        %2195 = vmatpush.bf16.msra.mxu0 %v2085
        %2196 = vmatpush.bf16.msra.mxu0 %v2081
        %2197 = vmatpush.bf16.msra.mxu0 %v2077
        %2198 = vmatpush.bf16.msra.mxu0 %v2073
        %2199 = vmatpush.bf16.msra.mxu0 %v2069
        %2200 = vmatpush.bf16.msra.mxu0 %v2065
        %2201 = vmatmul.bf16.gmra.mxu0 %v1853
        %v2202 = vpop.f32.mrf.mxu0
        %v2203 = vadd.f32 0.0, %v2202
        %v2204 = vpop.f32.mrf.mxu0
        %v2205 = vadd.f32 0.0, %v2204
        %2206 = vdwg.mxu0
        %2207 = vmatpush.bf16.msra.mxu0 %v2125
        %2208 = vmatpush.bf16.msra.mxu0 %v2121
        %2209 = vmatpush.bf16.msra.mxu0 %v2117
        %2210 = vmatpush.bf16.msra.mxu0 %v2113
        %2211 = vmatpush.bf16.msra.mxu0 %v2109
        %2212 = vmatpush.bf16.msra.mxu0 %v2105
        %2213 = vmatpush.bf16.msra.mxu0 %v2101
        %2214 = vmatpush.bf16.msra.mxu0 %v2097
        %2215 = vmatmul.bf16.gmra.mxu0 %v1870
        %v2216 = vpop.f32.mrf.mxu0
        %v2217 = vadd.f32 %v2203, %v2216
        %v2218 = vpop.f32.mrf.mxu0
        %v2219 = vadd.f32 %v2205, %v2218
        %2220 = vdwg.mxu0
        %2221 = vmatpush.bf16.msra.mxu0 %v2094
        %2222 = vmatpush.bf16.msra.mxu0 %v2090
        %2223 = vmatpush.bf16.msra.mxu0 %v2086
        %2224 = vmatpush.bf16.msra.mxu0 %v2082
        %2225 = vmatpush.bf16.msra.mxu0 %v2078
        %2226 = vmatpush.bf16.msra.mxu0 %v2074
        %2227 = vmatpush.bf16.msra.mxu0 %v2070
        %2228 = vmatpush.bf16.msra.mxu0 %v2066
        %2229 = vmatmul.bf16.gmra.mxu0 %v1853
        %v2230 = vpop.f32.mrf.mxu0
        %v2231 = vadd.f32 0.0, %v2230
        %v2232 = vpop.f32.mrf.mxu0
        %v2233 = vadd.f32 0.0, %v2232
        %2234 = vdwg.mxu0
        %2235 = vmatpush.bf16.msra.mxu0 %v2126
        %2236 = vmatpush.bf16.msra.mxu0 %v2122
        %2237 = vmatpush.bf16.msra.mxu0 %v2118
        %2238 = vmatpush.bf16.msra.mxu0 %v2114
        %2239 = vmatpush.bf16.msra.mxu0 %v2110
        %2240 = vmatpush.bf16.msra.mxu0 %v2106
        %2241 = vmatpush.bf16.msra.mxu0 %v2102
        %2242 = vmatpush.bf16.msra.mxu0 %v2098
        %2243 = vmatmul.bf16.gmra.mxu0 %v1870
        %v2244 = vpop.f32.mrf.mxu0
        %v2245 = vadd.f32 %v2231, %v2244
        %v2246 = vpop.f32.mrf.mxu0
        %v2247 = vadd.f32 %v2233, %v2246
        %2248 = vdwg.mxu0
        %2249 = vmatpush.bf16.msra.mxu0 %v2095
        %2250 = vmatpush.bf16.msra.mxu0 %v2091
        %2251 = vmatpush.bf16.msra.mxu0 %v2087
        %2252 = vmatpush.bf16.msra.mxu0 %v2083
        %2253 = vmatpush.bf16.msra.mxu0 %v2079
        %2254 = vmatpush.bf16.msra.mxu0 %v2075
        %2255 = vmatpush.bf16.msra.mxu0 %v2071
        %2256 = vmatpush.bf16.msra.mxu0 %v2067
        %2257 = vmatmul.bf16.gmra.mxu0 %v1853
        %v2258 = vpop.f32.mrf.mxu0
        %v2259 = vadd.f32 0.0, %v2258
        %v2260 = vpop.f32.mrf.mxu0
        %v2261 = vadd.f32 0.0, %v2260
        %2262 = vdwg.mxu0
        %2263 = vmatpush.bf16.msra.mxu0 %v2127
        %2264 = vmatpush.bf16.msra.mxu0 %v2123
        %2265 = vmatpush.bf16.msra.mxu0 %v2119
        %2266 = vmatpush.bf16.msra.mxu0 %v2115
        %2267 = vmatpush.bf16.msra.mxu0 %v2111
        %2268 = vmatpush.bf16.msra.mxu0 %v2107
        %2269 = vmatpush.bf16.msra.mxu0 %v2103
        %2270 = vmatpush.bf16.msra.mxu0 %v2099
        %2271 = vmatmul.bf16.gmra.mxu0 %v1870
        %v2272 = vpop.f32.mrf.mxu0
        %v2273 = vadd.f32 %v2259, %v2272
        %v2274 = vpop.f32.mrf.mxu0
        %v2275 = vadd.f32 %v2261, %v2274
        %2276 = vdwg.mxu0
        %2277 = vmatpush.bf16.msra.mxu0 %v2096
        %2278 = vmatpush.bf16.msra.mxu0 %v2092
        %2279 = vmatpush.bf16.msra.mxu0 %v2088
        %2280 = vmatpush.bf16.msra.mxu0 %v2084
        %2281 = vmatpush.bf16.msra.mxu0 %v2080
        %2282 = vmatpush.bf16.msra.mxu0 %v2076
        %2283 = vmatpush.bf16.msra.mxu0 %v2072
        %2284 = vmatpush.bf16.msra.mxu0 %v2068
        %2285 = vmatmul.bf16.gmra.mxu0 %v1853
        %v2286 = vpop.f32.mrf.mxu0
        %v2287 = vadd.f32 0.0, %v2286
        %v2288 = vpop.f32.mrf.mxu0
        %v2289 = vadd.f32 0.0, %v2288
        %2290 = vdwg.mxu0
        %2291 = vmatpush.bf16.msra.mxu0 %v2128
        %2292 = vmatpush.bf16.msra.mxu0 %v2124
        %2293 = vmatpush.bf16.msra.mxu0 %v2120
        %2294 = vmatpush.bf16.msra.mxu0 %v2116
        %2295 = vmatpush.bf16.msra.mxu0 %v2112
        %2296 = vmatpush.bf16.msra.mxu0 %v2108
        %2297 = vmatpush.bf16.msra.mxu0 %v2104
        %2298 = vmatpush.bf16.msra.mxu0 %v2100
        %2299 = vmatmul.bf16.gmra.mxu0 %v1870
        %v2300 = vpop.f32.mrf.mxu0
        %v2301 = vadd.f32 %v2287, %v2300
        %v2302 = vpop.f32.mrf.mxu0
        %v2303 = vadd.f32 %v2289, %v2302
        %2304 = vdwg.mxu0
        %v2305 = vadd.f32 %v1755, %v2217
        %v2306 = vadd.f32 %v1756, %v2245
        %v2307 = vadd.f32 %v1757, %v2273
        %v2308 = vadd.f32 %v1758, %v2301
        %v2309 = vadd.f32 %v1759, %v2219
        %v2310 = vadd.f32 %v1760, %v2247
        %v2311 = vadd.f32 %v1761, %v2275
        %v2312 = vadd.f32 %v1762, %v2303
        %v2313 = vld [vmem:[%s197] sm:$0xf0]
        %v2314 = vld [vmem:[%s197 + $0x8] sm:$0xf0]
        %v2315 = vld [vmem:[%s197 + $0x20] sm:$0xf]
        %v2316 = vld [vmem:[%s197 + $0x28] sm:$0xf]
        %v2317 = vpack.c.bf16 %v205, %v2313
        %v2318 = vpack.c.bf16 %v206, %v2314
        %v2319 = vpack.c.bf16 %v2315, %v2315
        %v2320 = vpack.c.bf16 %v2316, %v2316
        %s2321 = scalar_lea.vmem [#allocation2], 2048
        %v2322 = vld [vmem:[%s2321] sm:$0xff]
        %v2323 = vld [vmem:[%s2321 + $0x8] sm:$0xff]
        %v2324 = vld [vmem:[%s2321 + $0x10] sm:$0xff]
        %v2325 = vld [vmem:[%s2321 + $0x18] sm:$0xff]
        %v2326 = vld [vmem:[%s2321 + $0x20] sm:$0xff]
        %v2327 = vld [vmem:[%s2321 + $0x28] sm:$0xff]
        %v2328 = vld [vmem:[%s2321 + $0x30] sm:$0xff]
        %v2329 = vld [vmem:[%s2321 + $0x38] sm:$0xff]
        %v2330 = vld [vmem:[%s2321 + $0x40] sm:$0xff]
        %v2331 = vld [vmem:[%s2321 + $0x48] sm:$0xff]
        %v2332 = vld [vmem:[%s2321 + $0x50] sm:$0xff]
        %v2333 = vld [vmem:[%s2321 + $0x58] sm:$0xff]
        %v2334 = vld [vmem:[%s2321 + $0x60] sm:$0xff]
        %v2335 = vld [vmem:[%s2321 + $0x68] sm:$0xff]
        %v2336 = vld [vmem:[%s2321 + $0x70] sm:$0xff]
        %v2337 = vld [vmem:[%s2321 + $0x78] sm:$0xff]
        %v2338 = vld [vmem:[%s2321 + $0x80] sm:$0xff]
        %v2339 = vld [vmem:[%s2321 + $0x88] sm:$0xff]
        %v2340 = vld [vmem:[%s2321 + $0x90] sm:$0xff]
        %v2341 = vld [vmem:[%s2321 + $0x98] sm:$0xff]
        %v2342 = vld [vmem:[%s2321 + $0xa0] sm:$0xff]
        %v2343 = vld [vmem:[%s2321 + $0xa8] sm:$0xff]
        %v2344 = vld [vmem:[%s2321 + $0xb0] sm:$0xff]
        %v2345 = vld [vmem:[%s2321 + $0xb8] sm:$0xff]
        %v2346 = vld [vmem:[%s2321 + $0xc0] sm:$0xff]
        %v2347 = vld [vmem:[%s2321 + $0xc8] sm:$0xff]
        %v2348 = vld [vmem:[%s2321 + $0xd0] sm:$0xff]
        %v2349 = vld [vmem:[%s2321 + $0xd8] sm:$0xff]
        %v2350 = vld [vmem:[%s2321 + $0xe0] sm:$0xff]
        %v2351 = vld [vmem:[%s2321 + $0xe8] sm:$0xff]
        %v2352 = vld [vmem:[%s2321 + $0xf0] sm:$0xff]
        %v2353 = vld [vmem:[%s2321 + $0xf8] sm:$0xff]
        %v2354 = vld [vmem:[%s2321 + $0x100] sm:$0xff]
        %v2355 = vld [vmem:[%s2321 + $0x108] sm:$0xff]
        %v2356 = vld [vmem:[%s2321 + $0x110] sm:$0xff]
        %v2357 = vld [vmem:[%s2321 + $0x118] sm:$0xff]
        %v2358 = vld [vmem:[%s2321 + $0x120] sm:$0xff]
        %v2359 = vld [vmem:[%s2321 + $0x128] sm:$0xff]
        %v2360 = vld [vmem:[%s2321 + $0x130] sm:$0xff]
        %v2361 = vld [vmem:[%s2321 + $0x138] sm:$0xff]
        %v2362 = vld [vmem:[%s2321 + $0x140] sm:$0xff]
        %v2363 = vld [vmem:[%s2321 + $0x148] sm:$0xff]
        %v2364 = vld [vmem:[%s2321 + $0x150] sm:$0xff]
        %v2365 = vld [vmem:[%s2321 + $0x158] sm:$0xff]
        %v2366 = vld [vmem:[%s2321 + $0x160] sm:$0xff]
        %v2367 = vld [vmem:[%s2321 + $0x168] sm:$0xff]
        %v2368 = vld [vmem:[%s2321 + $0x170] sm:$0xff]
        %v2369 = vld [vmem:[%s2321 + $0x178] sm:$0xff]
        %v2370 = vld [vmem:[%s2321 + $0x180] sm:$0xff]
        %v2371 = vld [vmem:[%s2321 + $0x188] sm:$0xff]
        %v2372 = vld [vmem:[%s2321 + $0x190] sm:$0xff]
        %v2373 = vld [vmem:[%s2321 + $0x198] sm:$0xff]
        %v2374 = vld [vmem:[%s2321 + $0x1a0] sm:$0xff]
        %v2375 = vld [vmem:[%s2321 + $0x1a8] sm:$0xff]
        %v2376 = vld [vmem:[%s2321 + $0x1b0] sm:$0xff]
        %v2377 = vld [vmem:[%s2321 + $0x1b8] sm:$0xff]
        %v2378 = vld [vmem:[%s2321 + $0x1c0] sm:$0xff]
        %v2379 = vld [vmem:[%s2321 + $0x1c8] sm:$0xff]
        %v2380 = vld [vmem:[%s2321 + $0x1d0] sm:$0xff]
        %v2381 = vld [vmem:[%s2321 + $0x1d8] sm:$0xff]
        %v2382 = vld [vmem:[%s2321 + $0x1e0] sm:$0xff]
        %v2383 = vld [vmem:[%s2321 + $0x1e8] sm:$0xff]
        %v2384 = vld [vmem:[%s2321 + $0x1f0] sm:$0xff]
        %v2385 = vld [vmem:[%s2321 + $0x1f8] sm:$0xff]
        %vm2390 = vcmask 1045504
        %v2391 = vrot.slane %v2317, 2
        %v2392 = vrot.slane %v2319, 2
        %v2393 = vsel %vm2390, %v2391, %v2392
        %v2394 = vrot.slane %v2318, 2
        %v2395 = vrot.slane %v2320, 2
        %v2396 = vsel %vm2390, %v2394, %v2395
        %v2463 = vunpack.c.l.b16 %v2322
        %v2464 = vunpack.c.h.b16 %v2322
        %v2465 = vunpack.c.l.b16 %v2323
        %v2466 = vunpack.c.h.b16 %v2323
        %v2467 = vunpack.c.l.b16 %v2324
        %v2468 = vunpack.c.h.b16 %v2324
        %v2469 = vunpack.c.l.b16 %v2325
        %v2470 = vunpack.c.h.b16 %v2325
        %v2471 = vunpack.c.l.b16 %v2326
        %v2472 = vunpack.c.h.b16 %v2326
        %v2473 = vunpack.c.l.b16 %v2327
        %v2474 = vunpack.c.h.b16 %v2327
        %v2475 = vunpack.c.l.b16 %v2328
        %v2476 = vunpack.c.h.b16 %v2328
        %v2477 = vunpack.c.l.b16 %v2329
        %v2478 = vunpack.c.h.b16 %v2329
        %v2479 = vunpack.c.l.b16 %v2330
        %v2480 = vunpack.c.h.b16 %v2330
        %v2481 = vunpack.c.l.b16 %v2331
        %v2482 = vunpack.c.h.b16 %v2331
        %v2483 = vunpack.c.l.b16 %v2332
        %v2484 = vunpack.c.h.b16 %v2332
        %v2485 = vunpack.c.l.b16 %v2333
        %v2486 = vunpack.c.h.b16 %v2333
        %v2487 = vunpack.c.l.b16 %v2334
        %v2488 = vunpack.c.h.b16 %v2334
        %v2489 = vunpack.c.l.b16 %v2335
        %v2490 = vunpack.c.h.b16 %v2335
        %v2491 = vunpack.c.l.b16 %v2336
        %v2492 = vunpack.c.h.b16 %v2336
        %v2493 = vunpack.c.l.b16 %v2337
        %v2494 = vunpack.c.h.b16 %v2337
        %v2495 = vunpack.c.l.b16 %v2338
        %v2496 = vunpack.c.h.b16 %v2338
        %v2497 = vunpack.c.l.b16 %v2339
        %v2498 = vunpack.c.h.b16 %v2339
        %v2499 = vunpack.c.l.b16 %v2340
        %v2500 = vunpack.c.h.b16 %v2340
        %v2501 = vunpack.c.l.b16 %v2341
        %v2502 = vunpack.c.h.b16 %v2341
        %v2503 = vunpack.c.l.b16 %v2342
        %v2504 = vunpack.c.h.b16 %v2342
        %v2505 = vunpack.c.l.b16 %v2343
        %v2506 = vunpack.c.h.b16 %v2343
        %v2507 = vunpack.c.l.b16 %v2344
        %v2508 = vunpack.c.h.b16 %v2344
        %v2509 = vunpack.c.l.b16 %v2345
        %v2510 = vunpack.c.h.b16 %v2345
        %v2511 = vunpack.c.l.b16 %v2346
        %v2512 = vunpack.c.h.b16 %v2346
        %v2513 = vunpack.c.l.b16 %v2347
        %v2514 = vunpack.c.h.b16 %v2347
        %v2515 = vunpack.c.l.b16 %v2348
        %v2516 = vunpack.c.h.b16 %v2348
        %v2517 = vunpack.c.l.b16 %v2349
        %v2518 = vunpack.c.h.b16 %v2349
        %v2519 = vunpack.c.l.b16 %v2350
        %v2520 = vunpack.c.h.b16 %v2350
        %v2521 = vunpack.c.l.b16 %v2351
        %v2522 = vunpack.c.h.b16 %v2351
        %v2523 = vunpack.c.l.b16 %v2352
        %v2524 = vunpack.c.h.b16 %v2352
        %v2525 = vunpack.c.l.b16 %v2353
        %v2526 = vunpack.c.h.b16 %v2353
        %v2527 = vunpack.c.l.b16 %v2354
        %v2528 = vunpack.c.h.b16 %v2354
        %v2529 = vunpack.c.l.b16 %v2355
        %v2530 = vunpack.c.h.b16 %v2355
        %v2531 = vunpack.c.l.b16 %v2356
        %v2532 = vunpack.c.h.b16 %v2356
        %v2533 = vunpack.c.l.b16 %v2357
        %v2534 = vunpack.c.h.b16 %v2357
        %v2535 = vunpack.c.l.b16 %v2358
        %v2536 = vunpack.c.h.b16 %v2358
        %v2537 = vunpack.c.l.b16 %v2359
        %v2538 = vunpack.c.h.b16 %v2359
        %v2539 = vunpack.c.l.b16 %v2360
        %v2540 = vunpack.c.h.b16 %v2360
        %v2541 = vunpack.c.l.b16 %v2361
        %v2542 = vunpack.c.h.b16 %v2361
        %v2543 = vunpack.c.l.b16 %v2362
        %v2544 = vunpack.c.h.b16 %v2362
        %v2545 = vunpack.c.l.b16 %v2363
        %v2546 = vunpack.c.h.b16 %v2363
        %v2547 = vunpack.c.l.b16 %v2364
        %v2548 = vunpack.c.h.b16 %v2364
        %v2549 = vunpack.c.l.b16 %v2365
        %v2550 = vunpack.c.h.b16 %v2365
        %v2551 = vunpack.c.l.b16 %v2366
        %v2552 = vunpack.c.h.b16 %v2366
        %v2553 = vunpack.c.l.b16 %v2367
        %v2554 = vunpack.c.h.b16 %v2367
        %v2555 = vunpack.c.l.b16 %v2368
        %v2556 = vunpack.c.h.b16 %v2368
        %v2557 = vunpack.c.l.b16 %v2369
        %v2558 = vunpack.c.h.b16 %v2369
        %v2559 = vunpack.c.l.b16 %v2370
        %v2560 = vunpack.c.h.b16 %v2370
        %v2561 = vunpack.c.l.b16 %v2371
        %v2562 = vunpack.c.h.b16 %v2371
        %v2563 = vunpack.c.l.b16 %v2372
        %v2564 = vunpack.c.h.b16 %v2372
        %v2565 = vunpack.c.l.b16 %v2373
        %v2566 = vunpack.c.h.b16 %v2373
        %v2567 = vunpack.c.l.b16 %v2374
        %v2568 = vunpack.c.h.b16 %v2374
        %v2569 = vunpack.c.l.b16 %v2375
        %v2570 = vunpack.c.h.b16 %v2375
        %v2571 = vunpack.c.l.b16 %v2376
        %v2572 = vunpack.c.h.b16 %v2376
        %v2573 = vunpack.c.l.b16 %v2377
        %v2574 = vunpack.c.h.b16 %v2377
        %v2575 = vunpack.c.l.b16 %v2378
        %v2576 = vunpack.c.h.b16 %v2378
        %v2577 = vunpack.c.l.b16 %v2379
        %v2578 = vunpack.c.h.b16 %v2379
        %v2579 = vunpack.c.l.b16 %v2380
        %v2580 = vunpack.c.h.b16 %v2380
        %v2581 = vunpack.c.l.b16 %v2381
        %v2582 = vunpack.c.h.b16 %v2381
        %v2583 = vunpack.c.l.b16 %v2382
        %v2584 = vunpack.c.h.b16 %v2382
        %v2585 = vunpack.c.l.b16 %v2383
        %v2586 = vunpack.c.h.b16 %v2383
        %v2587 = vunpack.c.l.b16 %v2384
        %v2588 = vunpack.c.h.b16 %v2384
        %v2589 = vunpack.c.l.b16 %v2385
        %v2590 = vunpack.c.h.b16 %v2385
        %v2591 = vpack.c.b16 %v2467, %v2463
        %v2592 = vpack.c.b16 %v2468, %v2464
        %v2593 = vpack.c.b16 %v2469, %v2465
        %v2594 = vpack.c.b16 %v2470, %v2466
        %v2595 = vpack.c.b16 %v2475, %v2471
        %v2596 = vpack.c.b16 %v2476, %v2472
        %v2597 = vpack.c.b16 %v2477, %v2473
        %v2598 = vpack.c.b16 %v2478, %v2474
        %v2599 = vpack.c.b16 %v2483, %v2479
        %v2600 = vpack.c.b16 %v2484, %v2480
        %v2601 = vpack.c.b16 %v2485, %v2481
        %v2602 = vpack.c.b16 %v2486, %v2482
        %v2603 = vpack.c.b16 %v2491, %v2487
        %v2604 = vpack.c.b16 %v2492, %v2488
        %v2605 = vpack.c.b16 %v2493, %v2489
        %v2606 = vpack.c.b16 %v2494, %v2490
        %v2607 = vpack.c.b16 %v2499, %v2495
        %v2608 = vpack.c.b16 %v2500, %v2496
        %v2609 = vpack.c.b16 %v2501, %v2497
        %v2610 = vpack.c.b16 %v2502, %v2498
        %v2611 = vpack.c.b16 %v2507, %v2503
        %v2612 = vpack.c.b16 %v2508, %v2504
        %v2613 = vpack.c.b16 %v2509, %v2505
        %v2614 = vpack.c.b16 %v2510, %v2506
        %v2615 = vpack.c.b16 %v2515, %v2511
        %v2616 = vpack.c.b16 %v2516, %v2512
        %v2617 = vpack.c.b16 %v2517, %v2513
        %v2618 = vpack.c.b16 %v2518, %v2514
        %v2619 = vpack.c.b16 %v2523, %v2519
        %v2620 = vpack.c.b16 %v2524, %v2520
        %v2621 = vpack.c.b16 %v2525, %v2521
        %v2622 = vpack.c.b16 %v2526, %v2522
        %v2623 = vpack.c.b16 %v2531, %v2527
        %v2624 = vpack.c.b16 %v2532, %v2528
        %v2625 = vpack.c.b16 %v2533, %v2529
        %v2626 = vpack.c.b16 %v2534, %v2530
        %v2627 = vpack.c.b16 %v2539, %v2535
        %v2628 = vpack.c.b16 %v2540, %v2536
        %v2629 = vpack.c.b16 %v2541, %v2537
        %v2630 = vpack.c.b16 %v2542, %v2538
        %v2631 = vpack.c.b16 %v2547, %v2543
        %v2632 = vpack.c.b16 %v2548, %v2544
        %v2633 = vpack.c.b16 %v2549, %v2545
        %v2634 = vpack.c.b16 %v2550, %v2546
        %v2635 = vpack.c.b16 %v2555, %v2551
        %v2636 = vpack.c.b16 %v2556, %v2552
        %v2637 = vpack.c.b16 %v2557, %v2553
        %v2638 = vpack.c.b16 %v2558, %v2554
        %v2639 = vpack.c.b16 %v2563, %v2559
        %v2640 = vpack.c.b16 %v2564, %v2560
        %v2641 = vpack.c.b16 %v2565, %v2561
        %v2642 = vpack.c.b16 %v2566, %v2562
        %v2643 = vpack.c.b16 %v2571, %v2567
        %v2644 = vpack.c.b16 %v2572, %v2568
        %v2645 = vpack.c.b16 %v2573, %v2569
        %v2646 = vpack.c.b16 %v2574, %v2570
        %v2647 = vpack.c.b16 %v2579, %v2575
        %v2648 = vpack.c.b16 %v2580, %v2576
        %v2649 = vpack.c.b16 %v2581, %v2577
        %v2650 = vpack.c.b16 %v2582, %v2578
        %v2651 = vpack.c.b16 %v2587, %v2583
        %v2652 = vpack.c.b16 %v2588, %v2584
        %v2653 = vpack.c.b16 %v2589, %v2585
        %v2654 = vpack.c.b16 %v2590, %v2586
        %2719 = vmatpush.bf16.msra.mxu0 %v2619
        %2720 = vmatpush.bf16.msra.mxu0 %v2615
        %2721 = vmatpush.bf16.msra.mxu0 %v2611
        %2722 = vmatpush.bf16.msra.mxu0 %v2607
        %2723 = vmatpush.bf16.msra.mxu0 %v2603
        %2724 = vmatpush.bf16.msra.mxu0 %v2599
        %2725 = vmatpush.bf16.msra.mxu0 %v2595
        %2726 = vmatpush.bf16.msra.mxu0 %v2591
        %2727 = vmatmul.bf16.gmra.mxu0 %v2393
        %v2728 = vpop.f32.mrf.mxu0
        %v2729 = vadd.f32 0.0, %v2728
        %v2730 = vpop.f32.mrf.mxu0
        %v2731 = vadd.f32 0.0, %v2730
        %2732 = vdwg.mxu0
        %2733 = vmatpush.bf16.msra.mxu0 %v2651
        %2734 = vmatpush.bf16.msra.mxu0 %v2647
        %2735 = vmatpush.bf16.msra.mxu0 %v2643
        %2736 = vmatpush.bf16.msra.mxu0 %v2639
        %2737 = vmatpush.bf16.msra.mxu0 %v2635
        %2738 = vmatpush.bf16.msra.mxu0 %v2631
        %2739 = vmatpush.bf16.msra.mxu0 %v2627
        %2740 = vmatpush.bf16.msra.mxu0 %v2623
        %2741 = vmatmul.bf16.gmra.mxu0 %v2396
        %v2742 = vpop.f32.mrf.mxu0
        %v2743 = vadd.f32 %v2729, %v2742
        %v2744 = vpop.f32.mrf.mxu0
        %v2745 = vadd.f32 %v2731, %v2744
        %2746 = vdwg.mxu0
        %2747 = vmatpush.bf16.msra.mxu0 %v2620
        %2748 = vmatpush.bf16.msra.mxu0 %v2616
        %2749 = vmatpush.bf16.msra.mxu0 %v2612
        %2750 = vmatpush.bf16.msra.mxu0 %v2608
        %2751 = vmatpush.bf16.msra.mxu0 %v2604
        %2752 = vmatpush.bf16.msra.mxu0 %v2600
        %2753 = vmatpush.bf16.msra.mxu0 %v2596
        %2754 = vmatpush.bf16.msra.mxu0 %v2592
        %2755 = vmatmul.bf16.gmra.mxu0 %v2393
        %v2756 = vpop.f32.mrf.mxu0
        %v2757 = vadd.f32 0.0, %v2756
        %v2758 = vpop.f32.mrf.mxu0
        %v2759 = vadd.f32 0.0, %v2758
        %2760 = vdwg.mxu0
        %2761 = vmatpush.bf16.msra.mxu0 %v2652
        %2762 = vmatpush.bf16.msra.mxu0 %v2648
        %2763 = vmatpush.bf16.msra.mxu0 %v2644
        %2764 = vmatpush.bf16.msra.mxu0 %v2640
        %2765 = vmatpush.bf16.msra.mxu0 %v2636
        %2766 = vmatpush.bf16.msra.mxu0 %v2632
        %2767 = vmatpush.bf16.msra.mxu0 %v2628
        %2768 = vmatpush.bf16.msra.mxu0 %v2624
        %2769 = vmatmul.bf16.gmra.mxu0 %v2396
        %v2770 = vpop.f32.mrf.mxu0
        %v2771 = vadd.f32 %v2757, %v2770
        %v2772 = vpop.f32.mrf.mxu0
        %v2773 = vadd.f32 %v2759, %v2772
        %2774 = vdwg.mxu0
        %2775 = vmatpush.bf16.msra.mxu0 %v2621
        %2776 = vmatpush.bf16.msra.mxu0 %v2617
        %2777 = vmatpush.bf16.msra.mxu0 %v2613
        %2778 = vmatpush.bf16.msra.mxu0 %v2609
        %2779 = vmatpush.bf16.msra.mxu0 %v2605
        %2780 = vmatpush.bf16.msra.mxu0 %v2601
        %2781 = vmatpush.bf16.msra.mxu0 %v2597
        %2782 = vmatpush.bf16.msra.mxu0 %v2593
        %2783 = vmatmul.bf16.gmra.mxu0 %v2393
        %v2784 = vpop.f32.mrf.mxu0
        %v2785 = vadd.f32 0.0, %v2784
        %v2786 = vpop.f32.mrf.mxu0
        %v2787 = vadd.f32 0.0, %v2786
        %2788 = vdwg.mxu0
        %2789 = vmatpush.bf16.msra.mxu0 %v2653
        %2790 = vmatpush.bf16.msra.mxu0 %v2649
        %2791 = vmatpush.bf16.msra.mxu0 %v2645
        %2792 = vmatpush.bf16.msra.mxu0 %v2641
        %2793 = vmatpush.bf16.msra.mxu0 %v2637
        %2794 = vmatpush.bf16.msra.mxu0 %v2633
        %2795 = vmatpush.bf16.msra.mxu0 %v2629
        %2796 = vmatpush.bf16.msra.mxu0 %v2625
        %2797 = vmatmul.bf16.gmra.mxu0 %v2396
        %v2798 = vpop.f32.mrf.mxu0
        %v2799 = vadd.f32 %v2785, %v2798
        %v2800 = vpop.f32.mrf.mxu0
        %v2801 = vadd.f32 %v2787, %v2800
        %2802 = vdwg.mxu0
        %2803 = vmatpush.bf16.msra.mxu0 %v2622
        %2804 = vmatpush.bf16.msra.mxu0 %v2618
        %2805 = vmatpush.bf16.msra.mxu0 %v2614
        %2806 = vmatpush.bf16.msra.mxu0 %v2610
        %2807 = vmatpush.bf16.msra.mxu0 %v2606
        %2808 = vmatpush.bf16.msra.mxu0 %v2602
        %2809 = vmatpush.bf16.msra.mxu0 %v2598
        %2810 = vmatpush.bf16.msra.mxu0 %v2594
        %2811 = vmatmul.bf16.gmra.mxu0 %v2393
        %v2812 = vpop.f32.mrf.mxu0
        %v2813 = vadd.f32 0.0, %v2812
        %v2814 = vpop.f32.mrf.mxu0
        %v2815 = vadd.f32 0.0, %v2814
        %2816 = vdwg.mxu0
        %2817 = vmatpush.bf16.msra.mxu0 %v2654
        %2818 = vmatpush.bf16.msra.mxu0 %v2650
        %2819 = vmatpush.bf16.msra.mxu0 %v2646
        %2820 = vmatpush.bf16.msra.mxu0 %v2642
        %2821 = vmatpush.bf16.msra.mxu0 %v2638
        %2822 = vmatpush.bf16.msra.mxu0 %v2634
        %2823 = vmatpush.bf16.msra.mxu0 %v2630
        %2824 = vmatpush.bf16.msra.mxu0 %v2626
        %2825 = vmatmul.bf16.gmra.mxu0 %v2396
        %v2826 = vpop.f32.mrf.mxu0
        %v2827 = vadd.f32 %v2813, %v2826
        %v2828 = vpop.f32.mrf.mxu0
        %v2829 = vadd.f32 %v2815, %v2828
        %2830 = vdwg.mxu0
        %v2831 = vadd.f32 %v2305, %v2743
        %v2832 = vadd.f32 %v2306, %v2771
        %v2833 = vadd.f32 %v2307, %v2799
        %v2834 = vadd.f32 %v2308, %v2827
        %v2835 = vadd.f32 %v2309, %v2745
        %v2836 = vadd.f32 %v2310, %v2773
        %v2837 = vadd.f32 %v2311, %v2801
        %v2838 = vadd.f32 %v2312, %v2829
        %v2839 = vld [vmem:[#allocation4] sm:$0xf]
        %v2841 = vperm.slane %v2839, 0
        %v2842 = vperm.slane %v2839, 1
        %v2843 = vperm.slane %v2839, 2
        %v2844 = vperm.slane %v2839, 3
        %v2849 = vadd.f32 %v2831, %v2841
        %v2850 = vadd.f32 %v2832, %v2842
        %v2851 = vadd.f32 %v2833, %v2843
        %v2852 = vadd.f32 %v2834, %v2844
        %v2853 = vadd.f32 %v2835, %v2841
        %v2854 = vadd.f32 %v2836, %v2842
        %v2855 = vadd.f32 %v2837, %v2843
        %v2856 = vadd.f32 %v2838, %v2844
        %v2857 = vmax.f32 %v2849, 0.0
        %v2858 = vmax.f32 %v2850, 0.0
        %v2859 = vmax.f32 %v2851, 0.0
        %v2860 = vmax.f32 %v2852, 0.0
        %v2861 = vmax.f32 %v2853, 0.0
        %v2862 = vmax.f32 %v2854, 0.0
        %v2863 = vmax.f32 %v2855, 0.0
        %v2864 = vmax.f32 %v2856, 0.0
        %v2865 = vmax.f32 %v2857, %v2859
        %v2866 = vmax.f32 %v2858, %v2860
        %v2867 = vmax.f32 %v2861, %v2863
        %v2868 = vmax.f32 %v2862, %v2864
        %v2869 = vlaneseq
        %v2870 = vshrl.u32 %v2869, 7
        %v2871 = vlaneseq
        %v2872 = vand.u32 %v2871, 127
        %v2873 = vmul.u32 %v2870, 2
        %vm2874 = vcmp.eq.s32.totalorder %v2872, %v2873
        %v2875 = vsel %vm2874, 1, 0
        %v2876 = vcvt.s32.f32 %v2875
        %v2877 = vadd.s32 %v2873, 1
        %vm2878 = vcmp.eq.s32.totalorder %v2872, %v2877
        %v2879 = vsel %vm2878, 1, 0
        %v2880 = vcvt.s32.f32 %v2879
        %vm2881 = vcmask 130048
        %v2883 = vsel %vm2881, %v2876, 0
        %2885 = vmatpush.msra.mxu0 0.0
        %2886 = vmatpush.msra.mxu0 0.0
        %2887 = vmatpush.msra.mxu0 0.0
        %2888 = vmatpush.msra.mxu0 0.0
        %2889 = vmatpush.msra.mxu0 0.0
        %2890 = vmatpush.msra.mxu0 0.0
        %2891 = vmatpush.msra.mxu0 0.0
        %2892 = vmatpush.msra.mxu0 0.0
        %2893 = vmatpush.msra.mxu0 0.0
        %2894 = vmatpush.msra.mxu0 0.0
        %2895 = vmatpush.msra.mxu0 0.0
        %2896 = vmatpush.msra.mxu0 0.0
        %2897 = vmatpush.msra.mxu0 0.0
        %2898 = vmatpush.msra.mxu0 0.0
        %2899 = vmatpush.msra.mxu0 %v2867
        %2900 = vmatpush.msra.mxu0 %v2865
        %2901 = vmatmul.f32.gmra.mxu0 %v2883
        %v2902 = vpop.f32.mrf.mxu0
        %v2903 = vadd.f32 0.0, %v2902
        %2904 = vdwg.mxu0
        %2905 = vmatpush.msra.mxu0 0.0
        %2906 = vmatpush.msra.mxu0 0.0
        %2907 = vmatpush.msra.mxu0 0.0
        %2908 = vmatpush.msra.mxu0 0.0
        %2909 = vmatpush.msra.mxu0 0.0
        %2910 = vmatpush.msra.mxu0 0.0
        %2911 = vmatpush.msra.mxu0 0.0
        %2912 = vmatpush.msra.mxu0 0.0
        %2913 = vmatpush.msra.mxu0 0.0
        %2914 = vmatpush.msra.mxu0 0.0
        %2915 = vmatpush.msra.mxu0 0.0
        %2916 = vmatpush.msra.mxu0 0.0
        %2917 = vmatpush.msra.mxu0 0.0
        %2918 = vmatpush.msra.mxu0 0.0
        %2919 = vmatpush.msra.mxu0 %v2868
        %2920 = vmatpush.msra.mxu0 %v2866
        %2921 = vmatmul.f32.gmra.mxu0 %v2883
        %v2922 = vpop.f32.mrf.mxu0
        %v2923 = vadd.f32 0.0, %v2922
        %2924 = vdwg.mxu0
        %v2926 = vsel %vm2881, %v2880, 0
        %2928 = vmatpush.msra.mxu0 0.0
        %2929 = vmatpush.msra.mxu0 0.0
        %2930 = vmatpush.msra.mxu0 0.0
        %2931 = vmatpush.msra.mxu0 0.0
        %2932 = vmatpush.msra.mxu0 0.0
        %2933 = vmatpush.msra.mxu0 0.0
        %2934 = vmatpush.msra.mxu0 0.0
        %2935 = vmatpush.msra.mxu0 0.0
        %2936 = vmatpush.msra.mxu0 0.0
        %2937 = vmatpush.msra.mxu0 0.0
        %2938 = vmatpush.msra.mxu0 0.0
        %2939 = vmatpush.msra.mxu0 0.0
        %2940 = vmatpush.msra.mxu0 0.0
        %2941 = vmatpush.msra.mxu0 0.0
        %2942 = vmatpush.msra.mxu0 %v2867
        %2943 = vmatpush.msra.mxu0 %v2865
        %2944 = vmatmul.f32.gmra.mxu0 %v2926
        %v2945 = vpop.f32.mrf.mxu0
        %v2946 = vadd.f32 0.0, %v2945
        %2947 = vdwg.mxu0
        %2948 = vmatpush.msra.mxu0 0.0
        %2949 = vmatpush.msra.mxu0 0.0
        %2950 = vmatpush.msra.mxu0 0.0
        %2951 = vmatpush.msra.mxu0 0.0
        %2952 = vmatpush.msra.mxu0 0.0
        %2953 = vmatpush.msra.mxu0 0.0
        %2954 = vmatpush.msra.mxu0 0.0
        %2955 = vmatpush.msra.mxu0 0.0
        %2956 = vmatpush.msra.mxu0 0.0
        %2957 = vmatpush.msra.mxu0 0.0
        %2958 = vmatpush.msra.mxu0 0.0
        %2959 = vmatpush.msra.mxu0 0.0
        %2960 = vmatpush.msra.mxu0 0.0
        %2961 = vmatpush.msra.mxu0 0.0
        %2962 = vmatpush.msra.mxu0 %v2868
        %2963 = vmatpush.msra.mxu0 %v2866
        %2964 = vmatmul.f32.gmra.mxu0 %v2926
        %v2965 = vpop.f32.mrf.mxu0
        %v2966 = vadd.f32 0.0, %v2965
        %2967 = vdwg.mxu0
        %v2968 = vmax.f32 %v2903, %v2946
        %v2969 = vmax.f32 %v2923, %v2966
        %2970 = vst [vmem:[%s202] sm:$0xff] 0.0
        %2971 = vst [vmem:[%s202 + $0x8] sm:$0xff] 0.0
        %2972 = vst [vmem:[%s202 + $0x10] sm:$0xf] 0.0
        %2973 = vst [vmem:[%s202 + $0x18] sm:$0xf] 0.0
        %v2976 = vrot.slane %v2968, 6
        %v2977 = vrot.slane %v2969, 6
        %2980 = vst [vmem:[%s202] sm:$0xfc] %v2976
        %2981 = vst [vmem:[%s202 + $0x8] sm:$0xfc] %v2977
        %2982 = vst [vmem:[%s202 + $0x10] sm:$0x3] %v2976
        %2983 = vst [vmem:[%s202 + $0x18] sm:$0x3] %v2977
        %p2984 = scmp.lt.s32.totalorder %s16, 1
        %s2985 = scalar_select %p2984, %s16, 1
        %s2986 = smul.addr %s2985, 4
        %s2987 = smul.addr %s2986, 8
        %s2988 = scalar_lea.vmem %s3, %s2987
        // Predicated region
        $region41: #{cnn_forward.5} parent=31 // pred_check
          %p2989 = pneg %p102
        $region42: #{cnn_forward.5} parent=31 // pred_check_branch
          %2991 = sbr.rel (%p2989) target = $region44
        $region43: #{cnn_forward.5} parent=31 // pred_region
          _
        $region44: #{cnn_forward.5} parent=31 // pred_fallthru
          _
      $region32: #{cnn_forward.5} parent=5 // pred_fallthru
        _
      %p2992 = scmp.le.s32.totalorder 2, %s11
      // Predicated region
      $region45: #{cnn_forward.5} parent=5 // pred_check
        %p2993 = pneg %p2992
      $region46: #{cnn_forward.5} parent=5 // pred_check_branch
        %2995 = sbr.rel (%p2993) target = $region48
      $region47: #{cnn_forward.5} parent=5 // pred_region
        %s2996 = ssub.s32 %s11, 2
        // Predicated region
        $region49: #{cnn_forward.5} parent=47 // pred_check
          %p2997 = pneg %p108
        $region50: #{cnn_forward.5} parent=47 // pred_check_branch
          %2999 = sbr.rel (%p2997) target = $region52
        $region51: #{cnn_forward.5} parent=47 // pred_region
          %p3000 = scmp.lt.s32.totalorder %s17, 1
          %s3001 = scalar_select %p3000, %s17, 1
          %s3002 = smul.addr %s3001, 4
          %s3003 = smul.addr %s3002, 8
          %s3004 = scalar_lea.vmem %s3, %s3003
        $region52: #{cnn_forward.5} parent=47 // pred_fallthru
          _
      $region48: #{cnn_forward.5} parent=5 // pred_fallthru
        _
    $region6: #{cnn_forward.5} parent=1 // loop_footer
      %s15 = sadd.s32 1, %s11
    $region7: #{cnn_forward.5} parent=1 // loop_footer_branch
      %10 = sbr.rel target = $region3
    $region8: #{cnn_forward.5} parent=1 // loop_exit
      _
    %3005 = vsyncpa [#allocation3], 1
    %s3006 = scalar_lea.sflag [#allocation3], 1
    %3007 = vsyncpa %s3006, 1
    %3008 = vsyncpa [#allocation5], 1

// kernel: cnn_forward.6
$region0: #{cnn_forward.6}
  #allocation0 [shape = 'u32[]', space=smem, size = 0x4, offset = 0x4, fixed_abs, tag = 'smem constant byte address 0x4 - core index']
  #allocation1 [shape = 'u32[72,128]{1,0:T(1,128)}', space=vmem, size = 0x9000, scoped, tag = 'internal scratch']
  %s0 = inlined_call_operand.vmem [shape: f32[2,12,256], index: 0, kind: input, shape index: {}]
  %s1 = inlined_call_operand.hbm [shape: bf16[5,256,512], index: 1, kind: input, shape index: {}]
  %s2 = inlined_call_operand.hbm [shape: f32[1,512], index: 2, kind: input, shape index: {}]
  %s3 = inlined_call_operand.vmem [shape: f32[2,4,256], index: 3, kind: output, shape index: {}]
  %s4 = sld [smem:[#allocation0]]
  $region53: #{cnn_forward.6} parent=0
    _
  %s6 = ssub.s32 1, %s4
  %s7 = scalar_select 0, %s6, %s4
  $region1: #{cnn_forward.6} parent=0
    #allocation2 [shape = 'u8[1310720]{0}', space=vmem, size = 0x140000, scoped, tag = 'input window, operand 1, single buffered']
    #allocation3 [shape = 's32[2]{0}', space=sflag, size = 0x8, scoped, tag = 'scoped memory for cnn_forward.6']
    #allocation4 [shape = 'u8[2048]{0}', space=vmem, size = 0x800, scoped, tag = 'input window, operand 2, single buffered']
    #allocation5 [shape = 's32[1]{0}', space=sflag, size = 0x4, scoped, tag = 'scoped memory for cnn_forward.6']
    %8 = vsyncpa [#allocation3], 0
    %9 = vsyncpa [#allocation5], 0
    loop: start=0, step=1, limit=4
    $region2: #{cnn_forward.6} parent=1 // loop_pre_header
      _
    $region3: #{cnn_forward.6} parent=1 // loop_header
      %s11 = sphi 0, %s15
      %p12 = scmp.ge.s32.totalorder %s11, 4
      %s21 = sphi 0, %s23
      %s24 = sphi 0, %s21
      %s25 = sphi 0, %s24
      %s41 = sphi 0, %s25
      %s45 = sphi 0, %s45
      %s47 = sphi 0, %s45
      %s48 = sphi 0, %s47
      %s62 = sphi 0, %s48
      %s66 = sphi 0, %s66
      %s68 = sphi 0, %s66
      %s69 = sphi 0, %s68
      %s83 = sphi 0, %s69
      %s89 = sphi 0, %s91
      %s92 = sphi 0, %s89
      %s93 = sphi 0, %s92
      %s109 = sphi 0, %s93
    $region4: #{cnn_forward.6} parent=1 // loop_header_branch
      %14 = sbr.rel (%p12) target = $region8
    $region5: #{cnn_forward.6} parent=1 // loop_body
      %s16 = ssub.s32 %s11, 1
      %s17 = ssub.s32 %s11, 2
      %s18 = sadd.s32 %s11, 1
      %s19 = ssub.s32 %s11, %s18
      %p20 = scmp.eq.s32.totalorder %s19, 0
      %s22 = sadd.s32 %s21, 1
      %s23 = scalar_select %p20, %s21, %s22
      %p26 = pneg %p20
      %p27 = scmp.eq.s32.totalorder %s11, 1
      %p28 = por %p26, %p27
      %p29 = scmp.ne.s32.totalorder %s21, %s24
      %p30 = scmp.eq.s32.totalorder %s11, 0
      %p31 = por %p29, %p30
      %p32 = scmp.ne.s32.totalorder %s21, %s24
      %p33 = scmp.eq.s32.totalorder %s16, 1
      %p34 = por %p32, %p33
      %p35 = scmp.ne.s32.totalorder %s24, %s25
      %p36 = scmp.eq.s32.totalorder %s16, 0
      %p37 = por %p35, %p36
      %p38 = scmp.ne.s32.totalorder %s24, %s25
      %p39 = scmp.eq.s32.totalorder %s17, 1
      %p40 = por %p38, %p39
      %p42 = scmp.ne.s32.totalorder %s25, %s41
      %p43 = scmp.eq.s32.totalorder %s17, 0
      %p44 = por %p42, %p43
      %s46 = sadd.s32 %s45, 1
      %p49 = scmp.eq.s32.totalorder %s11, 1
      %p50 = scmp.ne.s32.totalorder %s45, %s47
      %p51 = scmp.eq.s32.totalorder %s11, 0
      %p52 = por %p50, %p51
      %p53 = scmp.ne.s32.totalorder %s45, %s47
      %p54 = scmp.eq.s32.totalorder %s16, 1
      %p55 = por %p53, %p54
      %p56 = scmp.ne.s32.totalorder %s47, %s48
      %p57 = scmp.eq.s32.totalorder %s16, 0
      %p58 = por %p56, %p57
      %p59 = scmp.ne.s32.totalorder %s47, %s48
      %p60 = scmp.eq.s32.totalorder %s17, 1
      %p61 = por %p59, %p60
      %p63 = scmp.ne.s32.totalorder %s48, %s62
      %p64 = scmp.eq.s32.totalorder %s17, 0
      %p65 = por %p63, %p64
      %s67 = sadd.s32 %s66, 1
      %p70 = scmp.eq.s32.totalorder %s11, 1
      %p71 = scmp.ne.s32.totalorder %s66, %s68
      %p72 = scmp.eq.s32.totalorder %s11, 0
      %p73 = por %p71, %p72
      %p74 = scmp.ne.s32.totalorder %s66, %s68
      %p75 = scmp.eq.s32.totalorder %s16, 1
      %p76 = por %p74, %p75
      %p77 = scmp.ne.s32.totalorder %s68, %s69
      %p78 = scmp.eq.s32.totalorder %s16, 0
      %p79 = por %p77, %p78
      %p80 = scmp.ne.s32.totalorder %s68, %s69
      %p81 = scmp.eq.s32.totalorder %s17, 1
      %p82 = por %p80, %p81
      %p84 = scmp.ne.s32.totalorder %s69, %s83
      %p85 = scmp.eq.s32.totalorder %s17, 0
      %p86 = por %p84, %p85
      %s87 = ssub.s32 %s11, %s18
      %p88 = scmp.eq.s32.totalorder %s87, 0
      %s90 = sadd.s32 %s89, 1
      %s91 = scalar_select %p88, %s89, %s90
      %p94 = pneg %p88
      %p95 = scmp.eq.s32.totalorder %s11, 1
      %p96 = por %p94, %p95
      %p97 = scmp.ne.s32.totalorder %s89, %s92
      %p98 = scmp.eq.s32.totalorder %s11, 0
      %p99 = por %p97, %p98
      %p100 = scmp.ne.s32.totalorder %s89, %s92
      %p101 = scmp.eq.s32.totalorder %s16, 1
      %p102 = por %p100, %p101
      %p103 = scmp.ne.s32.totalorder %s92, %s93
      %p104 = scmp.eq.s32.totalorder %s16, 0
      %p105 = por %p103, %p104
      %p106 = scmp.ne.s32.totalorder %s92, %s93
      %p107 = scmp.eq.s32.totalorder %s17, 1
      %p108 = por %p106, %p107
      %p110 = scmp.ne.s32.totalorder %s93, %s109
      %p111 = scmp.eq.s32.totalorder %s17, 0
      %p112 = por %p110, %p111
      %p113 = scmp.le.s32.totalorder 1, %s11
      %p114 = scmp.lt.s32.totalorder %s11, 3
      %p115 = pnand %p113, %p114
      %p116 = pneg %p115
      // Predicated region
      $region9: #{cnn_forward.6} parent=5 // pred_check
        _
      $region10: #{cnn_forward.6} parent=5 // pred_check_branch
        %118 = sbr.rel (%p115) target = $region12
      $region11: #{cnn_forward.6} parent=5 // pred_region
        %s119 = ssub.s32 %s11, 1
        // Predicated region
        $region13: #{cnn_forward.6} parent=11 // pred_check
          %p120 = pneg %p58
        $region14: #{cnn_forward.6} parent=11 // pred_check_branch
          %122 = sbr.rel (%p120) target = $region16
        $region15: #{cnn_forward.6} parent=11 // pred_region
          %124 = vsyncadd [#allocation3], 0
          %s125 = sshll.u32 %s1, 4
          %s126 = int_to_ptr.hbm [resolvable:$true] %s125
          %s127 = sshll.u32 [#allocation2], 4
          %s128 = int_to_ptr.vmem [resolvable:$true] %s127
          %133 = dma.hbm_to_vmem [thread:$0]  %s126, 40960, %s128, [#allocation3], 256, 256, 16
        $region16: #{cnn_forward.6} parent=11 // pred_fallthru
          _
        // Predicated region
        $region17: #{cnn_forward.6} parent=11 // pred_check
          %p134 = pneg %p79
        $region18: #{cnn_forward.6} parent=11 // pred_check_branch
          %136 = sbr.rel (%p134) target = $region20
        $region19: #{cnn_forward.6} parent=11 // pred_region
          %138 = vsyncadd [#allocation5], 0
          %s140 = sshll.u32 %s2, 4
          %s141 = int_to_ptr.hbm [resolvable:$true] %s140
          %s142 = sshll.u32 [#allocation4], 4
          %s143 = int_to_ptr.vmem [resolvable:$true] %s142
          %145 = dma.hbm_to_vmem [thread:$0]  %s141, 64, %s143, [#allocation5]
        $region20: #{cnn_forward.6} parent=11 // pred_fallthru
          _
      $region12: #{cnn_forward.6} parent=5 // pred_fallthru
        _
      %p146 = scmp.lt.s32.totalorder %s11, 2
      // Predicated region
      $region21: #{cnn_forward.6} parent=5 // pred_check
        %p147 = pneg %p146
      $region22: #{cnn_forward.6} parent=5 // pred_check_branch
        %149 = sbr.rel (%p147) target = $region24
      $region23: #{cnn_forward.6} parent=5 // pred_region
        // Predicated region
        $region25: #{cnn_forward.6} parent=23 // pred_check
          %p150 = pneg %p31
        $region26: #{cnn_forward.6} parent=23 // pred_check_branch
          %152 = sbr.rel (%p150) target = $region28
        $region27: #{cnn_forward.6} parent=23 // pred_region
          %p153 = scmp.lt.s32.totalorder %s11, 1
          %s154 = scalar_select %p153, %s11, 1
          %s155 = smul.addr %s154, 4
          %s156 = smul.addr %s155, 8
          %s157 = scalar_lea.vmem %s0, %s156
        $region28: #{cnn_forward.6} parent=23 // pred_fallthru
          _
      $region24: #{cnn_forward.6} parent=5 // pred_fallthru
        _
      %p158 = scmp.le.s32.totalorder 1, %s11
      %p159 = scmp.lt.s32.totalorder %s11, 3
      %p160 = pnand %p158, %p159
      %p161 = pneg %p160
      // Predicated region
      $region29: #{cnn_forward.6} parent=5 // pred_check
        _
      $region30: #{cnn_forward.6} parent=5 // pred_check_branch
        %163 = sbr.rel (%p160) target = $region32
      $region31: #{cnn_forward.6} parent=5 // pred_region
        %s164 = ssub.s32 %s11, 1
        // Predicated region
        $region33: #{cnn_forward.6} parent=31 // pred_check
          %p165 = pneg %p58
        $region34: #{cnn_forward.6} parent=31 // pred_check_branch
          %167 = sbr.rel (%p165) target = $region36
        $region35: #{cnn_forward.6} parent=31 // pred_region
          %169 = dma.done [#allocation3], 40960
        $region36: #{cnn_forward.6} parent=31 // pred_fallthru
          _
        // Predicated region
        $region37: #{cnn_forward.6} parent=31 // pred_check
          %p170 = pneg %p79
        $region38: #{cnn_forward.6} parent=31 // pred_check_branch
          %172 = sbr.rel (%p170) target = $region40
        $region39: #{cnn_forward.6} parent=31 // pred_region
          %174 = dma.done [#allocation5], 64
        $region40: #{cnn_forward.6} parent=31 // pred_fallthru
          _
        %p175 = scmp.lt.s32.totalorder %s16, 1
        %s176 = scalar_select %p175, %s16, 1
        %s177 = smul.addr %s176, 4
        %s178 = smul.addr %s177, 8
        %s179 = scalar_lea.vmem %s0, %s178
        %p180 = pneg %p37
        %p181 = pneg %p34
        %p182 = pneg %p58
        %p183 = pneg %p55
        %p184 = pneg %p79
        %p185 = pneg %p76
        %p186 = pneg %p105
        %p187 = pneg %p102
        %p188 = scmp.lt.s32.totalorder %s16, 1
        %s189 = scalar_select %p188, %s16, 1
        %s190 = smul.addr %s189, 2
        %s191 = smul.addr %s190, 4
        %s192 = scalar_lea.vmem %s3, %s191
        %p193 = scmp.lt.s32.totalorder %s16, 1
        %s194 = scalar_select %p193, %s16, 1
        %s195 = smul.addr %s194, 4
        %s196 = smul.addr %s195, 8
        %s197 = scalar_lea.vmem %s0, %s196
        %p198 = scmp.lt.s32.totalorder %s16, 1
        %s199 = scalar_select %p198, %s16, 1
        %s200 = smul.addr %s199, 2
        %s201 = smul.addr %s200, 4
        %s202 = scalar_lea.vmem %s3, %s201
        %v203 = vld [vmem:[%s197] sm:$0xff]
        %v204 = vld [vmem:[%s197 + $0x8] sm:$0xff]
        %v205 = vpack.c.bf16 %v203, %v203
        %v206 = vpack.c.bf16 %v204, %v204
        %v207 = vld [vmem:[#allocation2] sm:$0xff]
        %v208 = vld [vmem:[#allocation2 + $0x8] sm:$0xff]
        %v209 = vld [vmem:[#allocation2 + $0x10] sm:$0xff]
        %v210 = vld [vmem:[#allocation2 + $0x18] sm:$0xff]
        %v211 = vld [vmem:[#allocation2 + $0x20] sm:$0xff]
        %v212 = vld [vmem:[#allocation2 + $0x28] sm:$0xff]
        %v213 = vld [vmem:[#allocation2 + $0x30] sm:$0xff]
        %v214 = vld [vmem:[#allocation2 + $0x38] sm:$0xff]
        %v215 = vld [vmem:[#allocation2 + $0x40] sm:$0xff]
        %v216 = vld [vmem:[#allocation2 + $0x48] sm:$0xff]
        %v217 = vld [vmem:[#allocation2 + $0x50] sm:$0xff]
        %v218 = vld [vmem:[#allocation2 + $0x58] sm:$0xff]
        %v219 = vld [vmem:[#allocation2 + $0x60] sm:$0xff]
        %v220 = vld [vmem:[#allocation2 + $0x68] sm:$0xff]
        %v221 = vld [vmem:[#allocation2 + $0x70] sm:$0xff]
        %v222 = vld [vmem:[#allocation2 + $0x78] sm:$0xff]
        %v223 = vld [vmem:[#allocation2 + $0x80] sm:$0xff]
        %v224 = vld [vmem:[#allocation2 + $0x88] sm:$0xff]
        %v225 = vld [vmem:[#allocation2 + $0x90] sm:$0xff]
        %v226 = vld [vmem:[#allocation2 + $0x98] sm:$0xff]
        %v227 = vld [vmem:[#allocation2 + $0xa0] sm:$0xff]
        %v228 = vld [vmem:[#allocation2 + $0xa8] sm:$0xff]
        %v229 = vld [vmem:[#allocation2 + $0xb0] sm:$0xff]
        %v230 = vld [vmem:[#allocation2 + $0xb8] sm:$0xff]
        %v231 = vld [vmem:[#allocation2 + $0xc0] sm:$0xff]
        %v232 = vld [vmem:[#allocation2 + $0xc8] sm:$0xff]
        %v233 = vld [vmem:[#allocation2 + $0xd0] sm:$0xff]
        %v234 = vld [vmem:[#allocation2 + $0xd8] sm:$0xff]
        %v235 = vld [vmem:[#allocation2 + $0xe0] sm:$0xff]
        %v236 = vld [vmem:[#allocation2 + $0xe8] sm:$0xff]
        %v237 = vld [vmem:[#allocation2 + $0xf0] sm:$0xff]
        %v238 = vld [vmem:[#allocation2 + $0xf8] sm:$0xff]
        %v239 = vld [vmem:[#allocation2 + $0x100] sm:$0xff]
        %v240 = vld [vmem:[#allocation2 + $0x108] sm:$0xff]
        %v241 = vld [vmem:[#allocation2 + $0x110] sm:$0xff]
        %v242 = vld [vmem:[#allocation2 + $0x118] sm:$0xff]
        %v243 = vld [vmem:[#allocation2 + $0x120] sm:$0xff]
        %v244 = vld [vmem:[#allocation2 + $0x128] sm:$0xff]
        %v245 = vld [vmem:[#allocation2 + $0x130] sm:$0xff]
        %v246 = vld [vmem:[#allocation2 + $0x138] sm:$0xff]
        %v247 = vld [vmem:[#allocation2 + $0x140] sm:$0xff]
        %v248 = vld [vmem:[#allocation2 + $0x148] sm:$0xff]
        %v249 = vld [vmem:[#allocation2 + $0x150] sm:$0xff]
        %v250 = vld [vmem:[#allocation2 + $0x158] sm:$0xff]
        %v251 = vld [vmem:[#allocation2 + $0x160] sm:$0xff]
        %v252 = vld [vmem:[#allocation2 + $0x168] sm:$0xff]
        %v253 = vld [vmem:[#allocation2 + $0x170] sm:$0xff]
        %v254 = vld [vmem:[#allocation2 + $0x178] sm:$0xff]
        %v255 = vld [vmem:[#allocation2 + $0x180] sm:$0xff]
        %v256 = vld [vmem:[#allocation2 + $0x188] sm:$0xff]
        %v257 = vld [vmem:[#allocation2 + $0x190] sm:$0xff]
        %v258 = vld [vmem:[#allocation2 + $0x198] sm:$0xff]
        %v259 = vld [vmem:[#allocation2 + $0x1a0] sm:$0xff]
        %v260 = vld [vmem:[#allocation2 + $0x1a8] sm:$0xff]
        %v261 = vld [vmem:[#allocation2 + $0x1b0] sm:$0xff]
        %v262 = vld [vmem:[#allocation2 + $0x1b8] sm:$0xff]
        %v263 = vld [vmem:[#allocation2 + $0x1c0] sm:$0xff]
        %v264 = vld [vmem:[#allocation2 + $0x1c8] sm:$0xff]
        %v265 = vld [vmem:[#allocation2 + $0x1d0] sm:$0xff]
        %v266 = vld [vmem:[#allocation2 + $0x1d8] sm:$0xff]
        %v267 = vld [vmem:[#allocation2 + $0x1e0] sm:$0xff]
        %v268 = vld [vmem:[#allocation2 + $0x1e8] sm:$0xff]
        %v269 = vld [vmem:[#allocation2 + $0x1f0] sm:$0xff]
        %v270 = vld [vmem:[#allocation2 + $0x1f8] sm:$0xff]
        %v271 = vld [vmem:[%s197] sm:$0xfe]
        %v272 = vld [vmem:[%s197 + $0x8] sm:$0xfe]
        %v273 = vld [vmem:[%s197 + $0x10] sm:$0x1]
        %v274 = vld [vmem:[%s197 + $0x18] sm:$0x1]
        %v275 = vpack.c.bf16 %v273, %v271
        %v276 = vpack.c.bf16 %v274, %v272
        %s277 = scalar_lea.vmem [#allocation2], 512
        %v278 = vld [vmem:[%s277] sm:$0xff]
        %v279 = vld [vmem:[%s277 + $0x8] sm:$0xff]
        %v280 = vld [vmem:[%s277 + $0x10] sm:$0xff]
        %v281 = vld [vmem:[%s277 + $0x18] sm:$0xff]
        %v282 = vld [vmem:[%s277 + $0x20] sm:$0xff]
        %v283 = vld [vmem:[%s277 + $0x28] sm:$0xff]
        %v284 = vld [vmem:[%s277 + $0x30] sm:$0xff]
        %v285 = vld [vmem:[%s277 + $0x38] sm:$0xff]
        %v286 = vld [vmem:[%s277 + $0x40] sm:$0xff]
        %v287 = vld [vmem:[%s277 + $0x48] sm:$0xff]
        %v288 = vld [vmem:[%s277 + $0x50] sm:$0xff]
        %v289 = vld [vmem:[%s277 + $0x58] sm:$0xff]
        %v290 = vld [vmem:[%s277 + $0x60] sm:$0xff]
        %v291 = vld [vmem:[%s277 + $0x68] sm:$0xff]
        %v292 = vld [vmem:[%s277 + $0x70] sm:$0xff]
        %v293 = vld [vmem:[%s277 + $0x78] sm:$0xff]
        %v294 = vld [vmem:[%s277 + $0x80] sm:$0xff]
        %v295 = vld [vmem:[%s277 + $0x88] sm:$0xff]
        %v296 = vld [vmem:[%s277 + $0x90] sm:$0xff]
        %v297 = vld [vmem:[%s277 + $0x98] sm:$0xff]
        %v298 = vld [vmem:[%s277 + $0xa0] sm:$0xff]
        %v299 = vld [vmem:[%s277 + $0xa8] sm:$0xff]
        %v300 = vld [vmem:[%s277 + $0xb0] sm:$0xff]
        %v301 = vld [vmem:[%s277 + $0xb8] sm:$0xff]
        %v302 = vld [vmem:[%s277 + $0xc0] sm:$0xff]
        %v303 = vld [vmem:[%s277 + $0xc8] sm:$0xff]
        %v304 = vld [vmem:[%s277 + $0xd0] sm:$0xff]
        %v305 = vld [vmem:[%s277 + $0xd8] sm:$0xff]
        %v306 = vld [vmem:[%s277 + $0xe0] sm:$0xff]
        %v307 = vld [vmem:[%s277 + $0xe8] sm:$0xff]
        %v308 = vld [vmem:[%s277 + $0xf0] sm:$0xff]
        %v309 = vld [vmem:[%s277 + $0xf8] sm:$0xff]
        %v310 = vld [vmem:[%s277 + $0x100] sm:$0xff]
        %v311 = vld [vmem:[%s277 + $0x108] sm:$0xff]
        %v312 = vld [vmem:[%s277 + $0x110] sm:$0xff]
        %v313 = vld [vmem:[%s277 + $0x118] sm:$0xff]
        %v314 = vld [vmem:[%s277 + $0x120] sm:$0xff]
        %v315 = vld [vmem:[%s277 + $0x128] sm:$0xff]
        %v316 = vld [vmem:[%s277 + $0x130] sm:$0xff]
        %v317 = vld [vmem:[%s277 + $0x138] sm:$0xff]
        %v318 = vld [vmem:[%s277 + $0x140] sm:$0xff]
        %v319 = vld [vmem:[%s277 + $0x148] sm:$0xff]
        %v320 = vld [vmem:[%s277 + $0x150] sm:$0xff]
        %v321 = vld [vmem:[%s277 + $0x158] sm:$0xff]
        %v322 = vld [vmem:[%s277 + $0x160] sm:$0xff]
        %v323 = vld [vmem:[%s277 + $0x168] sm:$0xff]
        %v324 = vld [vmem:[%s277 + $0x170] sm:$0xff]
        %v325 = vld [vmem:[%s277 + $0x178] sm:$0xff]
        %v326 = vld [vmem:[%s277 + $0x180] sm:$0xff]
        %v327 = vld [vmem:[%s277 + $0x188] sm:$0xff]
        %v328 = vld [vmem:[%s277 + $0x190] sm:$0xff]
        %v329 = vld [vmem:[%s277 + $0x198] sm:$0xff]
        %v330 = vld [vmem:[%s277 + $0x1a0] sm:$0xff]
        %v331 = vld [vmem:[%s277 + $0x1a8] sm:$0xff]
        %v332 = vld [vmem:[%s277 + $0x1b0] sm:$0xff]
        %v333 = vld [vmem:[%s277 + $0x1b8] sm:$0xff]
        %v334 = vld [vmem:[%s277 + $0x1c0] sm:$0xff]
        %v335 = vld [vmem:[%s277 + $0x1c8] sm:$0xff]
        %v336 = vld [vmem:[%s277 + $0x1d0] sm:$0xff]
        %v337 = vld [vmem:[%s277 + $0x1d8] sm:$0xff]
        %v338 = vld [vmem:[%s277 + $0x1e0] sm:$0xff]
        %v339 = vld [vmem:[%s277 + $0x1e8] sm:$0xff]
        %v340 = vld [vmem:[%s277 + $0x1f0] sm:$0xff]
        %v341 = vld [vmem:[%s277 + $0x1f8] sm:$0xff]
        %v343 = vshrl.u32 %v275, 16
        %v345 = vshll.u32 %v275, 16
        %v347 = vrot.slane %v345, 1
        %v348 = vor.u32 %v343, %v347
        %v350 = vshrl.u32 %v276, 16
        %v352 = vshll.u32 %v276, 16
        %v354 = vrot.slane %v352, 1
        %v355 = vor.u32 %v350, %v354
        %v422 = vunpack.c.l.b16 %v278
        %v423 = vunpack.c.h.b16 %v278
        %v424 = vunpack.c.l.b16 %v279
        %v425 = vunpack.c.h.b16 %v279
        %v426 = vunpack.c.l.b16 %v280
        %v427 = vunpack.c.h.b16 %v280
        %v428 = vunpack.c.l.b16 %v281
        %v429 = vunpack.c.h.b16 %v281
        %v430 = vunpack.c.l.b16 %v282
        %v431 = vunpack.c.h.b16 %v282
        %v432 = vunpack.c.l.b16 %v283
        %v433 = vunpack.c.h.b16 %v283
        %v434 = vunpack.c.l.b16 %v284
        %v435 = vunpack.c.h.b16 %v284
        %v436 = vunpack.c.l.b16 %v285
        %v437 = vunpack.c.h.b16 %v285
        %v438 = vunpack.c.l.b16 %v286
        %v439 = vunpack.c.h.b16 %v286
        %v440 = vunpack.c.l.b16 %v287
        %v441 = vunpack.c.h.b16 %v287
        %v442 = vunpack.c.l.b16 %v288
        %v443 = vunpack.c.h.b16 %v288
        %v444 = vunpack.c.l.b16 %v289
        %v445 = vunpack.c.h.b16 %v289
        %v446 = vunpack.c.l.b16 %v290
        %v447 = vunpack.c.h.b16 %v290
        %v448 = vunpack.c.l.b16 %v291
        %v449 = vunpack.c.h.b16 %v291
        %v450 = vunpack.c.l.b16 %v292
        %v451 = vunpack.c.h.b16 %v292
        %v452 = vunpack.c.l.b16 %v293
        %v453 = vunpack.c.h.b16 %v293
        %v454 = vunpack.c.l.b16 %v294
        %v455 = vunpack.c.h.b16 %v294
        %v456 = vunpack.c.l.b16 %v295
        %v457 = vunpack.c.h.b16 %v295
        %v458 = vunpack.c.l.b16 %v296
        %v459 = vunpack.c.h.b16 %v296
        %v460 = vunpack.c.l.b16 %v297
        %v461 = vunpack.c.h.b16 %v297
        %v462 = vunpack.c.l.b16 %v298
        %v463 = vunpack.c.h.b16 %v298
        %v464 = vunpack.c.l.b16 %v299
        %v465 = vunpack.c.h.b16 %v299
        %v466 = vunpack.c.l.b16 %v300
        %v467 = vunpack.c.h.b16 %v300
        %v468 = vunpack.c.l.b16 %v301
        %v469 = vunpack.c.h.b16 %v301
        %v470 = vunpack.c.l.b16 %v302
        %v471 = vunpack.c.h.b16 %v302
        %v472 = vunpack.c.l.b16 %v303
        %v473 = vunpack.c.h.b16 %v303
        %v474 = vunpack.c.l.b16 %v304
        %v475 = vunpack.c.h.b16 %v304
        %v476 = vunpack.c.l.b16 %v305
        %v477 = vunpack.c.h.b16 %v305
        %v478 = vunpack.c.l.b16 %v306
        %v479 = vunpack.c.h.b16 %v306
        %v480 = vunpack.c.l.b16 %v307
        %v481 = vunpack.c.h.b16 %v307
        %v482 = vunpack.c.l.b16 %v308
        %v483 = vunpack.c.h.b16 %v308
        %v484 = vunpack.c.l.b16 %v309
        %v485 = vunpack.c.h.b16 %v309
        %v486 = vunpack.c.l.b16 %v310
        %v487 = vunpack.c.h.b16 %v310
        %v488 = vunpack.c.l.b16 %v311
        %v489 = vunpack.c.h.b16 %v311
        %v490 = vunpack.c.l.b16 %v312
        %v491 = vunpack.c.h.b16 %v312
        %v492 = vunpack.c.l.b16 %v313
        %v493 = vunpack.c.h.b16 %v313
        %v494 = vunpack.c.l.b16 %v314
        %v495 = vunpack.c.h.b16 %v314
        %v496 = vunpack.c.l.b16 %v315
        %v497 = vunpack.c.h.b16 %v315
        %v498 = vunpack.c.l.b16 %v316
        %v499 = vunpack.c.h.b16 %v316
        %v500 = vunpack.c.l.b16 %v317
        %v501 = vunpack.c.h.b16 %v317
        %v502 = vunpack.c.l.b16 %v318
        %v503 = vunpack.c.h.b16 %v318
        %v504 = vunpack.c.l.b16 %v319
        %v505 = vunpack.c.h.b16 %v319
        %v506 = vunpack.c.l.b16 %v320
        %v507 = vunpack.c.h.b16 %v320
        %v508 = vunpack.c.l.b16 %v321
        %v509 = vunpack.c.h.b16 %v321
        %v510 = vunpack.c.l.b16 %v322
        %v511 = vunpack.c.h.b16 %v322
        %v512 = vunpack.c.l.b16 %v323
        %v513 = vunpack.c.h.b16 %v323
        %v514 = vunpack.c.l.b16 %v324
        %v515 = vunpack.c.h.b16 %v324
        %v516 = vunpack.c.l.b16 %v325
        %v517 = vunpack.c.h.b16 %v325
        %v518 = vunpack.c.l.b16 %v326
        %v519 = vunpack.c.h.b16 %v326
        %v520 = vunpack.c.l.b16 %v327
        %v521 = vunpack.c.h.b16 %v327
        %v522 = vunpack.c.l.b16 %v328
        %v523 = vunpack.c.h.b16 %v328
        %v524 = vunpack.c.l.b16 %v329
        %v525 = vunpack.c.h.b16 %v329
        %v526 = vunpack.c.l.b16 %v330
        %v527 = vunpack.c.h.b16 %v330
        %v528 = vunpack.c.l.b16 %v331
        %v529 = vunpack.c.h.b16 %v331
        %v530 = vunpack.c.l.b16 %v332
        %v531 = vunpack.c.h.b16 %v332
        %v532 = vunpack.c.l.b16 %v333
        %v533 = vunpack.c.h.b16 %v333
        %v534 = vunpack.c.l.b16 %v334
        %v535 = vunpack.c.h.b16 %v334
        %v536 = vunpack.c.l.b16 %v335
        %v537 = vunpack.c.h.b16 %v335
        %v538 = vunpack.c.l.b16 %v336
        %v539 = vunpack.c.h.b16 %v336
        %v540 = vunpack.c.l.b16 %v337
        %v541 = vunpack.c.h.b16 %v337
        %v542 = vunpack.c.l.b16 %v338
        %v543 = vunpack.c.h.b16 %v338
        %v544 = vunpack.c.l.b16 %v339
        %v545 = vunpack.c.h.b16 %v339
        %v546 = vunpack.c.l.b16 %v340
        %v547 = vunpack.c.h.b16 %v340
        %v548 = vunpack.c.l.b16 %v341
        %v549 = vunpack.c.h.b16 %v341
        %v550 = vpack.c.b16 %v426, %v422
        %v551 = vpack.c.b16 %v427, %v423
        %v552 = vpack.c.b16 %v428, %v424
        %v553 = vpack.c.b16 %v429, %v425
        %v554 = vpack.c.b16 %v434, %v430
        %v555 = vpack.c.b16 %v435, %v431
        %v556 = vpack.c.b16 %v436, %v432
        %v557 = vpack.c.b16 %v437, %v433
        %v558 = vpack.c.b16 %v442, %v438
        %v559 = vpack.c.b16 %v443, %v439
        %v560 = vpack.c.b16 %v444, %v440
        %v561 = vpack.c.b16 %v445, %v441
        %v562 = vpack.c.b16 %v450, %v446
        %v563 = vpack.c.b16 %v451, %v447
        %v564 = vpack.c.b16 %v452, %v448
        %v565 = vpack.c.b16 %v453, %v449
        %v566 = vpack.c.b16 %v458, %v454
        %v567 = vpack.c.b16 %v459, %v455
        %v568 = vpack.c.b16 %v460, %v456
        %v569 = vpack.c.b16 %v461, %v457
        %v570 = vpack.c.b16 %v466, %v462
        %v571 = vpack.c.b16 %v467, %v463
        %v572 = vpack.c.b16 %v468, %v464
        %v573 = vpack.c.b16 %v469, %v465
        %v574 = vpack.c.b16 %v474, %v470
        %v575 = vpack.c.b16 %v475, %v471
        %v576 = vpack.c.b16 %v476, %v472
        %v577 = vpack.c.b16 %v477, %v473
        %v578 = vpack.c.b16 %v482, %v478
        %v579 = vpack.c.b16 %v483, %v479
        %v580 = vpack.c.b16 %v484, %v480
        %v581 = vpack.c.b16 %v485, %v481
        %v582 = vpack.c.b16 %v490, %v486
        %v583 = vpack.c.b16 %v491, %v487
        %v584 = vpack.c.b16 %v492, %v488
        %v585 = vpack.c.b16 %v493, %v489
        %v586 = vpack.c.b16 %v498, %v494
        %v587 = vpack.c.b16 %v499, %v495
        %v588 = vpack.c.b16 %v500, %v496
        %v589 = vpack.c.b16 %v501, %v497
        %v590 = vpack.c.b16 %v506, %v502
        %v591 = vpack.c.b16 %v507, %v503
        %v592 = vpack.c.b16 %v508, %v504
        %v593 = vpack.c.b16 %v509, %v505
        %v594 = vpack.c.b16 %v514, %v510
        %v595 = vpack.c.b16 %v515, %v511
        %v596 = vpack.c.b16 %v516, %v512
        %v597 = vpack.c.b16 %v517, %v513
        %v598 = vpack.c.b16 %v522, %v518
        %v599 = vpack.c.b16 %v523, %v519
        %v600 = vpack.c.b16 %v524, %v520
        %v601 = vpack.c.b16 %v525, %v521
        %v602 = vpack.c.b16 %v530, %v526
        %v603 = vpack.c.b16 %v531, %v527
        %v604 = vpack.c.b16 %v532, %v528
        %v605 = vpack.c.b16 %v533, %v529
        %v606 = vpack.c.b16 %v538, %v534
        %v607 = vpack.c.b16 %v539, %v535
        %v608 = vpack.c.b16 %v540, %v536
        %v609 = vpack.c.b16 %v541, %v537
        %v610 = vpack.c.b16 %v546, %v542
        %v611 = vpack.c.b16 %v547, %v543
        %v612 = vpack.c.b16 %v548, %v544
        %v613 = vpack.c.b16 %v549, %v545
        %678 = vmatpush.bf16.msra.mxu0 %v578
        %679 = vmatpush.bf16.msra.mxu0 %v574
        %680 = vmatpush.bf16.msra.mxu0 %v570
        %681 = vmatpush.bf16.msra.mxu0 %v566
        %682 = vmatpush.bf16.msra.mxu0 %v562
        %683 = vmatpush.bf16.msra.mxu0 %v558
        %684 = vmatpush.bf16.msra.mxu0 %v554
        %685 = vmatpush.bf16.msra.mxu0 %v550
        %686 = vmatmul.bf16.gmra.mxu0 %v348
        %v687 = vpop.f32.mrf.mxu0
        %v688 = vadd.f32 0.0, %v687
        %v689 = vpop.f32.mrf.mxu0
        %690 = vdwg.mxu0
        %691 = vmatpush.bf16.msra.mxu0 %v610
        %692 = vmatpush.bf16.msra.mxu0 %v606
        %693 = vmatpush.bf16.msra.mxu0 %v602
        %694 = vmatpush.bf16.msra.mxu0 %v598
        %695 = vmatpush.bf16.msra.mxu0 %v594
        %696 = vmatpush.bf16.msra.mxu0 %v590
        %697 = vmatpush.bf16.msra.mxu0 %v586
        %698 = vmatpush.bf16.msra.mxu0 %v582
        %699 = vmatmul.bf16.gmra.mxu0 %v355
        %v700 = vpop.f32.mrf.mxu0
        %v701 = vadd.f32 %v688, %v700
        %v702 = vpop.f32.mrf.mxu0
        %703 = vdwg.mxu0
        %704 = vmatpush.bf16.msra.mxu0 %v579
        %705 = vmatpush.bf16.msra.mxu0 %v575
        %706 = vmatpush.bf16.msra.mxu0 %v571
        %707 = vmatpush.bf16.msra.mxu0 %v567
        %708 = vmatpush.bf16.msra.mxu0 %v563
        %709 = vmatpush.bf16.msra.mxu0 %v559
        %710 = vmatpush.bf16.msra.mxu0 %v555
        %711 = vmatpush.bf16.msra.mxu0 %v551
        %712 = vmatmul.bf16.gmra.mxu0 %v348
        %v713 = vpop.f32.mrf.mxu0
        %v714 = vadd.f32 0.0, %v713
        %v715 = vpop.f32.mrf.mxu0
        %716 = vdwg.mxu0
        %717 = vmatpush.bf16.msra.mxu0 %v611
        %718 = vmatpush.bf16.msra.mxu0 %v607
        %719 = vmatpush.bf16.msra.mxu0 %v603
        %720 = vmatpush.bf16.msra.mxu0 %v599
        %721 = vmatpush.bf16.msra.mxu0 %v595
        %722 = vmatpush.bf16.msra.mxu0 %v591
        %723 = vmatpush.bf16.msra.mxu0 %v587
        %724 = vmatpush.bf16.msra.mxu0 %v583
        %725 = vmatmul.bf16.gmra.mxu0 %v355
        %v726 = vpop.f32.mrf.mxu0
        %v727 = vadd.f32 %v714, %v726
        %v728 = vpop.f32.mrf.mxu0
        %729 = vdwg.mxu0
        %730 = vmatpush.bf16.msra.mxu0 %v580
        %731 = vmatpush.bf16.msra.mxu0 %v576
        %732 = vmatpush.bf16.msra.mxu0 %v572
        %733 = vmatpush.bf16.msra.mxu0 %v568
        %734 = vmatpush.bf16.msra.mxu0 %v564
        %735 = vmatpush.bf16.msra.mxu0 %v560
        %736 = vmatpush.bf16.msra.mxu0 %v556
        %737 = vmatpush.bf16.msra.mxu0 %v552
        %738 = vmatmul.bf16.gmra.mxu0 %v348
        %v739 = vpop.f32.mrf.mxu0
        %v740 = vadd.f32 0.0, %v739
        %v741 = vpop.f32.mrf.mxu0
        %742 = vdwg.mxu0
        %743 = vmatpush.bf16.msra.mxu0 %v612
        %744 = vmatpush.bf16.msra.mxu0 %v608
        %745 = vmatpush.bf16.msra.mxu0 %v604
        %746 = vmatpush.bf16.msra.mxu0 %v600
        %747 = vmatpush.bf16.msra.mxu0 %v596
        %748 = vmatpush.bf16.msra.mxu0 %v592
        %749 = vmatpush.bf16.msra.mxu0 %v588
        %750 = vmatpush.bf16.msra.mxu0 %v584
        %751 = vmatmul.bf16.gmra.mxu0 %v355
        %v752 = vpop.f32.mrf.mxu0
        %v753 = vadd.f32 %v740, %v752
        %v754 = vpop.f32.mrf.mxu0
        %755 = vdwg.mxu0
        %756 = vmatpush.bf16.msra.mxu0 %v581
        %757 = vmatpush.bf16.msra.mxu0 %v577
        %758 = vmatpush.bf16.msra.mxu0 %v573
        %759 = vmatpush.bf16.msra.mxu0 %v569
        %760 = vmatpush.bf16.msra.mxu0 %v565
        %761 = vmatpush.bf16.msra.mxu0 %v561
        %762 = vmatpush.bf16.msra.mxu0 %v557
        %763 = vmatpush.bf16.msra.mxu0 %v553
        %764 = vmatmul.bf16.gmra.mxu0 %v348
        %v765 = vpop.f32.mrf.mxu0
        %v766 = vadd.f32 0.0, %v765
        %v767 = vpop.f32.mrf.mxu0
        %768 = vdwg.mxu0
        %769 = vmatpush.bf16.msra.mxu0 %v613
        %770 = vmatpush.bf16.msra.mxu0 %v609
        %771 = vmatpush.bf16.msra.mxu0 %v605
        %772 = vmatpush.bf16.msra.mxu0 %v601
        %773 = vmatpush.bf16.msra.mxu0 %v597
        %774 = vmatpush.bf16.msra.mxu0 %v593
        %775 = vmatpush.bf16.msra.mxu0 %v589
        %776 = vmatpush.bf16.msra.mxu0 %v585
        %777 = vmatmul.bf16.gmra.mxu0 %v355
        %v778 = vpop.f32.mrf.mxu0
        %v779 = vadd.f32 %v766, %v778
        %v780 = vpop.f32.mrf.mxu0
        %781 = vdwg.mxu0
        %v846 = vunpack.c.l.b16 %v207
        %v847 = vunpack.c.h.b16 %v207
        %v848 = vunpack.c.l.b16 %v208
        %v849 = vunpack.c.h.b16 %v208
        %v850 = vunpack.c.l.b16 %v209
        %v851 = vunpack.c.h.b16 %v209
        %v852 = vunpack.c.l.b16 %v210
        %v853 = vunpack.c.h.b16 %v210
        %v854 = vunpack.c.l.b16 %v211
        %v855 = vunpack.c.h.b16 %v211
        %v856 = vunpack.c.l.b16 %v212
        %v857 = vunpack.c.h.b16 %v212
        %v858 = vunpack.c.l.b16 %v213
        %v859 = vunpack.c.h.b16 %v213
        %v860 = vunpack.c.l.b16 %v214
        %v861 = vunpack.c.h.b16 %v214
        %v862 = vunpack.c.l.b16 %v215
        %v863 = vunpack.c.h.b16 %v215
        %v864 = vunpack.c.l.b16 %v216
        %v865 = vunpack.c.h.b16 %v216
        %v866 = vunpack.c.l.b16 %v217
        %v867 = vunpack.c.h.b16 %v217
        %v868 = vunpack.c.l.b16 %v218
        %v869 = vunpack.c.h.b16 %v218
        %v870 = vunpack.c.l.b16 %v219
        %v871 = vunpack.c.h.b16 %v219
        %v872 = vunpack.c.l.b16 %v220
        %v873 = vunpack.c.h.b16 %v220
        %v874 = vunpack.c.l.b16 %v221
        %v875 = vunpack.c.h.b16 %v221
        %v876 = vunpack.c.l.b16 %v222
        %v877 = vunpack.c.h.b16 %v222
        %v878 = vunpack.c.l.b16 %v223
        %v879 = vunpack.c.h.b16 %v223
        %v880 = vunpack.c.l.b16 %v224
        %v881 = vunpack.c.h.b16 %v224
        %v882 = vunpack.c.l.b16 %v225
        %v883 = vunpack.c.h.b16 %v225
        %v884 = vunpack.c.l.b16 %v226
        %v885 = vunpack.c.h.b16 %v226
        %v886 = vunpack.c.l.b16 %v227
        %v887 = vunpack.c.h.b16 %v227
        %v888 = vunpack.c.l.b16 %v228
        %v889 = vunpack.c.h.b16 %v228
        %v890 = vunpack.c.l.b16 %v229
        %v891 = vunpack.c.h.b16 %v229
        %v892 = vunpack.c.l.b16 %v230
        %v893 = vunpack.c.h.b16 %v230
        %v894 = vunpack.c.l.b16 %v231
        %v895 = vunpack.c.h.b16 %v231
        %v896 = vunpack.c.l.b16 %v232
        %v897 = vunpack.c.h.b16 %v232
        %v898 = vunpack.c.l.b16 %v233
        %v899 = vunpack.c.h.b16 %v233
        %v900 = vunpack.c.l.b16 %v234
        %v901 = vunpack.c.h.b16 %v234
        %v902 = vunpack.c.l.b16 %v235
        %v903 = vunpack.c.h.b16 %v235
        %v904 = vunpack.c.l.b16 %v236
        %v905 = vunpack.c.h.b16 %v236
        %v906 = vunpack.c.l.b16 %v237
        %v907 = vunpack.c.h.b16 %v237
        %v908 = vunpack.c.l.b16 %v238
        %v909 = vunpack.c.h.b16 %v238
        %v910 = vunpack.c.l.b16 %v239
        %v911 = vunpack.c.h.b16 %v239
        %v912 = vunpack.c.l.b16 %v240
        %v913 = vunpack.c.h.b16 %v240
        %v914 = vunpack.c.l.b16 %v241
        %v915 = vunpack.c.h.b16 %v241
        %v916 = vunpack.c.l.b16 %v242
        %v917 = vunpack.c.h.b16 %v242
        %v918 = vunpack.c.l.b16 %v243
        %v919 = vunpack.c.h.b16 %v243
        %v920 = vunpack.c.l.b16 %v244
        %v921 = vunpack.c.h.b16 %v244
        %v922 = vunpack.c.l.b16 %v245
        %v923 = vunpack.c.h.b16 %v245
        %v924 = vunpack.c.l.b16 %v246
        %v925 = vunpack.c.h.b16 %v246
        %v926 = vunpack.c.l.b16 %v247
        %v927 = vunpack.c.h.b16 %v247
        %v928 = vunpack.c.l.b16 %v248
        %v929 = vunpack.c.h.b16 %v248
        %v930 = vunpack.c.l.b16 %v249
        %v931 = vunpack.c.h.b16 %v249
        %v932 = vunpack.c.l.b16 %v250
        %v933 = vunpack.c.h.b16 %v250
        %v934 = vunpack.c.l.b16 %v251
        %v935 = vunpack.c.h.b16 %v251
        %v936 = vunpack.c.l.b16 %v252
        %v937 = vunpack.c.h.b16 %v252
        %v938 = vunpack.c.l.b16 %v253
        %v939 = vunpack.c.h.b16 %v253
        %v940 = vunpack.c.l.b16 %v254
        %v941 = vunpack.c.h.b16 %v254
        %v942 = vunpack.c.l.b16 %v255
        %v943 = vunpack.c.h.b16 %v255
        %v944 = vunpack.c.l.b16 %v256
        %v945 = vunpack.c.h.b16 %v256
        %v946 = vunpack.c.l.b16 %v257
        %v947 = vunpack.c.h.b16 %v257
        %v948 = vunpack.c.l.b16 %v258
        %v949 = vunpack.c.h.b16 %v258
        %v950 = vunpack.c.l.b16 %v259
        %v951 = vunpack.c.h.b16 %v259
        %v952 = vunpack.c.l.b16 %v260
        %v953 = vunpack.c.h.b16 %v260
        %v954 = vunpack.c.l.b16 %v261
        %v955 = vunpack.c.h.b16 %v261
        %v956 = vunpack.c.l.b16 %v262
        %v957 = vunpack.c.h.b16 %v262
        %v958 = vunpack.c.l.b16 %v263
        %v959 = vunpack.c.h.b16 %v263
        %v960 = vunpack.c.l.b16 %v264
        %v961 = vunpack.c.h.b16 %v264
        %v962 = vunpack.c.l.b16 %v265
        %v963 = vunpack.c.h.b16 %v265
        %v964 = vunpack.c.l.b16 %v266
        %v965 = vunpack.c.h.b16 %v266
        %v966 = vunpack.c.l.b16 %v267
        %v967 = vunpack.c.h.b16 %v267
        %v968 = vunpack.c.l.b16 %v268
        %v969 = vunpack.c.h.b16 %v268
        %v970 = vunpack.c.l.b16 %v269
        %v971 = vunpack.c.h.b16 %v269
        %v972 = vunpack.c.l.b16 %v270
        %v973 = vunpack.c.h.b16 %v270
        %v974 = vpack.c.b16 %v850, %v846
        %v975 = vpack.c.b16 %v851, %v847
        %v976 = vpack.c.b16 %v852, %v848
        %v977 = vpack.c.b16 %v853, %v849
        %v978 = vpack.c.b16 %v858, %v854
        %v979 = vpack.c.b16 %v859, %v855
        %v980 = vpack.c.b16 %v860, %v856
        %v981 = vpack.c.b16 %v861, %v857
        %v982 = vpack.c.b16 %v866, %v862
        %v983 = vpack.c.b16 %v867, %v863
        %v984 = vpack.c.b16 %v868, %v864
        %v985 = vpack.c.b16 %v869, %v865
        %v986 = vpack.c.b16 %v874, %v870
        %v987 = vpack.c.b16 %v875, %v871
        %v988 = vpack.c.b16 %v876, %v872
        %v989 = vpack.c.b16 %v877, %v873
        %v990 = vpack.c.b16 %v882, %v878
        %v991 = vpack.c.b16 %v883, %v879
        %v992 = vpack.c.b16 %v884, %v880
        %v993 = vpack.c.b16 %v885, %v881
        %v994 = vpack.c.b16 %v890, %v886
        %v995 = vpack.c.b16 %v891, %v887
        %v996 = vpack.c.b16 %v892, %v888
        %v997 = vpack.c.b16 %v893, %v889
        %v998 = vpack.c.b16 %v898, %v894
        %v999 = vpack.c.b16 %v899, %v895
        %v1000 = vpack.c.b16 %v900, %v896
        %v1001 = vpack.c.b16 %v901, %v897
        %v1002 = vpack.c.b16 %v906, %v902
        %v1003 = vpack.c.b16 %v907, %v903
        %v1004 = vpack.c.b16 %v908, %v904
        %v1005 = vpack.c.b16 %v909, %v905
        %v1006 = vpack.c.b16 %v914, %v910
        %v1007 = vpack.c.b16 %v915, %v911
        %v1008 = vpack.c.b16 %v916, %v912
        %v1009 = vpack.c.b16 %v917, %v913
        %v1010 = vpack.c.b16 %v922, %v918
        %v1011 = vpack.c.b16 %v923, %v919
        %v1012 = vpack.c.b16 %v924, %v920
        %v1013 = vpack.c.b16 %v925, %v921
        %v1014 = vpack.c.b16 %v930, %v926
        %v1015 = vpack.c.b16 %v931, %v927
        %v1016 = vpack.c.b16 %v932, %v928
        %v1017 = vpack.c.b16 %v933, %v929
        %v1018 = vpack.c.b16 %v938, %v934
        %v1019 = vpack.c.b16 %v939, %v935
        %v1020 = vpack.c.b16 %v940, %v936
        %v1021 = vpack.c.b16 %v941, %v937
        %v1022 = vpack.c.b16 %v946, %v942
        %v1023 = vpack.c.b16 %v947, %v943
        %v1024 = vpack.c.b16 %v948, %v944
        %v1025 = vpack.c.b16 %v949, %v945
        %v1026 = vpack.c.b16 %v954, %v950
        %v1027 = vpack.c.b16 %v955, %v951
        %v1028 = vpack.c.b16 %v956, %v952
        %v1029 = vpack.c.b16 %v957, %v953
        %v1030 = vpack.c.b16 %v962, %v958
        %v1031 = vpack.c.b16 %v963, %v959
        %v1032 = vpack.c.b16 %v964, %v960
        %v1033 = vpack.c.b16 %v965, %v961
        %v1034 = vpack.c.b16 %v970, %v966
        %v1035 = vpack.c.b16 %v971, %v967
        %v1036 = vpack.c.b16 %v972, %v968
        %v1037 = vpack.c.b16 %v973, %v969
        %1102 = vmatpush.bf16.msra.mxu0 %v1002
        %1103 = vmatpush.bf16.msra.mxu0 %v998
        %1104 = vmatpush.bf16.msra.mxu0 %v994
        %1105 = vmatpush.bf16.msra.mxu0 %v990
        %1106 = vmatpush.bf16.msra.mxu0 %v986
        %1107 = vmatpush.bf16.msra.mxu0 %v982
        %1108 = vmatpush.bf16.msra.mxu0 %v978
        %1109 = vmatpush.bf16.msra.mxu0 %v974
        %1110 = vmatmul.bf16.gmra.mxu0 %v205
        %v1111 = vpop.f32.mrf.mxu0
        %v1112 = vadd.f32 %v701, %v1111
        %v1113 = vpop.f32.mrf.mxu0
        %1114 = vdwg.mxu0
        %1115 = vmatpush.bf16.msra.mxu0 %v1034
        %1116 = vmatpush.bf16.msra.mxu0 %v1030
        %1117 = vmatpush.bf16.msra.mxu0 %v1026
        %1118 = vmatpush.bf16.msra.mxu0 %v1022
        %1119 = vmatpush.bf16.msra.mxu0 %v1018
        %1120 = vmatpush.bf16.msra.mxu0 %v1014
        %1121 = vmatpush.bf16.msra.mxu0 %v1010
        %1122 = vmatpush.bf16.msra.mxu0 %v1006
        %1123 = vmatmul.bf16.gmra.mxu0 %v206
        %v1124 = vpop.f32.mrf.mxu0
        %v1125 = vadd.f32 %v1112, %v1124
        %v1126 = vpop.f32.mrf.mxu0
        %1127 = vdwg.mxu0
        %1128 = vmatpush.bf16.msra.mxu0 %v1003
        %1129 = vmatpush.bf16.msra.mxu0 %v999
        %1130 = vmatpush.bf16.msra.mxu0 %v995
        %1131 = vmatpush.bf16.msra.mxu0 %v991
        %1132 = vmatpush.bf16.msra.mxu0 %v987
        %1133 = vmatpush.bf16.msra.mxu0 %v983
        %1134 = vmatpush.bf16.msra.mxu0 %v979
        %1135 = vmatpush.bf16.msra.mxu0 %v975
        %1136 = vmatmul.bf16.gmra.mxu0 %v205
        %v1137 = vpop.f32.mrf.mxu0
        %v1138 = vadd.f32 %v727, %v1137
        %v1139 = vpop.f32.mrf.mxu0
        %1140 = vdwg.mxu0
        %1141 = vmatpush.bf16.msra.mxu0 %v1035
        %1142 = vmatpush.bf16.msra.mxu0 %v1031
        %1143 = vmatpush.bf16.msra.mxu0 %v1027
        %1144 = vmatpush.bf16.msra.mxu0 %v1023
        %1145 = vmatpush.bf16.msra.mxu0 %v1019
        %1146 = vmatpush.bf16.msra.mxu0 %v1015
        %1147 = vmatpush.bf16.msra.mxu0 %v1011
        %1148 = vmatpush.bf16.msra.mxu0 %v1007
        %1149 = vmatmul.bf16.gmra.mxu0 %v206
        %v1150 = vpop.f32.mrf.mxu0
        %v1151 = vadd.f32 %v1138, %v1150
        %v1152 = vpop.f32.mrf.mxu0
        %1153 = vdwg.mxu0
        %1154 = vmatpush.bf16.msra.mxu0 %v1004
        %1155 = vmatpush.bf16.msra.mxu0 %v1000
        %1156 = vmatpush.bf16.msra.mxu0 %v996
        %1157 = vmatpush.bf16.msra.mxu0 %v992
        %1158 = vmatpush.bf16.msra.mxu0 %v988
        %1159 = vmatpush.bf16.msra.mxu0 %v984
        %1160 = vmatpush.bf16.msra.mxu0 %v980
        %1161 = vmatpush.bf16.msra.mxu0 %v976
        %1162 = vmatmul.bf16.gmra.mxu0 %v205
        %v1163 = vpop.f32.mrf.mxu0
        %v1164 = vadd.f32 %v753, %v1163
        %v1165 = vpop.f32.mrf.mxu0
        %1166 = vdwg.mxu0
        %1167 = vmatpush.bf16.msra.mxu0 %v1036
        %1168 = vmatpush.bf16.msra.mxu0 %v1032
        %1169 = vmatpush.bf16.msra.mxu0 %v1028
        %1170 = vmatpush.bf16.msra.mxu0 %v1024
        %1171 = vmatpush.bf16.msra.mxu0 %v1020
        %1172 = vmatpush.bf16.msra.mxu0 %v1016
        %1173 = vmatpush.bf16.msra.mxu0 %v1012
        %1174 = vmatpush.bf16.msra.mxu0 %v1008
        %1175 = vmatmul.bf16.gmra.mxu0 %v206
        %v1176 = vpop.f32.mrf.mxu0
        %v1177 = vadd.f32 %v1164, %v1176
        %v1178 = vpop.f32.mrf.mxu0
        %1179 = vdwg.mxu0
        %1180 = vmatpush.bf16.msra.mxu0 %v1005
        %1181 = vmatpush.bf16.msra.mxu0 %v1001
        %1182 = vmatpush.bf16.msra.mxu0 %v997
        %1183 = vmatpush.bf16.msra.mxu0 %v993
        %1184 = vmatpush.bf16.msra.mxu0 %v989
        %1185 = vmatpush.bf16.msra.mxu0 %v985
        %1186 = vmatpush.bf16.msra.mxu0 %v981
        %1187 = vmatpush.bf16.msra.mxu0 %v977
        %1188 = vmatmul.bf16.gmra.mxu0 %v205
        %v1189 = vpop.f32.mrf.mxu0
        %v1190 = vadd.f32 %v779, %v1189
        %v1191 = vpop.f32.mrf.mxu0
        %1192 = vdwg.mxu0
        %1193 = vmatpush.bf16.msra.mxu0 %v1037
        %1194 = vmatpush.bf16.msra.mxu0 %v1033
        %1195 = vmatpush.bf16.msra.mxu0 %v1029
        %1196 = vmatpush.bf16.msra.mxu0 %v1025
        %1197 = vmatpush.bf16.msra.mxu0 %v1021
        %1198 = vmatpush.bf16.msra.mxu0 %v1017
        %1199 = vmatpush.bf16.msra.mxu0 %v1013
        %1200 = vmatpush.bf16.msra.mxu0 %v1009
        %1201 = vmatmul.bf16.gmra.mxu0 %v206
        %v1202 = vpop.f32.mrf.mxu0
        %v1203 = vadd.f32 %v1190, %v1202
        %v1204 = vpop.f32.mrf.mxu0
        %1205 = vdwg.mxu0
        %v1206 = vld [vmem:[%s197] sm:$0xfc]
        %v1207 = vld [vmem:[%s197 + $0x8] sm:$0xfc]
        %v1208 = vld [vmem:[%s197 + $0x10] sm:$0x3]
        %v1209 = vld [vmem:[%s197 + $0x18] sm:$0x3]
        %v1210 = vpack.c.bf16 %v1208, %v1206
        %v1211 = vpack.c.bf16 %v1209, %v1207
        %s1212 = scalar_lea.vmem [#allocation2], 1024
        %v1213 = vld [vmem:[%s1212] sm:$0xff]
        %v1214 = vld [vmem:[%s1212 + $0x8] sm:$0xff]
        %v1215 = vld [vmem:[%s1212 + $0x10] sm:$0xff]
        %v1216 = vld [vmem:[%s1212 + $0x18] sm:$0xff]
        %v1217 = vld [vmem:[%s1212 + $0x20] sm:$0xff]
        %v1218 = vld [vmem:[%s1212 + $0x28] sm:$0xff]
        %v1219 = vld [vmem:[%s1212 + $0x30] sm:$0xff]
        %v1220 = vld [vmem:[%s1212 + $0x38] sm:$0xff]
        %v1221 = vld [vmem:[%s1212 + $0x40] sm:$0xff]
        %v1222 = vld [vmem:[%s1212 + $0x48] sm:$0xff]
        %v1223 = vld [vmem:[%s1212 + $0x50] sm:$0xff]
        %v1224 = vld [vmem:[%s1212 + $0x58] sm:$0xff]
        %v1225 = vld [vmem:[%s1212 + $0x60] sm:$0xff]
        %v1226 = vld [vmem:[%s1212 + $0x68] sm:$0xff]
        %v1227 = vld [vmem:[%s1212 + $0x70] sm:$0xff]
        %v1228 = vld [vmem:[%s1212 + $0x78] sm:$0xff]
        %v1229 = vld [vmem:[%s1212 + $0x80] sm:$0xff]
        %v1230 = vld [vmem:[%s1212 + $0x88] sm:$0xff]
        %v1231 = vld [vmem:[%s1212 + $0x90] sm:$0xff]
        %v1232 = vld [vmem:[%s1212 + $0x98] sm:$0xff]
        %v1233 = vld [vmem:[%s1212 + $0xa0] sm:$0xff]
        %v1234 = vld [vmem:[%s1212 + $0xa8] sm:$0xff]
        %v1235 = vld [vmem:[%s1212 + $0xb0] sm:$0xff]
        %v1236 = vld [vmem:[%s1212 + $0xb8] sm:$0xff]
        %v1237 = vld [vmem:[%s1212 + $0xc0] sm:$0xff]
        %v1238 = vld [vmem:[%s1212 + $0xc8] sm:$0xff]
        %v1239 = vld [vmem:[%s1212 + $0xd0] sm:$0xff]
        %v1240 = vld [vmem:[%s1212 + $0xd8] sm:$0xff]
        %v1241 = vld [vmem:[%s1212 + $0xe0] sm:$0xff]
        %v1242 = vld [vmem:[%s1212 + $0xe8] sm:$0xff]
        %v1243 = vld [vmem:[%s1212 + $0xf0] sm:$0xff]
        %v1244 = vld [vmem:[%s1212 + $0xf8] sm:$0xff]
        %v1245 = vld [vmem:[%s1212 + $0x100] sm:$0xff]
        %v1246 = vld [vmem:[%s1212 + $0x108] sm:$0xff]
        %v1247 = vld [vmem:[%s1212 + $0x110] sm:$0xff]
        %v1248 = vld [vmem:[%s1212 + $0x118] sm:$0xff]
        %v1249 = vld [vmem:[%s1212 + $0x120] sm:$0xff]
        %v1250 = vld [vmem:[%s1212 + $0x128] sm:$0xff]
        %v1251 = vld [vmem:[%s1212 + $0x130] sm:$0xff]
        %v1252 = vld [vmem:[%s1212 + $0x138] sm:$0xff]
        %v1253 = vld [vmem:[%s1212 + $0x140] sm:$0xff]
        %v1254 = vld [vmem:[%s1212 + $0x148] sm:$0xff]
        %v1255 = vld [vmem:[%s1212 + $0x150] sm:$0xff]
        %v1256 = vld [vmem:[%s1212 + $0x158] sm:$0xff]
        %v1257 = vld [vmem:[%s1212 + $0x160] sm:$0xff]
        %v1258 = vld [vmem:[%s1212 + $0x168] sm:$0xff]
        %v1259 = vld [vmem:[%s1212 + $0x170] sm:$0xff]
        %v1260 = vld [vmem:[%s1212 + $0x178] sm:$0xff]
        %v1261 = vld [vmem:[%s1212 + $0x180] sm:$0xff]
        %v1262 = vld [vmem:[%s1212 + $0x188] sm:$0xff]
        %v1263 = vld [vmem:[%s1212 + $0x190] sm:$0xff]
        %v1264 = vld [vmem:[%s1212 + $0x198] sm:$0xff]
        %v1265 = vld [vmem:[%s1212 + $0x1a0] sm:$0xff]
        %v1266 = vld [vmem:[%s1212 + $0x1a8] sm:$0xff]
        %v1267 = vld [vmem:[%s1212 + $0x1b0] sm:$0xff]
        %v1268 = vld [vmem:[%s1212 + $0x1b8] sm:$0xff]
        %v1269 = vld [vmem:[%s1212 + $0x1c0] sm:$0xff]
        %v1270 = vld [vmem:[%s1212 + $0x1c8] sm:$0xff]
        %v1271 = vld [vmem:[%s1212 + $0x1d0] sm:$0xff]
        %v1272 = vld [vmem:[%s1212 + $0x1d8] sm:$0xff]
        %v1273 = vld [vmem:[%s1212 + $0x1e0] sm:$0xff]
        %v1274 = vld [vmem:[%s1212 + $0x1e8] sm:$0xff]
        %v1275 = vld [vmem:[%s1212 + $0x1f0] sm:$0xff]
        %v1276 = vld [vmem:[%s1212 + $0x1f8] sm:$0xff]
        %v1279 = vrot.slane %v1210, 1
        %v1280 = vrot.slane %v1211, 1
        %v1347 = vunpack.c.l.b16 %v1213
        %v1348 = vunpack.c.h.b16 %v1213
        %v1349 = vunpack.c.l.b16 %v1214
        %v1350 = vunpack.c.h.b16 %v1214
        %v1351 = vunpack.c.l.b16 %v1215
        %v1352 = vunpack.c.h.b16 %v1215
        %v1353 = vunpack.c.l.b16 %v1216
        %v1354 = vunpack.c.h.b16 %v1216
        %v1355 = vunpack.c.l.b16 %v1217
        %v1356 = vunpack.c.h.b16 %v1217
        %v1357 = vunpack.c.l.b16 %v1218
        %v1358 = vunpack.c.h.b16 %v1218
        %v1359 = vunpack.c.l.b16 %v1219
        %v1360 = vunpack.c.h.b16 %v1219
        %v1361 = vunpack.c.l.b16 %v1220
        %v1362 = vunpack.c.h.b16 %v1220
        %v1363 = vunpack.c.l.b16 %v1221
        %v1364 = vunpack.c.h.b16 %v1221
        %v1365 = vunpack.c.l.b16 %v1222
        %v1366 = vunpack.c.h.b16 %v1222
        %v1367 = vunpack.c.l.b16 %v1223
        %v1368 = vunpack.c.h.b16 %v1223
        %v1369 = vunpack.c.l.b16 %v1224
        %v1370 = vunpack.c.h.b16 %v1224
        %v1371 = vunpack.c.l.b16 %v1225
        %v1372 = vunpack.c.h.b16 %v1225
        %v1373 = vunpack.c.l.b16 %v1226
        %v1374 = vunpack.c.h.b16 %v1226
        %v1375 = vunpack.c.l.b16 %v1227
        %v1376 = vunpack.c.h.b16 %v1227
        %v1377 = vunpack.c.l.b16 %v1228
        %v1378 = vunpack.c.h.b16 %v1228
        %v1379 = vunpack.c.l.b16 %v1229
        %v1380 = vunpack.c.h.b16 %v1229
        %v1381 = vunpack.c.l.b16 %v1230
        %v1382 = vunpack.c.h.b16 %v1230
        %v1383 = vunpack.c.l.b16 %v1231
        %v1384 = vunpack.c.h.b16 %v1231
        %v1385 = vunpack.c.l.b16 %v1232
        %v1386 = vunpack.c.h.b16 %v1232
        %v1387 = vunpack.c.l.b16 %v1233
        %v1388 = vunpack.c.h.b16 %v1233
        %v1389 = vunpack.c.l.b16 %v1234
        %v1390 = vunpack.c.h.b16 %v1234
        %v1391 = vunpack.c.l.b16 %v1235
        %v1392 = vunpack.c.h.b16 %v1235
        %v1393 = vunpack.c.l.b16 %v1236
        %v1394 = vunpack.c.h.b16 %v1236
        %v1395 = vunpack.c.l.b16 %v1237
        %v1396 = vunpack.c.h.b16 %v1237
        %v1397 = vunpack.c.l.b16 %v1238
        %v1398 = vunpack.c.h.b16 %v1238
        %v1399 = vunpack.c.l.b16 %v1239
        %v1400 = vunpack.c.h.b16 %v1239
        %v1401 = vunpack.c.l.b16 %v1240
        %v1402 = vunpack.c.h.b16 %v1240
        %v1403 = vunpack.c.l.b16 %v1241
        %v1404 = vunpack.c.h.b16 %v1241
        %v1405 = vunpack.c.l.b16 %v1242
        %v1406 = vunpack.c.h.b16 %v1242
        %v1407 = vunpack.c.l.b16 %v1243
        %v1408 = vunpack.c.h.b16 %v1243
        %v1409 = vunpack.c.l.b16 %v1244
        %v1410 = vunpack.c.h.b16 %v1244
        %v1411 = vunpack.c.l.b16 %v1245
        %v1412 = vunpack.c.h.b16 %v1245
        %v1413 = vunpack.c.l.b16 %v1246
        %v1414 = vunpack.c.h.b16 %v1246
        %v1415 = vunpack.c.l.b16 %v1247
        %v1416 = vunpack.c.h.b16 %v1247
        %v1417 = vunpack.c.l.b16 %v1248
        %v1418 = vunpack.c.h.b16 %v1248
        %v1419 = vunpack.c.l.b16 %v1249
        %v1420 = vunpack.c.h.b16 %v1249
        %v1421 = vunpack.c.l.b16 %v1250
        %v1422 = vunpack.c.h.b16 %v1250
        %v1423 = vunpack.c.l.b16 %v1251
        %v1424 = vunpack.c.h.b16 %v1251
        %v1425 = vunpack.c.l.b16 %v1252
        %v1426 = vunpack.c.h.b16 %v1252
        %v1427 = vunpack.c.l.b16 %v1253
        %v1428 = vunpack.c.h.b16 %v1253
        %v1429 = vunpack.c.l.b16 %v1254
        %v1430 = vunpack.c.h.b16 %v1254
        %v1431 = vunpack.c.l.b16 %v1255
        %v1432 = vunpack.c.h.b16 %v1255
        %v1433 = vunpack.c.l.b16 %v1256
        %v1434 = vunpack.c.h.b16 %v1256
        %v1435 = vunpack.c.l.b16 %v1257
        %v1436 = vunpack.c.h.b16 %v1257
        %v1437 = vunpack.c.l.b16 %v1258
        %v1438 = vunpack.c.h.b16 %v1258
        %v1439 = vunpack.c.l.b16 %v1259
        %v1440 = vunpack.c.h.b16 %v1259
        %v1441 = vunpack.c.l.b16 %v1260
        %v1442 = vunpack.c.h.b16 %v1260
        %v1443 = vunpack.c.l.b16 %v1261
        %v1444 = vunpack.c.h.b16 %v1261
        %v1445 = vunpack.c.l.b16 %v1262
        %v1446 = vunpack.c.h.b16 %v1262
        %v1447 = vunpack.c.l.b16 %v1263
        %v1448 = vunpack.c.h.b16 %v1263
        %v1449 = vunpack.c.l.b16 %v1264
        %v1450 = vunpack.c.h.b16 %v1264
        %v1451 = vunpack.c.l.b16 %v1265
        %v1452 = vunpack.c.h.b16 %v1265
        %v1453 = vunpack.c.l.b16 %v1266
        %v1454 = vunpack.c.h.b16 %v1266
        %v1455 = vunpack.c.l.b16 %v1267
        %v1456 = vunpack.c.h.b16 %v1267
        %v1457 = vunpack.c.l.b16 %v1268
        %v1458 = vunpack.c.h.b16 %v1268
        %v1459 = vunpack.c.l.b16 %v1269
        %v1460 = vunpack.c.h.b16 %v1269
        %v1461 = vunpack.c.l.b16 %v1270
        %v1462 = vunpack.c.h.b16 %v1270
        %v1463 = vunpack.c.l.b16 %v1271
        %v1464 = vunpack.c.h.b16 %v1271
        %v1465 = vunpack.c.l.b16 %v1272
        %v1466 = vunpack.c.h.b16 %v1272
        %v1467 = vunpack.c.l.b16 %v1273
        %v1468 = vunpack.c.h.b16 %v1273
        %v1469 = vunpack.c.l.b16 %v1274
        %v1470 = vunpack.c.h.b16 %v1274
        %v1471 = vunpack.c.l.b16 %v1275
        %v1472 = vunpack.c.h.b16 %v1275
        %v1473 = vunpack.c.l.b16 %v1276
        %v1474 = vunpack.c.h.b16 %v1276
        %v1475 = vpack.c.b16 %v1351, %v1347
        %v1476 = vpack.c.b16 %v1352, %v1348
        %v1477 = vpack.c.b16 %v1353, %v1349
        %v1478 = vpack.c.b16 %v1354, %v1350
        %v1479 = vpack.c.b16 %v1359, %v1355
        %v1480 = vpack.c.b16 %v1360, %v1356
        %v1481 = vpack.c.b16 %v1361, %v1357
        %v1482 = vpack.c.b16 %v1362, %v1358
        %v1483 = vpack.c.b16 %v1367, %v1363
        %v1484 = vpack.c.b16 %v1368, %v1364
        %v1485 = vpack.c.b16 %v1369, %v1365
        %v1486 = vpack.c.b16 %v1370, %v1366
        %v1487 = vpack.c.b16 %v1375, %v1371
        %v1488 = vpack.c.b16 %v1376, %v1372
        %v1489 = vpack.c.b16 %v1377, %v1373
        %v1490 = vpack.c.b16 %v1378, %v1374
        %v1491 = vpack.c.b16 %v1383, %v1379
        %v1492 = vpack.c.b16 %v1384, %v1380
        %v1493 = vpack.c.b16 %v1385, %v1381
        %v1494 = vpack.c.b16 %v1386, %v1382
        %v1495 = vpack.c.b16 %v1391, %v1387
        %v1496 = vpack.c.b16 %v1392, %v1388
        %v1497 = vpack.c.b16 %v1393, %v1389
        %v1498 = vpack.c.b16 %v1394, %v1390
        %v1499 = vpack.c.b16 %v1399, %v1395
        %v1500 = vpack.c.b16 %v1400, %v1396
        %v1501 = vpack.c.b16 %v1401, %v1397
        %v1502 = vpack.c.b16 %v1402, %v1398
        %v1503 = vpack.c.b16 %v1407, %v1403
        %v1504 = vpack.c.b16 %v1408, %v1404
        %v1505 = vpack.c.b16 %v1409, %v1405
        %v1506 = vpack.c.b16 %v1410, %v1406
        %v1507 = vpack.c.b16 %v1415, %v1411
        %v1508 = vpack.c.b16 %v1416, %v1412
        %v1509 = vpack.c.b16 %v1417, %v1413
        %v1510 = vpack.c.b16 %v1418, %v1414
        %v1511 = vpack.c.b16 %v1423, %v1419
        %v1512 = vpack.c.b16 %v1424, %v1420
        %v1513 = vpack.c.b16 %v1425, %v1421
        %v1514 = vpack.c.b16 %v1426, %v1422
        %v1515 = vpack.c.b16 %v1431, %v1427
        %v1516 = vpack.c.b16 %v1432, %v1428
        %v1517 = vpack.c.b16 %v1433, %v1429
        %v1518 = vpack.c.b16 %v1434, %v1430
        %v1519 = vpack.c.b16 %v1439, %v1435
        %v1520 = vpack.c.b16 %v1440, %v1436
        %v1521 = vpack.c.b16 %v1441, %v1437
        %v1522 = vpack.c.b16 %v1442, %v1438
        %v1523 = vpack.c.b16 %v1447, %v1443
        %v1524 = vpack.c.b16 %v1448, %v1444
        %v1525 = vpack.c.b16 %v1449, %v1445
        %v1526 = vpack.c.b16 %v1450, %v1446
        %v1527 = vpack.c.b16 %v1455, %v1451
        %v1528 = vpack.c.b16 %v1456, %v1452
        %v1529 = vpack.c.b16 %v1457, %v1453
        %v1530 = vpack.c.b16 %v1458, %v1454
        %v1531 = vpack.c.b16 %v1463, %v1459
        %v1532 = vpack.c.b16 %v1464, %v1460
        %v1533 = vpack.c.b16 %v1465, %v1461
        %v1534 = vpack.c.b16 %v1466, %v1462
        %v1535 = vpack.c.b16 %v1471, %v1467
        %v1536 = vpack.c.b16 %v1472, %v1468
        %v1537 = vpack.c.b16 %v1473, %v1469
        %v1538 = vpack.c.b16 %v1474, %v1470
        %1603 = vmatpush.bf16.msra.mxu0 %v1503
        %1604 = vmatpush.bf16.msra.mxu0 %v1499
        %1605 = vmatpush.bf16.msra.mxu0 %v1495
        %1606 = vmatpush.bf16.msra.mxu0 %v1491
        %1607 = vmatpush.bf16.msra.mxu0 %v1487
        %1608 = vmatpush.bf16.msra.mxu0 %v1483
        %1609 = vmatpush.bf16.msra.mxu0 %v1479
        %1610 = vmatpush.bf16.msra.mxu0 %v1475
        %1611 = vmatmul.bf16.gmra.mxu0 %v1279
        %v1612 = vpop.f32.mrf.mxu0
        %v1613 = vadd.f32 0.0, %v1612
        %v1614 = vpop.f32.mrf.mxu0
        %1615 = vdwg.mxu0
        %1616 = vmatpush.bf16.msra.mxu0 %v1535
        %1617 = vmatpush.bf16.msra.mxu0 %v1531
        %1618 = vmatpush.bf16.msra.mxu0 %v1527
        %1619 = vmatpush.bf16.msra.mxu0 %v1523
        %1620 = vmatpush.bf16.msra.mxu0 %v1519
        %1621 = vmatpush.bf16.msra.mxu0 %v1515
        %1622 = vmatpush.bf16.msra.mxu0 %v1511
        %1623 = vmatpush.bf16.msra.mxu0 %v1507
        %1624 = vmatmul.bf16.gmra.mxu0 %v1280
        %v1625 = vpop.f32.mrf.mxu0
        %v1626 = vadd.f32 %v1613, %v1625
        %v1627 = vpop.f32.mrf.mxu0
        %1628 = vdwg.mxu0
        %1629 = vmatpush.bf16.msra.mxu0 %v1504
        %1630 = vmatpush.bf16.msra.mxu0 %v1500
        %1631 = vmatpush.bf16.msra.mxu0 %v1496
        %1632 = vmatpush.bf16.msra.mxu0 %v1492
        %1633 = vmatpush.bf16.msra.mxu0 %v1488
        %1634 = vmatpush.bf16.msra.mxu0 %v1484
        %1635 = vmatpush.bf16.msra.mxu0 %v1480
        %1636 = vmatpush.bf16.msra.mxu0 %v1476
        %1637 = vmatmul.bf16.gmra.mxu0 %v1279
        %v1638 = vpop.f32.mrf.mxu0
        %v1639 = vadd.f32 0.0, %v1638
        %v1640 = vpop.f32.mrf.mxu0
        %1641 = vdwg.mxu0
        %1642 = vmatpush.bf16.msra.mxu0 %v1536
        %1643 = vmatpush.bf16.msra.mxu0 %v1532
        %1644 = vmatpush.bf16.msra.mxu0 %v1528
        %1645 = vmatpush.bf16.msra.mxu0 %v1524
        %1646 = vmatpush.bf16.msra.mxu0 %v1520
        %1647 = vmatpush.bf16.msra.mxu0 %v1516
        %1648 = vmatpush.bf16.msra.mxu0 %v1512
        %1649 = vmatpush.bf16.msra.mxu0 %v1508
        %1650 = vmatmul.bf16.gmra.mxu0 %v1280
        %v1651 = vpop.f32.mrf.mxu0
        %v1652 = vadd.f32 %v1639, %v1651
        %v1653 = vpop.f32.mrf.mxu0
        %1654 = vdwg.mxu0
        %1655 = vmatpush.bf16.msra.mxu0 %v1505
        %1656 = vmatpush.bf16.msra.mxu0 %v1501
        %1657 = vmatpush.bf16.msra.mxu0 %v1497
        %1658 = vmatpush.bf16.msra.mxu0 %v1493
        %1659 = vmatpush.bf16.msra.mxu0 %v1489
        %1660 = vmatpush.bf16.msra.mxu0 %v1485
        %1661 = vmatpush.bf16.msra.mxu0 %v1481
        %1662 = vmatpush.bf16.msra.mxu0 %v1477
        %1663 = vmatmul.bf16.gmra.mxu0 %v1279
        %v1664 = vpop.f32.mrf.mxu0
        %v1665 = vadd.f32 0.0, %v1664
        %v1666 = vpop.f32.mrf.mxu0
        %1667 = vdwg.mxu0
        %1668 = vmatpush.bf16.msra.mxu0 %v1537
        %1669 = vmatpush.bf16.msra.mxu0 %v1533
        %1670 = vmatpush.bf16.msra.mxu0 %v1529
        %1671 = vmatpush.bf16.msra.mxu0 %v1525
        %1672 = vmatpush.bf16.msra.mxu0 %v1521
        %1673 = vmatpush.bf16.msra.mxu0 %v1517
        %1674 = vmatpush.bf16.msra.mxu0 %v1513
        %1675 = vmatpush.bf16.msra.mxu0 %v1509
        %1676 = vmatmul.bf16.gmra.mxu0 %v1280
        %v1677 = vpop.f32.mrf.mxu0
        %v1678 = vadd.f32 %v1665, %v1677
        %v1679 = vpop.f32.mrf.mxu0
        %1680 = vdwg.mxu0
        %1681 = vmatpush.bf16.msra.mxu0 %v1506
        %1682 = vmatpush.bf16.msra.mxu0 %v1502
        %1683 = vmatpush.bf16.msra.mxu0 %v1498
        %1684 = vmatpush.bf16.msra.mxu0 %v1494
        %1685 = vmatpush.bf16.msra.mxu0 %v1490
        %1686 = vmatpush.bf16.msra.mxu0 %v1486
        %1687 = vmatpush.bf16.msra.mxu0 %v1482
        %1688 = vmatpush.bf16.msra.mxu0 %v1478
        %1689 = vmatmul.bf16.gmra.mxu0 %v1279
        %v1690 = vpop.f32.mrf.mxu0
        %v1691 = vadd.f32 0.0, %v1690
        %v1692 = vpop.f32.mrf.mxu0
        %1693 = vdwg.mxu0
        %1694 = vmatpush.bf16.msra.mxu0 %v1538
        %1695 = vmatpush.bf16.msra.mxu0 %v1534
        %1696 = vmatpush.bf16.msra.mxu0 %v1530
        %1697 = vmatpush.bf16.msra.mxu0 %v1526
        %1698 = vmatpush.bf16.msra.mxu0 %v1522
        %1699 = vmatpush.bf16.msra.mxu0 %v1518
        %1700 = vmatpush.bf16.msra.mxu0 %v1514
        %1701 = vmatpush.bf16.msra.mxu0 %v1510
        %1702 = vmatmul.bf16.gmra.mxu0 %v1280
        %v1703 = vpop.f32.mrf.mxu0
        %v1704 = vadd.f32 %v1691, %v1703
        %v1705 = vpop.f32.mrf.mxu0
        %1706 = vdwg.mxu0
        %v1707 = vadd.f32 %v1125, %v1626
        %v1708 = vadd.f32 %v1151, %v1652
        %v1709 = vadd.f32 %v1177, %v1678
        %v1710 = vadd.f32 %v1203, %v1704
        %v1711 = vld [vmem:[%s197] sm:$0xf8]
        %v1712 = vld [vmem:[%s197 + $0x8] sm:$0xf8]
        %v1713 = vld [vmem:[%s197 + $0x10] sm:$0x7]
        %v1714 = vld [vmem:[%s197 + $0x18] sm:$0x7]
        %v1715 = vpack.c.bf16 %v1713, %v1711
        %v1716 = vpack.c.bf16 %v1714, %v1712
        %s1717 = scalar_lea.vmem [#allocation2], 1536
        %v1718 = vld [vmem:[%s1717] sm:$0xff]
        %v1719 = vld [vmem:[%s1717 + $0x8] sm:$0xff]
        %v1720 = vld [vmem:[%s1717 + $0x10] sm:$0xff]
        %v1721 = vld [vmem:[%s1717 + $0x18] sm:$0xff]
        %v1722 = vld [vmem:[%s1717 + $0x20] sm:$0xff]
        %v1723 = vld [vmem:[%s1717 + $0x28] sm:$0xff]
        %v1724 = vld [vmem:[%s1717 + $0x30] sm:$0xff]
        %v1725 = vld [vmem:[%s1717 + $0x38] sm:$0xff]
        %v1726 = vld [vmem:[%s1717 + $0x40] sm:$0xff]
        %v1727 = vld [vmem:[%s1717 + $0x48] sm:$0xff]
        %v1728 = vld [vmem:[%s1717 + $0x50] sm:$0xff]
        %v1729 = vld [vmem:[%s1717 + $0x58] sm:$0xff]
        %v1730 = vld [vmem:[%s1717 + $0x60] sm:$0xff]
        %v1731 = vld [vmem:[%s1717 + $0x68] sm:$0xff]
        %v1732 = vld [vmem:[%s1717 + $0x70] sm:$0xff]
        %v1733 = vld [vmem:[%s1717 + $0x78] sm:$0xff]
        %v1734 = vld [vmem:[%s1717 + $0x80] sm:$0xff]
        %v1735 = vld [vmem:[%s1717 + $0x88] sm:$0xff]
        %v1736 = vld [vmem:[%s1717 + $0x90] sm:$0xff]
        %v1737 = vld [vmem:[%s1717 + $0x98] sm:$0xff]
        %v1738 = vld [vmem:[%s1717 + $0xa0] sm:$0xff]
        %v1739 = vld [vmem:[%s1717 + $0xa8] sm:$0xff]
        %v1740 = vld [vmem:[%s1717 + $0xb0] sm:$0xff]
        %v1741 = vld [vmem:[%s1717 + $0xb8] sm:$0xff]
        %v1742 = vld [vmem:[%s1717 + $0xc0] sm:$0xff]
        %v1743 = vld [vmem:[%s1717 + $0xc8] sm:$0xff]
        %v1744 = vld [vmem:[%s1717 + $0xd0] sm:$0xff]
        %v1745 = vld [vmem:[%s1717 + $0xd8] sm:$0xff]
        %v1746 = vld [vmem:[%s1717 + $0xe0] sm:$0xff]
        %v1747 = vld [vmem:[%s1717 + $0xe8] sm:$0xff]
        %v1748 = vld [vmem:[%s1717 + $0xf0] sm:$0xff]
        %v1749 = vld [vmem:[%s1717 + $0xf8] sm:$0xff]
        %v1750 = vld [vmem:[%s1717 + $0x100] sm:$0xff]
        %v1751 = vld [vmem:[%s1717 + $0x108] sm:$0xff]
        %v1752 = vld [vmem:[%s1717 + $0x110] sm:$0xff]
        %v1753 = vld [vmem:[%s1717 + $0x118] sm:$0xff]
        %v1754 = vld [vmem:[%s1717 + $0x120] sm:$0xff]
        %v1755 = vld [vmem:[%s1717 + $0x128] sm:$0xff]
        %v1756 = vld [vmem:[%s1717 + $0x130] sm:$0xff]
        %v1757 = vld [vmem:[%s1717 + $0x138] sm:$0xff]
        %v1758 = vld [vmem:[%s1717 + $0x140] sm:$0xff]
        %v1759 = vld [vmem:[%s1717 + $0x148] sm:$0xff]
        %v1760 = vld [vmem:[%s1717 + $0x150] sm:$0xff]
        %v1761 = vld [vmem:[%s1717 + $0x158] sm:$0xff]
        %v1762 = vld [vmem:[%s1717 + $0x160] sm:$0xff]
        %v1763 = vld [vmem:[%s1717 + $0x168] sm:$0xff]
        %v1764 = vld [vmem:[%s1717 + $0x170] sm:$0xff]
        %v1765 = vld [vmem:[%s1717 + $0x178] sm:$0xff]
        %v1766 = vld [vmem:[%s1717 + $0x180] sm:$0xff]
        %v1767 = vld [vmem:[%s1717 + $0x188] sm:$0xff]
        %v1768 = vld [vmem:[%s1717 + $0x190] sm:$0xff]
        %v1769 = vld [vmem:[%s1717 + $0x198] sm:$0xff]
        %v1770 = vld [vmem:[%s1717 + $0x1a0] sm:$0xff]
        %v1771 = vld [vmem:[%s1717 + $0x1a8] sm:$0xff]
        %v1772 = vld [vmem:[%s1717 + $0x1b0] sm:$0xff]
        %v1773 = vld [vmem:[%s1717 + $0x1b8] sm:$0xff]
        %v1774 = vld [vmem:[%s1717 + $0x1c0] sm:$0xff]
        %v1775 = vld [vmem:[%s1717 + $0x1c8] sm:$0xff]
        %v1776 = vld [vmem:[%s1717 + $0x1d0] sm:$0xff]
        %v1777 = vld [vmem:[%s1717 + $0x1d8] sm:$0xff]
        %v1778 = vld [vmem:[%s1717 + $0x1e0] sm:$0xff]
        %v1779 = vld [vmem:[%s1717 + $0x1e8] sm:$0xff]
        %v1780 = vld [vmem:[%s1717 + $0x1f0] sm:$0xff]
        %v1781 = vld [vmem:[%s1717 + $0x1f8] sm:$0xff]
        %v1783 = vshrl.u32 %v1715, 16
        %v1785 = vrot.slane %v1783, 1
        %v1786 = vshll.u32 %v1715, 16
        %v1788 = vrot.slane %v1786, 2
        %v1789 = vor.u32 %v1785, %v1788
        %v1791 = vshrl.u32 %v1716, 16
        %v1793 = vrot.slane %v1791, 1
        %v1794 = vshll.u32 %v1716, 16
        %v1796 = vrot.slane %v1794, 2
        %v1797 = vor.u32 %v1793, %v1796
        %v1864 = vunpack.c.l.b16 %v1718
        %v1865 = vunpack.c.h.b16 %v1718
        %v1866 = vunpack.c.l.b16 %v1719
        %v1867 = vunpack.c.h.b16 %v1719
        %v1868 = vunpack.c.l.b16 %v1720
        %v1869 = vunpack.c.h.b16 %v1720
        %v1870 = vunpack.c.l.b16 %v1721
        %v1871 = vunpack.c.h.b16 %v1721
        %v1872 = vunpack.c.l.b16 %v1722
        %v1873 = vunpack.c.h.b16 %v1722
        %v1874 = vunpack.c.l.b16 %v1723
        %v1875 = vunpack.c.h.b16 %v1723
        %v1876 = vunpack.c.l.b16 %v1724
        %v1877 = vunpack.c.h.b16 %v1724
        %v1878 = vunpack.c.l.b16 %v1725
        %v1879 = vunpack.c.h.b16 %v1725
        %v1880 = vunpack.c.l.b16 %v1726
        %v1881 = vunpack.c.h.b16 %v1726
        %v1882 = vunpack.c.l.b16 %v1727
        %v1883 = vunpack.c.h.b16 %v1727
        %v1884 = vunpack.c.l.b16 %v1728
        %v1885 = vunpack.c.h.b16 %v1728
        %v1886 = vunpack.c.l.b16 %v1729
        %v1887 = vunpack.c.h.b16 %v1729
        %v1888 = vunpack.c.l.b16 %v1730
        %v1889 = vunpack.c.h.b16 %v1730
        %v1890 = vunpack.c.l.b16 %v1731
        %v1891 = vunpack.c.h.b16 %v1731
        %v1892 = vunpack.c.l.b16 %v1732
        %v1893 = vunpack.c.h.b16 %v1732
        %v1894 = vunpack.c.l.b16 %v1733
        %v1895 = vunpack.c.h.b16 %v1733
        %v1896 = vunpack.c.l.b16 %v1734
        %v1897 = vunpack.c.h.b16 %v1734
        %v1898 = vunpack.c.l.b16 %v1735
        %v1899 = vunpack.c.h.b16 %v1735
        %v1900 = vunpack.c.l.b16 %v1736
        %v1901 = vunpack.c.h.b16 %v1736
        %v1902 = vunpack.c.l.b16 %v1737
        %v1903 = vunpack.c.h.b16 %v1737
        %v1904 = vunpack.c.l.b16 %v1738
        %v1905 = vunpack.c.h.b16 %v1738
        %v1906 = vunpack.c.l.b16 %v1739
        %v1907 = vunpack.c.h.b16 %v1739
        %v1908 = vunpack.c.l.b16 %v1740
        %v1909 = vunpack.c.h.b16 %v1740
        %v1910 = vunpack.c.l.b16 %v1741
        %v1911 = vunpack.c.h.b16 %v1741
        %v1912 = vunpack.c.l.b16 %v1742
        %v1913 = vunpack.c.h.b16 %v1742
        %v1914 = vunpack.c.l.b16 %v1743
        %v1915 = vunpack.c.h.b16 %v1743
        %v1916 = vunpack.c.l.b16 %v1744
        %v1917 = vunpack.c.h.b16 %v1744
        %v1918 = vunpack.c.l.b16 %v1745
        %v1919 = vunpack.c.h.b16 %v1745
        %v1920 = vunpack.c.l.b16 %v1746
        %v1921 = vunpack.c.h.b16 %v1746
        %v1922 = vunpack.c.l.b16 %v1747
        %v1923 = vunpack.c.h.b16 %v1747
        %v1924 = vunpack.c.l.b16 %v1748
        %v1925 = vunpack.c.h.b16 %v1748
        %v1926 = vunpack.c.l.b16 %v1749
        %v1927 = vunpack.c.h.b16 %v1749
        %v1928 = vunpack.c.l.b16 %v1750
        %v1929 = vunpack.c.h.b16 %v1750
        %v1930 = vunpack.c.l.b16 %v1751
        %v1931 = vunpack.c.h.b16 %v1751
        %v1932 = vunpack.c.l.b16 %v1752
        %v1933 = vunpack.c.h.b16 %v1752
        %v1934 = vunpack.c.l.b16 %v1753
        %v1935 = vunpack.c.h.b16 %v1753
        %v1936 = vunpack.c.l.b16 %v1754
        %v1937 = vunpack.c.h.b16 %v1754
        %v1938 = vunpack.c.l.b16 %v1755
        %v1939 = vunpack.c.h.b16 %v1755
        %v1940 = vunpack.c.l.b16 %v1756
        %v1941 = vunpack.c.h.b16 %v1756
        %v1942 = vunpack.c.l.b16 %v1757
        %v1943 = vunpack.c.h.b16 %v1757
        %v1944 = vunpack.c.l.b16 %v1758
        %v1945 = vunpack.c.h.b16 %v1758
        %v1946 = vunpack.c.l.b16 %v1759
        %v1947 = vunpack.c.h.b16 %v1759
        %v1948 = vunpack.c.l.b16 %v1760
        %v1949 = vunpack.c.h.b16 %v1760
        %v1950 = vunpack.c.l.b16 %v1761
        %v1951 = vunpack.c.h.b16 %v1761
        %v1952 = vunpack.c.l.b16 %v1762
        %v1953 = vunpack.c.h.b16 %v1762
        %v1954 = vunpack.c.l.b16 %v1763
        %v1955 = vunpack.c.h.b16 %v1763
        %v1956 = vunpack.c.l.b16 %v1764
        %v1957 = vunpack.c.h.b16 %v1764
        %v1958 = vunpack.c.l.b16 %v1765
        %v1959 = vunpack.c.h.b16 %v1765
        %v1960 = vunpack.c.l.b16 %v1766
        %v1961 = vunpack.c.h.b16 %v1766
        %v1962 = vunpack.c.l.b16 %v1767
        %v1963 = vunpack.c.h.b16 %v1767
        %v1964 = vunpack.c.l.b16 %v1768
        %v1965 = vunpack.c.h.b16 %v1768
        %v1966 = vunpack.c.l.b16 %v1769
        %v1967 = vunpack.c.h.b16 %v1769
        %v1968 = vunpack.c.l.b16 %v1770
        %v1969 = vunpack.c.h.b16 %v1770
        %v1970 = vunpack.c.l.b16 %v1771
        %v1971 = vunpack.c.h.b16 %v1771
        %v1972 = vunpack.c.l.b16 %v1772
        %v1973 = vunpack.c.h.b16 %v1772
        %v1974 = vunpack.c.l.b16 %v1773
        %v1975 = vunpack.c.h.b16 %v1773
        %v1976 = vunpack.c.l.b16 %v1774
        %v1977 = vunpack.c.h.b16 %v1774
        %v1978 = vunpack.c.l.b16 %v1775
        %v1979 = vunpack.c.h.b16 %v1775
        %v1980 = vunpack.c.l.b16 %v1776
        %v1981 = vunpack.c.h.b16 %v1776
        %v1982 = vunpack.c.l.b16 %v1777
        %v1983 = vunpack.c.h.b16 %v1777
        %v1984 = vunpack.c.l.b16 %v1778
        %v1985 = vunpack.c.h.b16 %v1778
        %v1986 = vunpack.c.l.b16 %v1779
        %v1987 = vunpack.c.h.b16 %v1779
        %v1988 = vunpack.c.l.b16 %v1780
        %v1989 = vunpack.c.h.b16 %v1780
        %v1990 = vunpack.c.l.b16 %v1781
        %v1991 = vunpack.c.h.b16 %v1781
        %v1992 = vpack.c.b16 %v1868, %v1864
        %v1993 = vpack.c.b16 %v1869, %v1865
        %v1994 = vpack.c.b16 %v1870, %v1866
        %v1995 = vpack.c.b16 %v1871, %v1867
        %v1996 = vpack.c.b16 %v1876, %v1872
        %v1997 = vpack.c.b16 %v1877, %v1873
        %v1998 = vpack.c.b16 %v1878, %v1874
        %v1999 = vpack.c.b16 %v1879, %v1875
        %v2000 = vpack.c.b16 %v1884, %v1880
        %v2001 = vpack.c.b16 %v1885, %v1881
        %v2002 = vpack.c.b16 %v1886, %v1882
        %v2003 = vpack.c.b16 %v1887, %v1883
        %v2004 = vpack.c.b16 %v1892, %v1888
        %v2005 = vpack.c.b16 %v1893, %v1889
        %v2006 = vpack.c.b16 %v1894, %v1890
        %v2007 = vpack.c.b16 %v1895, %v1891
        %v2008 = vpack.c.b16 %v1900, %v1896
        %v2009 = vpack.c.b16 %v1901, %v1897
        %v2010 = vpack.c.b16 %v1902, %v1898
        %v2011 = vpack.c.b16 %v1903, %v1899
        %v2012 = vpack.c.b16 %v1908, %v1904
        %v2013 = vpack.c.b16 %v1909, %v1905
        %v2014 = vpack.c.b16 %v1910, %v1906
        %v2015 = vpack.c.b16 %v1911, %v1907
        %v2016 = vpack.c.b16 %v1916, %v1912
        %v2017 = vpack.c.b16 %v1917, %v1913
        %v2018 = vpack.c.b16 %v1918, %v1914
        %v2019 = vpack.c.b16 %v1919, %v1915
        %v2020 = vpack.c.b16 %v1924, %v1920
        %v2021 = vpack.c.b16 %v1925, %v1921
        %v2022 = vpack.c.b16 %v1926, %v1922
        %v2023 = vpack.c.b16 %v1927, %v1923
        %v2024 = vpack.c.b16 %v1932, %v1928
        %v2025 = vpack.c.b16 %v1933, %v1929
        %v2026 = vpack.c.b16 %v1934, %v1930
        %v2027 = vpack.c.b16 %v1935, %v1931
        %v2028 = vpack.c.b16 %v1940, %v1936
        %v2029 = vpack.c.b16 %v1941, %v1937
        %v2030 = vpack.c.b16 %v1942, %v1938
        %v2031 = vpack.c.b16 %v1943, %v1939
        %v2032 = vpack.c.b16 %v1948, %v1944
        %v2033 = vpack.c.b16 %v1949, %v1945
        %v2034 = vpack.c.b16 %v1950, %v1946
        %v2035 = vpack.c.b16 %v1951, %v1947
        %v2036 = vpack.c.b16 %v1956, %v1952
        %v2037 = vpack.c.b16 %v1957, %v1953
        %v2038 = vpack.c.b16 %v1958, %v1954
        %v2039 = vpack.c.b16 %v1959, %v1955
        %v2040 = vpack.c.b16 %v1964, %v1960
        %v2041 = vpack.c.b16 %v1965, %v1961
        %v2042 = vpack.c.b16 %v1966, %v1962
        %v2043 = vpack.c.b16 %v1967, %v1963
        %v2044 = vpack.c.b16 %v1972, %v1968
        %v2045 = vpack.c.b16 %v1973, %v1969
        %v2046 = vpack.c.b16 %v1974, %v1970
        %v2047 = vpack.c.b16 %v1975, %v1971
        %v2048 = vpack.c.b16 %v1980, %v1976
        %v2049 = vpack.c.b16 %v1981, %v1977
        %v2050 = vpack.c.b16 %v1982, %v1978
        %v2051 = vpack.c.b16 %v1983, %v1979
        %v2052 = vpack.c.b16 %v1988, %v1984
        %v2053 = vpack.c.b16 %v1989, %v1985
        %v2054 = vpack.c.b16 %v1990, %v1986
        %v2055 = vpack.c.b16 %v1991, %v1987
        %2120 = vmatpush.bf16.msra.mxu0 %v2020
        %2121 = vmatpush.bf16.msra.mxu0 %v2016
        %2122 = vmatpush.bf16.msra.mxu0 %v2012
        %2123 = vmatpush.bf16.msra.mxu0 %v2008
        %2124 = vmatpush.bf16.msra.mxu0 %v2004
        %2125 = vmatpush.bf16.msra.mxu0 %v2000
        %2126 = vmatpush.bf16.msra.mxu0 %v1996
        %2127 = vmatpush.bf16.msra.mxu0 %v1992
        %2128 = vmatmul.bf16.gmra.mxu0 %v1789
        %v2129 = vpop.f32.mrf.mxu0
        %v2130 = vadd.f32 0.0, %v2129
        %v2131 = vpop.f32.mrf.mxu0
        %2132 = vdwg.mxu0
        %2133 = vmatpush.bf16.msra.mxu0 %v2052
        %2134 = vmatpush.bf16.msra.mxu0 %v2048
        %2135 = vmatpush.bf16.msra.mxu0 %v2044
        %2136 = vmatpush.bf16.msra.mxu0 %v2040
        %2137 = vmatpush.bf16.msra.mxu0 %v2036
        %2138 = vmatpush.bf16.msra.mxu0 %v2032
        %2139 = vmatpush.bf16.msra.mxu0 %v2028
        %2140 = vmatpush.bf16.msra.mxu0 %v2024
        %2141 = vmatmul.bf16.gmra.mxu0 %v1797
        %v2142 = vpop.f32.mrf.mxu0
        %v2143 = vadd.f32 %v2130, %v2142
        %v2144 = vpop.f32.mrf.mxu0
        %2145 = vdwg.mxu0
        %2146 = vmatpush.bf16.msra.mxu0 %v2021
        %2147 = vmatpush.bf16.msra.mxu0 %v2017
        %2148 = vmatpush.bf16.msra.mxu0 %v2013
        %2149 = vmatpush.bf16.msra.mxu0 %v2009
        %2150 = vmatpush.bf16.msra.mxu0 %v2005
        %2151 = vmatpush.bf16.msra.mxu0 %v2001
        %2152 = vmatpush.bf16.msra.mxu0 %v1997
        %2153 = vmatpush.bf16.msra.mxu0 %v1993
        %2154 = vmatmul.bf16.gmra.mxu0 %v1789
        %v2155 = vpop.f32.mrf.mxu0
        %v2156 = vadd.f32 0.0, %v2155
        %v2157 = vpop.f32.mrf.mxu0
        %2158 = vdwg.mxu0
        %2159 = vmatpush.bf16.msra.mxu0 %v2053
        %2160 = vmatpush.bf16.msra.mxu0 %v2049
        %2161 = vmatpush.bf16.msra.mxu0 %v2045
        %2162 = vmatpush.bf16.msra.mxu0 %v2041
        %2163 = vmatpush.bf16.msra.mxu0 %v2037
        %2164 = vmatpush.bf16.msra.mxu0 %v2033
        %2165 = vmatpush.bf16.msra.mxu0 %v2029
        %2166 = vmatpush.bf16.msra.mxu0 %v2025
        %2167 = vmatmul.bf16.gmra.mxu0 %v1797
        %v2168 = vpop.f32.mrf.mxu0
        %v2169 = vadd.f32 %v2156, %v2168
        %v2170 = vpop.f32.mrf.mxu0
        %2171 = vdwg.mxu0
        %2172 = vmatpush.bf16.msra.mxu0 %v2022
        %2173 = vmatpush.bf16.msra.mxu0 %v2018
        %2174 = vmatpush.bf16.msra.mxu0 %v2014
        %2175 = vmatpush.bf16.msra.mxu0 %v2010
        %2176 = vmatpush.bf16.msra.mxu0 %v2006
        %2177 = vmatpush.bf16.msra.mxu0 %v2002
        %2178 = vmatpush.bf16.msra.mxu0 %v1998
        %2179 = vmatpush.bf16.msra.mxu0 %v1994
        %2180 = vmatmul.bf16.gmra.mxu0 %v1789
        %v2181 = vpop.f32.mrf.mxu0
        %v2182 = vadd.f32 0.0, %v2181
        %v2183 = vpop.f32.mrf.mxu0
        %2184 = vdwg.mxu0
        %2185 = vmatpush.bf16.msra.mxu0 %v2054
        %2186 = vmatpush.bf16.msra.mxu0 %v2050
        %2187 = vmatpush.bf16.msra.mxu0 %v2046
        %2188 = vmatpush.bf16.msra.mxu0 %v2042
        %2189 = vmatpush.bf16.msra.mxu0 %v2038
        %2190 = vmatpush.bf16.msra.mxu0 %v2034
        %2191 = vmatpush.bf16.msra.mxu0 %v2030
        %2192 = vmatpush.bf16.msra.mxu0 %v2026
        %2193 = vmatmul.bf16.gmra.mxu0 %v1797
        %v2194 = vpop.f32.mrf.mxu0
        %v2195 = vadd.f32 %v2182, %v2194
        %v2196 = vpop.f32.mrf.mxu0
        %2197 = vdwg.mxu0
        %2198 = vmatpush.bf16.msra.mxu0 %v2023
        %2199 = vmatpush.bf16.msra.mxu0 %v2019
        %2200 = vmatpush.bf16.msra.mxu0 %v2015
        %2201 = vmatpush.bf16.msra.mxu0 %v2011
        %2202 = vmatpush.bf16.msra.mxu0 %v2007
        %2203 = vmatpush.bf16.msra.mxu0 %v2003
        %2204 = vmatpush.bf16.msra.mxu0 %v1999
        %2205 = vmatpush.bf16.msra.mxu0 %v1995
        %2206 = vmatmul.bf16.gmra.mxu0 %v1789
        %v2207 = vpop.f32.mrf.mxu0
        %v2208 = vadd.f32 0.0, %v2207
        %v2209 = vpop.f32.mrf.mxu0
        %2210 = vdwg.mxu0
        %2211 = vmatpush.bf16.msra.mxu0 %v2055
        %2212 = vmatpush.bf16.msra.mxu0 %v2051
        %2213 = vmatpush.bf16.msra.mxu0 %v2047
        %2214 = vmatpush.bf16.msra.mxu0 %v2043
        %2215 = vmatpush.bf16.msra.mxu0 %v2039
        %2216 = vmatpush.bf16.msra.mxu0 %v2035
        %2217 = vmatpush.bf16.msra.mxu0 %v2031
        %2218 = vmatpush.bf16.msra.mxu0 %v2027
        %2219 = vmatmul.bf16.gmra.mxu0 %v1797
        %v2220 = vpop.f32.mrf.mxu0
        %v2221 = vadd.f32 %v2208, %v2220
        %v2222 = vpop.f32.mrf.mxu0
        %2223 = vdwg.mxu0
        %v2224 = vadd.f32 %v1707, %v2143
        %v2225 = vadd.f32 %v1708, %v2169
        %v2226 = vadd.f32 %v1709, %v2195
        %v2227 = vadd.f32 %v1710, %v2221
        %v2228 = vld [vmem:[%s197] sm:$0xf0]
        %v2229 = vld [vmem:[%s197 + $0x8] sm:$0xf0]
        %v2230 = vld [vmem:[%s197 + $0x10] sm:$0xf]
        %v2231 = vld [vmem:[%s197 + $0x18] sm:$0xf]
        %v2232 = vpack.c.bf16 %v2230, %v2228
        %v2233 = vpack.c.bf16 %v2231, %v2229
        %s2234 = scalar_lea.vmem [#allocation2], 2048
        %v2235 = vld [vmem:[%s2234] sm:$0xff]
        %v2236 = vld [vmem:[%s2234 + $0x8] sm:$0xff]
        %v2237 = vld [vmem:[%s2234 + $0x10] sm:$0xff]
        %v2238 = vld [vmem:[%s2234 + $0x18] sm:$0xff]
        %v2239 = vld [vmem:[%s2234 + $0x20] sm:$0xff]
        %v2240 = vld [vmem:[%s2234 + $0x28] sm:$0xff]
        %v2241 = vld [vmem:[%s2234 + $0x30] sm:$0xff]
        %v2242 = vld [vmem:[%s2234 + $0x38] sm:$0xff]
        %v2243 = vld [vmem:[%s2234 + $0x40] sm:$0xff]
        %v2244 = vld [vmem:[%s2234 + $0x48] sm:$0xff]
        %v2245 = vld [vmem:[%s2234 + $0x50] sm:$0xff]
        %v2246 = vld [vmem:[%s2234 + $0x58] sm:$0xff]
        %v2247 = vld [vmem:[%s2234 + $0x60] sm:$0xff]
        %v2248 = vld [vmem:[%s2234 + $0x68] sm:$0xff]
        %v2249 = vld [vmem:[%s2234 + $0x70] sm:$0xff]
        %v2250 = vld [vmem:[%s2234 + $0x78] sm:$0xff]
        %v2251 = vld [vmem:[%s2234 + $0x80] sm:$0xff]
        %v2252 = vld [vmem:[%s2234 + $0x88] sm:$0xff]
        %v2253 = vld [vmem:[%s2234 + $0x90] sm:$0xff]
        %v2254 = vld [vmem:[%s2234 + $0x98] sm:$0xff]
        %v2255 = vld [vmem:[%s2234 + $0xa0] sm:$0xff]
        %v2256 = vld [vmem:[%s2234 + $0xa8] sm:$0xff]
        %v2257 = vld [vmem:[%s2234 + $0xb0] sm:$0xff]
        %v2258 = vld [vmem:[%s2234 + $0xb8] sm:$0xff]
        %v2259 = vld [vmem:[%s2234 + $0xc0] sm:$0xff]
        %v2260 = vld [vmem:[%s2234 + $0xc8] sm:$0xff]
        %v2261 = vld [vmem:[%s2234 + $0xd0] sm:$0xff]
        %v2262 = vld [vmem:[%s2234 + $0xd8] sm:$0xff]
        %v2263 = vld [vmem:[%s2234 + $0xe0] sm:$0xff]
        %v2264 = vld [vmem:[%s2234 + $0xe8] sm:$0xff]
        %v2265 = vld [vmem:[%s2234 + $0xf0] sm:$0xff]
        %v2266 = vld [vmem:[%s2234 + $0xf8] sm:$0xff]
        %v2267 = vld [vmem:[%s2234 + $0x100] sm:$0xff]
        %v2268 = vld [vmem:[%s2234 + $0x108] sm:$0xff]
        %v2269 = vld [vmem:[%s2234 + $0x110] sm:$0xff]
        %v2270 = vld [vmem:[%s2234 + $0x118] sm:$0xff]
        %v2271 = vld [vmem:[%s2234 + $0x120] sm:$0xff]
        %v2272 = vld [vmem:[%s2234 + $0x128] sm:$0xff]
        %v2273 = vld [vmem:[%s2234 + $0x130] sm:$0xff]
        %v2274 = vld [vmem:[%s2234 + $0x138] sm:$0xff]
        %v2275 = vld [vmem:[%s2234 + $0x140] sm:$0xff]
        %v2276 = vld [vmem:[%s2234 + $0x148] sm:$0xff]
        %v2277 = vld [vmem:[%s2234 + $0x150] sm:$0xff]
        %v2278 = vld [vmem:[%s2234 + $0x158] sm:$0xff]
        %v2279 = vld [vmem:[%s2234 + $0x160] sm:$0xff]
        %v2280 = vld [vmem:[%s2234 + $0x168] sm:$0xff]
        %v2281 = vld [vmem:[%s2234 + $0x170] sm:$0xff]
        %v2282 = vld [vmem:[%s2234 + $0x178] sm:$0xff]
        %v2283 = vld [vmem:[%s2234 + $0x180] sm:$0xff]
        %v2284 = vld [vmem:[%s2234 + $0x188] sm:$0xff]
        %v2285 = vld [vmem:[%s2234 + $0x190] sm:$0xff]
        %v2286 = vld [vmem:[%s2234 + $0x198] sm:$0xff]
        %v2287 = vld [vmem:[%s2234 + $0x1a0] sm:$0xff]
        %v2288 = vld [vmem:[%s2234 + $0x1a8] sm:$0xff]
        %v2289 = vld [vmem:[%s2234 + $0x1b0] sm:$0xff]
        %v2290 = vld [vmem:[%s2234 + $0x1b8] sm:$0xff]
        %v2291 = vld [vmem:[%s2234 + $0x1c0] sm:$0xff]
        %v2292 = vld [vmem:[%s2234 + $0x1c8] sm:$0xff]
        %v2293 = vld [vmem:[%s2234 + $0x1d0] sm:$0xff]
        %v2294 = vld [vmem:[%s2234 + $0x1d8] sm:$0xff]
        %v2295 = vld [vmem:[%s2234 + $0x1e0] sm:$0xff]
        %v2296 = vld [vmem:[%s2234 + $0x1e8] sm:$0xff]
        %v2297 = vld [vmem:[%s2234 + $0x1f0] sm:$0xff]
        %v2298 = vld [vmem:[%s2234 + $0x1f8] sm:$0xff]
        %v2301 = vrot.slane %v2232, 2
        %v2302 = vrot.slane %v2233, 2
        %v2369 = vunpack.c.l.b16 %v2235
        %v2370 = vunpack.c.h.b16 %v2235
        %v2371 = vunpack.c.l.b16 %v2236
        %v2372 = vunpack.c.h.b16 %v2236
        %v2373 = vunpack.c.l.b16 %v2237
        %v2374 = vunpack.c.h.b16 %v2237
        %v2375 = vunpack.c.l.b16 %v2238
        %v2376 = vunpack.c.h.b16 %v2238
        %v2377 = vunpack.c.l.b16 %v2239
        %v2378 = vunpack.c.h.b16 %v2239
        %v2379 = vunpack.c.l.b16 %v2240
        %v2380 = vunpack.c.h.b16 %v2240
        %v2381 = vunpack.c.l.b16 %v2241
        %v2382 = vunpack.c.h.b16 %v2241
        %v2383 = vunpack.c.l.b16 %v2242
        %v2384 = vunpack.c.h.b16 %v2242
        %v2385 = vunpack.c.l.b16 %v2243
        %v2386 = vunpack.c.h.b16 %v2243
        %v2387 = vunpack.c.l.b16 %v2244
        %v2388 = vunpack.c.h.b16 %v2244
        %v2389 = vunpack.c.l.b16 %v2245
        %v2390 = vunpack.c.h.b16 %v2245
        %v2391 = vunpack.c.l.b16 %v2246
        %v2392 = vunpack.c.h.b16 %v2246
        %v2393 = vunpack.c.l.b16 %v2247
        %v2394 = vunpack.c.h.b16 %v2247
        %v2395 = vunpack.c.l.b16 %v2248
        %v2396 = vunpack.c.h.b16 %v2248
        %v2397 = vunpack.c.l.b16 %v2249
        %v2398 = vunpack.c.h.b16 %v2249
        %v2399 = vunpack.c.l.b16 %v2250
        %v2400 = vunpack.c.h.b16 %v2250
        %v2401 = vunpack.c.l.b16 %v2251
        %v2402 = vunpack.c.h.b16 %v2251
        %v2403 = vunpack.c.l.b16 %v2252
        %v2404 = vunpack.c.h.b16 %v2252
        %v2405 = vunpack.c.l.b16 %v2253
        %v2406 = vunpack.c.h.b16 %v2253
        %v2407 = vunpack.c.l.b16 %v2254
        %v2408 = vunpack.c.h.b16 %v2254
        %v2409 = vunpack.c.l.b16 %v2255
        %v2410 = vunpack.c.h.b16 %v2255
        %v2411 = vunpack.c.l.b16 %v2256
        %v2412 = vunpack.c.h.b16 %v2256
        %v2413 = vunpack.c.l.b16 %v2257
        %v2414 = vunpack.c.h.b16 %v2257
        %v2415 = vunpack.c.l.b16 %v2258
        %v2416 = vunpack.c.h.b16 %v2258
        %v2417 = vunpack.c.l.b16 %v2259
        %v2418 = vunpack.c.h.b16 %v2259
        %v2419 = vunpack.c.l.b16 %v2260
        %v2420 = vunpack.c.h.b16 %v2260
        %v2421 = vunpack.c.l.b16 %v2261
        %v2422 = vunpack.c.h.b16 %v2261
        %v2423 = vunpack.c.l.b16 %v2262
        %v2424 = vunpack.c.h.b16 %v2262
        %v2425 = vunpack.c.l.b16 %v2263
        %v2426 = vunpack.c.h.b16 %v2263
        %v2427 = vunpack.c.l.b16 %v2264
        %v2428 = vunpack.c.h.b16 %v2264
        %v2429 = vunpack.c.l.b16 %v2265
        %v2430 = vunpack.c.h.b16 %v2265
        %v2431 = vunpack.c.l.b16 %v2266
        %v2432 = vunpack.c.h.b16 %v2266
        %v2433 = vunpack.c.l.b16 %v2267
        %v2434 = vunpack.c.h.b16 %v2267
        %v2435 = vunpack.c.l.b16 %v2268
        %v2436 = vunpack.c.h.b16 %v2268
        %v2437 = vunpack.c.l.b16 %v2269
        %v2438 = vunpack.c.h.b16 %v2269
        %v2439 = vunpack.c.l.b16 %v2270
        %v2440 = vunpack.c.h.b16 %v2270
        %v2441 = vunpack.c.l.b16 %v2271
        %v2442 = vunpack.c.h.b16 %v2271
        %v2443 = vunpack.c.l.b16 %v2272
        %v2444 = vunpack.c.h.b16 %v2272
        %v2445 = vunpack.c.l.b16 %v2273
        %v2446 = vunpack.c.h.b16 %v2273
        %v2447 = vunpack.c.l.b16 %v2274
        %v2448 = vunpack.c.h.b16 %v2274
        %v2449 = vunpack.c.l.b16 %v2275
        %v2450 = vunpack.c.h.b16 %v2275
        %v2451 = vunpack.c.l.b16 %v2276
        %v2452 = vunpack.c.h.b16 %v2276
        %v2453 = vunpack.c.l.b16 %v2277
        %v2454 = vunpack.c.h.b16 %v2277
        %v2455 = vunpack.c.l.b16 %v2278
        %v2456 = vunpack.c.h.b16 %v2278
        %v2457 = vunpack.c.l.b16 %v2279
        %v2458 = vunpack.c.h.b16 %v2279
        %v2459 = vunpack.c.l.b16 %v2280
        %v2460 = vunpack.c.h.b16 %v2280
        %v2461 = vunpack.c.l.b16 %v2281
        %v2462 = vunpack.c.h.b16 %v2281
        %v2463 = vunpack.c.l.b16 %v2282
        %v2464 = vunpack.c.h.b16 %v2282
        %v2465 = vunpack.c.l.b16 %v2283
        %v2466 = vunpack.c.h.b16 %v2283
        %v2467 = vunpack.c.l.b16 %v2284
        %v2468 = vunpack.c.h.b16 %v2284
        %v2469 = vunpack.c.l.b16 %v2285
        %v2470 = vunpack.c.h.b16 %v2285
        %v2471 = vunpack.c.l.b16 %v2286
        %v2472 = vunpack.c.h.b16 %v2286
        %v2473 = vunpack.c.l.b16 %v2287
        %v2474 = vunpack.c.h.b16 %v2287
        %v2475 = vunpack.c.l.b16 %v2288
        %v2476 = vunpack.c.h.b16 %v2288
        %v2477 = vunpack.c.l.b16 %v2289
        %v2478 = vunpack.c.h.b16 %v2289
        %v2479 = vunpack.c.l.b16 %v2290
        %v2480 = vunpack.c.h.b16 %v2290
        %v2481 = vunpack.c.l.b16 %v2291
        %v2482 = vunpack.c.h.b16 %v2291
        %v2483 = vunpack.c.l.b16 %v2292
        %v2484 = vunpack.c.h.b16 %v2292
        %v2485 = vunpack.c.l.b16 %v2293
        %v2486 = vunpack.c.h.b16 %v2293
        %v2487 = vunpack.c.l.b16 %v2294
        %v2488 = vunpack.c.h.b16 %v2294
        %v2489 = vunpack.c.l.b16 %v2295
        %v2490 = vunpack.c.h.b16 %v2295
        %v2491 = vunpack.c.l.b16 %v2296
        %v2492 = vunpack.c.h.b16 %v2296
        %v2493 = vunpack.c.l.b16 %v2297
        %v2494 = vunpack.c.h.b16 %v2297
        %v2495 = vunpack.c.l.b16 %v2298
        %v2496 = vunpack.c.h.b16 %v2298
        %v2497 = vpack.c.b16 %v2373, %v2369
        %v2498 = vpack.c.b16 %v2374, %v2370
        %v2499 = vpack.c.b16 %v2375, %v2371
        %v2500 = vpack.c.b16 %v2376, %v2372
        %v2501 = vpack.c.b16 %v2381, %v2377
        %v2502 = vpack.c.b16 %v2382, %v2378
        %v2503 = vpack.c.b16 %v2383, %v2379
        %v2504 = vpack.c.b16 %v2384, %v2380
        %v2505 = vpack.c.b16 %v2389, %v2385
        %v2506 = vpack.c.b16 %v2390, %v2386
        %v2507 = vpack.c.b16 %v2391, %v2387
        %v2508 = vpack.c.b16 %v2392, %v2388
        %v2509 = vpack.c.b16 %v2397, %v2393
        %v2510 = vpack.c.b16 %v2398, %v2394
        %v2511 = vpack.c.b16 %v2399, %v2395
        %v2512 = vpack.c.b16 %v2400, %v2396
        %v2513 = vpack.c.b16 %v2405, %v2401
        %v2514 = vpack.c.b16 %v2406, %v2402
        %v2515 = vpack.c.b16 %v2407, %v2403
        %v2516 = vpack.c.b16 %v2408, %v2404
        %v2517 = vpack.c.b16 %v2413, %v2409
        %v2518 = vpack.c.b16 %v2414, %v2410
        %v2519 = vpack.c.b16 %v2415, %v2411
        %v2520 = vpack.c.b16 %v2416, %v2412
        %v2521 = vpack.c.b16 %v2421, %v2417
        %v2522 = vpack.c.b16 %v2422, %v2418
        %v2523 = vpack.c.b16 %v2423, %v2419
        %v2524 = vpack.c.b16 %v2424, %v2420
        %v2525 = vpack.c.b16 %v2429, %v2425
        %v2526 = vpack.c.b16 %v2430, %v2426
        %v2527 = vpack.c.b16 %v2431, %v2427
        %v2528 = vpack.c.b16 %v2432, %v2428
        %v2529 = vpack.c.b16 %v2437, %v2433
        %v2530 = vpack.c.b16 %v2438, %v2434
        %v2531 = vpack.c.b16 %v2439, %v2435
        %v2532 = vpack.c.b16 %v2440, %v2436
        %v2533 = vpack.c.b16 %v2445, %v2441
        %v2534 = vpack.c.b16 %v2446, %v2442
        %v2535 = vpack.c.b16 %v2447, %v2443
        %v2536 = vpack.c.b16 %v2448, %v2444
        %v2537 = vpack.c.b16 %v2453, %v2449
        %v2538 = vpack.c.b16 %v2454, %v2450
        %v2539 = vpack.c.b16 %v2455, %v2451
        %v2540 = vpack.c.b16 %v2456, %v2452
        %v2541 = vpack.c.b16 %v2461, %v2457
        %v2542 = vpack.c.b16 %v2462, %v2458
        %v2543 = vpack.c.b16 %v2463, %v2459
        %v2544 = vpack.c.b16 %v2464, %v2460
        %v2545 = vpack.c.b16 %v2469, %v2465
        %v2546 = vpack.c.b16 %v2470, %v2466
        %v2547 = vpack.c.b16 %v2471, %v2467
        %v2548 = vpack.c.b16 %v2472, %v2468
        %v2549 = vpack.c.b16 %v2477, %v2473
        %v2550 = vpack.c.b16 %v2478, %v2474
        %v2551 = vpack.c.b16 %v2479, %v2475
        %v2552 = vpack.c.b16 %v2480, %v2476
        %v2553 = vpack.c.b16 %v2485, %v2481
        %v2554 = vpack.c.b16 %v2486, %v2482
        %v2555 = vpack.c.b16 %v2487, %v2483
        %v2556 = vpack.c.b16 %v2488, %v2484
        %v2557 = vpack.c.b16 %v2493, %v2489
        %v2558 = vpack.c.b16 %v2494, %v2490
        %v2559 = vpack.c.b16 %v2495, %v2491
        %v2560 = vpack.c.b16 %v2496, %v2492
        %2625 = vmatpush.bf16.msra.mxu0 %v2525
        %2626 = vmatpush.bf16.msra.mxu0 %v2521
        %2627 = vmatpush.bf16.msra.mxu0 %v2517
        %2628 = vmatpush.bf16.msra.mxu0 %v2513
        %2629 = vmatpush.bf16.msra.mxu0 %v2509
        %2630 = vmatpush.bf16.msra.mxu0 %v2505
        %2631 = vmatpush.bf16.msra.mxu0 %v2501
        %2632 = vmatpush.bf16.msra.mxu0 %v2497
        %2633 = vmatmul.bf16.gmra.mxu0 %v2301
        %v2634 = vpop.f32.mrf.mxu0
        %v2635 = vadd.f32 0.0, %v2634
        %v2636 = vpop.f32.mrf.mxu0
        %2637 = vdwg.mxu0
        %2638 = vmatpush.bf16.msra.mxu0 %v2557
        %2639 = vmatpush.bf16.msra.mxu0 %v2553
        %2640 = vmatpush.bf16.msra.mxu0 %v2549
        %2641 = vmatpush.bf16.msra.mxu0 %v2545
        %2642 = vmatpush.bf16.msra.mxu0 %v2541
        %2643 = vmatpush.bf16.msra.mxu0 %v2537
        %2644 = vmatpush.bf16.msra.mxu0 %v2533
        %2645 = vmatpush.bf16.msra.mxu0 %v2529
        %2646 = vmatmul.bf16.gmra.mxu0 %v2302
        %v2647 = vpop.f32.mrf.mxu0
        %v2648 = vadd.f32 %v2635, %v2647
        %v2649 = vpop.f32.mrf.mxu0
        %2650 = vdwg.mxu0
        %2651 = vmatpush.bf16.msra.mxu0 %v2526
        %2652 = vmatpush.bf16.msra.mxu0 %v2522
        %2653 = vmatpush.bf16.msra.mxu0 %v2518
        %2654 = vmatpush.bf16.msra.mxu0 %v2514
        %2655 = vmatpush.bf16.msra.mxu0 %v2510
        %2656 = vmatpush.bf16.msra.mxu0 %v2506
        %2657 = vmatpush.bf16.msra.mxu0 %v2502
        %2658 = vmatpush.bf16.msra.mxu0 %v2498
        %2659 = vmatmul.bf16.gmra.mxu0 %v2301
        %v2660 = vpop.f32.mrf.mxu0
        %v2661 = vadd.f32 0.0, %v2660
        %v2662 = vpop.f32.mrf.mxu0
        %2663 = vdwg.mxu0
        %2664 = vmatpush.bf16.msra.mxu0 %v2558
        %2665 = vmatpush.bf16.msra.mxu0 %v2554
        %2666 = vmatpush.bf16.msra.mxu0 %v2550
        %2667 = vmatpush.bf16.msra.mxu0 %v2546
        %2668 = vmatpush.bf16.msra.mxu0 %v2542
        %2669 = vmatpush.bf16.msra.mxu0 %v2538
        %2670 = vmatpush.bf16.msra.mxu0 %v2534
        %2671 = vmatpush.bf16.msra.mxu0 %v2530
        %2672 = vmatmul.bf16.gmra.mxu0 %v2302
        %v2673 = vpop.f32.mrf.mxu0
        %v2674 = vadd.f32 %v2661, %v2673
        %v2675 = vpop.f32.mrf.mxu0
        %2676 = vdwg.mxu0
        %2677 = vmatpush.bf16.msra.mxu0 %v2527
        %2678 = vmatpush.bf16.msra.mxu0 %v2523
        %2679 = vmatpush.bf16.msra.mxu0 %v2519
        %2680 = vmatpush.bf16.msra.mxu0 %v2515
        %2681 = vmatpush.bf16.msra.mxu0 %v2511
        %2682 = vmatpush.bf16.msra.mxu0 %v2507
        %2683 = vmatpush.bf16.msra.mxu0 %v2503
        %2684 = vmatpush.bf16.msra.mxu0 %v2499
        %2685 = vmatmul.bf16.gmra.mxu0 %v2301
        %v2686 = vpop.f32.mrf.mxu0
        %v2687 = vadd.f32 0.0, %v2686
        %v2688 = vpop.f32.mrf.mxu0
        %2689 = vdwg.mxu0
        %2690 = vmatpush.bf16.msra.mxu0 %v2559
        %2691 = vmatpush.bf16.msra.mxu0 %v2555
        %2692 = vmatpush.bf16.msra.mxu0 %v2551
        %2693 = vmatpush.bf16.msra.mxu0 %v2547
        %2694 = vmatpush.bf16.msra.mxu0 %v2543
        %2695 = vmatpush.bf16.msra.mxu0 %v2539
        %2696 = vmatpush.bf16.msra.mxu0 %v2535
        %2697 = vmatpush.bf16.msra.mxu0 %v2531
        %2698 = vmatmul.bf16.gmra.mxu0 %v2302
        %v2699 = vpop.f32.mrf.mxu0
        %v2700 = vadd.f32 %v2687, %v2699
        %v2701 = vpop.f32.mrf.mxu0
        %2702 = vdwg.mxu0
        %2703 = vmatpush.bf16.msra.mxu0 %v2528
        %2704 = vmatpush.bf16.msra.mxu0 %v2524
        %2705 = vmatpush.bf16.msra.mxu0 %v2520
        %2706 = vmatpush.bf16.msra.mxu0 %v2516
        %2707 = vmatpush.bf16.msra.mxu0 %v2512
        %2708 = vmatpush.bf16.msra.mxu0 %v2508
        %2709 = vmatpush.bf16.msra.mxu0 %v2504
        %2710 = vmatpush.bf16.msra.mxu0 %v2500
        %2711 = vmatmul.bf16.gmra.mxu0 %v2301
        %v2712 = vpop.f32.mrf.mxu0
        %v2713 = vadd.f32 0.0, %v2712
        %v2714 = vpop.f32.mrf.mxu0
        %2715 = vdwg.mxu0
        %2716 = vmatpush.bf16.msra.mxu0 %v2560
        %2717 = vmatpush.bf16.msra.mxu0 %v2556
        %2718 = vmatpush.bf16.msra.mxu0 %v2552
        %2719 = vmatpush.bf16.msra.mxu0 %v2548
        %2720 = vmatpush.bf16.msra.mxu0 %v2544
        %2721 = vmatpush.bf16.msra.mxu0 %v2540
        %2722 = vmatpush.bf16.msra.mxu0 %v2536
        %2723 = vmatpush.bf16.msra.mxu0 %v2532
        %2724 = vmatmul.bf16.gmra.mxu0 %v2302
        %v2725 = vpop.f32.mrf.mxu0
        %v2726 = vadd.f32 %v2713, %v2725
        %v2727 = vpop.f32.mrf.mxu0
        %2728 = vdwg.mxu0
        %v2729 = vadd.f32 %v2224, %v2648
        %v2730 = vadd.f32 %v2225, %v2674
        %v2731 = vadd.f32 %v2226, %v2700
        %v2732 = vadd.f32 %v2227, %v2726
        %v2733 = vld [vmem:[#allocation4] sm:$0xf]
        %v2735 = vperm.slane %v2733, 0
        %v2736 = vperm.slane %v2733, 1
        %v2737 = vperm.slane %v2733, 2
        %v2738 = vperm.slane %v2733, 3
        %v2743 = vadd.f32 %v2729, %v2735
        %v2744 = vadd.f32 %v2730, %v2736
        %v2745 = vadd.f32 %v2731, %v2737
        %v2746 = vadd.f32 %v2732, %v2738
        %v2747 = vmax.f32 %v2743, 0.0
        %v2748 = vmax.f32 %v2744, 0.0
        %v2749 = vmax.f32 %v2745, 0.0
        %v2750 = vmax.f32 %v2746, 0.0
        %v2751 = vmax.f32 %v2747, %v2749
        %v2752 = vmax.f32 %v2748, %v2750
        %v2753 = vlaneseq
        %v2754 = vshrl.u32 %v2753, 7
        %v2755 = vlaneseq
        %v2756 = vand.u32 %v2755, 127
        %v2757 = vmul.u32 %v2754, 2
        %vm2758 = vcmp.eq.s32.totalorder %v2756, %v2757
        %v2759 = vsel %vm2758, 1, 0
        %v2760 = vcvt.s32.f32 %v2759
        %v2761 = vadd.s32 %v2757, 1
        %vm2762 = vcmp.eq.s32.totalorder %v2756, %v2761
        %v2763 = vsel %vm2762, 1, 0
        %v2764 = vcvt.s32.f32 %v2763
        %vm2765 = vcmask 64512
        %v2767 = vsel %vm2765, %v2760, 0
        %2769 = vmatpush.msra.mxu0 0.0
        %2770 = vmatpush.msra.mxu0 0.0
        %2771 = vmatpush.msra.mxu0 0.0
        %2772 = vmatpush.msra.mxu0 0.0
        %2773 = vmatpush.msra.mxu0 0.0
        %2774 = vmatpush.msra.mxu0 0.0
        %2775 = vmatpush.msra.mxu0 0.0
        %2776 = vmatpush.msra.mxu0 0.0
        %2777 = vmatpush.msra.mxu0 0.0
        %2778 = vmatpush.msra.mxu0 0.0
        %2779 = vmatpush.msra.mxu0 0.0
        %2780 = vmatpush.msra.mxu0 0.0
        %2781 = vmatpush.msra.mxu0 0.0
        %2782 = vmatpush.msra.mxu0 0.0
        %2783 = vmatpush.msra.mxu0 0.0
        %2784 = vmatpush.msra.mxu0 %v2751
        %2785 = vmatmul.f32.gmra.mxu0 %v2767
        %v2786 = vpop.f32.mrf.mxu0
        %v2787 = vadd.f32 0.0, %v2786
        %2788 = vdwg.mxu0
        %2789 = vmatpush.msra.mxu0 0.0
        %2790 = vmatpush.msra.mxu0 0.0
        %2791 = vmatpush.msra.mxu0 0.0
        %2792 = vmatpush.msra.mxu0 0.0
        %2793 = vmatpush.msra.mxu0 0.0
        %2794 = vmatpush.msra.mxu0 0.0
        %2795 = vmatpush.msra.mxu0 0.0
        %2796 = vmatpush.msra.mxu0 0.0
        %2797 = vmatpush.msra.mxu0 0.0
        %2798 = vmatpush.msra.mxu0 0.0
        %2799 = vmatpush.msra.mxu0 0.0
        %2800 = vmatpush.msra.mxu0 0.0
        %2801 = vmatpush.msra.mxu0 0.0
        %2802 = vmatpush.msra.mxu0 0.0
        %2803 = vmatpush.msra.mxu0 0.0
        %2804 = vmatpush.msra.mxu0 %v2752
        %2805 = vmatmul.f32.gmra.mxu0 %v2767
        %v2806 = vpop.f32.mrf.mxu0
        %v2807 = vadd.f32 0.0, %v2806
        %2808 = vdwg.mxu0
        %v2810 = vsel %vm2765, %v2764, 0
        %2812 = vmatpush.msra.mxu0 0.0
        %2813 = vmatpush.msra.mxu0 0.0
        %2814 = vmatpush.msra.mxu0 0.0
        %2815 = vmatpush.msra.mxu0 0.0
        %2816 = vmatpush.msra.mxu0 0.0
        %2817 = vmatpush.msra.mxu0 0.0
        %2818 = vmatpush.msra.mxu0 0.0
        %2819 = vmatpush.msra.mxu0 0.0
        %2820 = vmatpush.msra.mxu0 0.0
        %2821 = vmatpush.msra.mxu0 0.0
        %2822 = vmatpush.msra.mxu0 0.0
        %2823 = vmatpush.msra.mxu0 0.0
        %2824 = vmatpush.msra.mxu0 0.0
        %2825 = vmatpush.msra.mxu0 0.0
        %2826 = vmatpush.msra.mxu0 0.0
        %2827 = vmatpush.msra.mxu0 %v2751
        %2828 = vmatmul.f32.gmra.mxu0 %v2810
        %v2829 = vpop.f32.mrf.mxu0
        %v2830 = vadd.f32 0.0, %v2829
        %2831 = vdwg.mxu0
        %2832 = vmatpush.msra.mxu0 0.0
        %2833 = vmatpush.msra.mxu0 0.0
        %2834 = vmatpush.msra.mxu0 0.0
        %2835 = vmatpush.msra.mxu0 0.0
        %2836 = vmatpush.msra.mxu0 0.0
        %2837 = vmatpush.msra.mxu0 0.0
        %2838 = vmatpush.msra.mxu0 0.0
        %2839 = vmatpush.msra.mxu0 0.0
        %2840 = vmatpush.msra.mxu0 0.0
        %2841 = vmatpush.msra.mxu0 0.0
        %2842 = vmatpush.msra.mxu0 0.0
        %2843 = vmatpush.msra.mxu0 0.0
        %2844 = vmatpush.msra.mxu0 0.0
        %2845 = vmatpush.msra.mxu0 0.0
        %2846 = vmatpush.msra.mxu0 0.0
        %2847 = vmatpush.msra.mxu0 %v2752
        %2848 = vmatmul.f32.gmra.mxu0 %v2810
        %v2849 = vpop.f32.mrf.mxu0
        %v2850 = vadd.f32 0.0, %v2849
        %2851 = vdwg.mxu0
        %v2852 = vmax.f32 %v2787, %v2830
        %v2853 = vmax.f32 %v2807, %v2850
        %v2856 = vrot.slane %v2853, 4
        %vm2857 = vcmask 1043456
        %v2858 = vsel %vm2857, %v2852, %v2856
        %2860 = vst [vmem:[%s202] sm:$0xff] %v2858
        %p2861 = scmp.lt.s32.totalorder %s16, 1
        %s2862 = scalar_select %p2861, %s16, 1
        %s2863 = smul.addr %s2862, 2
        %s2864 = smul.addr %s2863, 4
        %s2865 = scalar_lea.vmem %s3, %s2864
        // Predicated region
        $region41: #{cnn_forward.6} parent=31 // pred_check
          %p2866 = pneg %p102
        $region42: #{cnn_forward.6} parent=31 // pred_check_branch
          %2868 = sbr.rel (%p2866) target = $region44
        $region43: #{cnn_forward.6} parent=31 // pred_region
          _
        $region44: #{cnn_forward.6} parent=31 // pred_fallthru
          _
      $region32: #{cnn_forward.6} parent=5 // pred_fallthru
        _
      %p2869 = scmp.le.s32.totalorder 2, %s11
      // Predicated region
      $region45: #{cnn_forward.6} parent=5 // pred_check
        %p2870 = pneg %p2869
      $region46: #{cnn_forward.6} parent=5 // pred_check_branch
        %2872 = sbr.rel (%p2870) target = $region48
      $region47: #{cnn_forward.6} parent=5 // pred_region
        %s2873 = ssub.s32 %s11, 2
        // Predicated region
        $region49: #{cnn_forward.6} parent=47 // pred_check
          %p2874 = pneg %p108
        $region50: #{cnn_forward.6} parent=47 // pred_check_branch
          %2876 = sbr.rel (%p2874) target = $region52
        $region51: #{cnn_forward.6} parent=47 // pred_region
          %p2877 = scmp.lt.s32.totalorder %s17, 1
          %s2878 = scalar_select %p2877, %s17, 1
          %s2879 = smul.addr %s2878, 2
          %s2880 = smul.addr %s2879, 4
          %s2881 = scalar_lea.vmem %s3, %s2880
        $region52: #{cnn_forward.6} parent=47 // pred_fallthru
          _
      $region48: #{cnn_forward.6} parent=5 // pred_fallthru
        _
    $region6: #{cnn_forward.6} parent=1 // loop_footer
      %s15 = sadd.s32 1, %s11
    $region7: #{cnn_forward.6} parent=1 // loop_footer_branch
      %10 = sbr.rel target = $region3
    $region8: #{cnn_forward.6} parent=1 // loop_exit
      _
    %2882 = vsyncpa [#allocation3], 1
    %s2883 = scalar_lea.sflag [#allocation3], 1
    %2884 = vsyncpa %s2883, 1
    %2885 = vsyncpa [#allocation5], 1

</llo_original>
